<compile_context>
chip_gen: v7x
topology: tpu7x:2x2x1
jax: 0.10.0
libtpu: 0.0.40
codegen_flags: <defaults>
</compile_context>

<pallas_src>
import functools

import jax
import jax.numpy as jnp
from jax.experimental import pallas as pl
from jax.experimental.pallas import tpu as pltpu

LANE = 128
BN_EPS = 1e-5


def _ceil_to(x, m):
    return ((x + m - 1) // m) * m


def _row_tile(m):
    """Largest row tile <= 1024 that evenly divides m (keeps blocks tiling-legal and VMEM-sized)."""
    if m <= 1024:
        return m
    for t in (1024, 512, 256, 128, 64, 32, 16, 8):
        if m % t == 0:
            return t
    return m


# ----------------------------------------------------------------------------
# Pallas kernels
# ----------------------------------------------------------------------------
def _mm_bias_stats_kernel(a_ref, b_ref, bias_ref, o_ref, stats_ref):
    """pre-act = A @ B + bias (f32 acc), plus per-column sum / sumsq accumulated over row tiles."""
    acc = jnp.dot(a_ref[...], b_ref[...], preferred_element_type=jnp.float32)
    acc = acc + bias_ref[...]
    o_ref[...] = acc

    s = jnp.sum(acc, axis=0, keepdims=True)
    ss = jnp.sum(acc * acc, axis=0, keepdims=True)
    tile_stats = jnp.concatenate([s, ss], axis=0)

    @pl.when(pl.program_id(0) == 0)
    def _():
        stats_ref[...] = jnp.zeros_like(stats_ref)

    stats_ref[...] = stats_ref[...] + tile_stats


def _affine_act_kernel(x_ref, scale_ref, shift_ref, o_ref, *, activation):
    """y = act(x * scale + shift) -- BatchNorm folded into a per-channel affine (f32 math)."""
    y = x_ref[...] * scale_ref[...] + shift_ref[...]
    if activation == "relu":
        y = jnp.maximum(y, 0.0)
    elif activation == "sigmoid":
        y = jax.nn.sigmoid(y)
    o_ref[...] = y.astype(o_ref.dtype)


def _mm_bias_act_kernel(a_ref, b_ref, bias_ref, o_ref, *, activation):
    acc = jnp.dot(a_ref[...], b_ref[...], preferred_element_type=jnp.float32)
    acc = acc + bias_ref[...]
    if activation == "relu":
        acc = jnp.maximum(acc, 0.0)
    elif activation == "sigmoid":
        acc = jax.nn.sigmoid(acc)
    o_ref[...] = acc.astype(o_ref.dtype)


def _bottleneck_kernel(h_ref, w_ref, bias_ref, eps_ref, mulv_ref, z_ref, *, z_dim):
    """Fused fc1+fc2 (weights concatenated along N) + logvar clamp + reparameterization."""
    acc = jnp.dot(h_ref[...], w_ref[...], preferred_element_type=jnp.float32)
    acc = acc + bias_ref[...]
    mu = acc[:, :z_dim]
    logvar = jnp.clip(acc[:, z_dim:2 * z_dim], -4.0, 4.0)
    mulv_ref[:, :z_dim] = mu
    mulv_ref[:, z_dim:] = logvar
    z_ref[...] = mu + eps_ref[...] * jnp.exp(0.5 * logvar)


# ----------------------------------------------------------------------------
# pallas_call wrappers
# ----------------------------------------------------------------------------
def _mm_bias_stats(a, w, bias):
    m, k = a.shape
    k2, npad = w.shape
    assert k == k2 and npad % LANE == 0
    tm = _row_tile(m)
    return pl.pallas_call(
        _mm_bias_stats_kernel,
        out_shape=(jax.ShapeDtypeStruct((m, npad), jnp.float32),
                   jax.ShapeDtypeStruct((2, npad), jnp.float32)),
        grid=(m // tm,),
        in_specs=[
            pl.BlockSpec((tm, k), lambda i: (i, 0)),
            pl.BlockSpec((k, npad), lambda i: (0, 0)),
            pl.BlockSpec((1, npad), lambda i: (0, 0)),
        ],
        out_specs=(
            pl.BlockSpec((tm, npad), lambda i: (i, 0)),
            pl.BlockSpec((2, npad), lambda i: (0, 0)),
        ),
        compiler_params=pltpu.CompilerParams(dimension_semantics=("arbitrary",)),
    )(a, w, bias.reshape(1, npad))


def _affine_act(x, scale, shift, *, activation, out_dtype):
    m, npad = x.shape
    tm = _row_tile(m)
    return pl.pallas_call(
        functools.partial(_affine_act_kernel, activation=activation),
        out_shape=jax.ShapeDtypeStruct((m, npad), out_dtype),
        grid=(m // tm,),
        in_specs=[
            pl.BlockSpec((tm, npad), lambda i: (i, 0)),
            pl.BlockSpec((1, npad), lambda i: (0, 0)),
            pl.BlockSpec((1, npad), lambda i: (0, 0)),
        ],
        out_specs=pl.BlockSpec((tm, npad), lambda i: (i, 0)),
        compiler_params=pltpu.CompilerParams(dimension_semantics=("parallel",)),
    )(x, scale.reshape(1, npad).astype(jnp.float32),
      shift.reshape(1, npad).astype(jnp.float32))


def _mm_bias_act(a, w, bias, *, activation, out_dtype):
    m, k = a.shape
    _, n = w.shape
    tm = _row_tile(m)
    return pl.pallas_call(
        functools.partial(_mm_bias_act_kernel, activation=activation),
        out_shape=jax.ShapeDtypeStruct((m, n), out_dtype),
        grid=(m // tm,),
        in_specs=[
            pl.BlockSpec((tm, k), lambda i: (i, 0)),
            pl.BlockSpec((k, n), lambda i: (0, 0)),
            pl.BlockSpec((1, n), lambda i: (0, 0)),
        ],
        out_specs=pl.BlockSpec((tm, n), lambda i: (i, 0)),
        compiler_params=pltpu.CompilerParams(dimension_semantics=("parallel",)),
    )(a, w, bias.reshape(1, n))


def _bottleneck(h_flat, w12, b12, eps, z_dim):
    b, k = h_flat.shape
    n2 = w12.shape[1]  # == 2 * z_dim == 128 (lane dense)
    mulv, z = pl.pallas_call(
        functools.partial(_bottleneck_kernel, z_dim=z_dim),
        out_shape=(jax.ShapeDtypeStruct((b, 2 * z_dim), jnp.float32),
                   jax.ShapeDtypeStruct((b, z_dim), jnp.float32)),
        grid=(1,),
        in_specs=[
            pl.BlockSpec((b, k), lambda i: (0, 0)),
            pl.BlockSpec((k, n2), lambda i: (0, 0)),
            pl.BlockSpec((1, n2), lambda i: (0, 0)),
            pl.BlockSpec((b, z_dim), lambda i: (0, 0)),
        ],
        out_specs=(
            pl.BlockSpec((b, 2 * z_dim), lambda i: (0, 0)),
            pl.BlockSpec((b, z_dim), lambda i: (0, 0)),
        ),
    )(h_flat, w12, b12.reshape(1, n2), eps)
    return z, mulv[:, :z_dim], mulv[:, z_dim:]


# ----------------------------------------------------------------------------
# JAX-side glue: im2col, sub-pixel taps, BN scale/shift from accumulated stats
# ----------------------------------------------------------------------------
def _im2col(x_nhwc, ksize, stride, pad):
    n, h, w, c = x_nhwc.shape
    xp = jnp.pad(x_nhwc, ((0, 0), (pad, pad), (pad, pad), (0, 0)))
    ho = (h + 2 * pad - ksize) // stride + 1
    wo = (w + 2 * pad - ksize) // stride + 1
    taps = []
    for kh in range(ksize):
        for kw in range(ksize):
            taps.append(xp[:, kh:kh + stride * ho:stride, kw:kw + stride * wo:stride, :])
    col = jnp.concatenate(taps, axis=-1)                    # (n, ho, wo, k*k*c)
    return col.reshape(n * ho * wo, ksize * ksize * c), (n, ho, wo)


def _subpixel_col(x_nhwc):
    """4 shifted views of x (no zero-dilation): taps x[m,n], x[m,n+1], x[m+1,n], x[m+1,n+1]."""
    n, h, w, c = x_nhwc.shape
    xp = jnp.pad(x_nhwc, ((0, 0), (0, 1), (0, 1), (0, 0)))
    t00 = x_nhwc
    t01 = xp[:, :h, 1:w + 1, :]
    t10 = xp[:, 1:h + 1, :w, :]
    t11 = xp[:, 1:h + 1, 1:w + 1, :]
    col = jnp.concatenate([t00, t01, t10, t11], axis=-1)    # (n, h, w, 4c)
    return col.reshape(n * h * w, 4 * c)


def _bn_scale_shift(stats, count, gamma, beta, eps=BN_EPS):
    mean = stats[0] / count
    var = jnp.maximum(stats[1] / count - mean * mean, 0.0)  # biased (training-mode) variance
    scale = gamma * jax.lax.rsqrt(var + eps)
    shift = beta - mean * scale
    return scale, shift


# ----------------------------------------------------------------------------
# Layer helpers
# ----------------------------------------------------------------------------
def _conv_bn_relu(x_nhwc, layer):
    col, (n, ho, wo) = _im2col(x_nhwc, ksize=3, stride=2, pad=1)
    pre, stats = _mm_bias_stats(col.astype(jnp.bfloat16), layer["w"], layer["b"])
    scale, shift = _bn_scale_shift(stats, float(n * ho * wo), layer["gamma"], layer["beta"])
    y = _affine_act(pre, scale, shift, activation="relu", out_dtype=jnp.bfloat16)
    return y[:, :layer["cout"]].reshape(n, ho, wo, layer["cout"])


def _deconv_bn_act(x_nhwc, layer, activation, out_dtype):
    n, h, w, c = x_nhwc.shape
    col = _subpixel_col(x_nhwc).astype(jnp.bfloat16)        # (n*h*w, 4*c)
    pre, stats = _mm_bias_stats(col, layer["w"], layer["b"])  # (n*h*w, 4*cpp)
    cpp, cout = layer["cpp"], layer["cout"]
    stats_c = stats.reshape(2, 4, cpp).sum(axis=1)          # fold per-phase stats per channel
    scale_c, shift_c = _bn_scale_shift(stats_c, float(n * h * w * 4),
                                       layer["gamma"], layer["beta"])
    y = _affine_act(pre, jnp.tile(scale_c, 4), jnp.tile(shift_c, 4),
                    activation=activation, out_dtype=out_dtype)
    y = y.reshape(n, h, w, 2, 2, cpp)                       # (.., phase_row, phase_col, c)
    y = jnp.transpose(y, (0, 1, 3, 2, 4, 5)).reshape(n, 2 * h, 2 * w, cpp)  # pixel shuffle
    return y[..., :cout]


# ----------------------------------------------------------------------------
# Parameters: PyTorch-layout init + one-time re-layout (done OUTSIDE jit)
# ----------------------------------------------------------------------------
def init_params(key, h_dim, z_dim):
    ks = iter(jax.random.split(key, 32))

    def w(shape, scale=0.05):
        return (scale * jax.random.normal(next(ks), shape)).astype(jnp.float32)

    def bn(c):
        return jnp.ones((c,), jnp.float32), jnp.zeros((c,), jnp.float32)

    p = {}
    p["c1_w"], p["c1_b"] = w((32, 3, 3, 3)), w((32,))
    p["bn1_g"], p["bn1_b"] = bn(32)
    p["c2_w"], p["c2_b"] = w((64, 32, 3, 3)), w((64,))
    p["bn2_g"], p["bn2_b"] = bn(64)
    p["c3_w"], p["c3_b"] = w((128, 64, 3, 3)), w((128,))
    p["bn3_g"], p["bn3_b"] = bn(128)
    p["fc1_w"], p["fc1_b"] = w((z_dim, h_dim)), w((z_dim,))
    p["fc2_w"], p["fc2_b"] = w((z_dim, h_dim)), w((z_dim,))
    p["fc3_w"], p["fc3_b"] = w((h_dim, z_dim)), w((h_dim,))
    p["ct1_w"], p["ct1_b"] = w((128, 64, 3, 3)), w((64,))
    p["dbn1_g"], p["dbn1_b"] = bn(64)
    p["ct2_w"], p["ct2_b"] = w((64, 32, 3, 3)), w((32,))
    p["dbn2_g"], p["dbn2_b"] = bn(32)
    p["ct3_w"], p["ct3_b"] = w((32, 3, 3, 3)), w((3,))
    p["dbn3_g"], p["dbn3_b"] = bn(3)
    return p


def prepare_params(p, img, z_dim):
    """One-time weight re-layout: lane-dense matmul weights, phase-folded deconv kernels,
    Flatten/UnFlatten channel permutation folded into the fc weights. bf16 MXU operands."""

    def conv_pack(w, b, g, beta):
        cout, cin, kh, kw = w.shape
        cpad = _ceil_to(cout, LANE)
        wm = jnp.transpose(w, (2, 3, 1, 0)).reshape(kh * kw * cin, cout)
        wm = jnp.pad(wm, ((0, 0), (0, cpad - cout)))
        return dict(w=wm.astype(jnp.bfloat16),
                    b=jnp.pad(b, (0, cpad - cout)),
                    gamma=jnp.pad(g, (0, cpad - cout)),
                    beta=jnp.pad(beta, (0, cpad - cout)),
                    cout=cout)

    def deconv_pack(w, b, g, beta):
        # PyTorch ConvTranspose2d weight: (Cin, Cout, 3, 3); y[oh] gets x[ih]*w[kh] with
        # oh = 2*ih - 1 + kh.  Phase-folded weight: rows = 4 taps x Cin, cols = 4 phases x Cpp.
        cin, cout, kh, kw = w.shape
        assert (kh, kw) == (3, 3)
        cpp = _ceil_to(cout, 32)                        # 4*cpp is a multiple of 128
        wc = jnp.zeros((4 * cin, 4 * cpp), jnp.float32)

        def put(wc, tap, phase, kh_i, kw_i):
            return wc.at[tap * cin:(tap + 1) * cin,
                         phase * cpp:phase * cpp + cout].set(w[:, :, kh_i, kw_i])

        # phases: 0=(even,even) 1=(even,odd) 2=(odd,even) 3=(odd,odd)
        # taps:   0=x[m,n]      1=x[m,n+1]   2=x[m+1,n]   3=x[m+1,n+1]
        wc = put(wc, 0, 0, 1, 1)
        wc = put(wc, 0, 1, 1, 2)
        wc = put(wc, 1, 1, 1, 0)
        wc = put(wc, 0, 2, 2, 1)
        wc = put(wc, 2, 2, 0, 1)
        wc = put(wc, 0, 3, 2, 2)
        wc = put(wc, 1, 3, 2, 0)
        wc = put(wc, 2, 3, 0, 2)
        wc = put(wc, 3, 3, 0, 0)

        bias_pp = jnp.pad(b, (0, cpp - cout))
        return dict(w=wc.astype(jnp.bfloat16),
                    b=jnp.tile(bias_pp, 4),
                    gamma=jnp.pad(g, (0, cpp - cout)),
                    beta=jnp.pad(beta, (0, cpp - cout)),
                    cout=cout, cpp=cpp)

    ho = img // 8
    c_enc = 128
    h_dim = c_enc * ho * ho

    # Flatten() flattens NCHW (c,h,w order); our activations are NHWC (h,w,c order):
    # permute the fc input/output index accordingly so no activation transpose is needed.
    def enc_fc_w(w):  # (z, h_dim_chw) -> (h_dim_hwc, z)
        return jnp.transpose(w.reshape(z_dim, c_enc, ho, ho), (2, 3, 1, 0)).reshape(h_dim, z_dim)

    w12 = jnp.concatenate([enc_fc_w(p["fc1_w"]), enc_fc_w(p["fc2_w"])], axis=1)  # (h_dim, 2z)
    b12 = jnp.concatenate([p["fc1_b"], p["fc2_b"]])

    w3 = jnp.transpose(p["fc3_w"].reshape(c_enc, ho, ho, z_dim),
                       (1, 2, 0, 3)).reshape(h_dim, z_dim).T                      # (z, h_dim_hwc)
    b3 = jnp.transpose(p["fc3_b"].reshape(c_enc, ho, ho), (1, 2, 0)).reshape(h_dim)

    return dict(
        c1=conv_pack(p["c1_w"], p["c1_b"], p["bn1_g"], p["bn1_b"]),
        c2=conv_pack(p["c2_w"], p["c2_b"], p["bn2_g"], p["bn2_b"]),
        c3=conv_pack(p["c3_w"], p["c3_b"], p["bn3_g"], p["bn3_b"]),
        w12=w12.astype(jnp.bfloat16), b12=b12,
        w3=jnp.asarray(w3).astype(jnp.bfloat16), b3=b3,
        d1=deconv_pack(p["ct1_w"], p["ct1_b"], p["dbn1_g"], p["dbn1_b"]),
        d2=deconv_pack(p["ct2_w"], p["ct2_b"], p["dbn2_g"], p["dbn2_b"]),
        d3=deconv_pack(p["ct3_w"], p["ct3_b"], p["dbn3_g"], p["dbn3_b"]),
        z_dim=z_dim, dec_hw=ho, dec_c=c_enc,
    )


# ----------------------------------------------------------------------------
# Full forward (matches VAE.forward: returns (recon, mu, clamped logvar))
# ----------------------------------------------------------------------------
def vae_forward(prep, x_nchw, eps_key):
    z_dim = prep["z_dim"]
    x = jnp.transpose(x_nchw, (0, 2, 3, 1)).astype(jnp.bfloat16)   # NCHW -> NHWC

    # ------- encoder -------
    h = _conv_bn_relu(x, prep["c1"])
    h = _conv_bn_relu(h, prep["c2"])
    h = _conv_bn_relu(h, prep["c3"])
    n, ho, wo, c = h.shape
    h_flat = h.reshape(n, ho * wo * c)            # Flatten permutation folded into fc weights

    # ------- bottleneck (fused fc1 + fc2 + clamp + reparameterize) -------
    eps = jax.random.normal(eps_key, (n, z_dim), jnp.float32)      # torch.randn_like(std)
    z, mu, logvar = _bottleneck(h_flat, prep["w12"], prep["b12"], eps, z_dim)

    # ------- decoder -------
    d = _mm_bias_act(z.astype(jnp.bfloat16), prep["w3"], prep["b3"],
                     activation="relu", out_dtype=jnp.bfloat16)    # F.relu(fc3(z))
    d = d.reshape(n, prep["dec_hw"], prep["dec_hw"], prep["dec_c"])  # UnFlatten (hwc order)
    d = _deconv_bn_act(d, prep["d1"], "relu", jnp.bfloat16)
    d = _deconv_bn_act(d, prep["d2"], "relu", jnp.bfloat16)
    d = _deconv_bn_act(d, prep["d3"], "sigmoid", jnp.float32)
    recon = jnp.transpose(d, (0, 3, 1, 2))        # back to NCHW
    return recon, mu, logvar


# ----------------------------------------------------------------------------
# Main
# ----------------------------------------------------------------------------
if __name__ == "__main__":
    # Small-scale version of the module: 32x32 input -> h_dim = 128*4*4 = 2048, z_dim = 64.
    BATCH, IN_CH, IMG = 2, 3, 32
    Z_DIM = 64
    H_DIM = 128 * (IMG // 8) * (IMG // 8)

    key = jax.random.PRNGKey(0)
    pkey, xkey, ekey = jax.random.split(key, 3)

    params = init_params(pkey, H_DIM, Z_DIM)
    prep = prepare_params(params, IMG, Z_DIM)     # one-time weight re-layout, outside jit
    x = jax.random.normal(xkey, (BATCH, IN_CH, IMG, IMG), jnp.float32)

    fwd = jax.jit(functools.partial(vae_forward, prep))
    recon, mu, logvar = fwd(x, ekey)
    jax.block_until_ready((recon, mu, logvar))

    assert recon.shape == (BATCH, IN_CH, IMG, IMG)
    assert mu.shape == (BATCH, Z_DIM) and logvar.shape == (BATCH, Z_DIM)
    assert bool(jnp.all(jnp.isfinite(recon)))
    assert bool(jnp.all(recon >= 0.0)) and bool(jnp.all(recon <= 1.0))     # sigmoid output
    assert bool(jnp.all(logvar >= -4.0)) and bool(jnp.all(logvar <= 4.0))  # clamp(-4, 4)

    print("KERNEL_OK")
</pallas_src>

<mosaic_0001>
module attributes {stable_mosaic.version = 11 : i64} {
  func.func @_mm_bias_stats_kernel(%arg0: i32, %arg1: memref<512x27xbf16, #tpu.memory_space<vmem>>, %arg2: memref<27x128xbf16, #tpu.memory_space<vmem>>, %arg3: memref<1x128xf32, #tpu.memory_space<vmem>>, %arg4: memref<512x128xf32, #tpu.memory_space<vmem>>, %arg5: memref<2x128xf32, #tpu.memory_space<vmem>>) attributes {dimension_semantics = [#tpu.dimension_semantics<arbitrary>], iteration_bounds = array<i64: 1>, scalar_prefetch = 0 : i64, scratch_operands = 0 : i64, tpu.core_type = #tpu.core_type<tc>, window_params = [{transform_indices = @transform_0, window_bounds = array<i64: 512, 27>}, {pipeline_mode = #tpu.pipeline_mode<synchronous>, transform_indices = @transform_1, window_bounds = array<i64: 27, 128>}, {pipeline_mode = #tpu.pipeline_mode<synchronous>, transform_indices = @transform_2, window_bounds = array<i64: 1, 128>}, {transform_indices = @transform_3, window_bounds = array<i64: 512, 128>}, {pipeline_mode = #tpu.pipeline_mode<synchronous>, transform_indices = @transform_4, window_bounds = array<i64: 2, 128>}]} {
    %c0 = arith.constant 0 : index
    %c0_0 = arith.constant 0 : index
    %0 = vector.load %arg1[%c0, %c0_0] : memref<512x27xbf16, #tpu.memory_space<vmem>>, vector<512x27xbf16>
    %c0_1 = arith.constant 0 : index
    %c0_2 = arith.constant 0 : index
    %1 = vector.load %arg2[%c0_1, %c0_2] : memref<27x128xbf16, #tpu.memory_space<vmem>>, vector<27x128xbf16>
    %cst = arith.constant dense<0.000000e+00> : vector<512x128xf32>
    %2 = tpu.matmul %0, %1, %cst {dimension_numbers = #tpu.dot_dimension_numbers<[1], [0], [0], [1], [0, 0, 1, 1], [], []>} : vector<512x27xbf16>, vector<27x128xbf16>, vector<512x128xf32> -> vector<512x128xf32>
    %c0_3 = arith.constant 0 : index
    %c0_4 = arith.constant 0 : index
    %3 = vector.load %arg3[%c0_3, %c0_4] : memref<1x128xf32, #tpu.memory_space<vmem>>, vector<1x128xf32>
    %4 = vector.broadcast %3 : vector<1x128xf32> to vector<512x128xf32>
    %5 = arith.addf %2, %4 : vector<512x128xf32>
    %c0_5 = arith.constant 0 : index
    %c0_6 = arith.constant 0 : index
    %6 = vector.load %arg4[%c0_5, %c0_6] : memref<512x128xf32, #tpu.memory_space<vmem>>, vector<512x128xf32>
    tpu.vector_store %arg4[%c0_5, %c0_6], %5 {strides = array<i32>} : memref<512x128xf32, #tpu.memory_space<vmem>>, vector<512x128xf32>,
    %cst_7 = arith.constant dense<0.000000e+00> : vector<128xf32>
    %7 = vector.multi_reduction <add>, %5, %cst_7 [0] : vector<512x128xf32> to vector<128xf32>
    %8 = vector.shape_cast %7 : vector<128xf32> to vector<1x128xf32>
    %9 = arith.mulf %5, %5 : vector<512x128xf32>
    %cst_8 = arith.constant dense<0.000000e+00> : vector<128xf32>
    %10 = vector.multi_reduction <add>, %9, %cst_8 [0] : vector<512x128xf32> to vector<128xf32>
    %11 = vector.shape_cast %10 : vector<128xf32> to vector<1x128xf32>
    %12 = tpu.concatenate %8, %11 in 0 : vector<1x128xf32>, vector<1x128xf32> -> vector<2x128xf32>
    %c0_i32 = arith.constant 0 : i32
    %13 = arith.cmpi eq, %arg0, %c0_i32 : i32
    %14 = arith.extui %13 : i1 to i32
    %c0_i32_9 = arith.constant 0 : i32
    %15 = arith.cmpi ne, %14, %c0_i32_9 : i32
    scf.if %15 {
      %cst_14 = arith.constant 0.000000e+00 : f32
      %19 = vector.broadcast %cst_14 : f32 to vector<2x128xf32>
      %c0_15 = arith.constant 0 : index
      %c0_16 = arith.constant 0 : index
      %20 = vector.load %arg5[%c0_15, %c0_16] : memref<2x128xf32, #tpu.memory_space<vmem>>, vector<2x128xf32>
      tpu.vector_store %arg5[%c0_15, %c0_16], %19 {strides = array<i32>} : memref<2x128xf32, #tpu.memory_space<vmem>>, vector<2x128xf32>,
    } else {
    }
    %c0_10 = arith.constant 0 : index
    %c0_11 = arith.constant 0 : index
    %16 = vector.load %arg5[%c0_10, %c0_11] : memref<2x128xf32, #tpu.memory_space<vmem>>, vector<2x128xf32>
    %17 = arith.addf %16, %12 : vector<2x128xf32>
    %c0_12 = arith.constant 0 : index
    %c0_13 = arith.constant 0 : index
    %18 = vector.load %arg5[%c0_12, %c0_13] : memref<2x128xf32, #tpu.memory_space<vmem>>, vector<2x128xf32>
    tpu.vector_store %arg5[%c0_12, %c0_13], %17 {strides = array<i32>} : memref<2x128xf32, #tpu.memory_space<vmem>>, vector<2x128xf32>,
    return
  }
  func.func @transform_0(%arg0: i32) -> (i32, i32) {
    %c0_i32 = arith.constant 0 : i32
    %c0_i32_0 = arith.constant 0 : i32
    return %arg0, %c0_i32 : i32, i32
  }
  func.func @transform_1(%arg0: i32) -> (i32, i32) {
    %c0_i32 = arith.constant 0 : i32
    %c0_i32_0 = arith.constant 0 : i32
    %c0_i32_1 = arith.constant 0 : i32
    return %c0_i32, %c0_i32_0 : i32, i32
  }
  func.func @transform_2(%arg0: i32) -> (i32, i32) {
    %c0_i32 = arith.constant 0 : i32
    %c0_i32_0 = arith.constant 0 : i32
    %c0_i32_1 = arith.constant 0 : i32
    return %c0_i32, %c0_i32_0 : i32, i32
  }
  func.func @transform_3(%arg0: i32) -> (i32, i32) {
    %c0_i32 = arith.constant 0 : i32
    %c0_i32_0 = arith.constant 0 : i32
    return %arg0, %c0_i32 : i32, i32
  }
  func.func @transform_4(%arg0: i32) -> (i32, i32) {
    %c0_i32 = arith.constant 0 : i32
    %c0_i32_0 = arith.constant 0 : i32
    %c0_i32_1 = arith.constant 0 : i32
    return %c0_i32, %c0_i32_0 : i32, i32
  }
}

module attributes {stable_mosaic.version = 11 : i64} {
  func.func @_affine_act_kernel(%arg0: i32, %arg1: memref<512x128xf32, #tpu.memory_space<vmem>>, %arg2: memref<1x128xf32, #tpu.memory_space<vmem>>, %arg3: memref<1x128xf32, #tpu.memory_space<vmem>>, %arg4: memref<512x128xbf16, #tpu.memory_space<vmem>>) attributes {dimension_semantics = [#tpu.dimension_semantics<parallel>], iteration_bounds = array<i64: 1>, scalar_prefetch = 0 : i64, scratch_operands = 0 : i64, tpu.core_type = #tpu.core_type<tc>, window_params = [{transform_indices = @transform_0, window_bounds = array<i64: 512, 128>}, {pipeline_mode = #tpu.pipeline_mode<synchronous>, transform_indices = @transform_1, window_bounds = array<i64: 1, 128>}, {pipeline_mode = #tpu.pipeline_mode<synchronous>, transform_indices = @transform_2, window_bounds = array<i64: 1, 128>}, {transform_indices = @transform_3, window_bounds = array<i64: 512, 128>}]} {
    %c0 = arith.constant 0 : index
    %c0_0 = arith.constant 0 : index
    %0 = vector.load %arg1[%c0, %c0_0] : memref<512x128xf32, #tpu.memory_space<vmem>>, vector<512x128xf32>
    %c0_1 = arith.constant 0 : index
    %c0_2 = arith.constant 0 : index
    %1 = vector.load %arg2[%c0_1, %c0_2] : memref<1x128xf32, #tpu.memory_space<vmem>>, vector<1x128xf32>
    %2 = vector.broadcast %1 : vector<1x128xf32> to vector<512x128xf32>
    %3 = arith.mulf %0, %2 : vector<512x128xf32>
    %c0_3 = arith.constant 0 : index
    %c0_4 = arith.constant 0 : index
    %4 = vector.load %arg3[%c0_3, %c0_4] : memref<1x128xf32, #tpu.memory_space<vmem>>, vector<1x128xf32>
    %5 = vector.broadcast %4 : vector<1x128xf32> to vector<512x128xf32>
    %6 = arith.addf %3, %5 : vector<512x128xf32>
    %cst = arith.constant 0.000000e+00 : f32
    %7 = vector.broadcast %cst : f32 to vector<512x128xf32>
    %8 = arith.maximumf %6, %7 : vector<512x128xf32>
    %9 = arith.truncf %8 : vector<512x128xf32> to vector<512x128xbf16>
    %c0_5 = arith.constant 0 : index
    %c0_6 = arith.constant 0 : index
    %10 = vector.load %arg4[%c0_5, %c0_6] : memref<512x128xbf16, #tpu.memory_space<vmem>>, vector<512x128xbf16>
    tpu.vector_store %arg4[%c0_5, %c0_6], %9 {strides = array<i32>} : memref<512x128xbf16, #tpu.memory_space<vmem>>, vector<512x128xbf16>,
    return
  }
  func.func @transform_0(%arg0: i32) -> (i32, i32) {
    %c0_i32 = arith.constant 0 : i32
    %c0_i32_0 = arith.constant 0 : i32
    return %arg0, %c0_i32 : i32, i32
  }
  func.func @transform_1(%arg0: i32) -> (i32, i32) {
    %c0_i32 = arith.constant 0 : i32
    %c0_i32_0 = arith.constant 0 : i32
    %c0_i32_1 = arith.constant 0 : i32
    return %c0_i32, %c0_i32_0 : i32, i32
  }
  func.func @transform_2(%arg0: i32) -> (i32, i32) {
    %c0_i32 = arith.constant 0 : i32
    %c0_i32_0 = arith.constant 0 : i32
    %c0_i32_1 = arith.constant 0 : i32
    return %c0_i32, %c0_i32_0 : i32, i32
  }
  func.func @transform_3(%arg0: i32) -> (i32, i32) {
    %c0_i32 = arith.constant 0 : i32
    %c0_i32_0 = arith.constant 0 : i32
    return %arg0, %c0_i32 : i32, i32
  }
}

module attributes {stable_mosaic.version = 11 : i64} {
  func.func @_mm_bias_stats_kernel(%arg0: i32, %arg1: memref<128x288xbf16, #tpu.memory_space<vmem>>, %arg2: memref<288x128xbf16, #tpu.memory_space<vmem>>, %arg3: memref<1x128xf32, #tpu.memory_space<vmem>>, %arg4: memref<128x128xf32, #tpu.memory_space<vmem>>, %arg5: memref<2x128xf32, #tpu.memory_space<vmem>>) attributes {dimension_semantics = [#tpu.dimension_semantics<arbitrary>], iteration_bounds = array<i64: 1>, scalar_prefetch = 0 : i64, scratch_operands = 0 : i64, tpu.core_type = #tpu.core_type<tc>, window_params = [{transform_indices = @transform_0, window_bounds = array<i64: 128, 288>}, {pipeline_mode = #tpu.pipeline_mode<synchronous>, transform_indices = @transform_1, window_bounds = array<i64: 288, 128>}, {pipeline_mode = #tpu.pipeline_mode<synchronous>, transform_indices = @transform_2, window_bounds = array<i64: 1, 128>}, {transform_indices = @transform_3, window_bounds = array<i64: 128, 128>}, {pipeline_mode = #tpu.pipeline_mode<synchronous>, transform_indices = @transform_4, window_bounds = array<i64: 2, 128>}]} {
    %c0 = arith.constant 0 : index
    %c0_0 = arith.constant 0 : index
    %0 = vector.load %arg1[%c0, %c0_0] : memref<128x288xbf16, #tpu.memory_space<vmem>>, vector<128x288xbf16>
    %c0_1 = arith.constant 0 : index
    %c0_2 = arith.constant 0 : index
    %1 = vector.load %arg2[%c0_1, %c0_2] : memref<288x128xbf16, #tpu.memory_space<vmem>>, vector<288x128xbf16>
    %cst = arith.constant dense<0.000000e+00> : vector<128x128xf32>
    %2 = tpu.matmul %0, %1, %cst {dimension_numbers = #tpu.dot_dimension_numbers<[1], [0], [0], [1], [0, 0, 1, 1], [], []>} : vector<128x288xbf16>, vector<288x128xbf16>, vector<128x128xf32> -> vector<128x128xf32>
    %c0_3 = arith.constant 0 : index
    %c0_4 = arith.constant 0 : index
    %3 = vector.load %arg3[%c0_3, %c0_4] : memref<1x128xf32, #tpu.memory_space<vmem>>, vector<1x128xf32>
    %4 = vector.broadcast %3 : vector<1x128xf32> to vector<128x128xf32>
    %5 = arith.addf %2, %4 : vector<128x128xf32>
    %c0_5 = arith.constant 0 : index
    %c0_6 = arith.constant 0 : index
    %6 = vector.load %arg4[%c0_5, %c0_6] : memref<128x128xf32, #tpu.memory_space<vmem>>, vector<128x128xf32>
    tpu.vector_store %arg4[%c0_5, %c0_6], %5 {strides = array<i32>} : memref<128x128xf32, #tpu.memory_space<vmem>>, vector<128x128xf32>,
    %cst_7 = arith.constant dense<0.000000e+00> : vector<128xf32>
    %7 = vector.multi_reduction <add>, %5, %cst_7 [0] : vector<128x128xf32> to vector<128xf32>
    %8 = vector.shape_cast %7 : vector<128xf32> to vector<1x128xf32>
    %9 = arith.mulf %5, %5 : vector<128x128xf32>
    %cst_8 = arith.constant dense<0.000000e+00> : vector<128xf32>
    %10 = vector.multi_reduction <add>, %9, %cst_8 [0] : vector<128x128xf32> to vector<128xf32>
    %11 = vector.shape_cast %10 : vector<128xf32> to vector<1x128xf32>
    %12 = tpu.concatenate %8, %11 in 0 : vector<1x128xf32>, vector<1x128xf32> -> vector<2x128xf32>
    %c0_i32 = arith.constant 0 : i32
    %13 = arith.cmpi eq, %arg0, %c0_i32 : i32
    %14 = arith.extui %13 : i1 to i32
    %c0_i32_9 = arith.constant 0 : i32
    %15 = arith.cmpi ne, %14, %c0_i32_9 : i32
    scf.if %15 {
      %cst_14 = arith.constant 0.000000e+00 : f32
      %19 = vector.broadcast %cst_14 : f32 to vector<2x128xf32>
      %c0_15 = arith.constant 0 : index
      %c0_16 = arith.constant 0 : index
      %20 = vector.load %arg5[%c0_15, %c0_16] : memref<2x128xf32, #tpu.memory_space<vmem>>, vector<2x128xf32>
      tpu.vector_store %arg5[%c0_15, %c0_16], %19 {strides = array<i32>} : memref<2x128xf32, #tpu.memory_space<vmem>>, vector<2x128xf32>,
    } else {
    }
    %c0_10 = arith.constant 0 : index
    %c0_11 = arith.constant 0 : index
    %16 = vector.load %arg5[%c0_10, %c0_11] : memref<2x128xf32, #tpu.memory_space<vmem>>, vector<2x128xf32>
    %17 = arith.addf %16, %12 : vector<2x128xf32>
    %c0_12 = arith.constant 0 : index
    %c0_13 = arith.constant 0 : index
    %18 = vector.load %arg5[%c0_12, %c0_13] : memref<2x128xf32, #tpu.memory_space<vmem>>, vector<2x128xf32>
    tpu.vector_store %arg5[%c0_12, %c0_13], %17 {strides = array<i32>} : memref<2x128xf32, #tpu.memory_space<vmem>>, vector<2x128xf32>,
    return
  }
  func.func @transform_0(%arg0: i32) -> (i32, i32) {
    %c0_i32 = arith.constant 0 : i32
    %c0_i32_0 = arith.constant 0 : i32
    return %arg0, %c0_i32 : i32, i32
  }
  func.func @transform_1(%arg0: i32) -> (i32, i32) {
    %c0_i32 = arith.constant 0 : i32
    %c0_i32_0 = arith.constant 0 : i32
    %c0_i32_1 = arith.constant 0 : i32
    return %c0_i32, %c0_i32_0 : i32, i32
  }
  func.func @transform_2(%arg0: i32) -> (i32, i32) {
    %c0_i32 = arith.constant 0 : i32
    %c0_i32_0 = arith.constant 0 : i32
    %c0_i32_1 = arith.constant 0 : i32
    return %c0_i32, %c0_i32_0 : i32, i32
  }
  func.func @transform_3(%arg0: i32) -> (i32, i32) {
    %c0_i32 = arith.constant 0 : i32
    %c0_i32_0 = arith.constant 0 : i32
    return %arg0, %c0_i32 : i32, i32
  }
  func.func @transform_4(%arg0: i32) -> (i32, i32) {
    %c0_i32 = arith.constant 0 : i32
    %c0_i32_0 = arith.constant 0 : i32
    %c0_i32_1 = arith.constant 0 : i32
    return %c0_i32, %c0_i32_0 : i32, i32
  }
}

module attributes {stable_mosaic.version = 11 : i64} {
  func.func @_affine_act_kernel(%arg0: i32, %arg1: memref<128x128xf32, #tpu.memory_space<vmem>>, %arg2: memref<1x128xf32, #tpu.memory_space<vmem>>, %arg3: memref<1x128xf32, #tpu.memory_space<vmem>>, %arg4: memref<128x128xbf16, #tpu.memory_space<vmem>>) attributes {dimension_semantics = [#tpu.dimension_semantics<parallel>], iteration_bounds = array<i64: 1>, scalar_prefetch = 0 : i64, scratch_operands = 0 : i64, tpu.core_type = #tpu.core_type<tc>, window_params = [{transform_indices = @transform_0, window_bounds = array<i64: 128, 128>}, {pipeline_mode = #tpu.pipeline_mode<synchronous>, transform_indices = @transform_1, window_bounds = array<i64: 1, 128>}, {pipeline_mode = #tpu.pipeline_mode<synchronous>, transform_indices = @transform_2, window_bounds = array<i64: 1, 128>}, {transform_indices = @transform_3, window_bounds = array<i64: 128, 128>}]} {
    %c0 = arith.constant 0 : index
    %c0_0 = arith.constant 0 : index
    %0 = vector.load %arg1[%c0, %c0_0] : memref<128x128xf32, #tpu.memory_space<vmem>>, vector<128x128xf32>
    %c0_1 = arith.constant 0 : index
    %c0_2 = arith.constant 0 : index
    %1 = vector.load %arg2[%c0_1, %c0_2] : memref<1x128xf32, #tpu.memory_space<vmem>>, vector<1x128xf32>
    %2 = vector.broadcast %1 : vector<1x128xf32> to vector<128x128xf32>
    %3 = arith.mulf %0, %2 : vector<128x128xf32>
    %c0_3 = arith.constant 0 : index
    %c0_4 = arith.constant 0 : index
    %4 = vector.load %arg3[%c0_3, %c0_4] : memref<1x128xf32, #tpu.memory_space<vmem>>, vector<1x128xf32>
    %5 = vector.broadcast %4 : vector<1x128xf32> to vector<128x128xf32>
    %6 = arith.addf %3, %5 : vector<128x128xf32>
    %cst = arith.constant 0.000000e+00 : f32
    %7 = vector.broadcast %cst : f32 to vector<128x128xf32>
    %8 = arith.maximumf %6, %7 : vector<128x128xf32>
    %9 = arith.truncf %8 : vector<128x128xf32> to vector<128x128xbf16>
    %c0_5 = arith.constant 0 : index
    %c0_6 = arith.constant 0 : index
    %10 = vector.load %arg4[%c0_5, %c0_6] : memref<128x128xbf16, #tpu.memory_space<vmem>>, vector<128x128xbf16>
    tpu.vector_store %arg4[%c0_5, %c0_6], %9 {strides = array<i32>} : memref<128x128xbf16, #tpu.memory_space<vmem>>, vector<128x128xbf16>,
    return
  }
  func.func @transform_0(%arg0: i32) -> (i32, i32) {
    %c0_i32 = arith.constant 0 : i32
    %c0_i32_0 = arith.constant 0 : i32
    return %arg0, %c0_i32 : i32, i32
  }
  func.func @transform_1(%arg0: i32) -> (i32, i32) {
    %c0_i32 = arith.constant 0 : i32
    %c0_i32_0 = arith.constant 0 : i32
    %c0_i32_1 = arith.constant 0 : i32
    return %c0_i32, %c0_i32_0 : i32, i32
  }
  func.func @transform_2(%arg0: i32) -> (i32, i32) {
    %c0_i32 = arith.constant 0 : i32
    %c0_i32_0 = arith.constant 0 : i32
    %c0_i32_1 = arith.constant 0 : i32
    return %c0_i32, %c0_i32_0 : i32, i32
  }
  func.func @transform_3(%arg0: i32) -> (i32, i32) {
    %c0_i32 = arith.constant 0 : i32
    %c0_i32_0 = arith.constant 0 : i32
    return %arg0, %c0_i32 : i32, i32
  }
}

module attributes {stable_mosaic.version = 11 : i64} {
  func.func @_affine_act_kernel(%arg0: i32, %arg1: memref<32x128xf32, #tpu.memory_space<vmem>>, %arg2: memref<1x128xf32, #tpu.memory_space<vmem>>, %arg3: memref<1x128xf32, #tpu.memory_space<vmem>>, %arg4: memref<32x128xbf16, #tpu.memory_space<vmem>>) attributes {dimension_semantics = [#tpu.dimension_semantics<parallel>], iteration_bounds = array<i64: 1>, scalar_prefetch = 0 : i64, scratch_operands = 0 : i64, tpu.core_type = #tpu.core_type<tc>, window_params = [{transform_indices = @transform_0, window_bounds = array<i64: 32, 128>}, {pipeline_mode = #tpu.pipeline_mode<synchronous>, transform_indices = @transform_1, window_bounds = array<i64: 1, 128>}, {pipeline_mode = #tpu.pipeline_mode<synchronous>, transform_indices = @transform_2, window_bounds = array<i64: 1, 128>}, {transform_indices = @transform_3, window_bounds = array<i64: 32, 128>}]} {
    %c0 = arith.constant 0 : index
    %c0_0 = arith.constant 0 : index
    %0 = vector.load %arg1[%c0, %c0_0] : memref<32x128xf32, #tpu.memory_space<vmem>>, vector<32x128xf32>
    %c0_1 = arith.constant 0 : index
    %c0_2 = arith.constant 0 : index
    %1 = vector.load %arg2[%c0_1, %c0_2] : memref<1x128xf32, #tpu.memory_space<vmem>>, vector<1x128xf32>
    %2 = vector.broadcast %1 : vector<1x128xf32> to vector<32x128xf32>
    %3 = arith.mulf %0, %2 : vector<32x128xf32>
    %c0_3 = arith.constant 0 : index
    %c0_4 = arith.constant 0 : index
    %4 = vector.load %arg3[%c0_3, %c0_4] : memref<1x128xf32, #tpu.memory_space<vmem>>, vector<1x128xf32>
    %5 = vector.broadcast %4 : vector<1x128xf32> to vector<32x128xf32>
    %6 = arith.addf %3, %5 : vector<32x128xf32>
    %cst = arith.constant 0.000000e+00 : f32
    %7 = vector.broadcast %cst : f32 to vector<32x128xf32>
    %8 = arith.maximumf %6, %7 : vector<32x128xf32>
    %9 = arith.truncf %8 : vector<32x128xf32> to vector<32x128xbf16>
    %c0_5 = arith.constant 0 : index
    %c0_6 = arith.constant 0 : index
    %10 = vector.load %arg4[%c0_5, %c0_6] : memref<32x128xbf16, #tpu.memory_space<vmem>>, vector<32x128xbf16>
    tpu.vector_store %arg4[%c0_5, %c0_6], %9 {strides = array<i32>} : memref<32x128xbf16, #tpu.memory_space<vmem>>, vector<32x128xbf16>,
    return
  }
  func.func @transform_0(%arg0: i32) -> (i32, i32) {
    %c0_i32 = arith.constant 0 : i32
    %c0_i32_0 = arith.constant 0 : i32
    return %arg0, %c0_i32 : i32, i32
  }
  func.func @transform_1(%arg0: i32) -> (i32, i32) {
    %c0_i32 = arith.constant 0 : i32
    %c0_i32_0 = arith.constant 0 : i32
    %c0_i32_1 = arith.constant 0 : i32
    return %c0_i32, %c0_i32_0 : i32, i32
  }
  func.func @transform_2(%arg0: i32) -> (i32, i32) {
    %c0_i32 = arith.constant 0 : i32
    %c0_i32_0 = arith.constant 0 : i32
    %c0_i32_1 = arith.constant 0 : i32
    return %c0_i32, %c0_i32_0 : i32, i32
  }
  func.func @transform_3(%arg0: i32) -> (i32, i32) {
    %c0_i32 = arith.constant 0 : i32
    %c0_i32_0 = arith.constant 0 : i32
    return %arg0, %c0_i32 : i32, i32
  }
}

module attributes {stable_mosaic.version = 11 : i64} {
  func.func @_mm_bias_stats_kernel(%arg0: i32, %arg1: memref<32x576xbf16, #tpu.memory_space<vmem>>, %arg2: memref<576x128xbf16, #tpu.memory_space<vmem>>, %arg3: memref<1x128xf32, #tpu.memory_space<vmem>>, %arg4: memref<32x128xf32, #tpu.memory_space<vmem>>, %arg5: memref<2x128xf32, #tpu.memory_space<vmem>>) attributes {dimension_semantics = [#tpu.dimension_semantics<arbitrary>], iteration_bounds = array<i64: 1>, scalar_prefetch = 0 : i64, scratch_operands = 0 : i64, tpu.core_type = #tpu.core_type<tc>, window_params = [{transform_indices = @transform_0, window_bounds = array<i64: 32, 576>}, {pipeline_mode = #tpu.pipeline_mode<synchronous>, transform_indices = @transform_1, window_bounds = array<i64: 576, 128>}, {pipeline_mode = #tpu.pipeline_mode<synchronous>, transform_indices = @transform_2, window_bounds = array<i64: 1, 128>}, {transform_indices = @transform_3, window_bounds = array<i64: 32, 128>}, {pipeline_mode = #tpu.pipeline_mode<synchronous>, transform_indices = @transform_4, window_bounds = array<i64: 2, 128>}]} {
    %c0 = arith.constant 0 : index
    %c0_0 = arith.constant 0 : index
    %0 = vector.load %arg1[%c0, %c0_0] : memref<32x576xbf16, #tpu.memory_space<vmem>>, vector<32x576xbf16>
    %c0_1 = arith.constant 0 : index
    %c0_2 = arith.constant 0 : index
    %1 = vector.load %arg2[%c0_1, %c0_2] : memref<576x128xbf16, #tpu.memory_space<vmem>>, vector<576x128xbf16>
    %cst = arith.constant dense<0.000000e+00> : vector<32x128xf32>
    %2 = tpu.matmul %0, %1, %cst {dimension_numbers = #tpu.dot_dimension_numbers<[1], [0], [0], [1], [0, 0, 1, 1], [], []>} : vector<32x576xbf16>, vector<576x128xbf16>, vector<32x128xf32> -> vector<32x128xf32>
    %c0_3 = arith.constant 0 : index
    %c0_4 = arith.constant 0 : index
    %3 = vector.load %arg3[%c0_3, %c0_4] : memref<1x128xf32, #tpu.memory_space<vmem>>, vector<1x128xf32>
    %4 = vector.broadcast %3 : vector<1x128xf32> to vector<32x128xf32>
    %5 = arith.addf %2, %4 : vector<32x128xf32>
    %c0_5 = arith.constant 0 : index
    %c0_6 = arith.constant 0 : index
    %6 = vector.load %arg4[%c0_5, %c0_6] : memref<32x128xf32, #tpu.memory_space<vmem>>, vector<32x128xf32>
    tpu.vector_store %arg4[%c0_5, %c0_6], %5 {strides = array<i32>} : memref<32x128xf32, #tpu.memory_space<vmem>>, vector<32x128xf32>,
    %cst_7 = arith.constant dense<0.000000e+00> : vector<128xf32>
    %7 = vector.multi_reduction <add>, %5, %cst_7 [0] : vector<32x128xf32> to vector<128xf32>
    %8 = vector.shape_cast %7 : vector<128xf32> to vector<1x128xf32>
    %9 = arith.mulf %5, %5 : vector<32x128xf32>
    %cst_8 = arith.constant dense<0.000000e+00> : vector<128xf32>
    %10 = vector.multi_reduction <add>, %9, %cst_8 [0] : vector<32x128xf32> to vector<128xf32>
    %11 = vector.shape_cast %10 : vector<128xf32> to vector<1x128xf32>
    %12 = tpu.concatenate %8, %11 in 0 : vector<1x128xf32>, vector<1x128xf32> -> vector<2x128xf32>
    %c0_i32 = arith.constant 0 : i32
    %13 = arith.cmpi eq, %arg0, %c0_i32 : i32
    %14 = arith.extui %13 : i1 to i32
    %c0_i32_9 = arith.constant 0 : i32
    %15 = arith.cmpi ne, %14, %c0_i32_9 : i32
    scf.if %15 {
      %cst_14 = arith.constant 0.000000e+00 : f32
      %19 = vector.broadcast %cst_14 : f32 to vector<2x128xf32>
      %c0_15 = arith.constant 0 : index
      %c0_16 = arith.constant 0 : index
      %20 = vector.load %arg5[%c0_15, %c0_16] : memref<2x128xf32, #tpu.memory_space<vmem>>, vector<2x128xf32>
      tpu.vector_store %arg5[%c0_15, %c0_16], %19 {strides = array<i32>} : memref<2x128xf32, #tpu.memory_space<vmem>>, vector<2x128xf32>,
    } else {
    }
    %c0_10 = arith.constant 0 : index
    %c0_11 = arith.constant 0 : index
    %16 = vector.load %arg5[%c0_10, %c0_11] : memref<2x128xf32, #tpu.memory_space<vmem>>, vector<2x128xf32>
    %17 = arith.addf %16, %12 : vector<2x128xf32>
    %c0_12 = arith.constant 0 : index
    %c0_13 = arith.constant 0 : index
    %18 = vector.load %arg5[%c0_12, %c0_13] : memref<2x128xf32, #tpu.memory_space<vmem>>, vector<2x128xf32>
    tpu.vector_store %arg5[%c0_12, %c0_13], %17 {strides = array<i32>} : memref<2x128xf32, #tpu.memory_space<vmem>>, vector<2x128xf32>,
    return
  }
  func.func @transform_0(%arg0: i32) -> (i32, i32) {
    %c0_i32 = arith.constant 0 : i32
    %c0_i32_0 = arith.constant 0 : i32
    return %arg0, %c0_i32 : i32, i32
  }
  func.func @transform_1(%arg0: i32) -> (i32, i32) {
    %c0_i32 = arith.constant 0 : i32
    %c0_i32_0 = arith.constant 0 : i32
    %c0_i32_1 = arith.constant 0 : i32
    return %c0_i32, %c0_i32_0 : i32, i32
  }
  func.func @transform_2(%arg0: i32) -> (i32, i32) {
    %c0_i32 = arith.constant 0 : i32
    %c0_i32_0 = arith.constant 0 : i32
    %c0_i32_1 = arith.constant 0 : i32
    return %c0_i32, %c0_i32_0 : i32, i32
  }
  func.func @transform_3(%arg0: i32) -> (i32, i32) {
    %c0_i32 = arith.constant 0 : i32
    %c0_i32_0 = arith.constant 0 : i32
    return %arg0, %c0_i32 : i32, i32
  }
  func.func @transform_4(%arg0: i32) -> (i32, i32) {
    %c0_i32 = arith.constant 0 : i32
    %c0_i32_0 = arith.constant 0 : i32
    %c0_i32_1 = arith.constant 0 : i32
    return %c0_i32, %c0_i32_0 : i32, i32
  }
}

module attributes {stable_mosaic.version = 11 : i64} {
  func.func @_bottleneck_kernel(%arg0: i32, %arg1: memref<2x2048xbf16, #tpu.memory_space<vmem>>, %arg2: memref<2048x128xbf16, #tpu.memory_space<vmem>>, %arg3: memref<1x128xf32, #tpu.memory_space<vmem>>, %arg4: memref<2x64xf32, #tpu.memory_space<vmem>>, %arg5: memref<2x128xf32, #tpu.memory_space<vmem>>, %arg6: memref<2x64xf32, #tpu.memory_space<vmem>>) attributes {dimension_semantics = [#tpu.dimension_semantics<arbitrary>], iteration_bounds = array<i64: 1>, scalar_prefetch = 0 : i64, scratch_operands = 0 : i64, tpu.core_type = #tpu.core_type<tc>, window_params = [{pipeline_mode = #tpu.pipeline_mode<synchronous>, transform_indices = @transform_0, window_bounds = array<i64: 2, 2048>}, {pipeline_mode = #tpu.pipeline_mode<synchronous>, transform_indices = @transform_1, window_bounds = array<i64: 2048, 128>}, {pipeline_mode = #tpu.pipeline_mode<synchronous>, transform_indices = @transform_2, window_bounds = array<i64: 1, 128>}, {pipeline_mode = #tpu.pipeline_mode<synchronous>, transform_indices = @transform_3, window_bounds = array<i64: 2, 64>}, {pipeline_mode = #tpu.pipeline_mode<synchronous>, transform_indices = @transform_4, window_bounds = array<i64: 2, 128>}, {pipeline_mode = #tpu.pipeline_mode<synchronous>, transform_indices = @transform_5, window_bounds = array<i64: 2, 64>}]} {
    %c0 = arith.constant 0 : index
    %c0_0 = arith.constant 0 : index
    %0 = vector.load %arg1[%c0, %c0_0] : memref<2x2048xbf16, #tpu.memory_space<vmem>>, vector<2x2048xbf16>
    %c0_1 = arith.constant 0 : index
    %c0_2 = arith.constant 0 : index
    %1 = vector.load %arg2[%c0_1, %c0_2] : memref<2048x128xbf16, #tpu.memory_space<vmem>>, vector<2048x128xbf16>
    %cst = arith.constant dense<0.000000e+00> : vector<2x128xf32>
    %2 = tpu.matmul %0, %1, %cst {dimension_numbers = #tpu.dot_dimension_numbers<[1], [0], [0], [1], [0, 0, 1, 1], [], []>} : vector<2x2048xbf16>, vector<2048x128xbf16>, vector<2x128xf32> -> vector<2x128xf32>
    %c0_3 = arith.constant 0 : index
    %c0_4 = arith.constant 0 : index
    %3 = vector.load %arg3[%c0_3, %c0_4] : memref<1x128xf32, #tpu.memory_space<vmem>>, vector<1x128xf32>
    %4 = vector.broadcast %3 : vector<1x128xf32> to vector<2x128xf32>
    %5 = arith.addf %2, %4 : vector<2x128xf32>
    %6 = vector.extract_strided_slice %5 {offsets = [0, 0], sizes = [2, 64], strides = [1, 1]} : vector<2x128xf32> to vector<2x64xf32>
    %7 = vector.extract_strided_slice %5 {offsets = [0, 64], sizes = [2, 64], strides = [1, 1]} : vector<2x128xf32> to vector<2x64xf32>
    %cst_5 = arith.constant -4.000000e+00 : f32
    %cst_6 = arith.constant 4.000000e+00 : f32
    %8 = vector.broadcast %cst_5 : f32 to vector<2x64xf32>
    %9 = arith.maximumf %8, %7 : vector<2x64xf32>
    %10 = vector.broadcast %cst_6 : f32 to vector<2x64xf32>
    %11 = arith.minimumf %10, %9 : vector<2x64xf32>
    %c0_7 = arith.constant 0 : index
    %c0_8 = arith.constant 0 : index
    %12 = vector.load %arg5[%c0_7, %c0_8] : memref<2x128xf32, #tpu.memory_space<vmem>>, vector<2x64xf32>
    tpu.vector_store %arg5[%c0_7, %c0_8], %6 {strides = array<i32>} : memref<2x128xf32, #tpu.memory_space<vmem>>, vector<2x64xf32>,
    %c0_9 = arith.constant 0 : index
    %c64 = arith.constant 64 : index
    %13 = vector.load %arg5[%c0_9, %c64] : memref<2x128xf32, #tpu.memory_space<vmem>>, vector<2x64xf32>
    tpu.vector_store %arg5[%c0_9, %c64], %11 {strides = array<i32>} : memref<2x128xf32, #tpu.memory_space<vmem>>, vector<2x64xf32>,
    %c0_10 = arith.constant 0 : index
    %c0_11 = arith.constant 0 : index
    %14 = vector.load %arg4[%c0_10, %c0_11] : memref<2x64xf32, #tpu.memory_space<vmem>>, vector<2x64xf32>
    %cst_12 = arith.constant 5.000000e-01 : f32
    %15 = vector.broadcast %cst_12 : f32 to vector<2x64xf32>
    %16 = arith.mulf %15, %11 : vector<2x64xf32>
    %17 = math.exp %16 : vector<2x64xf32>
    %18 = arith.mulf %14, %17 : vector<2x64xf32>
    %19 = arith.addf %6, %18 : vector<2x64xf32>
    %c0_13 = arith.constant 0 : index
    %c0_14 = arith.constant 0 : index
    %20 = vector.load %arg6[%c0_13, %c0_14] : memref<2x64xf32, #tpu.memory_space<vmem>>, vector<2x64xf32>
    tpu.vector_store %arg6[%c0_13, %c0_14], %19 {strides = array<i32>} : memref<2x64xf32, #tpu.memory_space<vmem>>, vector<2x64xf32>,
    return
  }
  func.func @transform_0(%arg0: i32) -> (i32, i32) {
    %c0_i32 = arith.constant 0 : i32
    %c0_i32_0 = arith.constant 0 : i32
    %c0_i32_1 = arith.constant 0 : i32
    return %c0_i32, %c0_i32_0 : i32, i32
  }
  func.func @transform_1(%arg0: i32) -> (i32, i32) {
    %c0_i32 = arith.constant 0 : i32
    %c0_i32_0 = arith.constant 0 : i32
    %c0_i32_1 = arith.constant 0 : i32
    return %c0_i32, %c0_i32_0 : i32, i32
  }
  func.func @transform_2(%arg0: i32) -> (i32, i32) {
    %c0_i32 = arith.constant 0 : i32
    %c0_i32_0 = arith.constant 0 : i32
    %c0_i32_1 = arith.constant 0 : i32
    return %c0_i32, %c0_i32_0 : i32, i32
  }
  func.func @transform_3(%arg0: i32) -> (i32, i32) {
    %c0_i32 = arith.constant 0 : i32
    %c0_i32_0 = arith.constant 0 : i32
    %c0_i32_1 = arith.constant 0 : i32
    return %c0_i32, %c0_i32_0 : i32, i32
  }
  func.func @transform_4(%arg0: i32) -> (i32, i32) {
    %c0_i32 = arith.constant 0 : i32
    %c0_i32_0 = arith.constant 0 : i32
    %c0_i32_1 = arith.constant 0 : i32
    return %c0_i32, %c0_i32_0 : i32, i32
  }
  func.func @transform_5(%arg0: i32) -> (i32, i32) {
    %c0_i32 = arith.constant 0 : i32
    %c0_i32_0 = arith.constant 0 : i32
    %c0_i32_1 = arith.constant 0 : i32
    return %c0_i32, %c0_i32_0 : i32, i32
  }
}

module attributes {stable_mosaic.version = 11 : i64} {
  func.func @_mm_bias_act_kernel(%arg0: i32, %arg1: memref<2x64xbf16, #tpu.memory_space<vmem>>, %arg2: memref<64x2048xbf16, #tpu.memory_space<vmem>>, %arg3: memref<1x2048xf32, #tpu.memory_space<vmem>>, %arg4: memref<2x2048xbf16, #tpu.memory_space<vmem>>) attributes {dimension_semantics = [#tpu.dimension_semantics<parallel>], iteration_bounds = array<i64: 1>, scalar_prefetch = 0 : i64, scratch_operands = 0 : i64, tpu.core_type = #tpu.core_type<tc>, window_params = [{transform_indices = @transform_0, window_bounds = array<i64: 2, 64>}, {pipeline_mode = #tpu.pipeline_mode<synchronous>, transform_indices = @transform_1, window_bounds = array<i64: 64, 2048>}, {pipeline_mode = #tpu.pipeline_mode<synchronous>, transform_indices = @transform_2, window_bounds = array<i64: 1, 2048>}, {transform_indices = @transform_3, window_bounds = array<i64: 2, 2048>}]} {
    %c0 = arith.constant 0 : index
    %c0_0 = arith.constant 0 : index
    %0 = vector.load %arg1[%c0, %c0_0] : memref<2x64xbf16, #tpu.memory_space<vmem>>, vector<2x64xbf16>
    %c0_1 = arith.constant 0 : index
    %c0_2 = arith.constant 0 : index
    %1 = vector.load %arg2[%c0_1, %c0_2] : memref<64x2048xbf16, #tpu.memory_space<vmem>>, vector<64x2048xbf16>
    %cst = arith.constant dense<0.000000e+00> : vector<2x2048xf32>
    %2 = tpu.matmul %0, %1, %cst {dimension_numbers = #tpu.dot_dimension_numbers<[1], [0], [0], [1], [0, 0, 1, 1], [], []>} : vector<2x64xbf16>, vector<64x2048xbf16>, vector<2x2048xf32> -> vector<2x2048xf32>
    %c0_3 = arith.constant 0 : index
    %c0_4 = arith.constant 0 : index
    %3 = vector.load %arg3[%c0_3, %c0_4] : memref<1x2048xf32, #tpu.memory_space<vmem>>, vector<1x2048xf32>
    %4 = vector.broadcast %3 : vector<1x2048xf32> to vector<2x2048xf32>
    %5 = arith.addf %2, %4 : vector<2x2048xf32>
    %cst_5 = arith.constant 0.000000e+00 : f32
    %6 = vector.broadcast %cst_5 : f32 to vector<2x2048xf32>
    %7 = arith.maximumf %5, %6 : vector<2x2048xf32>
    %8 = arith.truncf %7 : vector<2x2048xf32> to vector<2x2048xbf16>
    %c0_6 = arith.constant 0 : index
    %c0_7 = arith.constant 0 : index
    %9 = vector.load %arg4[%c0_6, %c0_7] : memref<2x2048xbf16, #tpu.memory_space<vmem>>, vector<2x2048xbf16>
    tpu.vector_store %arg4[%c0_6, %c0_7], %8 {strides = array<i32>} : memref<2x2048xbf16, #tpu.memory_space<vmem>>, vector<2x2048xbf16>,
    return
  }
  func.func @transform_0(%arg0: i32) -> (i32, i32) {
    %c0_i32 = arith.constant 0 : i32
    %c0_i32_0 = arith.constant 0 : i32
    return %arg0, %c0_i32 : i32, i32
  }
  func.func @transform_1(%arg0: i32) -> (i32, i32) {
    %c0_i32 = arith.constant 0 : i32
    %c0_i32_0 = arith.constant 0 : i32
    %c0_i32_1 = arith.constant 0 : i32
    return %c0_i32, %c0_i32_0 : i32, i32
  }
  func.func @transform_2(%arg0: i32) -> (i32, i32) {
    %c0_i32 = arith.constant 0 : i32
    %c0_i32_0 = arith.constant 0 : i32
    %c0_i32_1 = arith.constant 0 : i32
    return %c0_i32, %c0_i32_0 : i32, i32
  }
  func.func @transform_3(%arg0: i32) -> (i32, i32) {
    %c0_i32 = arith.constant 0 : i32
    %c0_i32_0 = arith.constant 0 : i32
    return %arg0, %c0_i32 : i32, i32
  }
}

module attributes {stable_mosaic.version = 11 : i64} {
  func.func @_mm_bias_stats_kernel(%arg0: i32, %arg1: memref<32x512xbf16, #tpu.memory_space<vmem>>, %arg2: memref<512x256xbf16, #tpu.memory_space<vmem>>, %arg3: memref<1x256xf32, #tpu.memory_space<vmem>>, %arg4: memref<32x256xf32, #tpu.memory_space<vmem>>, %arg5: memref<2x256xf32, #tpu.memory_space<vmem>>) attributes {dimension_semantics = [#tpu.dimension_semantics<arbitrary>], iteration_bounds = array<i64: 1>, scalar_prefetch = 0 : i64, scratch_operands = 0 : i64, tpu.core_type = #tpu.core_type<tc>, window_params = [{transform_indices = @transform_0, window_bounds = array<i64: 32, 512>}, {pipeline_mode = #tpu.pipeline_mode<synchronous>, transform_indices = @transform_1, window_bounds = array<i64: 512, 256>}, {pipeline_mode = #tpu.pipeline_mode<synchronous>, transform_indices = @transform_2, window_bounds = array<i64: 1, 256>}, {transform_indices = @transform_3, window_bounds = array<i64: 32, 256>}, {pipeline_mode = #tpu.pipeline_mode<synchronous>, transform_indices = @transform_4, window_bounds = array<i64: 2, 256>}]} {
    %c0 = arith.constant 0 : index
    %c0_0 = arith.constant 0 : index
    %0 = vector.load %arg1[%c0, %c0_0] : memref<32x512xbf16, #tpu.memory_space<vmem>>, vector<32x512xbf16>
    %c0_1 = arith.constant 0 : index
    %c0_2 = arith.constant 0 : index
    %1 = vector.load %arg2[%c0_1, %c0_2] : memref<512x256xbf16, #tpu.memory_space<vmem>>, vector<512x256xbf16>
    %cst = arith.constant dense<0.000000e+00> : vector<32x256xf32>
    %2 = tpu.matmul %0, %1, %cst {dimension_numbers = #tpu.dot_dimension_numbers<[1], [0], [0], [1], [0, 0, 1, 1], [], []>} : vector<32x512xbf16>, vector<512x256xbf16>, vector<32x256xf32> -> vector<32x256xf32>
    %c0_3 = arith.constant 0 : index
    %c0_4 = arith.constant 0 : index
    %3 = vector.load %arg3[%c0_3, %c0_4] : memref<1x256xf32, #tpu.memory_space<vmem>>, vector<1x256xf32>
    %4 = vector.broadcast %3 : vector<1x256xf32> to vector<32x256xf32>
    %5 = arith.addf %2, %4 : vector<32x256xf32>
    %c0_5 = arith.constant 0 : index
    %c0_6 = arith.constant 0 : index
    %6 = vector.load %arg4[%c0_5, %c0_6] : memref<32x256xf32, #tpu.memory_space<vmem>>, vector<32x256xf32>
    tpu.vector_store %arg4[%c0_5, %c0_6], %5 {strides = array<i32>} : memref<32x256xf32, #tpu.memory_space<vmem>>, vector<32x256xf32>,
    %cst_7 = arith.constant dense<0.000000e+00> : vector<256xf32>
    %7 = vector.multi_reduction <add>, %5, %cst_7 [0] : vector<32x256xf32> to vector<256xf32>
    %8 = vector.shape_cast %7 : vector<256xf32> to vector<1x256xf32>
    %9 = arith.mulf %5, %5 : vector<32x256xf32>
    %cst_8 = arith.constant dense<0.000000e+00> : vector<256xf32>
    %10 = vector.multi_reduction <add>, %9, %cst_8 [0] : vector<32x256xf32> to vector<256xf32>
    %11 = vector.shape_cast %10 : vector<256xf32> to vector<1x256xf32>
    %12 = tpu.concatenate %8, %11 in 0 : vector<1x256xf32>, vector<1x256xf32> -> vector<2x256xf32>
    %c0_i32 = arith.constant 0 : i32
    %13 = arith.cmpi eq, %arg0, %c0_i32 : i32
    %14 = arith.extui %13 : i1 to i32
    %c0_i32_9 = arith.constant 0 : i32
    %15 = arith.cmpi ne, %14, %c0_i32_9 : i32
    scf.if %15 {
      %cst_14 = arith.constant 0.000000e+00 : f32
      %19 = vector.broadcast %cst_14 : f32 to vector<2x256xf32>
      %c0_15 = arith.constant 0 : index
      %c0_16 = arith.constant 0 : index
      %20 = vector.load %arg5[%c0_15, %c0_16] : memref<2x256xf32, #tpu.memory_space<vmem>>, vector<2x256xf32>
      tpu.vector_store %arg5[%c0_15, %c0_16], %19 {strides = array<i32>} : memref<2x256xf32, #tpu.memory_space<vmem>>, vector<2x256xf32>,
    } else {
    }
    %c0_10 = arith.constant 0 : index
    %c0_11 = arith.constant 0 : index
    %16 = vector.load %arg5[%c0_10, %c0_11] : memref<2x256xf32, #tpu.memory_space<vmem>>, vector<2x256xf32>
    %17 = arith.addf %16, %12 : vector<2x256xf32>
    %c0_12 = arith.constant 0 : index
    %c0_13 = arith.constant 0 : index
    %18 = vector.load %arg5[%c0_12, %c0_13] : memref<2x256xf32, #tpu.memory_space<vmem>>, vector<2x256xf32>
    tpu.vector_store %arg5[%c0_12, %c0_13], %17 {strides = array<i32>} : memref<2x256xf32, #tpu.memory_space<vmem>>, vector<2x256xf32>,
    return
  }
  func.func @transform_0(%arg0: i32) -> (i32, i32) {
    %c0_i32 = arith.constant 0 : i32
    %c0_i32_0 = arith.constant 0 : i32
    return %arg0, %c0_i32 : i32, i32
  }
  func.func @transform_1(%arg0: i32) -> (i32, i32) {
    %c0_i32 = arith.constant 0 : i32
    %c0_i32_0 = arith.constant 0 : i32
    %c0_i32_1 = arith.constant 0 : i32
    return %c0_i32, %c0_i32_0 : i32, i32
  }
  func.func @transform_2(%arg0: i32) -> (i32, i32) {
    %c0_i32 = arith.constant 0 : i32
    %c0_i32_0 = arith.constant 0 : i32
    %c0_i32_1 = arith.constant 0 : i32
    return %c0_i32, %c0_i32_0 : i32, i32
  }
  func.func @transform_3(%arg0: i32) -> (i32, i32) {
    %c0_i32 = arith.constant 0 : i32
    %c0_i32_0 = arith.constant 0 : i32
    return %arg0, %c0_i32 : i32, i32
  }
  func.func @transform_4(%arg0: i32) -> (i32, i32) {
    %c0_i32 = arith.constant 0 : i32
    %c0_i32_0 = arith.constant 0 : i32
    %c0_i32_1 = arith.constant 0 : i32
    return %c0_i32, %c0_i32_0 : i32, i32
  }
}

module attributes {stable_mosaic.version = 11 : i64} {
  func.func @_affine_act_kernel(%arg0: i32, %arg1: memref<32x256xf32, #tpu.memory_space<vmem>>, %arg2: memref<1x256xf32, #tpu.memory_space<vmem>>, %arg3: memref<1x256xf32, #tpu.memory_space<vmem>>, %arg4: memref<32x256xbf16, #tpu.memory_space<vmem>>) attributes {dimension_semantics = [#tpu.dimension_semantics<parallel>], iteration_bounds = array<i64: 1>, scalar_prefetch = 0 : i64, scratch_operands = 0 : i64, tpu.core_type = #tpu.core_type<tc>, window_params = [{transform_indices = @transform_0, window_bounds = array<i64: 32, 256>}, {pipeline_mode = #tpu.pipeline_mode<synchronous>, transform_indices = @transform_1, window_bounds = array<i64: 1, 256>}, {pipeline_mode = #tpu.pipeline_mode<synchronous>, transform_indices = @transform_2, window_bounds = array<i64: 1, 256>}, {transform_indices = @transform_3, window_bounds = array<i64: 32, 256>}]} {
    %c0 = arith.constant 0 : index
    %c0_0 = arith.constant 0 : index
    %0 = vector.load %arg1[%c0, %c0_0] : memref<32x256xf32, #tpu.memory_space<vmem>>, vector<32x256xf32>
    %c0_1 = arith.constant 0 : index
    %c0_2 = arith.constant 0 : index
    %1 = vector.load %arg2[%c0_1, %c0_2] : memref<1x256xf32, #tpu.memory_space<vmem>>, vector<1x256xf32>
    %2 = vector.broadcast %1 : vector<1x256xf32> to vector<32x256xf32>
    %3 = arith.mulf %0, %2 : vector<32x256xf32>
    %c0_3 = arith.constant 0 : index
    %c0_4 = arith.constant 0 : index
    %4 = vector.load %arg3[%c0_3, %c0_4] : memref<1x256xf32, #tpu.memory_space<vmem>>, vector<1x256xf32>
    %5 = vector.broadcast %4 : vector<1x256xf32> to vector<32x256xf32>
    %6 = arith.addf %3, %5 : vector<32x256xf32>
    %cst = arith.constant 0.000000e+00 : f32
    %7 = vector.broadcast %cst : f32 to vector<32x256xf32>
    %8 = arith.maximumf %6, %7 : vector<32x256xf32>
    %9 = arith.truncf %8 : vector<32x256xf32> to vector<32x256xbf16>
    %c0_5 = arith.constant 0 : index
    %c0_6 = arith.constant 0 : index
    %10 = vector.load %arg4[%c0_5, %c0_6] : memref<32x256xbf16, #tpu.memory_space<vmem>>, vector<32x256xbf16>
    tpu.vector_store %arg4[%c0_5, %c0_6], %9 {strides = array<i32>} : memref<32x256xbf16, #tpu.memory_space<vmem>>, vector<32x256xbf16>,
    return
  }
  func.func @transform_0(%arg0: i32) -> (i32, i32) {
    %c0_i32 = arith.constant 0 : i32
    %c0_i32_0 = arith.constant 0 : i32
    return %arg0, %c0_i32 : i32, i32
  }
  func.func @transform_1(%arg0: i32) -> (i32, i32) {
    %c0_i32 = arith.constant 0 : i32
    %c0_i32_0 = arith.constant 0 : i32
    %c0_i32_1 = arith.constant 0 : i32
    return %c0_i32, %c0_i32_0 : i32, i32
  }
  func.func @transform_2(%arg0: i32) -> (i32, i32) {
    %c0_i32 = arith.constant 0 : i32
    %c0_i32_0 = arith.constant 0 : i32
    %c0_i32_1 = arith.constant 0 : i32
    return %c0_i32, %c0_i32_0 : i32, i32
  }
  func.func @transform_3(%arg0: i32) -> (i32, i32) {
    %c0_i32 = arith.constant 0 : i32
    %c0_i32_0 = arith.constant 0 : i32
    return %arg0, %c0_i32 : i32, i32
  }
}

module attributes {stable_mosaic.version = 11 : i64} {
  func.func @_mm_bias_stats_kernel(%arg0: i32, %arg1: memref<128x256xbf16, #tpu.memory_space<vmem>>, %arg2: memref<256x128xbf16, #tpu.memory_space<vmem>>, %arg3: memref<1x128xf32, #tpu.memory_space<vmem>>, %arg4: memref<128x128xf32, #tpu.memory_space<vmem>>, %arg5: memref<2x128xf32, #tpu.memory_space<vmem>>) attributes {dimension_semantics = [#tpu.dimension_semantics<arbitrary>], iteration_bounds = array<i64: 1>, scalar_prefetch = 0 : i64, scratch_operands = 0 : i64, tpu.core_type = #tpu.core_type<tc>, window_params = [{transform_indices = @transform_0, window_bounds = array<i64: 128, 256>}, {pipeline_mode = #tpu.pipeline_mode<synchronous>, transform_indices = @transform_1, window_bounds = array<i64: 256, 128>}, {pipeline_mode = #tpu.pipeline_mode<synchronous>, transform_indices = @transform_2, window_bounds = array<i64: 1, 128>}, {transform_indices = @transform_3, window_bounds = array<i64: 128, 128>}, {pipeline_mode = #tpu.pipeline_mode<synchronous>, transform_indices = @transform_4, window_bounds = array<i64: 2, 128>}]} {
    %c0 = arith.constant 0 : index
    %c0_0 = arith.constant 0 : index
    %0 = vector.load %arg1[%c0, %c0_0] : memref<128x256xbf16, #tpu.memory_space<vmem>>, vector<128x256xbf16>
    %c0_1 = arith.constant 0 : index
    %c0_2 = arith.constant 0 : index
    %1 = vector.load %arg2[%c0_1, %c0_2] : memref<256x128xbf16, #tpu.memory_space<vmem>>, vector<256x128xbf16>
    %cst = arith.constant dense<0.000000e+00> : vector<128x128xf32>
    %2 = tpu.matmul %0, %1, %cst {dimension_numbers = #tpu.dot_dimension_numbers<[1], [0], [0], [1], [0, 0, 1, 1], [], []>} : vector<128x256xbf16>, vector<256x128xbf16>, vector<128x128xf32> -> vector<128x128xf32>
    %c0_3 = arith.constant 0 : index
    %c0_4 = arith.constant 0 : index
    %3 = vector.load %arg3[%c0_3, %c0_4] : memref<1x128xf32, #tpu.memory_space<vmem>>, vector<1x128xf32>
    %4 = vector.broadcast %3 : vector<1x128xf32> to vector<128x128xf32>
    %5 = arith.addf %2, %4 : vector<128x128xf32>
    %c0_5 = arith.constant 0 : index
    %c0_6 = arith.constant 0 : index
    %6 = vector.load %arg4[%c0_5, %c0_6] : memref<128x128xf32, #tpu.memory_space<vmem>>, vector<128x128xf32>
    tpu.vector_store %arg4[%c0_5, %c0_6], %5 {strides = array<i32>} : memref<128x128xf32, #tpu.memory_space<vmem>>, vector<128x128xf32>,
    %cst_7 = arith.constant dense<0.000000e+00> : vector<128xf32>
    %7 = vector.multi_reduction <add>, %5, %cst_7 [0] : vector<128x128xf32> to vector<128xf32>
    %8 = vector.shape_cast %7 : vector<128xf32> to vector<1x128xf32>
    %9 = arith.mulf %5, %5 : vector<128x128xf32>
    %cst_8 = arith.constant dense<0.000000e+00> : vector<128xf32>
    %10 = vector.multi_reduction <add>, %9, %cst_8 [0] : vector<128x128xf32> to vector<128xf32>
    %11 = vector.shape_cast %10 : vector<128xf32> to vector<1x128xf32>
    %12 = tpu.concatenate %8, %11 in 0 : vector<1x128xf32>, vector<1x128xf32> -> vector<2x128xf32>
    %c0_i32 = arith.constant 0 : i32
    %13 = arith.cmpi eq, %arg0, %c0_i32 : i32
    %14 = arith.extui %13 : i1 to i32
    %c0_i32_9 = arith.constant 0 : i32
    %15 = arith.cmpi ne, %14, %c0_i32_9 : i32
    scf.if %15 {
      %cst_14 = arith.constant 0.000000e+00 : f32
      %19 = vector.broadcast %cst_14 : f32 to vector<2x128xf32>
      %c0_15 = arith.constant 0 : index
      %c0_16 = arith.constant 0 : index
      %20 = vector.load %arg5[%c0_15, %c0_16] : memref<2x128xf32, #tpu.memory_space<vmem>>, vector<2x128xf32>
      tpu.vector_store %arg5[%c0_15, %c0_16], %19 {strides = array<i32>} : memref<2x128xf32, #tpu.memory_space<vmem>>, vector<2x128xf32>,
    } else {
    }
    %c0_10 = arith.constant 0 : index
    %c0_11 = arith.constant 0 : index
    %16 = vector.load %arg5[%c0_10, %c0_11] : memref<2x128xf32, #tpu.memory_space<vmem>>, vector<2x128xf32>
    %17 = arith.addf %16, %12 : vector<2x128xf32>
    %c0_12 = arith.constant 0 : index
    %c0_13 = arith.constant 0 : index
    %18 = vector.load %arg5[%c0_12, %c0_13] : memref<2x128xf32, #tpu.memory_space<vmem>>, vector<2x128xf32>
    tpu.vector_store %arg5[%c0_12, %c0_13], %17 {strides = array<i32>} : memref<2x128xf32, #tpu.memory_space<vmem>>, vector<2x128xf32>,
    return
  }
  func.func @transform_0(%arg0: i32) -> (i32, i32) {
    %c0_i32 = arith.constant 0 : i32
    %c0_i32_0 = arith.constant 0 : i32
    return %arg0, %c0_i32 : i32, i32
  }
  func.func @transform_1(%arg0: i32) -> (i32, i32) {
    %c0_i32 = arith.constant 0 : i32
    %c0_i32_0 = arith.constant 0 : i32
    %c0_i32_1 = arith.constant 0 : i32
    return %c0_i32, %c0_i32_0 : i32, i32
  }
  func.func @transform_2(%arg0: i32) -> (i32, i32) {
    %c0_i32 = arith.constant 0 : i32
    %c0_i32_0 = arith.constant 0 : i32
    %c0_i32_1 = arith.constant 0 : i32
    return %c0_i32, %c0_i32_0 : i32, i32
  }
  func.func @transform_3(%arg0: i32) -> (i32, i32) {
    %c0_i32 = arith.constant 0 : i32
    %c0_i32_0 = arith.constant 0 : i32
    return %arg0, %c0_i32 : i32, i32
  }
  func.func @transform_4(%arg0: i32) -> (i32, i32) {
    %c0_i32 = arith.constant 0 : i32
    %c0_i32_0 = arith.constant 0 : i32
    %c0_i32_1 = arith.constant 0 : i32
    return %c0_i32, %c0_i32_0 : i32, i32
  }
}

module attributes {stable_mosaic.version = 11 : i64} {
  func.func @_mm_bias_stats_kernel(%arg0: i32, %arg1: memref<512x128xbf16, #tpu.memory_space<vmem>>, %arg2: memref<128x128xbf16, #tpu.memory_space<vmem>>, %arg3: memref<1x128xf32, #tpu.memory_space<vmem>>, %arg4: memref<512x128xf32, #tpu.memory_space<vmem>>, %arg5: memref<2x128xf32, #tpu.memory_space<vmem>>) attributes {dimension_semantics = [#tpu.dimension_semantics<arbitrary>], iteration_bounds = array<i64: 1>, scalar_prefetch = 0 : i64, scratch_operands = 0 : i64, tpu.core_type = #tpu.core_type<tc>, window_params = [{transform_indices = @transform_0, window_bounds = array<i64: 512, 128>}, {pipeline_mode = #tpu.pipeline_mode<synchronous>, transform_indices = @transform_1, window_bounds = array<i64: 128, 128>}, {pipeline_mode = #tpu.pipeline_mode<synchronous>, transform_indices = @transform_2, window_bounds = array<i64: 1, 128>}, {transform_indices = @transform_3, window_bounds = array<i64: 512, 128>}, {pipeline_mode = #tpu.pipeline_mode<synchronous>, transform_indices = @transform_4, window_bounds = array<i64: 2, 128>}]} {
    %c0 = arith.constant 0 : index
    %c0_0 = arith.constant 0 : index
    %0 = vector.load %arg1[%c0, %c0_0] : memref<512x128xbf16, #tpu.memory_space<vmem>>, vector<512x128xbf16>
    %c0_1 = arith.constant 0 : index
    %c0_2 = arith.constant 0 : index
    %1 = vector.load %arg2[%c0_1, %c0_2] : memref<128x128xbf16, #tpu.memory_space<vmem>>, vector<128x128xbf16>
    %cst = arith.constant dense<0.000000e+00> : vector<512x128xf32>
    %2 = tpu.matmul %0, %1, %cst {dimension_numbers = #tpu.dot_dimension_numbers<[1], [0], [0], [1], [0, 0, 1, 1], [], []>} : vector<512x128xbf16>, vector<128x128xbf16>, vector<512x128xf32> -> vector<512x128xf32>
    %c0_3 = arith.constant 0 : index
    %c0_4 = arith.constant 0 : index
    %3 = vector.load %arg3[%c0_3, %c0_4] : memref<1x128xf32, #tpu.memory_space<vmem>>, vector<1x128xf32>
    %4 = vector.broadcast %3 : vector<1x128xf32> to vector<512x128xf32>
    %5 = arith.addf %2, %4 : vector<512x128xf32>
    %c0_5 = arith.constant 0 : index
    %c0_6 = arith.constant 0 : index
    %6 = vector.load %arg4[%c0_5, %c0_6] : memref<512x128xf32, #tpu.memory_space<vmem>>, vector<512x128xf32>
    tpu.vector_store %arg4[%c0_5, %c0_6], %5 {strides = array<i32>} : memref<512x128xf32, #tpu.memory_space<vmem>>, vector<512x128xf32>,
    %cst_7 = arith.constant dense<0.000000e+00> : vector<128xf32>
    %7 = vector.multi_reduction <add>, %5, %cst_7 [0] : vector<512x128xf32> to vector<128xf32>
    %8 = vector.shape_cast %7 : vector<128xf32> to vector<1x128xf32>
    %9 = arith.mulf %5, %5 : vector<512x128xf32>
    %cst_8 = arith.constant dense<0.000000e+00> : vector<128xf32>
    %10 = vector.multi_reduction <add>, %9, %cst_8 [0] : vector<512x128xf32> to vector<128xf32>
    %11 = vector.shape_cast %10 : vector<128xf32> to vector<1x128xf32>
    %12 = tpu.concatenate %8, %11 in 0 : vector<1x128xf32>, vector<1x128xf32> -> vector<2x128xf32>
    %c0_i32 = arith.constant 0 : i32
    %13 = arith.cmpi eq, %arg0, %c0_i32 : i32
    %14 = arith.extui %13 : i1 to i32
    %c0_i32_9 = arith.constant 0 : i32
    %15 = arith.cmpi ne, %14, %c0_i32_9 : i32
    scf.if %15 {
      %cst_14 = arith.constant 0.000000e+00 : f32
      %19 = vector.broadcast %cst_14 : f32 to vector<2x128xf32>
      %c0_15 = arith.constant 0 : index
      %c0_16 = arith.constant 0 : index
      %20 = vector.load %arg5[%c0_15, %c0_16] : memref<2x128xf32, #tpu.memory_space<vmem>>, vector<2x128xf32>
      tpu.vector_store %arg5[%c0_15, %c0_16], %19 {strides = array<i32>} : memref<2x128xf32, #tpu.memory_space<vmem>>, vector<2x128xf32>,
    } else {
    }
    %c0_10 = arith.constant 0 : index
    %c0_11 = arith.constant 0 : index
    %16 = vector.load %arg5[%c0_10, %c0_11] : memref<2x128xf32, #tpu.memory_space<vmem>>, vector<2x128xf32>
    %17 = arith.addf %16, %12 : vector<2x128xf32>
    %c0_12 = arith.constant 0 : index
    %c0_13 = arith.constant 0 : index
    %18 = vector.load %arg5[%c0_12, %c0_13] : memref<2x128xf32, #tpu.memory_space<vmem>>, vector<2x128xf32>
    tpu.vector_store %arg5[%c0_12, %c0_13], %17 {strides = array<i32>} : memref<2x128xf32, #tpu.memory_space<vmem>>, vector<2x128xf32>,
    return
  }
  func.func @transform_0(%arg0: i32) -> (i32, i32) {
    %c0_i32 = arith.constant 0 : i32
    %c0_i32_0 = arith.constant 0 : i32
    return %arg0, %c0_i32 : i32, i32
  }
  func.func @transform_1(%arg0: i32) -> (i32, i32) {
    %c0_i32 = arith.constant 0 : i32
    %c0_i32_0 = arith.constant 0 : i32
    %c0_i32_1 = arith.constant 0 : i32
    return %c0_i32, %c0_i32_0 : i32, i32
  }
  func.func @transform_2(%arg0: i32) -> (i32, i32) {
    %c0_i32 = arith.constant 0 : i32
    %c0_i32_0 = arith.constant 0 : i32
    %c0_i32_1 = arith.constant 0 : i32
    return %c0_i32, %c0_i32_0 : i32, i32
  }
  func.func @transform_3(%arg0: i32) -> (i32, i32) {
    %c0_i32 = arith.constant 0 : i32
    %c0_i32_0 = arith.constant 0 : i32
    return %arg0, %c0_i32 : i32, i32
  }
  func.func @transform_4(%arg0: i32) -> (i32, i32) {
    %c0_i32 = arith.constant 0 : i32
    %c0_i32_0 = arith.constant 0 : i32
    %c0_i32_1 = arith.constant 0 : i32
    return %c0_i32, %c0_i32_0 : i32, i32
  }
}

module attributes {stable_mosaic.version = 11 : i64} {
  func.func @_affine_act_kernel(%arg0: i32, %arg1: memref<512x128xf32, #tpu.memory_space<vmem>>, %arg2: memref<1x128xf32, #tpu.memory_space<vmem>>, %arg3: memref<1x128xf32, #tpu.memory_space<vmem>>, %arg4: memref<512x128xf32, #tpu.memory_space<vmem>>) attributes {dimension_semantics = [#tpu.dimension_semantics<parallel>], iteration_bounds = array<i64: 1>, scalar_prefetch = 0 : i64, scratch_operands = 0 : i64, tpu.core_type = #tpu.core_type<tc>, window_params = [{transform_indices = @transform_0, window_bounds = array<i64: 512, 128>}, {pipeline_mode = #tpu.pipeline_mode<synchronous>, transform_indices = @transform_1, window_bounds = array<i64: 1, 128>}, {pipeline_mode = #tpu.pipeline_mode<synchronous>, transform_indices = @transform_2, window_bounds = array<i64: 1, 128>}, {transform_indices = @transform_3, window_bounds = array<i64: 512, 128>}]} {
    %c0 = arith.constant 0 : index
    %c0_0 = arith.constant 0 : index
    %0 = vector.load %arg1[%c0, %c0_0] : memref<512x128xf32, #tpu.memory_space<vmem>>, vector<512x128xf32>
    %c0_1 = arith.constant 0 : index
    %c0_2 = arith.constant 0 : index
    %1 = vector.load %arg2[%c0_1, %c0_2] : memref<1x128xf32, #tpu.memory_space<vmem>>, vector<1x128xf32>
    %2 = vector.broadcast %1 : vector<1x128xf32> to vector<512x128xf32>
    %3 = arith.mulf %0, %2 : vector<512x128xf32>
    %c0_3 = arith.constant 0 : index
    %c0_4 = arith.constant 0 : index
    %4 = vector.load %arg3[%c0_3, %c0_4] : memref<1x128xf32, #tpu.memory_space<vmem>>, vector<1x128xf32>
    %5 = vector.broadcast %4 : vector<1x128xf32> to vector<512x128xf32>
    %6 = arith.addf %3, %5 : vector<512x128xf32>
    %7 = arith.negf %6 : vector<512x128xf32>
    %8 = math.exp %7 : vector<512x128xf32>
    %cst = arith.constant 1.000000e+00 : f32
    %9 = vector.broadcast %cst : f32 to vector<512x128xf32>
    %10 = arith.addf %9, %8 : vector<512x128xf32>
    %11 = arith.divf %9, %10 : vector<512x128xf32>
    %c0_5 = arith.constant 0 : index
    %c0_6 = arith.constant 0 : index
    %12 = vector.load %arg4[%c0_5, %c0_6] : memref<512x128xf32, #tpu.memory_space<vmem>>, vector<512x128xf32>
    tpu.vector_store %arg4[%c0_5, %c0_6], %11 {strides = array<i32>} : memref<512x128xf32, #tpu.memory_space<vmem>>, vector<512x128xf32>,
    return
  }
  func.func @transform_0(%arg0: i32) -> (i32, i32) {
    %c0_i32 = arith.constant 0 : i32
    %c0_i32_0 = arith.constant 0 : i32
    return %arg0, %c0_i32 : i32, i32
  }
  func.func @transform_1(%arg0: i32) -> (i32, i32) {
    %c0_i32 = arith.constant 0 : i32
    %c0_i32_0 = arith.constant 0 : i32
    %c0_i32_1 = arith.constant 0 : i32
    return %c0_i32, %c0_i32_0 : i32, i32
  }
  func.func @transform_2(%arg0: i32) -> (i32, i32) {
    %c0_i32 = arith.constant 0 : i32
    %c0_i32_0 = arith.constant 0 : i32
    %c0_i32_1 = arith.constant 0 : i32
    return %c0_i32, %c0_i32_0 : i32, i32
  }
  func.func @transform_3(%arg0: i32) -> (i32, i32) {
    %c0_i32 = arith.constant 0 : i32
    %c0_i32_0 = arith.constant 0 : i32
    return %arg0, %c0_i32 : i32, i32
  }
}

</mosaic_0001>

<llo_original>
// kernel: vae_forward.14
$region0: #{vae_forward.14}
  #allocation0 [shape = 'u32[]', space=smem, size = 0x4, offset = 0x4, fixed_abs, tag = 'smem constant byte address 0x4 - core index']
  #allocation1 [shape = 'u32[144,128]{1,0:T(1,128)}', space=vmem, size = 0x12000, scoped, tag = 'internal scratch']
  %s0 = inlined_call_operand.vmem [shape: bf16[512,27], index: 0, kind: input, shape index: {}]
  %s1 = inlined_call_operand.vmem [shape: bf16[27,128], index: 1, kind: input, shape index: {}]
  %s2 = inlined_call_operand.vmem [shape: f32[1,128], index: 2, kind: input, shape index: {}]
  %s3 = inlined_call_operand.vmem [shape: f32[512,128], index: 3, kind: output, shape index: {0}]
  %s4 = inlined_call_operand.vmem [shape: f32[2,128], index: 4, kind: output, shape index: {1}]
  %5 = xla_tuple %s3, %s4
  %s6 = sld [smem:[#allocation0]]
  $region34: #{vae_forward.14} parent=0
    _
  %s8 = ssub.s32 1, %s6
  %s9 = scalar_select 0, %s8, %s6
  // Predicated region
  $region2: #{vae_forward.14} parent=0 // pred_check
    _
  $region3: #{vae_forward.14} parent=0 // pred_check_branch
    %11 = sbr.rel (0) target = $region5
  $region4: #{vae_forward.14} parent=0 // pred_region
    _
  $region5: #{vae_forward.14} parent=0 // pred_fallthru
    _
  // Predicated region
  $region6: #{vae_forward.14} parent=0 // pred_check
    _
  $region7: #{vae_forward.14} parent=0 // pred_check_branch
    %13 = sbr.rel (0) target = $region9
  $region8: #{vae_forward.14} parent=0 // pred_region
    _
  $region9: #{vae_forward.14} parent=0 // pred_fallthru
    _
  // Predicated region
  $region10: #{vae_forward.14} parent=0 // pred_check
    _
  $region11: #{vae_forward.14} parent=0 // pred_check_branch
    %15 = sbr.rel (0) target = $region13
  $region12: #{vae_forward.14} parent=0 // pred_region
    _
  $region13: #{vae_forward.14} parent=0 // pred_fallthru
    _
  %v17 = vld [vmem:[%s0] sm:$0xf]
  %v18 = vld [vmem:[%s0 + $0x4] sm:$0xf]
  %v19 = vld [vmem:[%s0 + $0x8] sm:$0xf]
  %v20 = vld [vmem:[%s0 + $0xc] sm:$0xf]
  %v21 = vld [vmem:[%s0 + $0x10] sm:$0xf]
  %v22 = vld [vmem:[%s0 + $0x14] sm:$0xf]
  %v23 = vld [vmem:[%s0 + $0x18] sm:$0xf]
  %v24 = vld [vmem:[%s0 + $0x1c] sm:$0xf]
  %v25 = vld [vmem:[%s0 + $0x20] sm:$0xf]
  %v26 = vld [vmem:[%s0 + $0x24] sm:$0xf]
  %v27 = vld [vmem:[%s0 + $0x28] sm:$0xf]
  %v28 = vld [vmem:[%s0 + $0x2c] sm:$0xf]
  %v29 = vld [vmem:[%s0 + $0x30] sm:$0xf]
  %v30 = vld [vmem:[%s0 + $0x34] sm:$0xf]
  %v31 = vld [vmem:[%s0 + $0x38] sm:$0xf]
  %v32 = vld [vmem:[%s0 + $0x3c] sm:$0xf]
  %v33 = vld [vmem:[%s0 + $0x40] sm:$0xf]
  %v34 = vld [vmem:[%s0 + $0x44] sm:$0xf]
  %v35 = vld [vmem:[%s0 + $0x48] sm:$0xf]
  %v36 = vld [vmem:[%s0 + $0x4c] sm:$0xf]
  %v37 = vld [vmem:[%s0 + $0x50] sm:$0xf]
  %v38 = vld [vmem:[%s0 + $0x54] sm:$0xf]
  %v39 = vld [vmem:[%s0 + $0x58] sm:$0xf]
  %v40 = vld [vmem:[%s0 + $0x5c] sm:$0xf]
  %v41 = vld [vmem:[%s0 + $0x60] sm:$0xf]
  %v42 = vld [vmem:[%s0 + $0x64] sm:$0xf]
  %v43 = vld [vmem:[%s0 + $0x68] sm:$0xf]
  %v44 = vld [vmem:[%s0 + $0x6c] sm:$0xf]
  %v45 = vld [vmem:[%s0 + $0x70] sm:$0xf]
  %v46 = vld [vmem:[%s0 + $0x74] sm:$0xf]
  %v47 = vld [vmem:[%s0 + $0x78] sm:$0xf]
  %v48 = vld [vmem:[%s0 + $0x7c] sm:$0xf]
  %v49 = vld [vmem:[%s0 + $0x80] sm:$0xf]
  %v50 = vld [vmem:[%s0 + $0x84] sm:$0xf]
  %v51 = vld [vmem:[%s0 + $0x88] sm:$0xf]
  %v52 = vld [vmem:[%s0 + $0x8c] sm:$0xf]
  %v53 = vld [vmem:[%s0 + $0x90] sm:$0xf]
  %v54 = vld [vmem:[%s0 + $0x94] sm:$0xf]
  %v55 = vld [vmem:[%s0 + $0x98] sm:$0xf]
  %v56 = vld [vmem:[%s0 + $0x9c] sm:$0xf]
  %v57 = vld [vmem:[%s0 + $0xa0] sm:$0xf]
  %v58 = vld [vmem:[%s0 + $0xa4] sm:$0xf]
  %v59 = vld [vmem:[%s0 + $0xa8] sm:$0xf]
  %v60 = vld [vmem:[%s0 + $0xac] sm:$0xf]
  %v61 = vld [vmem:[%s0 + $0xb0] sm:$0xf]
  %v62 = vld [vmem:[%s0 + $0xb4] sm:$0xf]
  %v63 = vld [vmem:[%s0 + $0xb8] sm:$0xf]
  %v64 = vld [vmem:[%s0 + $0xbc] sm:$0xf]
  %v65 = vld [vmem:[%s0 + $0xc0] sm:$0xf]
  %v66 = vld [vmem:[%s0 + $0xc4] sm:$0xf]
  %v67 = vld [vmem:[%s0 + $0xc8] sm:$0xf]
  %v68 = vld [vmem:[%s0 + $0xcc] sm:$0xf]
  %v69 = vld [vmem:[%s0 + $0xd0] sm:$0xf]
  %v70 = vld [vmem:[%s0 + $0xd4] sm:$0xf]
  %v71 = vld [vmem:[%s0 + $0xd8] sm:$0xf]
  %v72 = vld [vmem:[%s0 + $0xdc] sm:$0xf]
  %v73 = vld [vmem:[%s0 + $0xe0] sm:$0xf]
  %v74 = vld [vmem:[%s0 + $0xe4] sm:$0xf]
  %v75 = vld [vmem:[%s0 + $0xe8] sm:$0xf]
  %v76 = vld [vmem:[%s0 + $0xec] sm:$0xf]
  %v77 = vld [vmem:[%s0 + $0xf0] sm:$0xf]
  %v78 = vld [vmem:[%s0 + $0xf4] sm:$0xf]
  %v79 = vld [vmem:[%s0 + $0xf8] sm:$0xf]
  %v80 = vld [vmem:[%s0 + $0xfc] sm:$0xf]
  %v81 = vld [vmem:[%s1] sm:$0xf]
  %v82 = vld [vmem:[%s1 + $0x4] sm:$0xf]
  %v83 = vld [vmem:[%s1 + $0x8] sm:$0xf]
  %v84 = vld [vmem:[%s1 + $0xc] sm:$0x3]
  %v85 = vld [vmem:[%s2] sm:$0x1]
  %v87 = vlaneseq
  %v88 = vshrl.u32 %v87, 7
  %v89 = vsub.s32 0, %v88
  %v90 = vrot.slane %v85, %v89
  %v156 = vunpack.c.l.b16 %v17
  %v157 = vunpack.c.l.b16 %v18
  %v158 = vunpack.c.l.b16 %v19
  %v159 = vunpack.c.l.b16 %v20
  %v160 = vunpack.c.l.b16 %v21
  %v161 = vunpack.c.l.b16 %v22
  %v162 = vunpack.c.l.b16 %v23
  %v163 = vunpack.c.l.b16 %v24
  %v164 = vunpack.c.l.b16 %v25
  %v165 = vunpack.c.l.b16 %v26
  %v166 = vunpack.c.l.b16 %v27
  %v167 = vunpack.c.l.b16 %v28
  %v168 = vunpack.c.l.b16 %v29
  %v169 = vunpack.c.l.b16 %v30
  %v170 = vunpack.c.l.b16 %v31
  %v171 = vunpack.c.l.b16 %v32
  %v172 = vunpack.c.l.b16 %v33
  %v173 = vunpack.c.l.b16 %v34
  %v174 = vunpack.c.l.b16 %v35
  %v175 = vunpack.c.l.b16 %v36
  %v176 = vunpack.c.l.b16 %v37
  %v177 = vunpack.c.l.b16 %v38
  %v178 = vunpack.c.l.b16 %v39
  %v179 = vunpack.c.l.b16 %v40
  %v180 = vunpack.c.l.b16 %v41
  %v181 = vunpack.c.l.b16 %v42
  %v182 = vunpack.c.l.b16 %v43
  %v183 = vunpack.c.l.b16 %v44
  %v184 = vunpack.c.l.b16 %v45
  %v185 = vunpack.c.l.b16 %v46
  %v186 = vunpack.c.l.b16 %v47
  %v187 = vunpack.c.l.b16 %v48
  %v188 = vunpack.c.l.b16 %v49
  %v189 = vunpack.c.l.b16 %v50
  %v190 = vunpack.c.l.b16 %v51
  %v191 = vunpack.c.l.b16 %v52
  %v192 = vunpack.c.l.b16 %v53
  %v193 = vunpack.c.l.b16 %v54
  %v194 = vunpack.c.l.b16 %v55
  %v195 = vunpack.c.l.b16 %v56
  %v196 = vunpack.c.l.b16 %v57
  %v197 = vunpack.c.l.b16 %v58
  %v198 = vunpack.c.l.b16 %v59
  %v199 = vunpack.c.l.b16 %v60
  %v200 = vunpack.c.l.b16 %v61
  %v201 = vunpack.c.l.b16 %v62
  %v202 = vunpack.c.l.b16 %v63
  %v203 = vunpack.c.l.b16 %v64
  %v204 = vunpack.c.l.b16 %v65
  %v205 = vunpack.c.l.b16 %v66
  %v206 = vunpack.c.l.b16 %v67
  %v207 = vunpack.c.l.b16 %v68
  %v208 = vunpack.c.l.b16 %v69
  %v209 = vunpack.c.l.b16 %v70
  %v210 = vunpack.c.l.b16 %v71
  %v211 = vunpack.c.l.b16 %v72
  %v212 = vunpack.c.l.b16 %v73
  %v213 = vunpack.c.l.b16 %v74
  %v214 = vunpack.c.l.b16 %v75
  %v215 = vunpack.c.l.b16 %v76
  %v216 = vunpack.c.l.b16 %v77
  %v217 = vunpack.c.l.b16 %v78
  %v218 = vunpack.c.l.b16 %v79
  %v219 = vunpack.c.l.b16 %v80
  %v220 = vpack.c.b16 %v157, %v156
  %v221 = vpack.c.b16 %v159, %v158
  %v222 = vpack.c.b16 %v161, %v160
  %v223 = vpack.c.b16 %v163, %v162
  %v224 = vpack.c.b16 %v165, %v164
  %v225 = vpack.c.b16 %v167, %v166
  %v226 = vpack.c.b16 %v169, %v168
  %v227 = vpack.c.b16 %v171, %v170
  %v228 = vpack.c.b16 %v173, %v172
  %v229 = vpack.c.b16 %v175, %v174
  %v230 = vpack.c.b16 %v177, %v176
  %v231 = vpack.c.b16 %v179, %v178
  %v232 = vpack.c.b16 %v181, %v180
  %v233 = vpack.c.b16 %v183, %v182
  %v234 = vpack.c.b16 %v185, %v184
  %v235 = vpack.c.b16 %v187, %v186
  %v236 = vpack.c.b16 %v189, %v188
  %v237 = vpack.c.b16 %v191, %v190
  %v238 = vpack.c.b16 %v193, %v192
  %v239 = vpack.c.b16 %v195, %v194
  %v240 = vpack.c.b16 %v197, %v196
  %v241 = vpack.c.b16 %v199, %v198
  %v242 = vpack.c.b16 %v201, %v200
  %v243 = vpack.c.b16 %v203, %v202
  %v244 = vpack.c.b16 %v205, %v204
  %v245 = vpack.c.b16 %v207, %v206
  %v246 = vpack.c.b16 %v209, %v208
  %v247 = vpack.c.b16 %v211, %v210
  %v248 = vpack.c.b16 %v213, %v212
  %v249 = vpack.c.b16 %v215, %v214
  %v250 = vpack.c.b16 %v217, %v216
  %v251 = vpack.c.b16 %v219, %v218
  %v256 = vunpack.c.l.b16 %v81
  %v257 = vunpack.c.l.b16 %v82
  %v258 = vunpack.c.l.b16 %v83
  %v259 = vunpack.c.l.b16 %v84
  %v260 = vpack.c.b16 %v257, %v256
  %v261 = vpack.c.b16 %v259, %v258
  %vm263 = vcmask 220160
  %v265 = vsel %vm263, %v220, 0
  %v268 = vsel %vm263, %v221, 0
  %v271 = vsel %vm263, %v222, 0
  %v274 = vsel %vm263, %v223, 0
  %v277 = vsel %vm263, %v224, 0
  %v280 = vsel %vm263, %v225, 0
  %v283 = vsel %vm263, %v226, 0
  %v286 = vsel %vm263, %v227, 0
  %v289 = vsel %vm263, %v228, 0
  %v292 = vsel %vm263, %v229, 0
  %v295 = vsel %vm263, %v230, 0
  %v298 = vsel %vm263, %v231, 0
  %v301 = vsel %vm263, %v232, 0
  %v304 = vsel %vm263, %v233, 0
  %v307 = vsel %vm263, %v234, 0
  %v310 = vsel %vm263, %v235, 0
  %v313 = vsel %vm263, %v236, 0
  %v316 = vsel %vm263, %v237, 0
  %v319 = vsel %vm263, %v238, 0
  %v322 = vsel %vm263, %v239, 0
  %v325 = vsel %vm263, %v240, 0
  %v328 = vsel %vm263, %v241, 0
  %v331 = vsel %vm263, %v242, 0
  %v334 = vsel %vm263, %v243, 0
  %v337 = vsel %vm263, %v244, 0
  %v340 = vsel %vm263, %v245, 0
  %v343 = vsel %vm263, %v246, 0
  %v346 = vsel %vm263, %v247, 0
  %v349 = vsel %vm263, %v248, 0
  %v352 = vsel %vm263, %v249, 0
  %v355 = vsel %vm263, %v250, 0
  %v358 = vsel %vm263, %v251, 0
  %vm360 = vcmask 1044480
  %vm361 = vcmask 1045504
  %v362 = vsel %vm360, 4294967295, 65535
  %v363 = vsel %vm361, %v362, 0
  %v365 = vand.u32 %v261, %v363
  %367 = vmatprep.subr.bf16.mxu0 0
  %368 = vmatpush1.bf16.msra.mxu0 %v260
  %369 = vmatprep.subr.bf16.mxu0 0
  %370 = vmatpush1.bf16.msra.mxu0 %v365
  %371 = vmatprep.subr.bf16.mxu0 0
  %372 = vmatpush1.bf16.msra.mxu0 0
  %373 = vmatprep.subr.bf16.mxu0 0
  %374 = vmatpush1.bf16.msra.mxu0 0
  %375 = vmatprep.subr.bf16.mxu0 0
  %376 = vmatpush1.bf16.msra.mxu0 0
  %377 = vmatprep.subr.bf16.mxu0 0
  %378 = vmatpush1.bf16.msra.mxu0 0
  %379 = vmatprep.subr.bf16.mxu0 0
  %380 = vmatpush1.bf16.msra.mxu0 0
  %381 = vmatprep.subr.bf16.mxu0 0
  %382 = vmatpush1.bf16.msra.mxu0 0
  %383 = vmatprep.subr.bf16.mxu0 0
  %384 = vmatpush1.bf16.msra.mxu0 0
  %385 = vmatprep.subr.bf16.mxu0 0
  %386 = vmatpush1.bf16.msra.mxu0 0
  %387 = vmatprep.subr.bf16.mxu0 0
  %388 = vmatpush1.bf16.msra.mxu0 0
  %389 = vmatprep.subr.bf16.mxu0 0
  %390 = vmatpush1.bf16.msra.mxu0 0
  %391 = vmatprep.subr.bf16.mxu0 0
  %392 = vmatpush1.bf16.msra.mxu0 0
  %393 = vmatprep.subr.bf16.mxu0 0
  %394 = vmatpush1.bf16.msra.mxu0 0
  %395 = vmatprep.subr.bf16.mxu0 0
  %396 = vmatpush1.bf16.msra.mxu0 0
  %397 = vmatprep.subr.bf16.mxu0 0
  %398 = vmatpush1.bf16.msra.mxu0 0
  %399 = vmatprep.mubr.bf16.mxu0 0
  %400 = vmatmul.mubr.bf16.gmra.mrb[0].mxu0 %v265
  %v401 = vpop.f32.mrb[0].mxu0
  %v402 = vadd.f32 %v90, %v401
  %v403 = vpop.f32.mrb[0].mxu0
  %v404 = vpop.f32.mrb[0].mxu0
  %v405 = vadd.f32 %v90, %v404
  %v406 = vpop.f32.mrb[0].mxu0
  %407 = vmatprep.mubr.bf16.mxu0 0
  %408 = vmatmul.mubr.bf16.gmra.mrb[0].mxu0 %v268
  %v409 = vpop.f32.mrb[0].mxu0
  %v410 = vadd.f32 %v90, %v409
  %v411 = vpop.f32.mrb[0].mxu0
  %v412 = vpop.f32.mrb[0].mxu0
  %v413 = vadd.f32 %v90, %v412
  %v414 = vpop.f32.mrb[0].mxu0
  %415 = vmatprep.mubr.bf16.mxu0 0
  %416 = vmatmul.mubr.bf16.gmra.mrb[0].mxu0 %v271
  %v417 = vpop.f32.mrb[0].mxu0
  %v418 = vadd.f32 %v90, %v417
  %v419 = vpop.f32.mrb[0].mxu0
  %v420 = vpop.f32.mrb[0].mxu0
  %v421 = vadd.f32 %v90, %v420
  %v422 = vpop.f32.mrb[0].mxu0
  %423 = vmatprep.mubr.bf16.mxu0 0
  %424 = vmatmul.mubr.bf16.gmra.mrb[0].mxu0 %v274
  %v425 = vpop.f32.mrb[0].mxu0
  %v426 = vadd.f32 %v90, %v425
  %v427 = vpop.f32.mrb[0].mxu0
  %v428 = vpop.f32.mrb[0].mxu0
  %v429 = vadd.f32 %v90, %v428
  %v430 = vpop.f32.mrb[0].mxu0
  %431 = vmatprep.mubr.bf16.mxu0 0
  %432 = vmatmul.mubr.bf16.gmra.mrb[0].mxu0 %v277
  %v433 = vpop.f32.mrb[0].mxu0
  %v434 = vadd.f32 %v90, %v433
  %v435 = vpop.f32.mrb[0].mxu0
  %v436 = vpop.f32.mrb[0].mxu0
  %v437 = vadd.f32 %v90, %v436
  %v438 = vpop.f32.mrb[0].mxu0
  %439 = vmatprep.mubr.bf16.mxu0 0
  %440 = vmatmul.mubr.bf16.gmra.mrb[0].mxu0 %v280
  %v441 = vpop.f32.mrb[0].mxu0
  %v442 = vadd.f32 %v90, %v441
  %v443 = vpop.f32.mrb[0].mxu0
  %v444 = vpop.f32.mrb[0].mxu0
  %v445 = vadd.f32 %v90, %v444
  %v446 = vpop.f32.mrb[0].mxu0
  %447 = vmatprep.mubr.bf16.mxu0 0
  %448 = vmatmul.mubr.bf16.gmra.mrb[0].mxu0 %v283
  %v449 = vpop.f32.mrb[0].mxu0
  %v450 = vadd.f32 %v90, %v449
  %v451 = vpop.f32.mrb[0].mxu0
  %v452 = vpop.f32.mrb[0].mxu0
  %v453 = vadd.f32 %v90, %v452
  %v454 = vpop.f32.mrb[0].mxu0
  %455 = vmatprep.mubr.bf16.mxu0 0
  %456 = vmatmul.mubr.bf16.gmra.mrb[0].mxu0 %v286
  %v457 = vpop.f32.mrb[0].mxu0
  %v458 = vadd.f32 %v90, %v457
  %v459 = vpop.f32.mrb[0].mxu0
  %v460 = vpop.f32.mrb[0].mxu0
  %v461 = vadd.f32 %v90, %v460
  %v462 = vpop.f32.mrb[0].mxu0
  %463 = vmatprep.mubr.bf16.mxu0 0
  %464 = vmatmul.mubr.bf16.gmra.mrb[0].mxu0 %v289
  %v465 = vpop.f32.mrb[0].mxu0
  %v466 = vadd.f32 %v90, %v465
  %v467 = vpop.f32.mrb[0].mxu0
  %v468 = vpop.f32.mrb[0].mxu0
  %v469 = vadd.f32 %v90, %v468
  %v470 = vpop.f32.mrb[0].mxu0
  %471 = vmatprep.mubr.bf16.mxu0 0
  %472 = vmatmul.mubr.bf16.gmra.mrb[0].mxu0 %v292
  %v473 = vpop.f32.mrb[0].mxu0
  %v474 = vadd.f32 %v90, %v473
  %v475 = vpop.f32.mrb[0].mxu0
  %v476 = vpop.f32.mrb[0].mxu0
  %v477 = vadd.f32 %v90, %v476
  %v478 = vpop.f32.mrb[0].mxu0
  %479 = vmatprep.mubr.bf16.mxu0 0
  %480 = vmatmul.mubr.bf16.gmra.mrb[0].mxu0 %v295
  %v481 = vpop.f32.mrb[0].mxu0
  %v482 = vadd.f32 %v90, %v481
  %v483 = vpop.f32.mrb[0].mxu0
  %v484 = vpop.f32.mrb[0].mxu0
  %v485 = vadd.f32 %v90, %v484
  %v486 = vpop.f32.mrb[0].mxu0
  %487 = vmatprep.mubr.bf16.mxu0 0
  %488 = vmatmul.mubr.bf16.gmra.mrb[0].mxu0 %v298
  %v489 = vpop.f32.mrb[0].mxu0
  %v490 = vadd.f32 %v90, %v489
  %v491 = vpop.f32.mrb[0].mxu0
  %v492 = vpop.f32.mrb[0].mxu0
  %v493 = vadd.f32 %v90, %v492
  %v494 = vpop.f32.mrb[0].mxu0
  %495 = vmatprep.mubr.bf16.mxu0 0
  %496 = vmatmul.mubr.bf16.gmra.mrb[0].mxu0 %v301
  %v497 = vpop.f32.mrb[0].mxu0
  %v498 = vadd.f32 %v90, %v497
  %v499 = vpop.f32.mrb[0].mxu0
  %v500 = vpop.f32.mrb[0].mxu0
  %v501 = vadd.f32 %v90, %v500
  %v502 = vpop.f32.mrb[0].mxu0
  %503 = vmatprep.mubr.bf16.mxu0 0
  %504 = vmatmul.mubr.bf16.gmra.mrb[0].mxu0 %v304
  %v505 = vpop.f32.mrb[0].mxu0
  %v506 = vadd.f32 %v90, %v505
  %v507 = vpop.f32.mrb[0].mxu0
  %v508 = vpop.f32.mrb[0].mxu0
  %v509 = vadd.f32 %v90, %v508
  %v510 = vpop.f32.mrb[0].mxu0
  %511 = vmatprep.mubr.bf16.mxu0 0
  %512 = vmatmul.mubr.bf16.gmra.mrb[0].mxu0 %v307
  %v513 = vpop.f32.mrb[0].mxu0
  %v514 = vadd.f32 %v90, %v513
  %v515 = vpop.f32.mrb[0].mxu0
  %v516 = vpop.f32.mrb[0].mxu0
  %v517 = vadd.f32 %v90, %v516
  %v518 = vpop.f32.mrb[0].mxu0
  %519 = vmatprep.mubr.bf16.mxu0 0
  %520 = vmatmul.mubr.bf16.gmra.mrb[0].mxu0 %v310
  %v521 = vpop.f32.mrb[0].mxu0
  %v522 = vadd.f32 %v90, %v521
  %v523 = vpop.f32.mrb[0].mxu0
  %v524 = vpop.f32.mrb[0].mxu0
  %v525 = vadd.f32 %v90, %v524
  %v526 = vpop.f32.mrb[0].mxu0
  %527 = vmatprep.mubr.bf16.mxu0 0
  %528 = vmatmul.mubr.bf16.gmra.mrb[0].mxu0 %v313
  %v529 = vpop.f32.mrb[0].mxu0
  %v530 = vadd.f32 %v90, %v529
  %v531 = vpop.f32.mrb[0].mxu0
  %v532 = vpop.f32.mrb[0].mxu0
  %v533 = vadd.f32 %v90, %v532
  %v534 = vpop.f32.mrb[0].mxu0
  %535 = vmatprep.mubr.bf16.mxu0 0
  %536 = vmatmul.mubr.bf16.gmra.mrb[0].mxu0 %v316
  %v537 = vpop.f32.mrb[0].mxu0
  %v538 = vadd.f32 %v90, %v537
  %v539 = vpop.f32.mrb[0].mxu0
  %v540 = vpop.f32.mrb[0].mxu0
  %v541 = vadd.f32 %v90, %v540
  %v542 = vpop.f32.mrb[0].mxu0
  %543 = vmatprep.mubr.bf16.mxu0 0
  %544 = vmatmul.mubr.bf16.gmra.mrb[0].mxu0 %v319
  %v545 = vpop.f32.mrb[0].mxu0
  %v546 = vadd.f32 %v90, %v545
  %v547 = vpop.f32.mrb[0].mxu0
  %v548 = vpop.f32.mrb[0].mxu0
  %v549 = vadd.f32 %v90, %v548
  %v550 = vpop.f32.mrb[0].mxu0
  %551 = vmatprep.mubr.bf16.mxu0 0
  %552 = vmatmul.mubr.bf16.gmra.mrb[0].mxu0 %v322
  %v553 = vpop.f32.mrb[0].mxu0
  %v554 = vadd.f32 %v90, %v553
  %v555 = vpop.f32.mrb[0].mxu0
  %v556 = vpop.f32.mrb[0].mxu0
  %v557 = vadd.f32 %v90, %v556
  %v558 = vpop.f32.mrb[0].mxu0
  %559 = vmatprep.mubr.bf16.mxu0 0
  %560 = vmatmul.mubr.bf16.gmra.mrb[0].mxu0 %v325
  %v561 = vpop.f32.mrb[0].mxu0
  %v562 = vadd.f32 %v90, %v561
  %v563 = vpop.f32.mrb[0].mxu0
  %v564 = vpop.f32.mrb[0].mxu0
  %v565 = vadd.f32 %v90, %v564
  %v566 = vpop.f32.mrb[0].mxu0
  %567 = vmatprep.mubr.bf16.mxu0 0
  %568 = vmatmul.mubr.bf16.gmra.mrb[0].mxu0 %v328
  %v569 = vpop.f32.mrb[0].mxu0
  %v570 = vadd.f32 %v90, %v569
  %v571 = vpop.f32.mrb[0].mxu0
  %v572 = vpop.f32.mrb[0].mxu0
  %v573 = vadd.f32 %v90, %v572
  %v574 = vpop.f32.mrb[0].mxu0
  %575 = vmatprep.mubr.bf16.mxu0 0
  %576 = vmatmul.mubr.bf16.gmra.mrb[0].mxu0 %v331
  %v577 = vpop.f32.mrb[0].mxu0
  %v578 = vadd.f32 %v90, %v577
  %v579 = vpop.f32.mrb[0].mxu0
  %v580 = vpop.f32.mrb[0].mxu0
  %v581 = vadd.f32 %v90, %v580
  %v582 = vpop.f32.mrb[0].mxu0
  %583 = vmatprep.mubr.bf16.mxu0 0
  %584 = vmatmul.mubr.bf16.gmra.mrb[0].mxu0 %v334
  %v585 = vpop.f32.mrb[0].mxu0
  %v586 = vadd.f32 %v90, %v585
  %v587 = vpop.f32.mrb[0].mxu0
  %v588 = vpop.f32.mrb[0].mxu0
  %v589 = vadd.f32 %v90, %v588
  %v590 = vpop.f32.mrb[0].mxu0
  %591 = vmatprep.mubr.bf16.mxu0 0
  %592 = vmatmul.mubr.bf16.gmra.mrb[0].mxu0 %v337
  %v593 = vpop.f32.mrb[0].mxu0
  %v594 = vadd.f32 %v90, %v593
  %v595 = vpop.f32.mrb[0].mxu0
  %v596 = vpop.f32.mrb[0].mxu0
  %v597 = vadd.f32 %v90, %v596
  %v598 = vpop.f32.mrb[0].mxu0
  %599 = vmatprep.mubr.bf16.mxu0 0
  %600 = vmatmul.mubr.bf16.gmra.mrb[0].mxu0 %v340
  %v601 = vpop.f32.mrb[0].mxu0
  %v602 = vadd.f32 %v90, %v601
  %v603 = vpop.f32.mrb[0].mxu0
  %v604 = vpop.f32.mrb[0].mxu0
  %v605 = vadd.f32 %v90, %v604
  %v606 = vpop.f32.mrb[0].mxu0
  %607 = vmatprep.mubr.bf16.mxu0 0
  %608 = vmatmul.mubr.bf16.gmra.mrb[0].mxu0 %v343
  %v609 = vpop.f32.mrb[0].mxu0
  %v610 = vadd.f32 %v90, %v609
  %v611 = vpop.f32.mrb[0].mxu0
  %v612 = vpop.f32.mrb[0].mxu0
  %v613 = vadd.f32 %v90, %v612
  %v614 = vpop.f32.mrb[0].mxu0
  %615 = vmatprep.mubr.bf16.mxu0 0
  %616 = vmatmul.mubr.bf16.gmra.mrb[0].mxu0 %v346
  %v617 = vpop.f32.mrb[0].mxu0
  %v618 = vadd.f32 %v90, %v617
  %v619 = vpop.f32.mrb[0].mxu0
  %v620 = vpop.f32.mrb[0].mxu0
  %v621 = vadd.f32 %v90, %v620
  %v622 = vpop.f32.mrb[0].mxu0
  %623 = vmatprep.mubr.bf16.mxu0 0
  %624 = vmatmul.mubr.bf16.gmra.mrb[0].mxu0 %v349
  %v625 = vpop.f32.mrb[0].mxu0
  %v626 = vadd.f32 %v90, %v625
  %v627 = vpop.f32.mrb[0].mxu0
  %v628 = vpop.f32.mrb[0].mxu0
  %v629 = vadd.f32 %v90, %v628
  %v630 = vpop.f32.mrb[0].mxu0
  %631 = vmatprep.mubr.bf16.mxu0 0
  %632 = vmatmul.mubr.bf16.gmra.mrb[0].mxu0 %v352
  %v633 = vpop.f32.mrb[0].mxu0
  %v634 = vadd.f32 %v90, %v633
  %v635 = vpop.f32.mrb[0].mxu0
  %v636 = vpop.f32.mrb[0].mxu0
  %v637 = vadd.f32 %v90, %v636
  %v638 = vpop.f32.mrb[0].mxu0
  %639 = vmatprep.mubr.bf16.mxu0 0
  %640 = vmatmul.mubr.bf16.gmra.mrb[0].mxu0 %v355
  %v641 = vpop.f32.mrb[0].mxu0
  %v642 = vadd.f32 %v90, %v641
  %v643 = vpop.f32.mrb[0].mxu0
  %v644 = vpop.f32.mrb[0].mxu0
  %v645 = vadd.f32 %v90, %v644
  %v646 = vpop.f32.mrb[0].mxu0
  %647 = vmatprep.mubr.bf16.mxu0 0
  %648 = vmatmul.mubr.bf16.gmra.mrb[0].mxu0 %v358
  %v649 = vpop.f32.mrb[0].mxu0
  %v650 = vadd.f32 %v90, %v649
  %v651 = vpop.f32.mrb[0].mxu0
  %v652 = vpop.f32.mrb[0].mxu0
  %v653 = vadd.f32 %v90, %v652
  %v654 = vpop.f32.mrb[0].mxu0
  %655 = vdwg.mxu0
  %656 = vst [vmem:[%s3] sm:$0xff] %v402
  %657 = vst [vmem:[%s3 + $0x8] sm:$0xff] %v405
  %658 = vst [vmem:[%s3 + $0x10] sm:$0xff] %v410
  %659 = vst [vmem:[%s3 + $0x18] sm:$0xff] %v413
  %660 = vst [vmem:[%s3 + $0x20] sm:$0xff] %v418
  %661 = vst [vmem:[%s3 + $0x28] sm:$0xff] %v421
  %662 = vst [vmem:[%s3 + $0x30] sm:$0xff] %v426
  %663 = vst [vmem:[%s3 + $0x38] sm:$0xff] %v429
  %664 = vst [vmem:[%s3 + $0x40] sm:$0xff] %v434
  %665 = vst [vmem:[%s3 + $0x48] sm:$0xff] %v437
  %666 = vst [vmem:[%s3 + $0x50] sm:$0xff] %v442
  %667 = vst [vmem:[%s3 + $0x58] sm:$0xff] %v445
  %668 = vst [vmem:[%s3 + $0x60] sm:$0xff] %v450
  %669 = vst [vmem:[%s3 + $0x68] sm:$0xff] %v453
  %670 = vst [vmem:[%s3 + $0x70] sm:$0xff] %v458
  %671 = vst [vmem:[%s3 + $0x78] sm:$0xff] %v461
  %672 = vst [vmem:[%s3 + $0x80] sm:$0xff] %v466
  %673 = vst [vmem:[%s3 + $0x88] sm:$0xff] %v469
  %674 = vst [vmem:[%s3 + $0x90] sm:$0xff] %v474
  %675 = vst [vmem:[%s3 + $0x98] sm:$0xff] %v477
  %676 = vst [vmem:[%s3 + $0xa0] sm:$0xff] %v482
  %677 = vst [vmem:[%s3 + $0xa8] sm:$0xff] %v485
  %678 = vst [vmem:[%s3 + $0xb0] sm:$0xff] %v490
  %679 = vst [vmem:[%s3 + $0xb8] sm:$0xff] %v493
  %680 = vst [vmem:[%s3 + $0xc0] sm:$0xff] %v498
  %681 = vst [vmem:[%s3 + $0xc8] sm:$0xff] %v501
  %682 = vst [vmem:[%s3 + $0xd0] sm:$0xff] %v506
  %683 = vst [vmem:[%s3 + $0xd8] sm:$0xff] %v509
  %684 = vst [vmem:[%s3 + $0xe0] sm:$0xff] %v514
  %685 = vst [vmem:[%s3 + $0xe8] sm:$0xff] %v517
  %686 = vst [vmem:[%s3 + $0xf0] sm:$0xff] %v522
  %687 = vst [vmem:[%s3 + $0xf8] sm:$0xff] %v525
  %688 = vst [vmem:[%s3 + $0x100] sm:$0xff] %v530
  %689 = vst [vmem:[%s3 + $0x108] sm:$0xff] %v533
  %690 = vst [vmem:[%s3 + $0x110] sm:$0xff] %v538
  %691 = vst [vmem:[%s3 + $0x118] sm:$0xff] %v541
  %692 = vst [vmem:[%s3 + $0x120] sm:$0xff] %v546
  %693 = vst [vmem:[%s3 + $0x128] sm:$0xff] %v549
  %694 = vst [vmem:[%s3 + $0x130] sm:$0xff] %v554
  %695 = vst [vmem:[%s3 + $0x138] sm:$0xff] %v557
  %696 = vst [vmem:[%s3 + $0x140] sm:$0xff] %v562
  %697 = vst [vmem:[%s3 + $0x148] sm:$0xff] %v565
  %698 = vst [vmem:[%s3 + $0x150] sm:$0xff] %v570
  %699 = vst [vmem:[%s3 + $0x158] sm:$0xff] %v573
  %700 = vst [vmem:[%s3 + $0x160] sm:$0xff] %v578
  %701 = vst [vmem:[%s3 + $0x168] sm:$0xff] %v581
  %702 = vst [vmem:[%s3 + $0x170] sm:$0xff] %v586
  %703 = vst [vmem:[%s3 + $0x178] sm:$0xff] %v589
  %704 = vst [vmem:[%s3 + $0x180] sm:$0xff] %v594
  %705 = vst [vmem:[%s3 + $0x188] sm:$0xff] %v597
  %706 = vst [vmem:[%s3 + $0x190] sm:$0xff] %v602
  %707 = vst [vmem:[%s3 + $0x198] sm:$0xff] %v605
  %708 = vst [vmem:[%s3 + $0x1a0] sm:$0xff] %v610
  %709 = vst [vmem:[%s3 + $0x1a8] sm:$0xff] %v613
  %710 = vst [vmem:[%s3 + $0x1b0] sm:$0xff] %v618
  %711 = vst [vmem:[%s3 + $0x1b8] sm:$0xff] %v621
  %712 = vst [vmem:[%s3 + $0x1c0] sm:$0xff] %v626
  %713 = vst [vmem:[%s3 + $0x1c8] sm:$0xff] %v629
  %714 = vst [vmem:[%s3 + $0x1d0] sm:$0xff] %v634
  %715 = vst [vmem:[%s3 + $0x1d8] sm:$0xff] %v637
  %716 = vst [vmem:[%s3 + $0x1e0] sm:$0xff] %v642
  %717 = vst [vmem:[%s3 + $0x1e8] sm:$0xff] %v645
  %718 = vst [vmem:[%s3 + $0x1f0] sm:$0xff] %v650
  %719 = vst [vmem:[%s3 + $0x1f8] sm:$0xff] %v653
  %v720 = vadd.f32 %v402, %v405
  %v721 = vadd.f32 %v720, %v410
  %v722 = vadd.f32 %v721, %v413
  %v723 = vadd.f32 %v722, %v418
  %v724 = vadd.f32 %v723, %v421
  %v725 = vadd.f32 %v724, %v426
  %v726 = vadd.f32 %v725, %v429
  %v727 = vadd.f32 %v726, %v434
  %v728 = vadd.f32 %v727, %v437
  %v729 = vadd.f32 %v728, %v442
  %v730 = vadd.f32 %v729, %v445
  %v731 = vadd.f32 %v730, %v450
  %v732 = vadd.f32 %v731, %v453
  %v733 = vadd.f32 %v732, %v458
  %v734 = vadd.f32 %v733, %v461
  %v735 = vadd.f32 %v734, %v466
  %v736 = vadd.f32 %v735, %v469
  %v737 = vadd.f32 %v736, %v474
  %v738 = vadd.f32 %v737, %v477
  %v739 = vadd.f32 %v738, %v482
  %v740 = vadd.f32 %v739, %v485
  %v741 = vadd.f32 %v740, %v490
  %v742 = vadd.f32 %v741, %v493
  %v743 = vadd.f32 %v742, %v498
  %v744 = vadd.f32 %v743, %v501
  %v745 = vadd.f32 %v744, %v506
  %v746 = vadd.f32 %v745, %v509
  %v747 = vadd.f32 %v746, %v514
  %v748 = vadd.f32 %v747, %v517
  %v749 = vadd.f32 %v748, %v522
  %v750 = vadd.f32 %v749, %v525
  %v751 = vadd.f32 %v750, %v530
  %v752 = vadd.f32 %v751, %v533
  %v753 = vadd.f32 %v752, %v538
  %v754 = vadd.f32 %v753, %v541
  %v755 = vadd.f32 %v754, %v546
  %v756 = vadd.f32 %v755, %v549
  %v757 = vadd.f32 %v756, %v554
  %v758 = vadd.f32 %v757, %v557
  %v759 = vadd.f32 %v758, %v562
  %v760 = vadd.f32 %v759, %v565
  %v761 = vadd.f32 %v760, %v570
  %v762 = vadd.f32 %v761, %v573
  %v763 = vadd.f32 %v762, %v578
  %v764 = vadd.f32 %v763, %v581
  %v765 = vadd.f32 %v764, %v586
  %v766 = vadd.f32 %v765, %v589
  %v767 = vadd.f32 %v766, %v594
  %v768 = vadd.f32 %v767, %v597
  %v769 = vadd.f32 %v768, %v602
  %v770 = vadd.f32 %v769, %v605
  %v771 = vadd.f32 %v770, %v610
  %v772 = vadd.f32 %v771, %v613
  %v773 = vadd.f32 %v772, %v618
  %v774 = vadd.f32 %v773, %v621
  %v775 = vadd.f32 %v774, %v626
  %v776 = vadd.f32 %v775, %v629
  %v777 = vadd.f32 %v776, %v634
  %v778 = vadd.f32 %v777, %v637
  %v779 = vadd.f32 %v778, %v642
  %v780 = vadd.f32 %v779, %v645
  %v781 = vadd.f32 %v780, %v650
  %v782 = vadd.f32 %v781, %v653
  %v783 = vrot.slane %v782, 4
  %v784 = vadd.f32 %v782, %v783
  %v785 = vrot.slane %v784, 2
  %v786 = vadd.f32 %v784, %v785
  %v787 = vrot.slane %v786, 1
  %v788 = vadd.f32 %v786, %v787
  %v789 = vmul.f32 %v402, %v402
  %v790 = vmul.f32 %v405, %v405
  %v791 = vmul.f32 %v410, %v410
  %v792 = vmul.f32 %v413, %v413
  %v793 = vmul.f32 %v418, %v418
  %v794 = vmul.f32 %v421, %v421
  %v795 = vmul.f32 %v426, %v426
  %v796 = vmul.f32 %v429, %v429
  %v797 = vmul.f32 %v434, %v434
  %v798 = vmul.f32 %v437, %v437
  %v799 = vmul.f32 %v442, %v442
  %v800 = vmul.f32 %v445, %v445
  %v801 = vmul.f32 %v450, %v450
  %v802 = vmul.f32 %v453, %v453
  %v803 = vmul.f32 %v458, %v458
  %v804 = vmul.f32 %v461, %v461
  %v805 = vmul.f32 %v466, %v466
  %v806 = vmul.f32 %v469, %v469
  %v807 = vmul.f32 %v474, %v474
  %v808 = vmul.f32 %v477, %v477
  %v809 = vmul.f32 %v482, %v482
  %v810 = vmul.f32 %v485, %v485
  %v811 = vmul.f32 %v490, %v490
  %v812 = vmul.f32 %v493, %v493
  %v813 = vmul.f32 %v498, %v498
  %v814 = vmul.f32 %v501, %v501
  %v815 = vmul.f32 %v506, %v506
  %v816 = vmul.f32 %v509, %v509
  %v817 = vmul.f32 %v514, %v514
  %v818 = vmul.f32 %v517, %v517
  %v819 = vmul.f32 %v522, %v522
  %v820 = vmul.f32 %v525, %v525
  %v821 = vmul.f32 %v530, %v530
  %v822 = vmul.f32 %v533, %v533
  %v823 = vmul.f32 %v538, %v538
  %v824 = vmul.f32 %v541, %v541
  %v825 = vmul.f32 %v546, %v546
  %v826 = vmul.f32 %v549, %v549
  %v827 = vmul.f32 %v554, %v554
  %v828 = vmul.f32 %v557, %v557
  %v829 = vmul.f32 %v562, %v562
  %v830 = vmul.f32 %v565, %v565
  %v831 = vmul.f32 %v570, %v570
  %v832 = vmul.f32 %v573, %v573
  %v833 = vmul.f32 %v578, %v578
  %v834 = vmul.f32 %v581, %v581
  %v835 = vmul.f32 %v586, %v586
  %v836 = vmul.f32 %v589, %v589
  %v837 = vmul.f32 %v594, %v594
  %v838 = vmul.f32 %v597, %v597
  %v839 = vmul.f32 %v602, %v602
  %v840 = vmul.f32 %v605, %v605
  %v841 = vmul.f32 %v610, %v610
  %v842 = vmul.f32 %v613, %v613
  %v843 = vmul.f32 %v618, %v618
  %v844 = vmul.f32 %v621, %v621
  %v845 = vmul.f32 %v626, %v626
  %v846 = vmul.f32 %v629, %v629
  %v847 = vmul.f32 %v634, %v634
  %v848 = vmul.f32 %v637, %v637
  %v849 = vmul.f32 %v642, %v642
  %v850 = vmul.f32 %v645, %v645
  %v851 = vmul.f32 %v650, %v650
  %v852 = vmul.f32 %v653, %v653
  %v853 = vadd.f32 %v789, %v790
  %v854 = vadd.f32 %v853, %v791
  %v855 = vadd.f32 %v854, %v792
  %v856 = vadd.f32 %v855, %v793
  %v857 = vadd.f32 %v856, %v794
  %v858 = vadd.f32 %v857, %v795
  %v859 = vadd.f32 %v858, %v796
  %v860 = vadd.f32 %v859, %v797
  %v861 = vadd.f32 %v860, %v798
  %v862 = vadd.f32 %v861, %v799
  %v863 = vadd.f32 %v862, %v800
  %v864 = vadd.f32 %v863, %v801
  %v865 = vadd.f32 %v864, %v802
  %v866 = vadd.f32 %v865, %v803
  %v867 = vadd.f32 %v866, %v804
  %v868 = vadd.f32 %v867, %v805
  %v869 = vadd.f32 %v868, %v806
  %v870 = vadd.f32 %v869, %v807
  %v871 = vadd.f32 %v870, %v808
  %v872 = vadd.f32 %v871, %v809
  %v873 = vadd.f32 %v872, %v810
  %v874 = vadd.f32 %v873, %v811
  %v875 = vadd.f32 %v874, %v812
  %v876 = vadd.f32 %v875, %v813
  %v877 = vadd.f32 %v876, %v814
  %v878 = vadd.f32 %v877, %v815
  %v879 = vadd.f32 %v878, %v816
  %v880 = vadd.f32 %v879, %v817
  %v881 = vadd.f32 %v880, %v818
  %v882 = vadd.f32 %v881, %v819
  %v883 = vadd.f32 %v882, %v820
  %v884 = vadd.f32 %v883, %v821
  %v885 = vadd.f32 %v884, %v822
  %v886 = vadd.f32 %v885, %v823
  %v887 = vadd.f32 %v886, %v824
  %v888 = vadd.f32 %v887, %v825
  %v889 = vadd.f32 %v888, %v826
  %v890 = vadd.f32 %v889, %v827
  %v891 = vadd.f32 %v890, %v828
  %v892 = vadd.f32 %v891, %v829
  %v893 = vadd.f32 %v892, %v830
  %v894 = vadd.f32 %v893, %v831
  %v895 = vadd.f32 %v894, %v832
  %v896 = vadd.f32 %v895, %v833
  %v897 = vadd.f32 %v896, %v834
  %v898 = vadd.f32 %v897, %v835
  %v899 = vadd.f32 %v898, %v836
  %v900 = vadd.f32 %v899, %v837
  %v901 = vadd.f32 %v900, %v838
  %v902 = vadd.f32 %v901, %v839
  %v903 = vadd.f32 %v902, %v840
  %v904 = vadd.f32 %v903, %v841
  %v905 = vadd.f32 %v904, %v842
  %v906 = vadd.f32 %v905, %v843
  %v907 = vadd.f32 %v906, %v844
  %v908 = vadd.f32 %v907, %v845
  %v909 = vadd.f32 %v908, %v846
  %v910 = vadd.f32 %v909, %v847
  %v911 = vadd.f32 %v910, %v848
  %v912 = vadd.f32 %v911, %v849
  %v913 = vadd.f32 %v912, %v850
  %v914 = vadd.f32 %v913, %v851
  %v915 = vadd.f32 %v914, %v852
  %v916 = vrot.slane %v915, 4
  %v917 = vadd.f32 %v915, %v916
  %v918 = vrot.slane %v917, 2
  %v919 = vadd.f32 %v917, %v918
  %v920 = vrot.slane %v919, 1
  %v921 = vadd.f32 %v919, %v920
  %vm922 = vcmask 1040384
  %v923 = vsel %vm922, %v788, %v921
  %p924 = scmp.eq.s32.totalorder 0, 0
  // Predicated region
  $region14: #{vae_forward.14} parent=0 // pred_check
    %p925 = pneg %p924
  $region15: #{vae_forward.14} parent=0 // pred_check_branch
    %927 = sbr.rel (%p925) target = $region17
  $region16: #{vae_forward.14} parent=0 // pred_region
    %928 = vst [vmem:[%s4] sm:$0x3] 0.0
  $region17: #{vae_forward.14} parent=0 // pred_fallthru
    _
  %v929 = vld [vmem:[%s4] sm:$0x3]
  %v930 = vadd.f32 %v929, %v923
  %931 = vst [vmem:[%s4] sm:$0x3] %v930
  // Predicated region
  $region18: #{vae_forward.14} parent=0 // pred_check
    _
  $region19: #{vae_forward.14} parent=0 // pred_check_branch
    %933 = sbr.rel (0) target = $region21
  $region20: #{vae_forward.14} parent=0 // pred_region
    _
  $region21: #{vae_forward.14} parent=0 // pred_fallthru
    _
  // Predicated region
  $region22: #{vae_forward.14} parent=0 // pred_check
    _
  $region23: #{vae_forward.14} parent=0 // pred_check_branch
    %935 = sbr.rel (0) target = $region25
  $region24: #{vae_forward.14} parent=0 // pred_region
    _
  $region25: #{vae_forward.14} parent=0 // pred_fallthru
    _
  // Predicated region
  $region26: #{vae_forward.14} parent=0 // pred_check
    _
  $region27: #{vae_forward.14} parent=0 // pred_check_branch
    %937 = sbr.rel (0) target = $region29
  $region28: #{vae_forward.14} parent=0 // pred_region
    _
  $region29: #{vae_forward.14} parent=0 // pred_fallthru
    _
  // Predicated region
  $region30: #{vae_forward.14} parent=0 // pred_check
    _
  $region31: #{vae_forward.14} parent=0 // pred_check_branch
    %939 = sbr.rel (0) target = $region33
  $region32: #{vae_forward.14} parent=0 // pred_region
    _
  $region33: #{vae_forward.14} parent=0 // pred_fallthru
    _

// kernel: vae_forward.15
$region0: #{vae_forward.15}
  #allocation0 [shape = 'u32[]', space=smem, size = 0x4, offset = 0x4, fixed_abs, tag = 'smem constant byte address 0x4 - core index']
  #allocation1 [shape = 'u32[144,128]{1,0:T(1,128)}', space=vmem, size = 0x12000, scoped, tag = 'internal scratch']
  %s0 = inlined_call_operand.vmem [shape: f32[512,128], index: 0, kind: input, shape index: {}]
  %s1 = inlined_call_operand.vmem [shape: f32[1,128], index: 1, kind: input, shape index: {}]
  %s2 = inlined_call_operand.vmem [shape: f32[1,128], index: 2, kind: input, shape index: {}]
  %s3 = inlined_call_operand.vmem [shape: bf16[512,128], index: 3, kind: output, shape index: {}]
  %s4 = sld [smem:[#allocation0]]
  $region22: #{vae_forward.15} parent=0
    _
  %s6 = ssub.s32 1, %s4
  %s7 = scalar_select 0, %s6, %s4
  // Predicated region
  $region2: #{vae_forward.15} parent=0 // pred_check
    _
  $region3: #{vae_forward.15} parent=0 // pred_check_branch
    %9 = sbr.rel (0) target = $region5
  $region4: #{vae_forward.15} parent=0 // pred_region
    _
  $region5: #{vae_forward.15} parent=0 // pred_fallthru
    _
  // Predicated region
  $region6: #{vae_forward.15} parent=0 // pred_check
    _
  $region7: #{vae_forward.15} parent=0 // pred_check_branch
    %11 = sbr.rel (0) target = $region9
  $region8: #{vae_forward.15} parent=0 // pred_region
    _
  $region9: #{vae_forward.15} parent=0 // pred_fallthru
    _
  // Predicated region
  $region10: #{vae_forward.15} parent=0 // pred_check
    _
  $region11: #{vae_forward.15} parent=0 // pred_check_branch
    %13 = sbr.rel (0) target = $region13
  $region12: #{vae_forward.15} parent=0 // pred_region
    _
  $region13: #{vae_forward.15} parent=0 // pred_fallthru
    _
  %v14 = vld [vmem:[%s0] sm:$0xff]
  %v15 = vld [vmem:[%s0 + $0x8] sm:$0xff]
  %v16 = vld [vmem:[%s0 + $0x10] sm:$0xff]
  %v17 = vld [vmem:[%s0 + $0x18] sm:$0xff]
  %v18 = vld [vmem:[%s0 + $0x20] sm:$0xff]
  %v19 = vld [vmem:[%s0 + $0x28] sm:$0xff]
  %v20 = vld [vmem:[%s0 + $0x30] sm:$0xff]
  %v21 = vld [vmem:[%s0 + $0x38] sm:$0xff]
  %v22 = vld [vmem:[%s0 + $0x40] sm:$0xff]
  %v23 = vld [vmem:[%s0 + $0x48] sm:$0xff]
  %v24 = vld [vmem:[%s0 + $0x50] sm:$0xff]
  %v25 = vld [vmem:[%s0 + $0x58] sm:$0xff]
  %v26 = vld [vmem:[%s0 + $0x60] sm:$0xff]
  %v27 = vld [vmem:[%s0 + $0x68] sm:$0xff]
  %v28 = vld [vmem:[%s0 + $0x70] sm:$0xff]
  %v29 = vld [vmem:[%s0 + $0x78] sm:$0xff]
  %v30 = vld [vmem:[%s0 + $0x80] sm:$0xff]
  %v31 = vld [vmem:[%s0 + $0x88] sm:$0xff]
  %v32 = vld [vmem:[%s0 + $0x90] sm:$0xff]
  %v33 = vld [vmem:[%s0 + $0x98] sm:$0xff]
  %v34 = vld [vmem:[%s0 + $0xa0] sm:$0xff]
  %v35 = vld [vmem:[%s0 + $0xa8] sm:$0xff]
  %v36 = vld [vmem:[%s0 + $0xb0] sm:$0xff]
  %v37 = vld [vmem:[%s0 + $0xb8] sm:$0xff]
  %v38 = vld [vmem:[%s0 + $0xc0] sm:$0xff]
  %v39 = vld [vmem:[%s0 + $0xc8] sm:$0xff]
  %v40 = vld [vmem:[%s0 + $0xd0] sm:$0xff]
  %v41 = vld [vmem:[%s0 + $0xd8] sm:$0xff]
  %v42 = vld [vmem:[%s0 + $0xe0] sm:$0xff]
  %v43 = vld [vmem:[%s0 + $0xe8] sm:$0xff]
  %v44 = vld [vmem:[%s0 + $0xf0] sm:$0xff]
  %v45 = vld [vmem:[%s0 + $0xf8] sm:$0xff]
  %v46 = vld [vmem:[%s0 + $0x100] sm:$0xff]
  %v47 = vld [vmem:[%s0 + $0x108] sm:$0xff]
  %v48 = vld [vmem:[%s0 + $0x110] sm:$0xff]
  %v49 = vld [vmem:[%s0 + $0x118] sm:$0xff]
  %v50 = vld [vmem:[%s0 + $0x120] sm:$0xff]
  %v51 = vld [vmem:[%s0 + $0x128] sm:$0xff]
  %v52 = vld [vmem:[%s0 + $0x130] sm:$0xff]
  %v53 = vld [vmem:[%s0 + $0x138] sm:$0xff]
  %v54 = vld [vmem:[%s0 + $0x140] sm:$0xff]
  %v55 = vld [vmem:[%s0 + $0x148] sm:$0xff]
  %v56 = vld [vmem:[%s0 + $0x150] sm:$0xff]
  %v57 = vld [vmem:[%s0 + $0x158] sm:$0xff]
  %v58 = vld [vmem:[%s0 + $0x160] sm:$0xff]
  %v59 = vld [vmem:[%s0 + $0x168] sm:$0xff]
  %v60 = vld [vmem:[%s0 + $0x170] sm:$0xff]
  %v61 = vld [vmem:[%s0 + $0x178] sm:$0xff]
  %v62 = vld [vmem:[%s0 + $0x180] sm:$0xff]
  %v63 = vld [vmem:[%s0 + $0x188] sm:$0xff]
  %v64 = vld [vmem:[%s0 + $0x190] sm:$0xff]
  %v65 = vld [vmem:[%s0 + $0x198] sm:$0xff]
  %v66 = vld [vmem:[%s0 + $0x1a0] sm:$0xff]
  %v67 = vld [vmem:[%s0 + $0x1a8] sm:$0xff]
  %v68 = vld [vmem:[%s0 + $0x1b0] sm:$0xff]
  %v69 = vld [vmem:[%s0 + $0x1b8] sm:$0xff]
  %v70 = vld [vmem:[%s0 + $0x1c0] sm:$0xff]
  %v71 = vld [vmem:[%s0 + $0x1c8] sm:$0xff]
  %v72 = vld [vmem:[%s0 + $0x1d0] sm:$0xff]
  %v73 = vld [vmem:[%s0 + $0x1d8] sm:$0xff]
  %v74 = vld [vmem:[%s0 + $0x1e0] sm:$0xff]
  %v75 = vld [vmem:[%s0 + $0x1e8] sm:$0xff]
  %v76 = vld [vmem:[%s0 + $0x1f0] sm:$0xff]
  %v77 = vld [vmem:[%s0 + $0x1f8] sm:$0xff]
  %v78 = vld [vmem:[%s1] sm:$0x1]
  %v80 = vlaneseq
  %v81 = vshrl.u32 %v80, 7
  %v82 = vsub.s32 0, %v81
  %v83 = vrot.slane %v78, %v82
  %v85 = vmul.f32 %v14, %v83
  %v86 = vmul.f32 %v15, %v83
  %v87 = vmul.f32 %v16, %v83
  %v88 = vmul.f32 %v17, %v83
  %v89 = vmul.f32 %v18, %v83
  %v90 = vmul.f32 %v19, %v83
  %v91 = vmul.f32 %v20, %v83
  %v92 = vmul.f32 %v21, %v83
  %v93 = vmul.f32 %v22, %v83
  %v94 = vmul.f32 %v23, %v83
  %v95 = vmul.f32 %v24, %v83
  %v96 = vmul.f32 %v25, %v83
  %v97 = vmul.f32 %v26, %v83
  %v98 = vmul.f32 %v27, %v83
  %v99 = vmul.f32 %v28, %v83
  %v100 = vmul.f32 %v29, %v83
  %v101 = vmul.f32 %v30, %v83
  %v102 = vmul.f32 %v31, %v83
  %v103 = vmul.f32 %v32, %v83
  %v104 = vmul.f32 %v33, %v83
  %v105 = vmul.f32 %v34, %v83
  %v106 = vmul.f32 %v35, %v83
  %v107 = vmul.f32 %v36, %v83
  %v108 = vmul.f32 %v37, %v83
  %v109 = vmul.f32 %v38, %v83
  %v110 = vmul.f32 %v39, %v83
  %v111 = vmul.f32 %v40, %v83
  %v112 = vmul.f32 %v41, %v83
  %v113 = vmul.f32 %v42, %v83
  %v114 = vmul.f32 %v43, %v83
  %v115 = vmul.f32 %v44, %v83
  %v116 = vmul.f32 %v45, %v83
  %v117 = vmul.f32 %v46, %v83
  %v118 = vmul.f32 %v47, %v83
  %v119 = vmul.f32 %v48, %v83
  %v120 = vmul.f32 %v49, %v83
  %v121 = vmul.f32 %v50, %v83
  %v122 = vmul.f32 %v51, %v83
  %v123 = vmul.f32 %v52, %v83
  %v124 = vmul.f32 %v53, %v83
  %v125 = vmul.f32 %v54, %v83
  %v126 = vmul.f32 %v55, %v83
  %v127 = vmul.f32 %v56, %v83
  %v128 = vmul.f32 %v57, %v83
  %v129 = vmul.f32 %v58, %v83
  %v130 = vmul.f32 %v59, %v83
  %v131 = vmul.f32 %v60, %v83
  %v132 = vmul.f32 %v61, %v83
  %v133 = vmul.f32 %v62, %v83
  %v134 = vmul.f32 %v63, %v83
  %v135 = vmul.f32 %v64, %v83
  %v136 = vmul.f32 %v65, %v83
  %v137 = vmul.f32 %v66, %v83
  %v138 = vmul.f32 %v67, %v83
  %v139 = vmul.f32 %v68, %v83
  %v140 = vmul.f32 %v69, %v83
  %v141 = vmul.f32 %v70, %v83
  %v142 = vmul.f32 %v71, %v83
  %v143 = vmul.f32 %v72, %v83
  %v144 = vmul.f32 %v73, %v83
  %v145 = vmul.f32 %v74, %v83
  %v146 = vmul.f32 %v75, %v83
  %v147 = vmul.f32 %v76, %v83
  %v148 = vmul.f32 %v77, %v83
  %v149 = vld [vmem:[%s2] sm:$0x1]
  %v151 = vlaneseq
  %v152 = vshrl.u32 %v151, 7
  %v153 = vsub.s32 0, %v152
  %v154 = vrot.slane %v149, %v153
  %v156 = vadd.f32 %v85, %v154
  %v157 = vadd.f32 %v86, %v154
  %v158 = vadd.f32 %v87, %v154
  %v159 = vadd.f32 %v88, %v154
  %v160 = vadd.f32 %v89, %v154
  %v161 = vadd.f32 %v90, %v154
  %v162 = vadd.f32 %v91, %v154
  %v163 = vadd.f32 %v92, %v154
  %v164 = vadd.f32 %v93, %v154
  %v165 = vadd.f32 %v94, %v154
  %v166 = vadd.f32 %v95, %v154
  %v167 = vadd.f32 %v96, %v154
  %v168 = vadd.f32 %v97, %v154
  %v169 = vadd.f32 %v98, %v154
  %v170 = vadd.f32 %v99, %v154
  %v171 = vadd.f32 %v100, %v154
  %v172 = vadd.f32 %v101, %v154
  %v173 = vadd.f32 %v102, %v154
  %v174 = vadd.f32 %v103, %v154
  %v175 = vadd.f32 %v104, %v154
  %v176 = vadd.f32 %v105, %v154
  %v177 = vadd.f32 %v106, %v154
  %v178 = vadd.f32 %v107, %v154
  %v179 = vadd.f32 %v108, %v154
  %v180 = vadd.f32 %v109, %v154
  %v181 = vadd.f32 %v110, %v154
  %v182 = vadd.f32 %v111, %v154
  %v183 = vadd.f32 %v112, %v154
  %v184 = vadd.f32 %v113, %v154
  %v185 = vadd.f32 %v114, %v154
  %v186 = vadd.f32 %v115, %v154
  %v187 = vadd.f32 %v116, %v154
  %v188 = vadd.f32 %v117, %v154
  %v189 = vadd.f32 %v118, %v154
  %v190 = vadd.f32 %v119, %v154
  %v191 = vadd.f32 %v120, %v154
  %v192 = vadd.f32 %v121, %v154
  %v193 = vadd.f32 %v122, %v154
  %v194 = vadd.f32 %v123, %v154
  %v195 = vadd.f32 %v124, %v154
  %v196 = vadd.f32 %v125, %v154
  %v197 = vadd.f32 %v126, %v154
  %v198 = vadd.f32 %v127, %v154
  %v199 = vadd.f32 %v128, %v154
  %v200 = vadd.f32 %v129, %v154
  %v201 = vadd.f32 %v130, %v154
  %v202 = vadd.f32 %v131, %v154
  %v203 = vadd.f32 %v132, %v154
  %v204 = vadd.f32 %v133, %v154
  %v205 = vadd.f32 %v134, %v154
  %v206 = vadd.f32 %v135, %v154
  %v207 = vadd.f32 %v136, %v154
  %v208 = vadd.f32 %v137, %v154
  %v209 = vadd.f32 %v138, %v154
  %v210 = vadd.f32 %v139, %v154
  %v211 = vadd.f32 %v140, %v154
  %v212 = vadd.f32 %v141, %v154
  %v213 = vadd.f32 %v142, %v154
  %v214 = vadd.f32 %v143, %v154
  %v215 = vadd.f32 %v144, %v154
  %v216 = vadd.f32 %v145, %v154
  %v217 = vadd.f32 %v146, %v154
  %v218 = vadd.f32 %v147, %v154
  %v219 = vadd.f32 %v148, %v154
  %v220 = vmax.f32 %v156, 0.0
  %v221 = vmax.f32 %v157, 0.0
  %v222 = vmax.f32 %v158, 0.0
  %v223 = vmax.f32 %v159, 0.0
  %v224 = vmax.f32 %v160, 0.0
  %v225 = vmax.f32 %v161, 0.0
  %v226 = vmax.f32 %v162, 0.0
  %v227 = vmax.f32 %v163, 0.0
  %v228 = vmax.f32 %v164, 0.0
  %v229 = vmax.f32 %v165, 0.0
  %v230 = vmax.f32 %v166, 0.0
  %v231 = vmax.f32 %v167, 0.0
  %v232 = vmax.f32 %v168, 0.0
  %v233 = vmax.f32 %v169, 0.0
  %v234 = vmax.f32 %v170, 0.0
  %v235 = vmax.f32 %v171, 0.0
  %v236 = vmax.f32 %v172, 0.0
  %v237 = vmax.f32 %v173, 0.0
  %v238 = vmax.f32 %v174, 0.0
  %v239 = vmax.f32 %v175, 0.0
  %v240 = vmax.f32 %v176, 0.0
  %v241 = vmax.f32 %v177, 0.0
  %v242 = vmax.f32 %v178, 0.0
  %v243 = vmax.f32 %v179, 0.0
  %v244 = vmax.f32 %v180, 0.0
  %v245 = vmax.f32 %v181, 0.0
  %v246 = vmax.f32 %v182, 0.0
  %v247 = vmax.f32 %v183, 0.0
  %v248 = vmax.f32 %v184, 0.0
  %v249 = vmax.f32 %v185, 0.0
  %v250 = vmax.f32 %v186, 0.0
  %v251 = vmax.f32 %v187, 0.0
  %v252 = vmax.f32 %v188, 0.0
  %v253 = vmax.f32 %v189, 0.0
  %v254 = vmax.f32 %v190, 0.0
  %v255 = vmax.f32 %v191, 0.0
  %v256 = vmax.f32 %v192, 0.0
  %v257 = vmax.f32 %v193, 0.0
  %v258 = vmax.f32 %v194, 0.0
  %v259 = vmax.f32 %v195, 0.0
  %v260 = vmax.f32 %v196, 0.0
  %v261 = vmax.f32 %v197, 0.0
  %v262 = vmax.f32 %v198, 0.0
  %v263 = vmax.f32 %v199, 0.0
  %v264 = vmax.f32 %v200, 0.0
  %v265 = vmax.f32 %v201, 0.0
  %v266 = vmax.f32 %v202, 0.0
  %v267 = vmax.f32 %v203, 0.0
  %v268 = vmax.f32 %v204, 0.0
  %v269 = vmax.f32 %v205, 0.0
  %v270 = vmax.f32 %v206, 0.0
  %v271 = vmax.f32 %v207, 0.0
  %v272 = vmax.f32 %v208, 0.0
  %v273 = vmax.f32 %v209, 0.0
  %v274 = vmax.f32 %v210, 0.0
  %v275 = vmax.f32 %v211, 0.0
  %v276 = vmax.f32 %v212, 0.0
  %v277 = vmax.f32 %v213, 0.0
  %v278 = vmax.f32 %v214, 0.0
  %v279 = vmax.f32 %v215, 0.0
  %v280 = vmax.f32 %v216, 0.0
  %v281 = vmax.f32 %v217, 0.0
  %v282 = vmax.f32 %v218, 0.0
  %v283 = vmax.f32 %v219, 0.0
  %v284 = vpack.c.bf16 %v221, %v220
  %v285 = vpack.c.bf16 %v223, %v222
  %v286 = vpack.c.bf16 %v225, %v224
  %v287 = vpack.c.bf16 %v227, %v226
  %v288 = vpack.c.bf16 %v229, %v228
  %v289 = vpack.c.bf16 %v231, %v230
  %v290 = vpack.c.bf16 %v233, %v232
  %v291 = vpack.c.bf16 %v235, %v234
  %v292 = vpack.c.bf16 %v237, %v236
  %v293 = vpack.c.bf16 %v239, %v238
  %v294 = vpack.c.bf16 %v241, %v240
  %v295 = vpack.c.bf16 %v243, %v242
  %v296 = vpack.c.bf16 %v245, %v244
  %v297 = vpack.c.bf16 %v247, %v246
  %v298 = vpack.c.bf16 %v249, %v248
  %v299 = vpack.c.bf16 %v251, %v250
  %v300 = vpack.c.bf16 %v253, %v252
  %v301 = vpack.c.bf16 %v255, %v254
  %v302 = vpack.c.bf16 %v257, %v256
  %v303 = vpack.c.bf16 %v259, %v258
  %v304 = vpack.c.bf16 %v261, %v260
  %v305 = vpack.c.bf16 %v263, %v262
  %v306 = vpack.c.bf16 %v265, %v264
  %v307 = vpack.c.bf16 %v267, %v266
  %v308 = vpack.c.bf16 %v269, %v268
  %v309 = vpack.c.bf16 %v271, %v270
  %v310 = vpack.c.bf16 %v273, %v272
  %v311 = vpack.c.bf16 %v275, %v274
  %v312 = vpack.c.bf16 %v277, %v276
  %v313 = vpack.c.bf16 %v279, %v278
  %v314 = vpack.c.bf16 %v281, %v280
  %v315 = vpack.c.bf16 %v283, %v282
  %v348 = vunpack.c.l.b16 %v284
  %v349 = vunpack.c.h.b16 %v284
  %v350 = vunpack.c.l.b16 %v285
  %v351 = vunpack.c.h.b16 %v285
  %v352 = vunpack.c.l.b16 %v286
  %v353 = vunpack.c.h.b16 %v286
  %v354 = vunpack.c.l.b16 %v287
  %v355 = vunpack.c.h.b16 %v287
  %v356 = vunpack.c.l.b16 %v288
  %v357 = vunpack.c.h.b16 %v288
  %v358 = vunpack.c.l.b16 %v289
  %v359 = vunpack.c.h.b16 %v289
  %v360 = vunpack.c.l.b16 %v290
  %v361 = vunpack.c.h.b16 %v290
  %v362 = vunpack.c.l.b16 %v291
  %v363 = vunpack.c.h.b16 %v291
  %v364 = vunpack.c.l.b16 %v292
  %v365 = vunpack.c.h.b16 %v292
  %v366 = vunpack.c.l.b16 %v293
  %v367 = vunpack.c.h.b16 %v293
  %v368 = vunpack.c.l.b16 %v294
  %v369 = vunpack.c.h.b16 %v294
  %v370 = vunpack.c.l.b16 %v295
  %v371 = vunpack.c.h.b16 %v295
  %v372 = vunpack.c.l.b16 %v296
  %v373 = vunpack.c.h.b16 %v296
  %v374 = vunpack.c.l.b16 %v297
  %v375 = vunpack.c.h.b16 %v297
  %v376 = vunpack.c.l.b16 %v298
  %v377 = vunpack.c.h.b16 %v298
  %v378 = vunpack.c.l.b16 %v299
  %v379 = vunpack.c.h.b16 %v299
  %v380 = vunpack.c.l.b16 %v300
  %v381 = vunpack.c.h.b16 %v300
  %v382 = vunpack.c.l.b16 %v301
  %v383 = vunpack.c.h.b16 %v301
  %v384 = vunpack.c.l.b16 %v302
  %v385 = vunpack.c.h.b16 %v302
  %v386 = vunpack.c.l.b16 %v303
  %v387 = vunpack.c.h.b16 %v303
  %v388 = vunpack.c.l.b16 %v304
  %v389 = vunpack.c.h.b16 %v304
  %v390 = vunpack.c.l.b16 %v305
  %v391 = vunpack.c.h.b16 %v305
  %v392 = vunpack.c.l.b16 %v306
  %v393 = vunpack.c.h.b16 %v306
  %v394 = vunpack.c.l.b16 %v307
  %v395 = vunpack.c.h.b16 %v307
  %v396 = vunpack.c.l.b16 %v308
  %v397 = vunpack.c.h.b16 %v308
  %v398 = vunpack.c.l.b16 %v309
  %v399 = vunpack.c.h.b16 %v309
  %v400 = vunpack.c.l.b16 %v310
  %v401 = vunpack.c.h.b16 %v310
  %v402 = vunpack.c.l.b16 %v311
  %v403 = vunpack.c.h.b16 %v311
  %v404 = vunpack.c.l.b16 %v312
  %v405 = vunpack.c.h.b16 %v312
  %v406 = vunpack.c.l.b16 %v313
  %v407 = vunpack.c.h.b16 %v313
  %v408 = vunpack.c.l.b16 %v314
  %v409 = vunpack.c.h.b16 %v314
  %v410 = vunpack.c.l.b16 %v315
  %v411 = vunpack.c.h.b16 %v315
  %v412 = vpack.c.b16 %v348, %v348
  %v413 = vpack.c.b16 %v349, %v349
  %v414 = vpack.c.b16 %v350, %v350
  %v415 = vpack.c.b16 %v351, %v351
  %v416 = vpack.c.b16 %v352, %v352
  %v417 = vpack.c.b16 %v353, %v353
  %v418 = vpack.c.b16 %v354, %v354
  %v419 = vpack.c.b16 %v355, %v355
  %v420 = vpack.c.b16 %v356, %v356
  %v421 = vpack.c.b16 %v357, %v357
  %v422 = vpack.c.b16 %v358, %v358
  %v423 = vpack.c.b16 %v359, %v359
  %v424 = vpack.c.b16 %v360, %v360
  %v425 = vpack.c.b16 %v361, %v361
  %v426 = vpack.c.b16 %v362, %v362
  %v427 = vpack.c.b16 %v363, %v363
  %v428 = vpack.c.b16 %v364, %v364
  %v429 = vpack.c.b16 %v365, %v365
  %v430 = vpack.c.b16 %v366, %v366
  %v431 = vpack.c.b16 %v367, %v367
  %v432 = vpack.c.b16 %v368, %v368
  %v433 = vpack.c.b16 %v369, %v369
  %v434 = vpack.c.b16 %v370, %v370
  %v435 = vpack.c.b16 %v371, %v371
  %v436 = vpack.c.b16 %v372, %v372
  %v437 = vpack.c.b16 %v373, %v373
  %v438 = vpack.c.b16 %v374, %v374
  %v439 = vpack.c.b16 %v375, %v375
  %v440 = vpack.c.b16 %v376, %v376
  %v441 = vpack.c.b16 %v377, %v377
  %v442 = vpack.c.b16 %v378, %v378
  %v443 = vpack.c.b16 %v379, %v379
  %v444 = vpack.c.b16 %v380, %v380
  %v445 = vpack.c.b16 %v381, %v381
  %v446 = vpack.c.b16 %v382, %v382
  %v447 = vpack.c.b16 %v383, %v383
  %v448 = vpack.c.b16 %v384, %v384
  %v449 = vpack.c.b16 %v385, %v385
  %v450 = vpack.c.b16 %v386, %v386
  %v451 = vpack.c.b16 %v387, %v387
  %v452 = vpack.c.b16 %v388, %v388
  %v453 = vpack.c.b16 %v389, %v389
  %v454 = vpack.c.b16 %v390, %v390
  %v455 = vpack.c.b16 %v391, %v391
  %v456 = vpack.c.b16 %v392, %v392
  %v457 = vpack.c.b16 %v393, %v393
  %v458 = vpack.c.b16 %v394, %v394
  %v459 = vpack.c.b16 %v395, %v395
  %v460 = vpack.c.b16 %v396, %v396
  %v461 = vpack.c.b16 %v397, %v397
  %v462 = vpack.c.b16 %v398, %v398
  %v463 = vpack.c.b16 %v399, %v399
  %v464 = vpack.c.b16 %v400, %v400
  %v465 = vpack.c.b16 %v401, %v401
  %v466 = vpack.c.b16 %v402, %v402
  %v467 = vpack.c.b16 %v403, %v403
  %v468 = vpack.c.b16 %v404, %v404
  %v469 = vpack.c.b16 %v405, %v405
  %v470 = vpack.c.b16 %v406, %v406
  %v471 = vpack.c.b16 %v407, %v407
  %v472 = vpack.c.b16 %v408, %v408
  %v473 = vpack.c.b16 %v409, %v409
  %v474 = vpack.c.b16 %v410, %v410
  %v475 = vpack.c.b16 %v411, %v411
  %540 = vst [vmem:[%s3] sm:$0xf] %v412
  %541 = vst [vmem:[%s3 + $0x4] sm:$0xf] %v413
  %542 = vst [vmem:[%s3 + $0x8] sm:$0xf] %v414
  %543 = vst [vmem:[%s3 + $0xc] sm:$0xf] %v415
  %544 = vst [vmem:[%s3 + $0x10] sm:$0xf] %v416
  %545 = vst [vmem:[%s3 + $0x14] sm:$0xf] %v417
  %546 = vst [vmem:[%s3 + $0x18] sm:$0xf] %v418
  %547 = vst [vmem:[%s3 + $0x1c] sm:$0xf] %v419
  %548 = vst [vmem:[%s3 + $0x20] sm:$0xf] %v420
  %549 = vst [vmem:[%s3 + $0x24] sm:$0xf] %v421
  %550 = vst [vmem:[%s3 + $0x28] sm:$0xf] %v422
  %551 = vst [vmem:[%s3 + $0x2c] sm:$0xf] %v423
  %552 = vst [vmem:[%s3 + $0x30] sm:$0xf] %v424
  %553 = vst [vmem:[%s3 + $0x34] sm:$0xf] %v425
  %554 = vst [vmem:[%s3 + $0x38] sm:$0xf] %v426
  %555 = vst [vmem:[%s3 + $0x3c] sm:$0xf] %v427
  %556 = vst [vmem:[%s3 + $0x40] sm:$0xf] %v428
  %557 = vst [vmem:[%s3 + $0x44] sm:$0xf] %v429
  %558 = vst [vmem:[%s3 + $0x48] sm:$0xf] %v430
  %559 = vst [vmem:[%s3 + $0x4c] sm:$0xf] %v431
  %560 = vst [vmem:[%s3 + $0x50] sm:$0xf] %v432
  %561 = vst [vmem:[%s3 + $0x54] sm:$0xf] %v433
  %562 = vst [vmem:[%s3 + $0x58] sm:$0xf] %v434
  %563 = vst [vmem:[%s3 + $0x5c] sm:$0xf] %v435
  %564 = vst [vmem:[%s3 + $0x60] sm:$0xf] %v436
  %565 = vst [vmem:[%s3 + $0x64] sm:$0xf] %v437
  %566 = vst [vmem:[%s3 + $0x68] sm:$0xf] %v438
  %567 = vst [vmem:[%s3 + $0x6c] sm:$0xf] %v439
  %568 = vst [vmem:[%s3 + $0x70] sm:$0xf] %v440
  %569 = vst [vmem:[%s3 + $0x74] sm:$0xf] %v441
  %570 = vst [vmem:[%s3 + $0x78] sm:$0xf] %v442
  %571 = vst [vmem:[%s3 + $0x7c] sm:$0xf] %v443
  %572 = vst [vmem:[%s3 + $0x80] sm:$0xf] %v444
  %573 = vst [vmem:[%s3 + $0x84] sm:$0xf] %v445
  %574 = vst [vmem:[%s3 + $0x88] sm:$0xf] %v446
  %575 = vst [vmem:[%s3 + $0x8c] sm:$0xf] %v447
  %576 = vst [vmem:[%s3 + $0x90] sm:$0xf] %v448
  %577 = vst [vmem:[%s3 + $0x94] sm:$0xf] %v449
  %578 = vst [vmem:[%s3 + $0x98] sm:$0xf] %v450
  %579 = vst [vmem:[%s3 + $0x9c] sm:$0xf] %v451
  %580 = vst [vmem:[%s3 + $0xa0] sm:$0xf] %v452
  %581 = vst [vmem:[%s3 + $0xa4] sm:$0xf] %v453
  %582 = vst [vmem:[%s3 + $0xa8] sm:$0xf] %v454
  %583 = vst [vmem:[%s3 + $0xac] sm:$0xf] %v455
  %584 = vst [vmem:[%s3 + $0xb0] sm:$0xf] %v456
  %585 = vst [vmem:[%s3 + $0xb4] sm:$0xf] %v457
  %586 = vst [vmem:[%s3 + $0xb8] sm:$0xf] %v458
  %587 = vst [vmem:[%s3 + $0xbc] sm:$0xf] %v459
  %588 = vst [vmem:[%s3 + $0xc0] sm:$0xf] %v460
  %589 = vst [vmem:[%s3 + $0xc4] sm:$0xf] %v461
  %590 = vst [vmem:[%s3 + $0xc8] sm:$0xf] %v462
  %591 = vst [vmem:[%s3 + $0xcc] sm:$0xf] %v463
  %592 = vst [vmem:[%s3 + $0xd0] sm:$0xf] %v464
  %593 = vst [vmem:[%s3 + $0xd4] sm:$0xf] %v465
  %594 = vst [vmem:[%s3 + $0xd8] sm:$0xf] %v466
  %595 = vst [vmem:[%s3 + $0xdc] sm:$0xf] %v467
  %596 = vst [vmem:[%s3 + $0xe0] sm:$0xf] %v468
  %597 = vst [vmem:[%s3 + $0xe4] sm:$0xf] %v469
  %598 = vst [vmem:[%s3 + $0xe8] sm:$0xf] %v470
  %599 = vst [vmem:[%s3 + $0xec] sm:$0xf] %v471
  %600 = vst [vmem:[%s3 + $0xf0] sm:$0xf] %v472
  %601 = vst [vmem:[%s3 + $0xf4] sm:$0xf] %v473
  %602 = vst [vmem:[%s3 + $0xf8] sm:$0xf] %v474
  %603 = vst [vmem:[%s3 + $0xfc] sm:$0xf] %v475
  // Predicated region
  $region14: #{vae_forward.15} parent=0 // pred_check
    _
  $region15: #{vae_forward.15} parent=0 // pred_check_branch
    %605 = sbr.rel (0) target = $region17
  $region16: #{vae_forward.15} parent=0 // pred_region
    _
  $region17: #{vae_forward.15} parent=0 // pred_fallthru
    _
  // Predicated region
  $region18: #{vae_forward.15} parent=0 // pred_check
    _
  $region19: #{vae_forward.15} parent=0 // pred_check_branch
    %607 = sbr.rel (0) target = $region21
  $region20: #{vae_forward.15} parent=0 // pred_region
    _
  $region21: #{vae_forward.15} parent=0 // pred_fallthru
    _

// kernel: vae_forward.17
$region0: #{vae_forward.17}
  #allocation0 [shape = 'u32[]', space=smem, size = 0x4, offset = 0x4, fixed_abs, tag = 'smem constant byte address 0x4 - core index']
  #allocation1 [shape = 'u32[144,128]{1,0:T(1,128)}', space=vmem, size = 0x12000, scoped, tag = 'internal scratch']
  %s0 = inlined_call_operand.vmem [shape: f32[128,128], index: 0, kind: input, shape index: {}]
  %s1 = inlined_call_operand.vmem [shape: f32[1,128], index: 1, kind: input, shape index: {}]
  %s2 = inlined_call_operand.vmem [shape: f32[1,128], index: 2, kind: input, shape index: {}]
  %s3 = inlined_call_operand.vmem [shape: bf16[128,128], index: 3, kind: output, shape index: {}]
  %s4 = sld [smem:[#allocation0]]
  $region22: #{vae_forward.17} parent=0
    _
  %s6 = ssub.s32 1, %s4
  %s7 = scalar_select 0, %s6, %s4
  // Predicated region
  $region2: #{vae_forward.17} parent=0 // pred_check
    _
  $region3: #{vae_forward.17} parent=0 // pred_check_branch
    %9 = sbr.rel (0) target = $region5
  $region4: #{vae_forward.17} parent=0 // pred_region
    _
  $region5: #{vae_forward.17} parent=0 // pred_fallthru
    _
  // Predicated region
  $region6: #{vae_forward.17} parent=0 // pred_check
    _
  $region7: #{vae_forward.17} parent=0 // pred_check_branch
    %11 = sbr.rel (0) target = $region9
  $region8: #{vae_forward.17} parent=0 // pred_region
    _
  $region9: #{vae_forward.17} parent=0 // pred_fallthru
    _
  // Predicated region
  $region10: #{vae_forward.17} parent=0 // pred_check
    _
  $region11: #{vae_forward.17} parent=0 // pred_check_branch
    %13 = sbr.rel (0) target = $region13
  $region12: #{vae_forward.17} parent=0 // pred_region
    _
  $region13: #{vae_forward.17} parent=0 // pred_fallthru
    _
  %v14 = vld [vmem:[%s0] sm:$0xff]
  %v15 = vld [vmem:[%s0 + $0x8] sm:$0xff]
  %v16 = vld [vmem:[%s0 + $0x10] sm:$0xff]
  %v17 = vld [vmem:[%s0 + $0x18] sm:$0xff]
  %v18 = vld [vmem:[%s0 + $0x20] sm:$0xff]
  %v19 = vld [vmem:[%s0 + $0x28] sm:$0xff]
  %v20 = vld [vmem:[%s0 + $0x30] sm:$0xff]
  %v21 = vld [vmem:[%s0 + $0x38] sm:$0xff]
  %v22 = vld [vmem:[%s0 + $0x40] sm:$0xff]
  %v23 = vld [vmem:[%s0 + $0x48] sm:$0xff]
  %v24 = vld [vmem:[%s0 + $0x50] sm:$0xff]
  %v25 = vld [vmem:[%s0 + $0x58] sm:$0xff]
  %v26 = vld [vmem:[%s0 + $0x60] sm:$0xff]
  %v27 = vld [vmem:[%s0 + $0x68] sm:$0xff]
  %v28 = vld [vmem:[%s0 + $0x70] sm:$0xff]
  %v29 = vld [vmem:[%s0 + $0x78] sm:$0xff]
  %v30 = vld [vmem:[%s1] sm:$0x1]
  %v32 = vlaneseq
  %v33 = vshrl.u32 %v32, 7
  %v34 = vsub.s32 0, %v33
  %v35 = vrot.slane %v30, %v34
  %v37 = vmul.f32 %v14, %v35
  %v38 = vmul.f32 %v15, %v35
  %v39 = vmul.f32 %v16, %v35
  %v40 = vmul.f32 %v17, %v35
  %v41 = vmul.f32 %v18, %v35
  %v42 = vmul.f32 %v19, %v35
  %v43 = vmul.f32 %v20, %v35
  %v44 = vmul.f32 %v21, %v35
  %v45 = vmul.f32 %v22, %v35
  %v46 = vmul.f32 %v23, %v35
  %v47 = vmul.f32 %v24, %v35
  %v48 = vmul.f32 %v25, %v35
  %v49 = vmul.f32 %v26, %v35
  %v50 = vmul.f32 %v27, %v35
  %v51 = vmul.f32 %v28, %v35
  %v52 = vmul.f32 %v29, %v35
  %v53 = vld [vmem:[%s2] sm:$0x1]
  %v55 = vlaneseq
  %v56 = vshrl.u32 %v55, 7
  %v57 = vsub.s32 0, %v56
  %v58 = vrot.slane %v53, %v57
  %v60 = vadd.f32 %v37, %v58
  %v61 = vadd.f32 %v38, %v58
  %v62 = vadd.f32 %v39, %v58
  %v63 = vadd.f32 %v40, %v58
  %v64 = vadd.f32 %v41, %v58
  %v65 = vadd.f32 %v42, %v58
  %v66 = vadd.f32 %v43, %v58
  %v67 = vadd.f32 %v44, %v58
  %v68 = vadd.f32 %v45, %v58
  %v69 = vadd.f32 %v46, %v58
  %v70 = vadd.f32 %v47, %v58
  %v71 = vadd.f32 %v48, %v58
  %v72 = vadd.f32 %v49, %v58
  %v73 = vadd.f32 %v50, %v58
  %v74 = vadd.f32 %v51, %v58
  %v75 = vadd.f32 %v52, %v58
  %v76 = vmax.f32 %v60, 0.0
  %v77 = vmax.f32 %v61, 0.0
  %v78 = vmax.f32 %v62, 0.0
  %v79 = vmax.f32 %v63, 0.0
  %v80 = vmax.f32 %v64, 0.0
  %v81 = vmax.f32 %v65, 0.0
  %v82 = vmax.f32 %v66, 0.0
  %v83 = vmax.f32 %v67, 0.0
  %v84 = vmax.f32 %v68, 0.0
  %v85 = vmax.f32 %v69, 0.0
  %v86 = vmax.f32 %v70, 0.0
  %v87 = vmax.f32 %v71, 0.0
  %v88 = vmax.f32 %v72, 0.0
  %v89 = vmax.f32 %v73, 0.0
  %v90 = vmax.f32 %v74, 0.0
  %v91 = vmax.f32 %v75, 0.0
  %v92 = vpack.c.bf16 %v77, %v76
  %v93 = vpack.c.bf16 %v79, %v78
  %v94 = vpack.c.bf16 %v81, %v80
  %v95 = vpack.c.bf16 %v83, %v82
  %v96 = vpack.c.bf16 %v85, %v84
  %v97 = vpack.c.bf16 %v87, %v86
  %v98 = vpack.c.bf16 %v89, %v88
  %v99 = vpack.c.bf16 %v91, %v90
  %v108 = vunpack.c.l.b16 %v92
  %v109 = vunpack.c.h.b16 %v92
  %v110 = vunpack.c.l.b16 %v93
  %v111 = vunpack.c.h.b16 %v93
  %v112 = vunpack.c.l.b16 %v94
  %v113 = vunpack.c.h.b16 %v94
  %v114 = vunpack.c.l.b16 %v95
  %v115 = vunpack.c.h.b16 %v95
  %v116 = vunpack.c.l.b16 %v96
  %v117 = vunpack.c.h.b16 %v96
  %v118 = vunpack.c.l.b16 %v97
  %v119 = vunpack.c.h.b16 %v97
  %v120 = vunpack.c.l.b16 %v98
  %v121 = vunpack.c.h.b16 %v98
  %v122 = vunpack.c.l.b16 %v99
  %v123 = vunpack.c.h.b16 %v99
  %v124 = vpack.c.b16 %v108, %v108
  %v125 = vpack.c.b16 %v109, %v109
  %v126 = vpack.c.b16 %v110, %v110
  %v127 = vpack.c.b16 %v111, %v111
  %v128 = vpack.c.b16 %v112, %v112
  %v129 = vpack.c.b16 %v113, %v113
  %v130 = vpack.c.b16 %v114, %v114
  %v131 = vpack.c.b16 %v115, %v115
  %v132 = vpack.c.b16 %v116, %v116
  %v133 = vpack.c.b16 %v117, %v117
  %v134 = vpack.c.b16 %v118, %v118
  %v135 = vpack.c.b16 %v119, %v119
  %v136 = vpack.c.b16 %v120, %v120
  %v137 = vpack.c.b16 %v121, %v121
  %v138 = vpack.c.b16 %v122, %v122
  %v139 = vpack.c.b16 %v123, %v123
  %156 = vst [vmem:[%s3] sm:$0xf] %v124
  %157 = vst [vmem:[%s3 + $0x4] sm:$0xf] %v125
  %158 = vst [vmem:[%s3 + $0x8] sm:$0xf] %v126
  %159 = vst [vmem:[%s3 + $0xc] sm:$0xf] %v127
  %160 = vst [vmem:[%s3 + $0x10] sm:$0xf] %v128
  %161 = vst [vmem:[%s3 + $0x14] sm:$0xf] %v129
  %162 = vst [vmem:[%s3 + $0x18] sm:$0xf] %v130
  %163 = vst [vmem:[%s3 + $0x1c] sm:$0xf] %v131
  %164 = vst [vmem:[%s3 + $0x20] sm:$0xf] %v132
  %165 = vst [vmem:[%s3 + $0x24] sm:$0xf] %v133
  %166 = vst [vmem:[%s3 + $0x28] sm:$0xf] %v134
  %167 = vst [vmem:[%s3 + $0x2c] sm:$0xf] %v135
  %168 = vst [vmem:[%s3 + $0x30] sm:$0xf] %v136
  %169 = vst [vmem:[%s3 + $0x34] sm:$0xf] %v137
  %170 = vst [vmem:[%s3 + $0x38] sm:$0xf] %v138
  %171 = vst [vmem:[%s3 + $0x3c] sm:$0xf] %v139
  // Predicated region
  $region14: #{vae_forward.17} parent=0 // pred_check
    _
  $region15: #{vae_forward.17} parent=0 // pred_check_branch
    %173 = sbr.rel (0) target = $region17
  $region16: #{vae_forward.17} parent=0 // pred_region
    _
  $region17: #{vae_forward.17} parent=0 // pred_fallthru
    _
  // Predicated region
  $region18: #{vae_forward.17} parent=0 // pred_check
    _
  $region19: #{vae_forward.17} parent=0 // pred_check_branch
    %175 = sbr.rel (0) target = $region21
  $region20: #{vae_forward.17} parent=0 // pred_region
    _
  $region21: #{vae_forward.17} parent=0 // pred_fallthru
    _

// kernel: vae_forward.16
$region0: #{vae_forward.16}
  #allocation0 [shape = 'u32[]', space=smem, size = 0x4, offset = 0x4, fixed_abs, tag = 'smem constant byte address 0x4 - core index']
  #allocation1 [shape = 'u32[144,128]{1,0:T(1,128)}', space=vmem, size = 0x12000, scoped, tag = 'internal scratch']
  %s0 = inlined_call_operand.vmem [shape: bf16[128,288], index: 0, kind: input, shape index: {}]
  %s1 = inlined_call_operand.vmem [shape: bf16[288,128], index: 1, kind: input, shape index: {}]
  %s2 = inlined_call_operand.vmem [shape: f32[1,128], index: 2, kind: input, shape index: {}]
  %s3 = inlined_call_operand.vmem [shape: f32[128,128], index: 3, kind: output, shape index: {0}]
  %s4 = inlined_call_operand.vmem [shape: f32[2,128], index: 4, kind: output, shape index: {1}]
  %5 = xla_tuple %s3, %s4
  %s6 = sld [smem:[#allocation0]]
  $region34: #{vae_forward.16} parent=0
    _
  %s8 = ssub.s32 1, %s6
  %s9 = scalar_select 0, %s8, %s6
  // Predicated region
  $region2: #{vae_forward.16} parent=0 // pred_check
    _
  $region3: #{vae_forward.16} parent=0 // pred_check_branch
    %11 = sbr.rel (0) target = $region5
  $region4: #{vae_forward.16} parent=0 // pred_region
    _
  $region5: #{vae_forward.16} parent=0 // pred_fallthru
    _
  // Predicated region
  $region6: #{vae_forward.16} parent=0 // pred_check
    _
  $region7: #{vae_forward.16} parent=0 // pred_check_branch
    %13 = sbr.rel (0) target = $region9
  $region8: #{vae_forward.16} parent=0 // pred_region
    _
  $region9: #{vae_forward.16} parent=0 // pred_fallthru
    _
  // Predicated region
  $region10: #{vae_forward.16} parent=0 // pred_check
    _
  $region11: #{vae_forward.16} parent=0 // pred_check_branch
    %15 = sbr.rel (0) target = $region13
  $region12: #{vae_forward.16} parent=0 // pred_region
    _
  $region13: #{vae_forward.16} parent=0 // pred_fallthru
    _
  %v17 = vld [vmem:[%s0] sm:$0xff]
  %v18 = vld [vmem:[%s0 + $0x8] sm:$0xf]
  %v19 = vld [vmem:[%s0 + $0xc] sm:$0xff]
  %v20 = vld [vmem:[%s0 + $0x14] sm:$0xf]
  %v21 = vld [vmem:[%s0 + $0x18] sm:$0xff]
  %v22 = vld [vmem:[%s0 + $0x20] sm:$0xf]
  %v23 = vld [vmem:[%s0 + $0x24] sm:$0xff]
  %v24 = vld [vmem:[%s0 + $0x2c] sm:$0xf]
  %v25 = vld [vmem:[%s0 + $0x30] sm:$0xff]
  %v26 = vld [vmem:[%s0 + $0x38] sm:$0xf]
  %v27 = vld [vmem:[%s0 + $0x3c] sm:$0xff]
  %v28 = vld [vmem:[%s0 + $0x44] sm:$0xf]
  %v29 = vld [vmem:[%s0 + $0x48] sm:$0xff]
  %v30 = vld [vmem:[%s0 + $0x50] sm:$0xf]
  %v31 = vld [vmem:[%s0 + $0x54] sm:$0xff]
  %v32 = vld [vmem:[%s0 + $0x5c] sm:$0xf]
  %v33 = vld [vmem:[%s0 + $0x60] sm:$0xff]
  %v34 = vld [vmem:[%s0 + $0x68] sm:$0xf]
  %v35 = vld [vmem:[%s0 + $0x6c] sm:$0xff]
  %v36 = vld [vmem:[%s0 + $0x74] sm:$0xf]
  %v37 = vld [vmem:[%s0 + $0x78] sm:$0xff]
  %v38 = vld [vmem:[%s0 + $0x80] sm:$0xf]
  %v39 = vld [vmem:[%s0 + $0x84] sm:$0xff]
  %v40 = vld [vmem:[%s0 + $0x8c] sm:$0xf]
  %v41 = vld [vmem:[%s0 + $0x90] sm:$0xff]
  %v42 = vld [vmem:[%s0 + $0x98] sm:$0xf]
  %v43 = vld [vmem:[%s0 + $0x9c] sm:$0xff]
  %v44 = vld [vmem:[%s0 + $0xa4] sm:$0xf]
  %v45 = vld [vmem:[%s0 + $0xa8] sm:$0xff]
  %v46 = vld [vmem:[%s0 + $0xb0] sm:$0xf]
  %v47 = vld [vmem:[%s0 + $0xb4] sm:$0xff]
  %v48 = vld [vmem:[%s0 + $0xbc] sm:$0xf]
  %v49 = vld [vmem:[%s1] sm:$0xf]
  %v50 = vld [vmem:[%s1 + $0x4] sm:$0xf]
  %v51 = vld [vmem:[%s1 + $0x8] sm:$0xf]
  %v52 = vld [vmem:[%s1 + $0xc] sm:$0xf]
  %v53 = vld [vmem:[%s1 + $0x10] sm:$0xf]
  %v54 = vld [vmem:[%s1 + $0x14] sm:$0xf]
  %v55 = vld [vmem:[%s1 + $0x18] sm:$0xf]
  %v56 = vld [vmem:[%s1 + $0x1c] sm:$0xf]
  %v57 = vld [vmem:[%s1 + $0x20] sm:$0xf]
  %v58 = vld [vmem:[%s1 + $0x24] sm:$0xf]
  %v59 = vld [vmem:[%s1 + $0x28] sm:$0xf]
  %v60 = vld [vmem:[%s1 + $0x2c] sm:$0xf]
  %v61 = vld [vmem:[%s1 + $0x30] sm:$0xf]
  %v62 = vld [vmem:[%s1 + $0x34] sm:$0xf]
  %v63 = vld [vmem:[%s1 + $0x38] sm:$0xf]
  %v64 = vld [vmem:[%s1 + $0x3c] sm:$0xf]
  %v65 = vld [vmem:[%s1 + $0x40] sm:$0xf]
  %v66 = vld [vmem:[%s1 + $0x44] sm:$0xf]
  %v67 = vld [vmem:[%s1 + $0x48] sm:$0xf]
  %v68 = vld [vmem:[%s1 + $0x4c] sm:$0xf]
  %v69 = vld [vmem:[%s1 + $0x50] sm:$0xf]
  %v70 = vld [vmem:[%s1 + $0x54] sm:$0xf]
  %v71 = vld [vmem:[%s1 + $0x58] sm:$0xf]
  %v72 = vld [vmem:[%s1 + $0x5c] sm:$0xf]
  %v73 = vld [vmem:[%s1 + $0x60] sm:$0xf]
  %v74 = vld [vmem:[%s1 + $0x64] sm:$0xf]
  %v75 = vld [vmem:[%s1 + $0x68] sm:$0xf]
  %v76 = vld [vmem:[%s1 + $0x6c] sm:$0xf]
  %v77 = vld [vmem:[%s1 + $0x70] sm:$0xf]
  %v78 = vld [vmem:[%s1 + $0x74] sm:$0xf]
  %v79 = vld [vmem:[%s1 + $0x78] sm:$0xf]
  %v80 = vld [vmem:[%s1 + $0x7c] sm:$0xf]
  %v81 = vld [vmem:[%s1 + $0x80] sm:$0xf]
  %v82 = vld [vmem:[%s1 + $0x84] sm:$0xf]
  %v83 = vld [vmem:[%s1 + $0x88] sm:$0xf]
  %v84 = vld [vmem:[%s1 + $0x8c] sm:$0xf]
  %v85 = vld [vmem:[%s2] sm:$0x1]
  %v87 = vlaneseq
  %v88 = vshrl.u32 %v87, 7
  %v89 = vsub.s32 0, %v88
  %v90 = vrot.slane %v85, %v89
  %v124 = vunpack.c.l.b16 %v17
  %v125 = vunpack.c.h.b16 %v17
  %v126 = vunpack.c.l.b16 %v18
  %v127 = vunpack.c.l.b16 %v19
  %v128 = vunpack.c.h.b16 %v19
  %v129 = vunpack.c.l.b16 %v20
  %v130 = vunpack.c.l.b16 %v21
  %v131 = vunpack.c.h.b16 %v21
  %v132 = vunpack.c.l.b16 %v22
  %v133 = vunpack.c.l.b16 %v23
  %v134 = vunpack.c.h.b16 %v23
  %v135 = vunpack.c.l.b16 %v24
  %v136 = vunpack.c.l.b16 %v25
  %v137 = vunpack.c.h.b16 %v25
  %v138 = vunpack.c.l.b16 %v26
  %v139 = vunpack.c.l.b16 %v27
  %v140 = vunpack.c.h.b16 %v27
  %v141 = vunpack.c.l.b16 %v28
  %v142 = vunpack.c.l.b16 %v29
  %v143 = vunpack.c.h.b16 %v29
  %v144 = vunpack.c.l.b16 %v30
  %v145 = vunpack.c.l.b16 %v31
  %v146 = vunpack.c.h.b16 %v31
  %v147 = vunpack.c.l.b16 %v32
  %v148 = vunpack.c.l.b16 %v33
  %v149 = vunpack.c.h.b16 %v33
  %v150 = vunpack.c.l.b16 %v34
  %v151 = vunpack.c.l.b16 %v35
  %v152 = vunpack.c.h.b16 %v35
  %v153 = vunpack.c.l.b16 %v36
  %v154 = vunpack.c.l.b16 %v37
  %v155 = vunpack.c.h.b16 %v37
  %v156 = vunpack.c.l.b16 %v38
  %v157 = vunpack.c.l.b16 %v39
  %v158 = vunpack.c.h.b16 %v39
  %v159 = vunpack.c.l.b16 %v40
  %v160 = vunpack.c.l.b16 %v41
  %v161 = vunpack.c.h.b16 %v41
  %v162 = vunpack.c.l.b16 %v42
  %v163 = vunpack.c.l.b16 %v43
  %v164 = vunpack.c.h.b16 %v43
  %v165 = vunpack.c.l.b16 %v44
  %v166 = vunpack.c.l.b16 %v45
  %v167 = vunpack.c.h.b16 %v45
  %v168 = vunpack.c.l.b16 %v46
  %v169 = vunpack.c.l.b16 %v47
  %v170 = vunpack.c.h.b16 %v47
  %v171 = vunpack.c.l.b16 %v48
  %v172 = vpack.c.b16 %v127, %v124
  %v173 = vpack.c.b16 %v128, %v125
  %v174 = vpack.c.b16 %v129, %v126
  %v175 = vpack.c.b16 %v133, %v130
  %v176 = vpack.c.b16 %v134, %v131
  %v177 = vpack.c.b16 %v135, %v132
  %v178 = vpack.c.b16 %v139, %v136
  %v179 = vpack.c.b16 %v140, %v137
  %v180 = vpack.c.b16 %v141, %v138
  %v181 = vpack.c.b16 %v145, %v142
  %v182 = vpack.c.b16 %v146, %v143
  %v183 = vpack.c.b16 %v147, %v144
  %v184 = vpack.c.b16 %v151, %v148
  %v185 = vpack.c.b16 %v152, %v149
  %v186 = vpack.c.b16 %v153, %v150
  %v187 = vpack.c.b16 %v157, %v154
  %v188 = vpack.c.b16 %v158, %v155
  %v189 = vpack.c.b16 %v159, %v156
  %v190 = vpack.c.b16 %v163, %v160
  %v191 = vpack.c.b16 %v164, %v161
  %v192 = vpack.c.b16 %v165, %v162
  %v193 = vpack.c.b16 %v169, %v166
  %v194 = vpack.c.b16 %v170, %v167
  %v195 = vpack.c.b16 %v171, %v168
  %v248 = vunpack.c.l.b16 %v49
  %v249 = vunpack.c.l.b16 %v50
  %v250 = vunpack.c.l.b16 %v51
  %v251 = vunpack.c.l.b16 %v52
  %v252 = vunpack.c.l.b16 %v53
  %v253 = vunpack.c.l.b16 %v54
  %v254 = vunpack.c.l.b16 %v55
  %v255 = vunpack.c.l.b16 %v56
  %v256 = vunpack.c.l.b16 %v57
  %v257 = vunpack.c.l.b16 %v58
  %v258 = vunpack.c.l.b16 %v59
  %v259 = vunpack.c.l.b16 %v60
  %v260 = vunpack.c.l.b16 %v61
  %v261 = vunpack.c.l.b16 %v62
  %v262 = vunpack.c.l.b16 %v63
  %v263 = vunpack.c.l.b16 %v64
  %v264 = vunpack.c.l.b16 %v65
  %v265 = vunpack.c.l.b16 %v66
  %v266 = vunpack.c.l.b16 %v67
  %v267 = vunpack.c.l.b16 %v68
  %v268 = vunpack.c.l.b16 %v69
  %v269 = vunpack.c.l.b16 %v70
  %v270 = vunpack.c.l.b16 %v71
  %v271 = vunpack.c.l.b16 %v72
  %v272 = vunpack.c.l.b16 %v73
  %v273 = vunpack.c.l.b16 %v74
  %v274 = vunpack.c.l.b16 %v75
  %v275 = vunpack.c.l.b16 %v76
  %v276 = vunpack.c.l.b16 %v77
  %v277 = vunpack.c.l.b16 %v78
  %v278 = vunpack.c.l.b16 %v79
  %v279 = vunpack.c.l.b16 %v80
  %v280 = vunpack.c.l.b16 %v81
  %v281 = vunpack.c.l.b16 %v82
  %v282 = vunpack.c.l.b16 %v83
  %v283 = vunpack.c.l.b16 %v84
  %v284 = vpack.c.b16 %v249, %v248
  %v285 = vpack.c.b16 %v251, %v250
  %v286 = vpack.c.b16 %v253, %v252
  %v287 = vpack.c.b16 %v255, %v254
  %v288 = vpack.c.b16 %v257, %v256
  %v289 = vpack.c.b16 %v259, %v258
  %v290 = vpack.c.b16 %v261, %v260
  %v291 = vpack.c.b16 %v263, %v262
  %v292 = vpack.c.b16 %v265, %v264
  %v293 = vpack.c.b16 %v267, %v266
  %v294 = vpack.c.b16 %v269, %v268
  %v295 = vpack.c.b16 %v271, %v270
  %v296 = vpack.c.b16 %v273, %v272
  %v297 = vpack.c.b16 %v275, %v274
  %v298 = vpack.c.b16 %v277, %v276
  %v299 = vpack.c.b16 %v279, %v278
  %v300 = vpack.c.b16 %v281, %v280
  %v301 = vpack.c.b16 %v283, %v282
  %vm320 = vcmask 261120
  %v322 = vsel %vm320, %v174, 0
  %v325 = vsel %vm320, %v177, 0
  %v328 = vsel %vm320, %v180, 0
  %v331 = vsel %vm320, %v183, 0
  %v334 = vsel %vm320, %v186, 0
  %v337 = vsel %vm320, %v189, 0
  %v340 = vsel %vm320, %v192, 0
  %v343 = vsel %vm320, %v195, 0
  %345 = vmatprep.subr.bf16.mxu0 0
  %346 = vmatpush1.bf16.msra.mxu0 %v284
  %347 = vmatprep.subr.bf16.mxu0 0
  %348 = vmatpush1.bf16.msra.mxu0 %v285
  %349 = vmatprep.subr.bf16.mxu0 0
  %350 = vmatpush1.bf16.msra.mxu0 %v286
  %351 = vmatprep.subr.bf16.mxu0 0
  %352 = vmatpush1.bf16.msra.mxu0 %v287
  %353 = vmatprep.subr.bf16.mxu0 0
  %354 = vmatpush1.bf16.msra.mxu0 %v288
  %355 = vmatprep.subr.bf16.mxu0 0
  %356 = vmatpush1.bf16.msra.mxu0 %v289
  %357 = vmatprep.subr.bf16.mxu0 0
  %358 = vmatpush1.bf16.msra.mxu0 %v290
  %359 = vmatprep.subr.bf16.mxu0 0
  %360 = vmatpush1.bf16.msra.mxu0 %v291
  %361 = vmatprep.subr.bf16.mxu0 0
  %362 = vmatpush1.bf16.msra.mxu0 %v292
  %363 = vmatprep.subr.bf16.mxu0 0
  %364 = vmatpush1.bf16.msra.mxu0 %v293
  %365 = vmatprep.subr.bf16.mxu0 0
  %366 = vmatpush1.bf16.msra.mxu0 %v294
  %367 = vmatprep.subr.bf16.mxu0 0
  %368 = vmatpush1.bf16.msra.mxu0 %v295
  %369 = vmatprep.subr.bf16.mxu0 0
  %370 = vmatpush1.bf16.msra.mxu0 %v296
  %371 = vmatprep.subr.bf16.mxu0 0
  %372 = vmatpush1.bf16.msra.mxu0 %v297
  %373 = vmatprep.subr.bf16.mxu0 0
  %374 = vmatpush1.bf16.msra.mxu0 %v298
  %375 = vmatprep.subr.bf16.mxu0 0
  %376 = vmatpush1.bf16.msra.mxu0 %v299
  %377 = vmatprep.mubr.bf16.mxu0 %v173
  %378 = vmatmul.mubr.bf16.gmra.mrb[0].mxu0 %v172
  %v379 = vpop.f32.mrb[0].mxu0
  %v380 = vadd.f32 %v90, %v379
  %v381 = vpop.f32.mrb[0].mxu0
  %v382 = vpop.f32.mrb[0].mxu0
  %v383 = vadd.f32 %v90, %v382
  %v384 = vpop.f32.mrb[0].mxu0
  %385 = vmatprep.mubr.bf16.mxu0 %v176
  %386 = vmatmul.mubr.bf16.gmra.mrb[0].mxu0 %v175
  %v387 = vpop.f32.mrb[0].mxu0
  %v388 = vadd.f32 %v90, %v387
  %v389 = vpop.f32.mrb[0].mxu0
  %v390 = vpop.f32.mrb[0].mxu0
  %v391 = vadd.f32 %v90, %v390
  %v392 = vpop.f32.mrb[0].mxu0
  %393 = vmatprep.mubr.bf16.mxu0 %v179
  %394 = vmatmul.mubr.bf16.gmra.mrb[0].mxu0 %v178
  %v395 = vpop.f32.mrb[0].mxu0
  %v396 = vadd.f32 %v90, %v395
  %v397 = vpop.f32.mrb[0].mxu0
  %v398 = vpop.f32.mrb[0].mxu0
  %v399 = vadd.f32 %v90, %v398
  %v400 = vpop.f32.mrb[0].mxu0
  %401 = vmatprep.mubr.bf16.mxu0 %v182
  %402 = vmatmul.mubr.bf16.gmra.mrb[0].mxu0 %v181
  %v403 = vpop.f32.mrb[0].mxu0
  %v404 = vadd.f32 %v90, %v403
  %v405 = vpop.f32.mrb[0].mxu0
  %v406 = vpop.f32.mrb[0].mxu0
  %v407 = vadd.f32 %v90, %v406
  %v408 = vpop.f32.mrb[0].mxu0
  %409 = vmatprep.mubr.bf16.mxu0 %v185
  %410 = vmatmul.mubr.bf16.gmra.mrb[0].mxu0 %v184
  %v411 = vpop.f32.mrb[0].mxu0
  %v412 = vadd.f32 %v90, %v411
  %v413 = vpop.f32.mrb[0].mxu0
  %v414 = vpop.f32.mrb[0].mxu0
  %v415 = vadd.f32 %v90, %v414
  %v416 = vpop.f32.mrb[0].mxu0
  %417 = vmatprep.mubr.bf16.mxu0 %v188
  %418 = vmatmul.mubr.bf16.gmra.mrb[0].mxu0 %v187
  %v419 = vpop.f32.mrb[0].mxu0
  %v420 = vadd.f32 %v90, %v419
  %v421 = vpop.f32.mrb[0].mxu0
  %v422 = vpop.f32.mrb[0].mxu0
  %v423 = vadd.f32 %v90, %v422
  %v424 = vpop.f32.mrb[0].mxu0
  %425 = vmatprep.mubr.bf16.mxu0 %v191
  %426 = vmatmul.mubr.bf16.gmra.mrb[0].mxu0 %v190
  %v427 = vpop.f32.mrb[0].mxu0
  %v428 = vadd.f32 %v90, %v427
  %v429 = vpop.f32.mrb[0].mxu0
  %v430 = vpop.f32.mrb[0].mxu0
  %v431 = vadd.f32 %v90, %v430
  %v432 = vpop.f32.mrb[0].mxu0
  %433 = vmatprep.mubr.bf16.mxu0 %v194
  %434 = vmatmul.mubr.bf16.gmra.mrb[0].mxu0 %v193
  %v435 = vpop.f32.mrb[0].mxu0
  %v436 = vadd.f32 %v90, %v435
  %v437 = vpop.f32.mrb[0].mxu0
  %v438 = vpop.f32.mrb[0].mxu0
  %v439 = vadd.f32 %v90, %v438
  %v440 = vpop.f32.mrb[0].mxu0
  %441 = vdwg.mxu0
  %442 = vmatprep.subr.bf16.mxu0 0
  %443 = vmatpush1.bf16.msra.mxu0 %v300
  %444 = vmatprep.subr.bf16.mxu0 0
  %445 = vmatpush1.bf16.msra.mxu0 %v301
  %446 = vmatprep.subr.bf16.mxu0 0
  %447 = vmatpush1.bf16.msra.mxu0 0
  %448 = vmatprep.subr.bf16.mxu0 0
  %449 = vmatpush1.bf16.msra.mxu0 0
  %450 = vmatprep.subr.bf16.mxu0 0
  %451 = vmatpush1.bf16.msra.mxu0 0
  %452 = vmatprep.subr.bf16.mxu0 0
  %453 = vmatpush1.bf16.msra.mxu0 0
  %454 = vmatprep.subr.bf16.mxu0 0
  %455 = vmatpush1.bf16.msra.mxu0 0
  %456 = vmatprep.subr.bf16.mxu0 0
  %457 = vmatpush1.bf16.msra.mxu0 0
  %458 = vmatprep.subr.bf16.mxu0 0
  %459 = vmatpush1.bf16.msra.mxu0 0
  %460 = vmatprep.subr.bf16.mxu0 0
  %461 = vmatpush1.bf16.msra.mxu0 0
  %462 = vmatprep.subr.bf16.mxu0 0
  %463 = vmatpush1.bf16.msra.mxu0 0
  %464 = vmatprep.subr.bf16.mxu0 0
  %465 = vmatpush1.bf16.msra.mxu0 0
  %466 = vmatprep.subr.bf16.mxu0 0
  %467 = vmatpush1.bf16.msra.mxu0 0
  %468 = vmatprep.subr.bf16.mxu0 0
  %469 = vmatpush1.bf16.msra.mxu0 0
  %470 = vmatprep.subr.bf16.mxu0 0
  %471 = vmatpush1.bf16.msra.mxu0 0
  %472 = vmatprep.subr.bf16.mxu0 0
  %473 = vmatpush1.bf16.msra.mxu0 0
  %474 = vmatprep.mubr.bf16.mxu0 0
  %475 = vmatmul.mubr.bf16.gmra.mrb[0].mxu0 %v322
  %v476 = vpop.f32.mrb[0].mxu0
  %v477 = vadd.f32 %v380, %v476
  %v478 = vpop.f32.mrb[0].mxu0
  %v479 = vpop.f32.mrb[0].mxu0
  %v480 = vadd.f32 %v383, %v479
  %v481 = vpop.f32.mrb[0].mxu0
  %482 = vmatprep.mubr.bf16.mxu0 0
  %483 = vmatmul.mubr.bf16.gmra.mrb[0].mxu0 %v325
  %v484 = vpop.f32.mrb[0].mxu0
  %v485 = vadd.f32 %v388, %v484
  %v486 = vpop.f32.mrb[0].mxu0
  %v487 = vpop.f32.mrb[0].mxu0
  %v488 = vadd.f32 %v391, %v487
  %v489 = vpop.f32.mrb[0].mxu0
  %490 = vmatprep.mubr.bf16.mxu0 0
  %491 = vmatmul.mubr.bf16.gmra.mrb[0].mxu0 %v328
  %v492 = vpop.f32.mrb[0].mxu0
  %v493 = vadd.f32 %v396, %v492
  %v494 = vpop.f32.mrb[0].mxu0
  %v495 = vpop.f32.mrb[0].mxu0
  %v496 = vadd.f32 %v399, %v495
  %v497 = vpop.f32.mrb[0].mxu0
  %498 = vmatprep.mubr.bf16.mxu0 0
  %499 = vmatmul.mubr.bf16.gmra.mrb[0].mxu0 %v331
  %v500 = vpop.f32.mrb[0].mxu0
  %v501 = vadd.f32 %v404, %v500
  %v502 = vpop.f32.mrb[0].mxu0
  %v503 = vpop.f32.mrb[0].mxu0
  %v504 = vadd.f32 %v407, %v503
  %v505 = vpop.f32.mrb[0].mxu0
  %506 = vmatprep.mubr.bf16.mxu0 0
  %507 = vmatmul.mubr.bf16.gmra.mrb[0].mxu0 %v334
  %v508 = vpop.f32.mrb[0].mxu0
  %v509 = vadd.f32 %v412, %v508
  %v510 = vpop.f32.mrb[0].mxu0
  %v511 = vpop.f32.mrb[0].mxu0
  %v512 = vadd.f32 %v415, %v511
  %v513 = vpop.f32.mrb[0].mxu0
  %514 = vmatprep.mubr.bf16.mxu0 0
  %515 = vmatmul.mubr.bf16.gmra.mrb[0].mxu0 %v337
  %v516 = vpop.f32.mrb[0].mxu0
  %v517 = vadd.f32 %v420, %v516
  %v518 = vpop.f32.mrb[0].mxu0
  %v519 = vpop.f32.mrb[0].mxu0
  %v520 = vadd.f32 %v423, %v519
  %v521 = vpop.f32.mrb[0].mxu0
  %522 = vmatprep.mubr.bf16.mxu0 0
  %523 = vmatmul.mubr.bf16.gmra.mrb[0].mxu0 %v340
  %v524 = vpop.f32.mrb[0].mxu0
  %v525 = vadd.f32 %v428, %v524
  %v526 = vpop.f32.mrb[0].mxu0
  %v527 = vpop.f32.mrb[0].mxu0
  %v528 = vadd.f32 %v431, %v527
  %v529 = vpop.f32.mrb[0].mxu0
  %530 = vmatprep.mubr.bf16.mxu0 0
  %531 = vmatmul.mubr.bf16.gmra.mrb[0].mxu0 %v343
  %v532 = vpop.f32.mrb[0].mxu0
  %v533 = vadd.f32 %v436, %v532
  %v534 = vpop.f32.mrb[0].mxu0
  %v535 = vpop.f32.mrb[0].mxu0
  %v536 = vadd.f32 %v439, %v535
  %v537 = vpop.f32.mrb[0].mxu0
  %538 = vdwg.mxu0
  %539 = vst [vmem:[%s3] sm:$0xff] %v477
  %540 = vst [vmem:[%s3 + $0x8] sm:$0xff] %v480
  %541 = vst [vmem:[%s3 + $0x10] sm:$0xff] %v485
  %542 = vst [vmem:[%s3 + $0x18] sm:$0xff] %v488
  %543 = vst [vmem:[%s3 + $0x20] sm:$0xff] %v493
  %544 = vst [vmem:[%s3 + $0x28] sm:$0xff] %v496
  %545 = vst [vmem:[%s3 + $0x30] sm:$0xff] %v501
  %546 = vst [vmem:[%s3 + $0x38] sm:$0xff] %v504
  %547 = vst [vmem:[%s3 + $0x40] sm:$0xff] %v509
  %548 = vst [vmem:[%s3 + $0x48] sm:$0xff] %v512
  %549 = vst [vmem:[%s3 + $0x50] sm:$0xff] %v517
  %550 = vst [vmem:[%s3 + $0x58] sm:$0xff] %v520
  %551 = vst [vmem:[%s3 + $0x60] sm:$0xff] %v525
  %552 = vst [vmem:[%s3 + $0x68] sm:$0xff] %v528
  %553 = vst [vmem:[%s3 + $0x70] sm:$0xff] %v533
  %554 = vst [vmem:[%s3 + $0x78] sm:$0xff] %v536
  %v555 = vadd.f32 %v477, %v480
  %v556 = vadd.f32 %v555, %v485
  %v557 = vadd.f32 %v556, %v488
  %v558 = vadd.f32 %v557, %v493
  %v559 = vadd.f32 %v558, %v496
  %v560 = vadd.f32 %v559, %v501
  %v561 = vadd.f32 %v560, %v504
  %v562 = vadd.f32 %v561, %v509
  %v563 = vadd.f32 %v562, %v512
  %v564 = vadd.f32 %v563, %v517
  %v565 = vadd.f32 %v564, %v520
  %v566 = vadd.f32 %v565, %v525
  %v567 = vadd.f32 %v566, %v528
  %v568 = vadd.f32 %v567, %v533
  %v569 = vadd.f32 %v568, %v536
  %v570 = vrot.slane %v569, 4
  %v571 = vadd.f32 %v569, %v570
  %v572 = vrot.slane %v571, 2
  %v573 = vadd.f32 %v571, %v572
  %v574 = vrot.slane %v573, 1
  %v575 = vadd.f32 %v573, %v574
  %v576 = vmul.f32 %v477, %v477
  %v577 = vmul.f32 %v480, %v480
  %v578 = vmul.f32 %v485, %v485
  %v579 = vmul.f32 %v488, %v488
  %v580 = vmul.f32 %v493, %v493
  %v581 = vmul.f32 %v496, %v496
  %v582 = vmul.f32 %v501, %v501
  %v583 = vmul.f32 %v504, %v504
  %v584 = vmul.f32 %v509, %v509
  %v585 = vmul.f32 %v512, %v512
  %v586 = vmul.f32 %v517, %v517
  %v587 = vmul.f32 %v520, %v520
  %v588 = vmul.f32 %v525, %v525
  %v589 = vmul.f32 %v528, %v528
  %v590 = vmul.f32 %v533, %v533
  %v591 = vmul.f32 %v536, %v536
  %v592 = vadd.f32 %v576, %v577
  %v593 = vadd.f32 %v592, %v578
  %v594 = vadd.f32 %v593, %v579
  %v595 = vadd.f32 %v594, %v580
  %v596 = vadd.f32 %v595, %v581
  %v597 = vadd.f32 %v596, %v582
  %v598 = vadd.f32 %v597, %v583
  %v599 = vadd.f32 %v598, %v584
  %v600 = vadd.f32 %v599, %v585
  %v601 = vadd.f32 %v600, %v586
  %v602 = vadd.f32 %v601, %v587
  %v603 = vadd.f32 %v602, %v588
  %v604 = vadd.f32 %v603, %v589
  %v605 = vadd.f32 %v604, %v590
  %v606 = vadd.f32 %v605, %v591
  %v607 = vrot.slane %v606, 4
  %v608 = vadd.f32 %v606, %v607
  %v609 = vrot.slane %v608, 2
  %v610 = vadd.f32 %v608, %v609
  %v611 = vrot.slane %v610, 1
  %v612 = vadd.f32 %v610, %v611
  %vm613 = vcmask 1040384
  %v614 = vsel %vm613, %v575, %v612
  %p615 = scmp.eq.s32.totalorder 0, 0
  // Predicated region
  $region14: #{vae_forward.16} parent=0 // pred_check
    %p616 = pneg %p615
  $region15: #{vae_forward.16} parent=0 // pred_check_branch
    %618 = sbr.rel (%p616) target = $region17
  $region16: #{vae_forward.16} parent=0 // pred_region
    %619 = vst [vmem:[%s4] sm:$0x3] 0.0
  $region17: #{vae_forward.16} parent=0 // pred_fallthru
    _
  %v620 = vld [vmem:[%s4] sm:$0x3]
  %v621 = vadd.f32 %v620, %v614
  %622 = vst [vmem:[%s4] sm:$0x3] %v621
  // Predicated region
  $region18: #{vae_forward.16} parent=0 // pred_check
    _
  $region19: #{vae_forward.16} parent=0 // pred_check_branch
    %624 = sbr.rel (0) target = $region21
  $region20: #{vae_forward.16} parent=0 // pred_region
    _
  $region21: #{vae_forward.16} parent=0 // pred_fallthru
    _
  // Predicated region
  $region22: #{vae_forward.16} parent=0 // pred_check
    _
  $region23: #{vae_forward.16} parent=0 // pred_check_branch
    %626 = sbr.rel (0) target = $region25
  $region24: #{vae_forward.16} parent=0 // pred_region
    _
  $region25: #{vae_forward.16} parent=0 // pred_fallthru
    _
  // Predicated region
  $region26: #{vae_forward.16} parent=0 // pred_check
    _
  $region27: #{vae_forward.16} parent=0 // pred_check_branch
    %628 = sbr.rel (0) target = $region29
  $region28: #{vae_forward.16} parent=0 // pred_region
    _
  $region29: #{vae_forward.16} parent=0 // pred_fallthru
    _
  // Predicated region
  $region30: #{vae_forward.16} parent=0 // pred_check
    _
  $region31: #{vae_forward.16} parent=0 // pred_check_branch
    %630 = sbr.rel (0) target = $region33
  $region32: #{vae_forward.16} parent=0 // pred_region
    _
  $region33: #{vae_forward.16} parent=0 // pred_fallthru
    _

// kernel: vae_forward.19
$region0: #{vae_forward.19}
  #allocation0 [shape = 'u32[]', space=smem, size = 0x4, offset = 0x4, fixed_abs, tag = 'smem constant byte address 0x4 - core index']
  #allocation1 [shape = 'u32[144,128]{1,0:T(1,128)}', space=vmem, size = 0x12000, scoped, tag = 'internal scratch']
  %s0 = inlined_call_operand.vmem [shape: f32[32,128], index: 0, kind: input, shape index: {}]
  %s1 = inlined_call_operand.vmem [shape: f32[1,128], index: 1, kind: input, shape index: {}]
  %s2 = inlined_call_operand.vmem [shape: f32[1,128], index: 2, kind: input, shape index: {}]
  %s3 = inlined_call_operand.vmem [shape: bf16[32,128], index: 3, kind: output, shape index: {}]
  %s4 = sld [smem:[#allocation0]]
  $region22: #{vae_forward.19} parent=0
    _
  %s6 = ssub.s32 1, %s4
  %s7 = scalar_select 0, %s6, %s4
  // Predicated region
  $region2: #{vae_forward.19} parent=0 // pred_check
    _
  $region3: #{vae_forward.19} parent=0 // pred_check_branch
    %9 = sbr.rel (0) target = $region5
  $region4: #{vae_forward.19} parent=0 // pred_region
    _
  $region5: #{vae_forward.19} parent=0 // pred_fallthru
    _
  // Predicated region
  $region6: #{vae_forward.19} parent=0 // pred_check
    _
  $region7: #{vae_forward.19} parent=0 // pred_check_branch
    %11 = sbr.rel (0) target = $region9
  $region8: #{vae_forward.19} parent=0 // pred_region
    _
  $region9: #{vae_forward.19} parent=0 // pred_fallthru
    _
  // Predicated region
  $region10: #{vae_forward.19} parent=0 // pred_check
    _
  $region11: #{vae_forward.19} parent=0 // pred_check_branch
    %13 = sbr.rel (0) target = $region13
  $region12: #{vae_forward.19} parent=0 // pred_region
    _
  $region13: #{vae_forward.19} parent=0 // pred_fallthru
    _
  %v14 = vld [vmem:[%s0] sm:$0xff]
  %v15 = vld [vmem:[%s0 + $0x8] sm:$0xff]
  %v16 = vld [vmem:[%s0 + $0x10] sm:$0xff]
  %v17 = vld [vmem:[%s0 + $0x18] sm:$0xff]
  %v18 = vld [vmem:[%s1] sm:$0x1]
  %v20 = vlaneseq
  %v21 = vshrl.u32 %v20, 7
  %v22 = vsub.s32 0, %v21
  %v23 = vrot.slane %v18, %v22
  %v25 = vmul.f32 %v14, %v23
  %v26 = vmul.f32 %v15, %v23
  %v27 = vmul.f32 %v16, %v23
  %v28 = vmul.f32 %v17, %v23
  %v29 = vld [vmem:[%s2] sm:$0x1]
  %v31 = vlaneseq
  %v32 = vshrl.u32 %v31, 7
  %v33 = vsub.s32 0, %v32
  %v34 = vrot.slane %v29, %v33
  %v36 = vadd.f32 %v25, %v34
  %v37 = vadd.f32 %v26, %v34
  %v38 = vadd.f32 %v27, %v34
  %v39 = vadd.f32 %v28, %v34
  %v40 = vmax.f32 %v36, 0.0
  %v41 = vmax.f32 %v37, 0.0
  %v42 = vmax.f32 %v38, 0.0
  %v43 = vmax.f32 %v39, 0.0
  %v44 = vpack.c.bf16 %v41, %v40
  %v45 = vpack.c.bf16 %v43, %v42
  %v48 = vunpack.c.l.b16 %v44
  %v49 = vunpack.c.h.b16 %v44
  %v50 = vunpack.c.l.b16 %v45
  %v51 = vunpack.c.h.b16 %v45
  %v52 = vpack.c.b16 %v48, %v48
  %v53 = vpack.c.b16 %v49, %v49
  %v54 = vpack.c.b16 %v50, %v50
  %v55 = vpack.c.b16 %v51, %v51
  %60 = vst [vmem:[%s3] sm:$0xf] %v52
  %61 = vst [vmem:[%s3 + $0x4] sm:$0xf] %v53
  %62 = vst [vmem:[%s3 + $0x8] sm:$0xf] %v54
  %63 = vst [vmem:[%s3 + $0xc] sm:$0xf] %v55
  // Predicated region
  $region14: #{vae_forward.19} parent=0 // pred_check
    _
  $region15: #{vae_forward.19} parent=0 // pred_check_branch
    %65 = sbr.rel (0) target = $region17
  $region16: #{vae_forward.19} parent=0 // pred_region
    _
  $region17: #{vae_forward.19} parent=0 // pred_fallthru
    _
  // Predicated region
  $region18: #{vae_forward.19} parent=0 // pred_check
    _
  $region19: #{vae_forward.19} parent=0 // pred_check_branch
    %67 = sbr.rel (0) target = $region21
  $region20: #{vae_forward.19} parent=0 // pred_region
    _
  $region21: #{vae_forward.19} parent=0 // pred_fallthru
    _

// kernel: vae_forward.18
$region0: #{vae_forward.18}
  #allocation0 [shape = 'u32[]', space=smem, size = 0x4, offset = 0x4, fixed_abs, tag = 'smem constant byte address 0x4 - core index']
  #allocation1 [shape = 'u32[144,128]{1,0:T(1,128)}', space=vmem, size = 0x12000, scoped, tag = 'internal scratch']
  %s0 = inlined_call_operand.vmem [shape: bf16[32,576], index: 0, kind: input, shape index: {}]
  %s1 = inlined_call_operand.vmem [shape: bf16[576,128], index: 1, kind: input, shape index: {}]
  %s2 = inlined_call_operand.vmem [shape: f32[1,128], index: 2, kind: input, shape index: {}]
  %s3 = inlined_call_operand.vmem [shape: f32[32,128], index: 3, kind: output, shape index: {0}]
  %s4 = inlined_call_operand.vmem [shape: f32[2,128], index: 4, kind: output, shape index: {1}]
  %5 = xla_tuple %s3, %s4
  %s6 = sld [smem:[#allocation0]]
  $region34: #{vae_forward.18} parent=0
    _
  %s8 = ssub.s32 1, %s6
  %s9 = scalar_select 0, %s8, %s6
  // Predicated region
  $region2: #{vae_forward.18} parent=0 // pred_check
    _
  $region3: #{vae_forward.18} parent=0 // pred_check_branch
    %11 = sbr.rel (0) target = $region5
  $region4: #{vae_forward.18} parent=0 // pred_region
    _
  $region5: #{vae_forward.18} parent=0 // pred_fallthru
    _
  // Predicated region
  $region6: #{vae_forward.18} parent=0 // pred_check
    _
  $region7: #{vae_forward.18} parent=0 // pred_check_branch
    %13 = sbr.rel (0) target = $region9
  $region8: #{vae_forward.18} parent=0 // pred_region
    _
  $region9: #{vae_forward.18} parent=0 // pred_fallthru
    _
  // Predicated region
  $region10: #{vae_forward.18} parent=0 // pred_check
    _
  $region11: #{vae_forward.18} parent=0 // pred_check_branch
    %15 = sbr.rel (0) target = $region13
  $region12: #{vae_forward.18} parent=0 // pred_region
    _
  $region13: #{vae_forward.18} parent=0 // pred_fallthru
    _
  %v17 = vld [vmem:[%s0] sm:$0xff]
  %v18 = vld [vmem:[%s0 + $0x8] sm:$0xff]
  %v19 = vld [vmem:[%s0 + $0x10] sm:$0xf]
  %v20 = vld [vmem:[%s0 + $0x14] sm:$0xff]
  %v21 = vld [vmem:[%s0 + $0x1c] sm:$0xff]
  %v22 = vld [vmem:[%s0 + $0x24] sm:$0xf]
  %v23 = vld [vmem:[%s0 + $0x28] sm:$0xff]
  %v24 = vld [vmem:[%s0 + $0x30] sm:$0xff]
  %v25 = vld [vmem:[%s0 + $0x38] sm:$0xf]
  %v26 = vld [vmem:[%s0 + $0x3c] sm:$0xff]
  %v27 = vld [vmem:[%s0 + $0x44] sm:$0xff]
  %v28 = vld [vmem:[%s0 + $0x4c] sm:$0xf]
  %v29 = vld [vmem:[%s1] sm:$0xf]
  %v30 = vld [vmem:[%s1 + $0x4] sm:$0xf]
  %v31 = vld [vmem:[%s1 + $0x8] sm:$0xf]
  %v32 = vld [vmem:[%s1 + $0xc] sm:$0xf]
  %v33 = vld [vmem:[%s1 + $0x10] sm:$0xf]
  %v34 = vld [vmem:[%s1 + $0x14] sm:$0xf]
  %v35 = vld [vmem:[%s1 + $0x18] sm:$0xf]
  %v36 = vld [vmem:[%s1 + $0x1c] sm:$0xf]
  %v37 = vld [vmem:[%s1 + $0x20] sm:$0xf]
  %v38 = vld [vmem:[%s1 + $0x24] sm:$0xf]
  %v39 = vld [vmem:[%s1 + $0x28] sm:$0xf]
  %v40 = vld [vmem:[%s1 + $0x2c] sm:$0xf]
  %v41 = vld [vmem:[%s1 + $0x30] sm:$0xf]
  %v42 = vld [vmem:[%s1 + $0x34] sm:$0xf]
  %v43 = vld [vmem:[%s1 + $0x38] sm:$0xf]
  %v44 = vld [vmem:[%s1 + $0x3c] sm:$0xf]
  %v45 = vld [vmem:[%s1 + $0x40] sm:$0xf]
  %v46 = vld [vmem:[%s1 + $0x44] sm:$0xf]
  %v47 = vld [vmem:[%s1 + $0x48] sm:$0xf]
  %v48 = vld [vmem:[%s1 + $0x4c] sm:$0xf]
  %v49 = vld [vmem:[%s1 + $0x50] sm:$0xf]
  %v50 = vld [vmem:[%s1 + $0x54] sm:$0xf]
  %v51 = vld [vmem:[%s1 + $0x58] sm:$0xf]
  %v52 = vld [vmem:[%s1 + $0x5c] sm:$0xf]
  %v53 = vld [vmem:[%s1 + $0x60] sm:$0xf]
  %v54 = vld [vmem:[%s1 + $0x64] sm:$0xf]
  %v55 = vld [vmem:[%s1 + $0x68] sm:$0xf]
  %v56 = vld [vmem:[%s1 + $0x6c] sm:$0xf]
  %v57 = vld [vmem:[%s1 + $0x70] sm:$0xf]
  %v58 = vld [vmem:[%s1 + $0x74] sm:$0xf]
  %v59 = vld [vmem:[%s1 + $0x78] sm:$0xf]
  %v60 = vld [vmem:[%s1 + $0x7c] sm:$0xf]
  %v61 = vld [vmem:[%s1 + $0x80] sm:$0xf]
  %v62 = vld [vmem:[%s1 + $0x84] sm:$0xf]
  %v63 = vld [vmem:[%s1 + $0x88] sm:$0xf]
  %v64 = vld [vmem:[%s1 + $0x8c] sm:$0xf]
  %v65 = vld [vmem:[%s1 + $0x90] sm:$0xf]
  %v66 = vld [vmem:[%s1 + $0x94] sm:$0xf]
  %v67 = vld [vmem:[%s1 + $0x98] sm:$0xf]
  %v68 = vld [vmem:[%s1 + $0x9c] sm:$0xf]
  %v69 = vld [vmem:[%s1 + $0xa0] sm:$0xf]
  %v70 = vld [vmem:[%s1 + $0xa4] sm:$0xf]
  %v71 = vld [vmem:[%s1 + $0xa8] sm:$0xf]
  %v72 = vld [vmem:[%s1 + $0xac] sm:$0xf]
  %v73 = vld [vmem:[%s1 + $0xb0] sm:$0xf]
  %v74 = vld [vmem:[%s1 + $0xb4] sm:$0xf]
  %v75 = vld [vmem:[%s1 + $0xb8] sm:$0xf]
  %v76 = vld [vmem:[%s1 + $0xbc] sm:$0xf]
  %v77 = vld [vmem:[%s1 + $0xc0] sm:$0xf]
  %v78 = vld [vmem:[%s1 + $0xc4] sm:$0xf]
  %v79 = vld [vmem:[%s1 + $0xc8] sm:$0xf]
  %v80 = vld [vmem:[%s1 + $0xcc] sm:$0xf]
  %v81 = vld [vmem:[%s1 + $0xd0] sm:$0xf]
  %v82 = vld [vmem:[%s1 + $0xd4] sm:$0xf]
  %v83 = vld [vmem:[%s1 + $0xd8] sm:$0xf]
  %v84 = vld [vmem:[%s1 + $0xdc] sm:$0xf]
  %v85 = vld [vmem:[%s1 + $0xe0] sm:$0xf]
  %v86 = vld [vmem:[%s1 + $0xe4] sm:$0xf]
  %v87 = vld [vmem:[%s1 + $0xe8] sm:$0xf]
  %v88 = vld [vmem:[%s1 + $0xec] sm:$0xf]
  %v89 = vld [vmem:[%s1 + $0xf0] sm:$0xf]
  %v90 = vld [vmem:[%s1 + $0xf4] sm:$0xf]
  %v91 = vld [vmem:[%s1 + $0xf8] sm:$0xf]
  %v92 = vld [vmem:[%s1 + $0xfc] sm:$0xf]
  %v93 = vld [vmem:[%s1 + $0x100] sm:$0xf]
  %v94 = vld [vmem:[%s1 + $0x104] sm:$0xf]
  %v95 = vld [vmem:[%s1 + $0x108] sm:$0xf]
  %v96 = vld [vmem:[%s1 + $0x10c] sm:$0xf]
  %v97 = vld [vmem:[%s1 + $0x110] sm:$0xf]
  %v98 = vld [vmem:[%s1 + $0x114] sm:$0xf]
  %v99 = vld [vmem:[%s1 + $0x118] sm:$0xf]
  %v100 = vld [vmem:[%s1 + $0x11c] sm:$0xf]
  %v101 = vld [vmem:[%s2] sm:$0x1]
  %v103 = vlaneseq
  %v104 = vshrl.u32 %v103, 7
  %v105 = vsub.s32 0, %v104
  %v106 = vrot.slane %v101, %v105
  %v120 = vunpack.c.l.b16 %v17
  %v121 = vunpack.c.h.b16 %v17
  %v122 = vunpack.c.l.b16 %v18
  %v123 = vunpack.c.h.b16 %v18
  %v124 = vunpack.c.l.b16 %v19
  %v125 = vunpack.c.l.b16 %v20
  %v126 = vunpack.c.h.b16 %v20
  %v127 = vunpack.c.l.b16 %v21
  %v128 = vunpack.c.h.b16 %v21
  %v129 = vunpack.c.l.b16 %v22
  %v130 = vunpack.c.l.b16 %v23
  %v131 = vunpack.c.h.b16 %v23
  %v132 = vunpack.c.l.b16 %v24
  %v133 = vunpack.c.h.b16 %v24
  %v134 = vunpack.c.l.b16 %v25
  %v135 = vunpack.c.l.b16 %v26
  %v136 = vunpack.c.h.b16 %v26
  %v137 = vunpack.c.l.b16 %v27
  %v138 = vunpack.c.h.b16 %v27
  %v139 = vunpack.c.l.b16 %v28
  %v140 = vpack.c.b16 %v125, %v120
  %v141 = vpack.c.b16 %v126, %v121
  %v142 = vpack.c.b16 %v127, %v122
  %v143 = vpack.c.b16 %v128, %v123
  %v144 = vpack.c.b16 %v129, %v124
  %v145 = vpack.c.b16 %v135, %v130
  %v146 = vpack.c.b16 %v136, %v131
  %v147 = vpack.c.b16 %v137, %v132
  %v148 = vpack.c.b16 %v138, %v133
  %v149 = vpack.c.b16 %v139, %v134
  %v230 = vunpack.c.l.b16 %v29
  %v231 = vunpack.c.l.b16 %v30
  %v232 = vunpack.c.l.b16 %v31
  %v233 = vunpack.c.l.b16 %v32
  %v234 = vunpack.c.l.b16 %v33
  %v235 = vunpack.c.l.b16 %v34
  %v236 = vunpack.c.l.b16 %v35
  %v237 = vunpack.c.l.b16 %v36
  %v238 = vunpack.c.l.b16 %v37
  %v239 = vunpack.c.l.b16 %v38
  %v240 = vunpack.c.l.b16 %v39
  %v241 = vunpack.c.l.b16 %v40
  %v242 = vunpack.c.l.b16 %v41
  %v243 = vunpack.c.l.b16 %v42
  %v244 = vunpack.c.l.b16 %v43
  %v245 = vunpack.c.l.b16 %v44
  %v246 = vunpack.c.l.b16 %v45
  %v247 = vunpack.c.l.b16 %v46
  %v248 = vunpack.c.l.b16 %v47
  %v249 = vunpack.c.l.b16 %v48
  %v250 = vunpack.c.l.b16 %v49
  %v251 = vunpack.c.l.b16 %v50
  %v252 = vunpack.c.l.b16 %v51
  %v253 = vunpack.c.l.b16 %v52
  %v254 = vunpack.c.l.b16 %v53
  %v255 = vunpack.c.l.b16 %v54
  %v256 = vunpack.c.l.b16 %v55
  %v257 = vunpack.c.l.b16 %v56
  %v258 = vunpack.c.l.b16 %v57
  %v259 = vunpack.c.l.b16 %v58
  %v260 = vunpack.c.l.b16 %v59
  %v261 = vunpack.c.l.b16 %v60
  %v262 = vunpack.c.l.b16 %v61
  %v263 = vunpack.c.l.b16 %v62
  %v264 = vunpack.c.l.b16 %v63
  %v265 = vunpack.c.l.b16 %v64
  %v266 = vunpack.c.l.b16 %v65
  %v267 = vunpack.c.l.b16 %v66
  %v268 = vunpack.c.l.b16 %v67
  %v269 = vunpack.c.l.b16 %v68
  %v270 = vunpack.c.l.b16 %v69
  %v271 = vunpack.c.l.b16 %v70
  %v272 = vunpack.c.l.b16 %v71
  %v273 = vunpack.c.l.b16 %v72
  %v274 = vunpack.c.l.b16 %v73
  %v275 = vunpack.c.l.b16 %v74
  %v276 = vunpack.c.l.b16 %v75
  %v277 = vunpack.c.l.b16 %v76
  %v278 = vunpack.c.l.b16 %v77
  %v279 = vunpack.c.l.b16 %v78
  %v280 = vunpack.c.l.b16 %v79
  %v281 = vunpack.c.l.b16 %v80
  %v282 = vunpack.c.l.b16 %v81
  %v283 = vunpack.c.l.b16 %v82
  %v284 = vunpack.c.l.b16 %v83
  %v285 = vunpack.c.l.b16 %v84
  %v286 = vunpack.c.l.b16 %v85
  %v287 = vunpack.c.l.b16 %v86
  %v288 = vunpack.c.l.b16 %v87
  %v289 = vunpack.c.l.b16 %v88
  %v290 = vunpack.c.l.b16 %v89
  %v291 = vunpack.c.l.b16 %v90
  %v292 = vunpack.c.l.b16 %v91
  %v293 = vunpack.c.l.b16 %v92
  %v294 = vunpack.c.l.b16 %v93
  %v295 = vunpack.c.l.b16 %v94
  %v296 = vunpack.c.l.b16 %v95
  %v297 = vunpack.c.l.b16 %v96
  %v298 = vunpack.c.l.b16 %v97
  %v299 = vunpack.c.l.b16 %v98
  %v300 = vunpack.c.l.b16 %v99
  %v301 = vunpack.c.l.b16 %v100
  %v302 = vpack.c.b16 %v231, %v230
  %v303 = vpack.c.b16 %v233, %v232
  %v304 = vpack.c.b16 %v235, %v234
  %v305 = vpack.c.b16 %v237, %v236
  %v306 = vpack.c.b16 %v239, %v238
  %v307 = vpack.c.b16 %v241, %v240
  %v308 = vpack.c.b16 %v243, %v242
  %v309 = vpack.c.b16 %v245, %v244
  %v310 = vpack.c.b16 %v247, %v246
  %v311 = vpack.c.b16 %v249, %v248
  %v312 = vpack.c.b16 %v251, %v250
  %v313 = vpack.c.b16 %v253, %v252
  %v314 = vpack.c.b16 %v255, %v254
  %v315 = vpack.c.b16 %v257, %v256
  %v316 = vpack.c.b16 %v259, %v258
  %v317 = vpack.c.b16 %v261, %v260
  %v318 = vpack.c.b16 %v263, %v262
  %v319 = vpack.c.b16 %v265, %v264
  %v320 = vpack.c.b16 %v267, %v266
  %v321 = vpack.c.b16 %v269, %v268
  %v322 = vpack.c.b16 %v271, %v270
  %v323 = vpack.c.b16 %v273, %v272
  %v324 = vpack.c.b16 %v275, %v274
  %v325 = vpack.c.b16 %v277, %v276
  %v326 = vpack.c.b16 %v279, %v278
  %v327 = vpack.c.b16 %v281, %v280
  %v328 = vpack.c.b16 %v283, %v282
  %v329 = vpack.c.b16 %v285, %v284
  %v330 = vpack.c.b16 %v287, %v286
  %v331 = vpack.c.b16 %v289, %v288
  %v332 = vpack.c.b16 %v291, %v290
  %v333 = vpack.c.b16 %v293, %v292
  %v334 = vpack.c.b16 %v295, %v294
  %v335 = vpack.c.b16 %v297, %v296
  %v336 = vpack.c.b16 %v299, %v298
  %v337 = vpack.c.b16 %v301, %v300
  %vm374 = vcmask 523264
  %v376 = vsel %vm374, %v144, 0
  %v379 = vsel %vm374, %v149, 0
  %381 = vmatprep.subr.bf16.mxu0 0
  %382 = vmatpush1.bf16.msra.mxu0 %v302
  %383 = vmatprep.subr.bf16.mxu0 0
  %384 = vmatpush1.bf16.msra.mxu0 %v303
  %385 = vmatprep.subr.bf16.mxu0 0
  %386 = vmatpush1.bf16.msra.mxu0 %v304
  %387 = vmatprep.subr.bf16.mxu0 0
  %388 = vmatpush1.bf16.msra.mxu0 %v305
  %389 = vmatprep.subr.bf16.mxu0 0
  %390 = vmatpush1.bf16.msra.mxu0 %v306
  %391 = vmatprep.subr.bf16.mxu0 0
  %392 = vmatpush1.bf16.msra.mxu0 %v307
  %393 = vmatprep.subr.bf16.mxu0 0
  %394 = vmatpush1.bf16.msra.mxu0 %v308
  %395 = vmatprep.subr.bf16.mxu0 0
  %396 = vmatpush1.bf16.msra.mxu0 %v309
  %397 = vmatprep.subr.bf16.mxu0 0
  %398 = vmatpush1.bf16.msra.mxu0 %v310
  %399 = vmatprep.subr.bf16.mxu0 0
  %400 = vmatpush1.bf16.msra.mxu0 %v311
  %401 = vmatprep.subr.bf16.mxu0 0
  %402 = vmatpush1.bf16.msra.mxu0 %v312
  %403 = vmatprep.subr.bf16.mxu0 0
  %404 = vmatpush1.bf16.msra.mxu0 %v313
  %405 = vmatprep.subr.bf16.mxu0 0
  %406 = vmatpush1.bf16.msra.mxu0 %v314
  %407 = vmatprep.subr.bf16.mxu0 0
  %408 = vmatpush1.bf16.msra.mxu0 %v315
  %409 = vmatprep.subr.bf16.mxu0 0
  %410 = vmatpush1.bf16.msra.mxu0 %v316
  %411 = vmatprep.subr.bf16.mxu0 0
  %412 = vmatpush1.bf16.msra.mxu0 %v317
  %413 = vmatprep.mubr.bf16.mxu0 %v141
  %414 = vmatmul.mubr.bf16.gmra.mrb[0].mxu0 %v140
  %v415 = vpop.f32.mrb[0].mxu0
  %v416 = vadd.f32 %v106, %v415
  %v417 = vpop.f32.mrb[0].mxu0
  %v418 = vpop.f32.mrb[0].mxu0
  %v419 = vadd.f32 %v106, %v418
  %v420 = vpop.f32.mrb[0].mxu0
  %421 = vmatprep.mubr.bf16.mxu0 %v146
  %422 = vmatmul.mubr.bf16.gmra.mrb[0].mxu0 %v145
  %v423 = vpop.f32.mrb[0].mxu0
  %v424 = vadd.f32 %v106, %v423
  %v425 = vpop.f32.mrb[0].mxu0
  %v426 = vpop.f32.mrb[0].mxu0
  %v427 = vadd.f32 %v106, %v426
  %v428 = vpop.f32.mrb[0].mxu0
  %429 = vdwg.mxu0
  %430 = vmatprep.subr.bf16.mxu0 0
  %431 = vmatpush1.bf16.msra.mxu0 %v318
  %432 = vmatprep.subr.bf16.mxu0 0
  %433 = vmatpush1.bf16.msra.mxu0 %v319
  %434 = vmatprep.subr.bf16.mxu0 0
  %435 = vmatpush1.bf16.msra.mxu0 %v320
  %436 = vmatprep.subr.bf16.mxu0 0
  %437 = vmatpush1.bf16.msra.mxu0 %v321
  %438 = vmatprep.subr.bf16.mxu0 0
  %439 = vmatpush1.bf16.msra.mxu0 %v322
  %440 = vmatprep.subr.bf16.mxu0 0
  %441 = vmatpush1.bf16.msra.mxu0 %v323
  %442 = vmatprep.subr.bf16.mxu0 0
  %443 = vmatpush1.bf16.msra.mxu0 %v324
  %444 = vmatprep.subr.bf16.mxu0 0
  %445 = vmatpush1.bf16.msra.mxu0 %v325
  %446 = vmatprep.subr.bf16.mxu0 0
  %447 = vmatpush1.bf16.msra.mxu0 %v326
  %448 = vmatprep.subr.bf16.mxu0 0
  %449 = vmatpush1.bf16.msra.mxu0 %v327
  %450 = vmatprep.subr.bf16.mxu0 0
  %451 = vmatpush1.bf16.msra.mxu0 %v328
  %452 = vmatprep.subr.bf16.mxu0 0
  %453 = vmatpush1.bf16.msra.mxu0 %v329
  %454 = vmatprep.subr.bf16.mxu0 0
  %455 = vmatpush1.bf16.msra.mxu0 %v330
  %456 = vmatprep.subr.bf16.mxu0 0
  %457 = vmatpush1.bf16.msra.mxu0 %v331
  %458 = vmatprep.subr.bf16.mxu0 0
  %459 = vmatpush1.bf16.msra.mxu0 %v332
  %460 = vmatprep.subr.bf16.mxu0 0
  %461 = vmatpush1.bf16.msra.mxu0 %v333
  %462 = vmatprep.mubr.bf16.mxu0 %v143
  %463 = vmatmul.mubr.bf16.gmra.mrb[0].mxu0 %v142
  %v464 = vpop.f32.mrb[0].mxu0
  %v465 = vadd.f32 %v416, %v464
  %v466 = vpop.f32.mrb[0].mxu0
  %v467 = vpop.f32.mrb[0].mxu0
  %v468 = vadd.f32 %v419, %v467
  %v469 = vpop.f32.mrb[0].mxu0
  %470 = vmatprep.mubr.bf16.mxu0 %v148
  %471 = vmatmul.mubr.bf16.gmra.mrb[0].mxu0 %v147
  %v472 = vpop.f32.mrb[0].mxu0
  %v473 = vadd.f32 %v424, %v472
  %v474 = vpop.f32.mrb[0].mxu0
  %v475 = vpop.f32.mrb[0].mxu0
  %v476 = vadd.f32 %v427, %v475
  %v477 = vpop.f32.mrb[0].mxu0
  %478 = vdwg.mxu0
  %479 = vmatprep.subr.bf16.mxu0 0
  %480 = vmatpush1.bf16.msra.mxu0 %v334
  %481 = vmatprep.subr.bf16.mxu0 0
  %482 = vmatpush1.bf16.msra.mxu0 %v335
  %483 = vmatprep.subr.bf16.mxu0 0
  %484 = vmatpush1.bf16.msra.mxu0 %v336
  %485 = vmatprep.subr.bf16.mxu0 0
  %486 = vmatpush1.bf16.msra.mxu0 %v337
  %487 = vmatprep.subr.bf16.mxu0 0
  %488 = vmatpush1.bf16.msra.mxu0 0
  %489 = vmatprep.subr.bf16.mxu0 0
  %490 = vmatpush1.bf16.msra.mxu0 0
  %491 = vmatprep.subr.bf16.mxu0 0
  %492 = vmatpush1.bf16.msra.mxu0 0
  %493 = vmatprep.subr.bf16.mxu0 0
  %494 = vmatpush1.bf16.msra.mxu0 0
  %495 = vmatprep.subr.bf16.mxu0 0
  %496 = vmatpush1.bf16.msra.mxu0 0
  %497 = vmatprep.subr.bf16.mxu0 0
  %498 = vmatpush1.bf16.msra.mxu0 0
  %499 = vmatprep.subr.bf16.mxu0 0
  %500 = vmatpush1.bf16.msra.mxu0 0
  %501 = vmatprep.subr.bf16.mxu0 0
  %502 = vmatpush1.bf16.msra.mxu0 0
  %503 = vmatprep.subr.bf16.mxu0 0
  %504 = vmatpush1.bf16.msra.mxu0 0
  %505 = vmatprep.subr.bf16.mxu0 0
  %506 = vmatpush1.bf16.msra.mxu0 0
  %507 = vmatprep.subr.bf16.mxu0 0
  %508 = vmatpush1.bf16.msra.mxu0 0
  %509 = vmatprep.subr.bf16.mxu0 0
  %510 = vmatpush1.bf16.msra.mxu0 0
  %511 = vmatprep.mubr.bf16.mxu0 0
  %512 = vmatmul.mubr.bf16.gmra.mrb[0].mxu0 %v376
  %v513 = vpop.f32.mrb[0].mxu0
  %v514 = vadd.f32 %v465, %v513
  %v515 = vpop.f32.mrb[0].mxu0
  %v516 = vpop.f32.mrb[0].mxu0
  %v517 = vadd.f32 %v468, %v516
  %v518 = vpop.f32.mrb[0].mxu0
  %519 = vmatprep.mubr.bf16.mxu0 0
  %520 = vmatmul.mubr.bf16.gmra.mrb[0].mxu0 %v379
  %v521 = vpop.f32.mrb[0].mxu0
  %v522 = vadd.f32 %v473, %v521
  %v523 = vpop.f32.mrb[0].mxu0
  %v524 = vpop.f32.mrb[0].mxu0
  %v525 = vadd.f32 %v476, %v524
  %v526 = vpop.f32.mrb[0].mxu0
  %527 = vdwg.mxu0
  %528 = vst [vmem:[%s3] sm:$0xff] %v514
  %529 = vst [vmem:[%s3 + $0x8] sm:$0xff] %v517
  %530 = vst [vmem:[%s3 + $0x10] sm:$0xff] %v522
  %531 = vst [vmem:[%s3 + $0x18] sm:$0xff] %v525
  %v532 = vadd.f32 %v514, %v517
  %v533 = vadd.f32 %v532, %v522
  %v534 = vadd.f32 %v533, %v525
  %v535 = vrot.slane %v534, 4
  %v536 = vadd.f32 %v534, %v535
  %v537 = vrot.slane %v536, 2
  %v538 = vadd.f32 %v536, %v537
  %v539 = vrot.slane %v538, 1
  %v540 = vadd.f32 %v538, %v539
  %v541 = vmul.f32 %v514, %v514
  %v542 = vmul.f32 %v517, %v517
  %v543 = vmul.f32 %v522, %v522
  %v544 = vmul.f32 %v525, %v525
  %v545 = vadd.f32 %v541, %v542
  %v546 = vadd.f32 %v545, %v543
  %v547 = vadd.f32 %v546, %v544
  %v548 = vrot.slane %v547, 4
  %v549 = vadd.f32 %v547, %v548
  %v550 = vrot.slane %v549, 2
  %v551 = vadd.f32 %v549, %v550
  %v552 = vrot.slane %v551, 1
  %v553 = vadd.f32 %v551, %v552
  %vm554 = vcmask 1040384
  %v555 = vsel %vm554, %v540, %v553
  %p556 = scmp.eq.s32.totalorder 0, 0
  // Predicated region
  $region14: #{vae_forward.18} parent=0 // pred_check
    %p557 = pneg %p556
  $region15: #{vae_forward.18} parent=0 // pred_check_branch
    %559 = sbr.rel (%p557) target = $region17
  $region16: #{vae_forward.18} parent=0 // pred_region
    %560 = vst [vmem:[%s4] sm:$0x3] 0.0
  $region17: #{vae_forward.18} parent=0 // pred_fallthru
    _
  %v561 = vld [vmem:[%s4] sm:$0x3]
  %v562 = vadd.f32 %v561, %v555
  %563 = vst [vmem:[%s4] sm:$0x3] %v562
  // Predicated region
  $region18: #{vae_forward.18} parent=0 // pred_check
    _
  $region19: #{vae_forward.18} parent=0 // pred_check_branch
    %565 = sbr.rel (0) target = $region21
  $region20: #{vae_forward.18} parent=0 // pred_region
    _
  $region21: #{vae_forward.18} parent=0 // pred_fallthru
    _
  // Predicated region
  $region22: #{vae_forward.18} parent=0 // pred_check
    _
  $region23: #{vae_forward.18} parent=0 // pred_check_branch
    %567 = sbr.rel (0) target = $region25
  $region24: #{vae_forward.18} parent=0 // pred_region
    _
  $region25: #{vae_forward.18} parent=0 // pred_fallthru
    _
  // Predicated region
  $region26: #{vae_forward.18} parent=0 // pred_check
    _
  $region27: #{vae_forward.18} parent=0 // pred_check_branch
    %569 = sbr.rel (0) target = $region29
  $region28: #{vae_forward.18} parent=0 // pred_region
    _
  $region29: #{vae_forward.18} parent=0 // pred_fallthru
    _
  // Predicated region
  $region30: #{vae_forward.18} parent=0 // pred_check
    _
  $region31: #{vae_forward.18} parent=0 // pred_check_branch
    %571 = sbr.rel (0) target = $region33
  $region32: #{vae_forward.18} parent=0 // pred_region
    _
  $region33: #{vae_forward.18} parent=0 // pred_fallthru
    _

// kernel: vae_forward.21
$region0: #{vae_forward.21}
  #allocation0 [shape = 'u32[]', space=smem, size = 0x4, offset = 0x4, fixed_abs, tag = 'smem constant byte address 0x4 - core index']
  #allocation1 [shape = 'u32[144,128]{1,0:T(1,128)}', space=vmem, size = 0x12000, scoped, tag = 'internal scratch']
  %s0 = inlined_call_operand.vmem [shape: bf16[2,64], index: 0, kind: input, shape index: {}]
  %s1 = inlined_call_operand.vmem [shape: bf16[64,2048], index: 1, kind: input, shape index: {}]
  %s2 = inlined_call_operand.vmem [shape: f32[1,2048], index: 2, kind: input, shape index: {}]
  %s3 = inlined_call_operand.vmem [shape: bf16[2,2048], index: 3, kind: output, shape index: {}]
  %s4 = sld [smem:[#allocation0]]
  $region22: #{vae_forward.21} parent=0
    _
  %s6 = ssub.s32 1, %s4
  %s7 = scalar_select 0, %s6, %s4
  // Predicated region
  $region2: #{vae_forward.21} parent=0 // pred_check
    _
  $region3: #{vae_forward.21} parent=0 // pred_check_branch
    %9 = sbr.rel (0) target = $region5
  $region4: #{vae_forward.21} parent=0 // pred_region
    _
  $region5: #{vae_forward.21} parent=0 // pred_fallthru
    _
  // Predicated region
  $region6: #{vae_forward.21} parent=0 // pred_check
    _
  $region7: #{vae_forward.21} parent=0 // pred_check_branch
    %11 = sbr.rel (0) target = $region9
  $region8: #{vae_forward.21} parent=0 // pred_region
    _
  $region9: #{vae_forward.21} parent=0 // pred_fallthru
    _
  // Predicated region
  $region10: #{vae_forward.21} parent=0 // pred_check
    _
  $region11: #{vae_forward.21} parent=0 // pred_check_branch
    %13 = sbr.rel (0) target = $region13
  $region12: #{vae_forward.21} parent=0 // pred_region
    _
  $region13: #{vae_forward.21} parent=0 // pred_fallthru
    _
  %v15 = vld [vmem:[%s0] sm:$0x1]
  %v16 = vld [vmem:[%s1] sm:$0xff]
  %v17 = vld [vmem:[%s1 + $0x8] sm:$0xff]
  %v18 = vld [vmem:[%s1 + $0x10] sm:$0xff]
  %v19 = vld [vmem:[%s1 + $0x18] sm:$0xff]
  %v20 = vld [vmem:[%s1 + $0x20] sm:$0xff]
  %v21 = vld [vmem:[%s1 + $0x28] sm:$0xff]
  %v22 = vld [vmem:[%s1 + $0x30] sm:$0xff]
  %v23 = vld [vmem:[%s1 + $0x38] sm:$0xff]
  %v24 = vld [vmem:[%s1 + $0x40] sm:$0xff]
  %v25 = vld [vmem:[%s1 + $0x48] sm:$0xff]
  %v26 = vld [vmem:[%s1 + $0x50] sm:$0xff]
  %v27 = vld [vmem:[%s1 + $0x58] sm:$0xff]
  %v28 = vld [vmem:[%s1 + $0x60] sm:$0xff]
  %v29 = vld [vmem:[%s1 + $0x68] sm:$0xff]
  %v30 = vld [vmem:[%s1 + $0x70] sm:$0xff]
  %v31 = vld [vmem:[%s1 + $0x78] sm:$0xff]
  %v32 = vld [vmem:[%s1 + $0x80] sm:$0xff]
  %v33 = vld [vmem:[%s1 + $0x88] sm:$0xff]
  %v34 = vld [vmem:[%s1 + $0x90] sm:$0xff]
  %v35 = vld [vmem:[%s1 + $0x98] sm:$0xff]
  %v36 = vld [vmem:[%s1 + $0xa0] sm:$0xff]
  %v37 = vld [vmem:[%s1 + $0xa8] sm:$0xff]
  %v38 = vld [vmem:[%s1 + $0xb0] sm:$0xff]
  %v39 = vld [vmem:[%s1 + $0xb8] sm:$0xff]
  %v40 = vld [vmem:[%s1 + $0xc0] sm:$0xff]
  %v41 = vld [vmem:[%s1 + $0xc8] sm:$0xff]
  %v42 = vld [vmem:[%s1 + $0xd0] sm:$0xff]
  %v43 = vld [vmem:[%s1 + $0xd8] sm:$0xff]
  %v44 = vld [vmem:[%s1 + $0xe0] sm:$0xff]
  %v45 = vld [vmem:[%s1 + $0xe8] sm:$0xff]
  %v46 = vld [vmem:[%s1 + $0xf0] sm:$0xff]
  %v47 = vld [vmem:[%s1 + $0xf8] sm:$0xff]
  %v48 = vld [vmem:[%s1 + $0x100] sm:$0xff]
  %v49 = vld [vmem:[%s1 + $0x108] sm:$0xff]
  %v50 = vld [vmem:[%s1 + $0x110] sm:$0xff]
  %v51 = vld [vmem:[%s1 + $0x118] sm:$0xff]
  %v52 = vld [vmem:[%s1 + $0x120] sm:$0xff]
  %v53 = vld [vmem:[%s1 + $0x128] sm:$0xff]
  %v54 = vld [vmem:[%s1 + $0x130] sm:$0xff]
  %v55 = vld [vmem:[%s1 + $0x138] sm:$0xff]
  %v56 = vld [vmem:[%s1 + $0x140] sm:$0xff]
  %v57 = vld [vmem:[%s1 + $0x148] sm:$0xff]
  %v58 = vld [vmem:[%s1 + $0x150] sm:$0xff]
  %v59 = vld [vmem:[%s1 + $0x158] sm:$0xff]
  %v60 = vld [vmem:[%s1 + $0x160] sm:$0xff]
  %v61 = vld [vmem:[%s1 + $0x168] sm:$0xff]
  %v62 = vld [vmem:[%s1 + $0x170] sm:$0xff]
  %v63 = vld [vmem:[%s1 + $0x178] sm:$0xff]
  %v64 = vld [vmem:[%s1 + $0x180] sm:$0xff]
  %v65 = vld [vmem:[%s1 + $0x188] sm:$0xff]
  %v66 = vld [vmem:[%s1 + $0x190] sm:$0xff]
  %v67 = vld [vmem:[%s1 + $0x198] sm:$0xff]
  %v68 = vld [vmem:[%s1 + $0x1a0] sm:$0xff]
  %v69 = vld [vmem:[%s1 + $0x1a8] sm:$0xff]
  %v70 = vld [vmem:[%s1 + $0x1b0] sm:$0xff]
  %v71 = vld [vmem:[%s1 + $0x1b8] sm:$0xff]
  %v72 = vld [vmem:[%s1 + $0x1c0] sm:$0xff]
  %v73 = vld [vmem:[%s1 + $0x1c8] sm:$0xff]
  %v74 = vld [vmem:[%s1 + $0x1d0] sm:$0xff]
  %v75 = vld [vmem:[%s1 + $0x1d8] sm:$0xff]
  %v76 = vld [vmem:[%s1 + $0x1e0] sm:$0xff]
  %v77 = vld [vmem:[%s1 + $0x1e8] sm:$0xff]
  %v78 = vld [vmem:[%s1 + $0x1f0] sm:$0xff]
  %v79 = vld [vmem:[%s1 + $0x1f8] sm:$0xff]
  %v80 = vld [vmem:[%s2] sm:$0xff]
  %v81 = vld [vmem:[%s2 + $0x8] sm:$0xff]
  %v84 = vlaneseq
  %v85 = vshrl.u32 %v84, 7
  %v86 = vsub.s32 0, %v85
  %v87 = vrot.slane %v80, %v86
  %v88 = vlaneseq
  %v89 = vshrl.u32 %v88, 7
  %v90 = vsub.s32 1, %v89
  %v91 = vrot.slane %v80, %v90
  %v92 = vlaneseq
  %v93 = vshrl.u32 %v92, 7
  %v94 = vsub.s32 2, %v93
  %v95 = vrot.slane %v80, %v94
  %v96 = vlaneseq
  %v97 = vshrl.u32 %v96, 7
  %v98 = vsub.s32 3, %v97
  %v99 = vrot.slane %v80, %v98
  %v100 = vlaneseq
  %v101 = vshrl.u32 %v100, 7
  %v102 = vsub.s32 4, %v101
  %v103 = vrot.slane %v80, %v102
  %v104 = vlaneseq
  %v105 = vshrl.u32 %v104, 7
  %v106 = vsub.s32 5, %v105
  %v107 = vrot.slane %v80, %v106
  %v108 = vlaneseq
  %v109 = vshrl.u32 %v108, 7
  %v110 = vsub.s32 6, %v109
  %v111 = vrot.slane %v80, %v110
  %v112 = vlaneseq
  %v113 = vshrl.u32 %v112, 7
  %v114 = vsub.s32 7, %v113
  %v115 = vrot.slane %v80, %v114
  %v116 = vlaneseq
  %v117 = vshrl.u32 %v116, 7
  %v118 = vsub.s32 0, %v117
  %v119 = vrot.slane %v81, %v118
  %v120 = vlaneseq
  %v121 = vshrl.u32 %v120, 7
  %v122 = vsub.s32 1, %v121
  %v123 = vrot.slane %v81, %v122
  %v124 = vlaneseq
  %v125 = vshrl.u32 %v124, 7
  %v126 = vsub.s32 2, %v125
  %v127 = vrot.slane %v81, %v126
  %v128 = vlaneseq
  %v129 = vshrl.u32 %v128, 7
  %v130 = vsub.s32 3, %v129
  %v131 = vrot.slane %v81, %v130
  %v132 = vlaneseq
  %v133 = vshrl.u32 %v132, 7
  %v134 = vsub.s32 4, %v133
  %v135 = vrot.slane %v81, %v134
  %v136 = vlaneseq
  %v137 = vshrl.u32 %v136, 7
  %v138 = vsub.s32 5, %v137
  %v139 = vrot.slane %v81, %v138
  %v140 = vlaneseq
  %v141 = vshrl.u32 %v140, 7
  %v142 = vsub.s32 6, %v141
  %v143 = vrot.slane %v81, %v142
  %v144 = vlaneseq
  %v145 = vshrl.u32 %v144, 7
  %v146 = vsub.s32 7, %v145
  %v147 = vrot.slane %v81, %v146
  %v228 = vunpack.c.l.b16 %v16
  %v229 = vunpack.c.h.b16 %v16
  %v230 = vunpack.c.l.b16 %v17
  %v231 = vunpack.c.h.b16 %v17
  %v232 = vunpack.c.l.b16 %v18
  %v233 = vunpack.c.h.b16 %v18
  %v234 = vunpack.c.l.b16 %v19
  %v235 = vunpack.c.h.b16 %v19
  %v236 = vunpack.c.l.b16 %v20
  %v237 = vunpack.c.h.b16 %v20
  %v238 = vunpack.c.l.b16 %v21
  %v239 = vunpack.c.h.b16 %v21
  %v240 = vunpack.c.l.b16 %v22
  %v241 = vunpack.c.h.b16 %v22
  %v242 = vunpack.c.l.b16 %v23
  %v243 = vunpack.c.h.b16 %v23
  %v244 = vunpack.c.l.b16 %v24
  %v245 = vunpack.c.h.b16 %v24
  %v246 = vunpack.c.l.b16 %v25
  %v247 = vunpack.c.h.b16 %v25
  %v248 = vunpack.c.l.b16 %v26
  %v249 = vunpack.c.h.b16 %v26
  %v250 = vunpack.c.l.b16 %v27
  %v251 = vunpack.c.h.b16 %v27
  %v252 = vunpack.c.l.b16 %v28
  %v253 = vunpack.c.h.b16 %v28
  %v254 = vunpack.c.l.b16 %v29
  %v255 = vunpack.c.h.b16 %v29
  %v256 = vunpack.c.l.b16 %v30
  %v257 = vunpack.c.h.b16 %v30
  %v258 = vunpack.c.l.b16 %v31
  %v259 = vunpack.c.h.b16 %v31
  %v260 = vunpack.c.l.b16 %v32
  %v261 = vunpack.c.h.b16 %v32
  %v262 = vunpack.c.l.b16 %v33
  %v263 = vunpack.c.h.b16 %v33
  %v264 = vunpack.c.l.b16 %v34
  %v265 = vunpack.c.h.b16 %v34
  %v266 = vunpack.c.l.b16 %v35
  %v267 = vunpack.c.h.b16 %v35
  %v268 = vunpack.c.l.b16 %v36
  %v269 = vunpack.c.h.b16 %v36
  %v270 = vunpack.c.l.b16 %v37
  %v271 = vunpack.c.h.b16 %v37
  %v272 = vunpack.c.l.b16 %v38
  %v273 = vunpack.c.h.b16 %v38
  %v274 = vunpack.c.l.b16 %v39
  %v275 = vunpack.c.h.b16 %v39
  %v276 = vunpack.c.l.b16 %v40
  %v277 = vunpack.c.h.b16 %v40
  %v278 = vunpack.c.l.b16 %v41
  %v279 = vunpack.c.h.b16 %v41
  %v280 = vunpack.c.l.b16 %v42
  %v281 = vunpack.c.h.b16 %v42
  %v282 = vunpack.c.l.b16 %v43
  %v283 = vunpack.c.h.b16 %v43
  %v284 = vunpack.c.l.b16 %v44
  %v285 = vunpack.c.h.b16 %v44
  %v286 = vunpack.c.l.b16 %v45
  %v287 = vunpack.c.h.b16 %v45
  %v288 = vunpack.c.l.b16 %v46
  %v289 = vunpack.c.h.b16 %v46
  %v290 = vunpack.c.l.b16 %v47
  %v291 = vunpack.c.h.b16 %v47
  %v292 = vunpack.c.l.b16 %v48
  %v293 = vunpack.c.h.b16 %v48
  %v294 = vunpack.c.l.b16 %v49
  %v295 = vunpack.c.h.b16 %v49
  %v296 = vunpack.c.l.b16 %v50
  %v297 = vunpack.c.h.b16 %v50
  %v298 = vunpack.c.l.b16 %v51
  %v299 = vunpack.c.h.b16 %v51
  %v300 = vunpack.c.l.b16 %v52
  %v301 = vunpack.c.h.b16 %v52
  %v302 = vunpack.c.l.b16 %v53
  %v303 = vunpack.c.h.b16 %v53
  %v304 = vunpack.c.l.b16 %v54
  %v305 = vunpack.c.h.b16 %v54
  %v306 = vunpack.c.l.b16 %v55
  %v307 = vunpack.c.h.b16 %v55
  %v308 = vunpack.c.l.b16 %v56
  %v309 = vunpack.c.h.b16 %v56
  %v310 = vunpack.c.l.b16 %v57
  %v311 = vunpack.c.h.b16 %v57
  %v312 = vunpack.c.l.b16 %v58
  %v313 = vunpack.c.h.b16 %v58
  %v314 = vunpack.c.l.b16 %v59
  %v315 = vunpack.c.h.b16 %v59
  %v316 = vunpack.c.l.b16 %v60
  %v317 = vunpack.c.h.b16 %v60
  %v318 = vunpack.c.l.b16 %v61
  %v319 = vunpack.c.h.b16 %v61
  %v320 = vunpack.c.l.b16 %v62
  %v321 = vunpack.c.h.b16 %v62
  %v322 = vunpack.c.l.b16 %v63
  %v323 = vunpack.c.h.b16 %v63
  %v324 = vunpack.c.l.b16 %v64
  %v325 = vunpack.c.h.b16 %v64
  %v326 = vunpack.c.l.b16 %v65
  %v327 = vunpack.c.h.b16 %v65
  %v328 = vunpack.c.l.b16 %v66
  %v329 = vunpack.c.h.b16 %v66
  %v330 = vunpack.c.l.b16 %v67
  %v331 = vunpack.c.h.b16 %v67
  %v332 = vunpack.c.l.b16 %v68
  %v333 = vunpack.c.h.b16 %v68
  %v334 = vunpack.c.l.b16 %v69
  %v335 = vunpack.c.h.b16 %v69
  %v336 = vunpack.c.l.b16 %v70
  %v337 = vunpack.c.h.b16 %v70
  %v338 = vunpack.c.l.b16 %v71
  %v339 = vunpack.c.h.b16 %v71
  %v340 = vunpack.c.l.b16 %v72
  %v341 = vunpack.c.h.b16 %v72
  %v342 = vunpack.c.l.b16 %v73
  %v343 = vunpack.c.h.b16 %v73
  %v344 = vunpack.c.l.b16 %v74
  %v345 = vunpack.c.h.b16 %v74
  %v346 = vunpack.c.l.b16 %v75
  %v347 = vunpack.c.h.b16 %v75
  %v348 = vunpack.c.l.b16 %v76
  %v349 = vunpack.c.h.b16 %v76
  %v350 = vunpack.c.l.b16 %v77
  %v351 = vunpack.c.h.b16 %v77
  %v352 = vunpack.c.l.b16 %v78
  %v353 = vunpack.c.h.b16 %v78
  %v354 = vunpack.c.l.b16 %v79
  %v355 = vunpack.c.h.b16 %v79
  %v356 = vpack.c.b16 %v244, %v228
  %v357 = vpack.c.b16 %v245, %v229
  %v358 = vpack.c.b16 %v246, %v230
  %v359 = vpack.c.b16 %v247, %v231
  %v360 = vpack.c.b16 %v248, %v232
  %v361 = vpack.c.b16 %v249, %v233
  %v362 = vpack.c.b16 %v250, %v234
  %v363 = vpack.c.b16 %v251, %v235
  %v364 = vpack.c.b16 %v252, %v236
  %v365 = vpack.c.b16 %v253, %v237
  %v366 = vpack.c.b16 %v254, %v238
  %v367 = vpack.c.b16 %v255, %v239
  %v368 = vpack.c.b16 %v256, %v240
  %v369 = vpack.c.b16 %v257, %v241
  %v370 = vpack.c.b16 %v258, %v242
  %v371 = vpack.c.b16 %v259, %v243
  %v372 = vpack.c.b16 %v276, %v260
  %v373 = vpack.c.b16 %v277, %v261
  %v374 = vpack.c.b16 %v278, %v262
  %v375 = vpack.c.b16 %v279, %v263
  %v376 = vpack.c.b16 %v280, %v264
  %v377 = vpack.c.b16 %v281, %v265
  %v378 = vpack.c.b16 %v282, %v266
  %v379 = vpack.c.b16 %v283, %v267
  %v380 = vpack.c.b16 %v284, %v268
  %v381 = vpack.c.b16 %v285, %v269
  %v382 = vpack.c.b16 %v286, %v270
  %v383 = vpack.c.b16 %v287, %v271
  %v384 = vpack.c.b16 %v288, %v272
  %v385 = vpack.c.b16 %v289, %v273
  %v386 = vpack.c.b16 %v290, %v274
  %v387 = vpack.c.b16 %v291, %v275
  %v388 = vpack.c.b16 %v308, %v292
  %v389 = vpack.c.b16 %v309, %v293
  %v390 = vpack.c.b16 %v310, %v294
  %v391 = vpack.c.b16 %v311, %v295
  %v392 = vpack.c.b16 %v312, %v296
  %v393 = vpack.c.b16 %v313, %v297
  %v394 = vpack.c.b16 %v314, %v298
  %v395 = vpack.c.b16 %v315, %v299
  %v396 = vpack.c.b16 %v316, %v300
  %v397 = vpack.c.b16 %v317, %v301
  %v398 = vpack.c.b16 %v318, %v302
  %v399 = vpack.c.b16 %v319, %v303
  %v400 = vpack.c.b16 %v320, %v304
  %v401 = vpack.c.b16 %v321, %v305
  %v402 = vpack.c.b16 %v322, %v306
  %v403 = vpack.c.b16 %v323, %v307
  %v404 = vpack.c.b16 %v340, %v324
  %v405 = vpack.c.b16 %v341, %v325
  %v406 = vpack.c.b16 %v342, %v326
  %v407 = vpack.c.b16 %v343, %v327
  %v408 = vpack.c.b16 %v344, %v328
  %v409 = vpack.c.b16 %v345, %v329
  %v410 = vpack.c.b16 %v346, %v330
  %v411 = vpack.c.b16 %v347, %v331
  %v412 = vpack.c.b16 %v348, %v332
  %v413 = vpack.c.b16 %v349, %v333
  %v414 = vpack.c.b16 %v350, %v334
  %v415 = vpack.c.b16 %v351, %v335
  %v416 = vpack.c.b16 %v352, %v336
  %v417 = vpack.c.b16 %v353, %v337
  %v418 = vpack.c.b16 %v354, %v338
  %v419 = vpack.c.b16 %v355, %v339
  %vm484 = vcmask 523264
  %v486 = vsel %vm484, %v15, 0
  %488 = vmatprep.subr.bf16.mxu0 %v357
  %489 = vmatpush1.bf16.msra.mxu0 %v356
  %490 = vmatprep.subr.bf16.mxu0 %v373
  %491 = vmatpush1.bf16.msra.mxu0 %v372
  %492 = vmatprep.subr.bf16.mxu0 %v389
  %493 = vmatpush1.bf16.msra.mxu0 %v388
  %494 = vmatprep.subr.bf16.mxu0 %v405
  %495 = vmatpush1.bf16.msra.mxu0 %v404
  %496 = vmatprep.subr.bf16.mxu0 0
  %497 = vmatpush1.bf16.msra.mxu0 0
  %498 = vmatprep.subr.bf16.mxu0 0
  %499 = vmatpush1.bf16.msra.mxu0 0
  %500 = vmatprep.subr.bf16.mxu0 0
  %501 = vmatpush1.bf16.msra.mxu0 0
  %502 = vmatprep.subr.bf16.mxu0 0
  %503 = vmatpush1.bf16.msra.mxu0 0
  %504 = vmatprep.subr.bf16.mxu0 0
  %505 = vmatpush1.bf16.msra.mxu0 0
  %506 = vmatprep.subr.bf16.mxu0 0
  %507 = vmatpush1.bf16.msra.mxu0 0
  %508 = vmatprep.subr.bf16.mxu0 0
  %509 = vmatpush1.bf16.msra.mxu0 0
  %510 = vmatprep.subr.bf16.mxu0 0
  %511 = vmatpush1.bf16.msra.mxu0 0
  %512 = vmatprep.subr.bf16.mxu0 0
  %513 = vmatpush1.bf16.msra.mxu0 0
  %514 = vmatprep.subr.bf16.mxu0 0
  %515 = vmatpush1.bf16.msra.mxu0 0
  %516 = vmatprep.subr.bf16.mxu0 0
  %517 = vmatpush1.bf16.msra.mxu0 0
  %518 = vmatprep.subr.bf16.mxu0 0
  %519 = vmatpush1.bf16.msra.mxu0 0
  %520 = vmatprep.mubr.bf16.mxu0 0
  %521 = vmatmul.mubr.bf16.gmra.mrb[0].mxu0 %v486
  %v522 = vpop.f32.mrb[0].mxu0
  %v523 = vadd.f32 %v87, %v522
  %v524 = vpop.f32.mrb[0].mxu0
  %v525 = vadd.f32 %v91, %v524
  %v526 = vpop.f32.mrb[0].mxu0
  %v527 = vpop.f32.mrb[0].mxu0
  %528 = vdwg.mxu0
  %529 = vmatprep.subr.bf16.mxu0 %v359
  %530 = vmatpush1.bf16.msra.mxu0 %v358
  %531 = vmatprep.subr.bf16.mxu0 %v375
  %532 = vmatpush1.bf16.msra.mxu0 %v374
  %533 = vmatprep.subr.bf16.mxu0 %v391
  %534 = vmatpush1.bf16.msra.mxu0 %v390
  %535 = vmatprep.subr.bf16.mxu0 %v407
  %536 = vmatpush1.bf16.msra.mxu0 %v406
  %537 = vmatprep.subr.bf16.mxu0 0
  %538 = vmatpush1.bf16.msra.mxu0 0
  %539 = vmatprep.subr.bf16.mxu0 0
  %540 = vmatpush1.bf16.msra.mxu0 0
  %541 = vmatprep.subr.bf16.mxu0 0
  %542 = vmatpush1.bf16.msra.mxu0 0
  %543 = vmatprep.subr.bf16.mxu0 0
  %544 = vmatpush1.bf16.msra.mxu0 0
  %545 = vmatprep.subr.bf16.mxu0 0
  %546 = vmatpush1.bf16.msra.mxu0 0
  %547 = vmatprep.subr.bf16.mxu0 0
  %548 = vmatpush1.bf16.msra.mxu0 0
  %549 = vmatprep.subr.bf16.mxu0 0
  %550 = vmatpush1.bf16.msra.mxu0 0
  %551 = vmatprep.subr.bf16.mxu0 0
  %552 = vmatpush1.bf16.msra.mxu0 0
  %553 = vmatprep.subr.bf16.mxu0 0
  %554 = vmatpush1.bf16.msra.mxu0 0
  %555 = vmatprep.subr.bf16.mxu0 0
  %556 = vmatpush1.bf16.msra.mxu0 0
  %557 = vmatprep.subr.bf16.mxu0 0
  %558 = vmatpush1.bf16.msra.mxu0 0
  %559 = vmatprep.subr.bf16.mxu0 0
  %560 = vmatpush1.bf16.msra.mxu0 0
  %561 = vmatprep.mubr.bf16.mxu0 0
  %562 = vmatmul.mubr.bf16.gmra.mrb[0].mxu0 %v486
  %v563 = vpop.f32.mrb[0].mxu0
  %v564 = vadd.f32 %v95, %v563
  %v565 = vpop.f32.mrb[0].mxu0
  %v566 = vadd.f32 %v99, %v565
  %v567 = vpop.f32.mrb[0].mxu0
  %v568 = vpop.f32.mrb[0].mxu0
  %569 = vdwg.mxu0
  %570 = vmatprep.subr.bf16.mxu0 %v361
  %571 = vmatpush1.bf16.msra.mxu0 %v360
  %572 = vmatprep.subr.bf16.mxu0 %v377
  %573 = vmatpush1.bf16.msra.mxu0 %v376
  %574 = vmatprep.subr.bf16.mxu0 %v393
  %575 = vmatpush1.bf16.msra.mxu0 %v392
  %576 = vmatprep.subr.bf16.mxu0 %v409
  %577 = vmatpush1.bf16.msra.mxu0 %v408
  %578 = vmatprep.subr.bf16.mxu0 0
  %579 = vmatpush1.bf16.msra.mxu0 0
  %580 = vmatprep.subr.bf16.mxu0 0
  %581 = vmatpush1.bf16.msra.mxu0 0
  %582 = vmatprep.subr.bf16.mxu0 0
  %583 = vmatpush1.bf16.msra.mxu0 0
  %584 = vmatprep.subr.bf16.mxu0 0
  %585 = vmatpush1.bf16.msra.mxu0 0
  %586 = vmatprep.subr.bf16.mxu0 0
  %587 = vmatpush1.bf16.msra.mxu0 0
  %588 = vmatprep.subr.bf16.mxu0 0
  %589 = vmatpush1.bf16.msra.mxu0 0
  %590 = vmatprep.subr.bf16.mxu0 0
  %591 = vmatpush1.bf16.msra.mxu0 0
  %592 = vmatprep.subr.bf16.mxu0 0
  %593 = vmatpush1.bf16.msra.mxu0 0
  %594 = vmatprep.subr.bf16.mxu0 0
  %595 = vmatpush1.bf16.msra.mxu0 0
  %596 = vmatprep.subr.bf16.mxu0 0
  %597 = vmatpush1.bf16.msra.mxu0 0
  %598 = vmatprep.subr.bf16.mxu0 0
  %599 = vmatpush1.bf16.msra.mxu0 0
  %600 = vmatprep.subr.bf16.mxu0 0
  %601 = vmatpush1.bf16.msra.mxu0 0
  %602 = vmatprep.mubr.bf16.mxu0 0
  %603 = vmatmul.mubr.bf16.gmra.mrb[0].mxu0 %v486
  %v604 = vpop.f32.mrb[0].mxu0
  %v605 = vadd.f32 %v103, %v604
  %v606 = vpop.f32.mrb[0].mxu0
  %v607 = vadd.f32 %v107, %v606
  %v608 = vpop.f32.mrb[0].mxu0
  %v609 = vpop.f32.mrb[0].mxu0
  %610 = vdwg.mxu0
  %611 = vmatprep.subr.bf16.mxu0 %v363
  %612 = vmatpush1.bf16.msra.mxu0 %v362
  %613 = vmatprep.subr.bf16.mxu0 %v379
  %614 = vmatpush1.bf16.msra.mxu0 %v378
  %615 = vmatprep.subr.bf16.mxu0 %v395
  %616 = vmatpush1.bf16.msra.mxu0 %v394
  %617 = vmatprep.subr.bf16.mxu0 %v411
  %618 = vmatpush1.bf16.msra.mxu0 %v410
  %619 = vmatprep.subr.bf16.mxu0 0
  %620 = vmatpush1.bf16.msra.mxu0 0
  %621 = vmatprep.subr.bf16.mxu0 0
  %622 = vmatpush1.bf16.msra.mxu0 0
  %623 = vmatprep.subr.bf16.mxu0 0
  %624 = vmatpush1.bf16.msra.mxu0 0
  %625 = vmatprep.subr.bf16.mxu0 0
  %626 = vmatpush1.bf16.msra.mxu0 0
  %627 = vmatprep.subr.bf16.mxu0 0
  %628 = vmatpush1.bf16.msra.mxu0 0
  %629 = vmatprep.subr.bf16.mxu0 0
  %630 = vmatpush1.bf16.msra.mxu0 0
  %631 = vmatprep.subr.bf16.mxu0 0
  %632 = vmatpush1.bf16.msra.mxu0 0
  %633 = vmatprep.subr.bf16.mxu0 0
  %634 = vmatpush1.bf16.msra.mxu0 0
  %635 = vmatprep.subr.bf16.mxu0 0
  %636 = vmatpush1.bf16.msra.mxu0 0
  %637 = vmatprep.subr.bf16.mxu0 0
  %638 = vmatpush1.bf16.msra.mxu0 0
  %639 = vmatprep.subr.bf16.mxu0 0
  %640 = vmatpush1.bf16.msra.mxu0 0
  %641 = vmatprep.subr.bf16.mxu0 0
  %642 = vmatpush1.bf16.msra.mxu0 0
  %643 = vmatprep.mubr.bf16.mxu0 0
  %644 = vmatmul.mubr.bf16.gmra.mrb[0].mxu0 %v486
  %v645 = vpop.f32.mrb[0].mxu0
  %v646 = vadd.f32 %v111, %v645
  %v647 = vpop.f32.mrb[0].mxu0
  %v648 = vadd.f32 %v115, %v647
  %v649 = vpop.f32.mrb[0].mxu0
  %v650 = vpop.f32.mrb[0].mxu0
  %651 = vdwg.mxu0
  %652 = vmatprep.subr.bf16.mxu0 %v365
  %653 = vmatpush1.bf16.msra.mxu0 %v364
  %654 = vmatprep.subr.bf16.mxu0 %v381
  %655 = vmatpush1.bf16.msra.mxu0 %v380
  %656 = vmatprep.subr.bf16.mxu0 %v397
  %657 = vmatpush1.bf16.msra.mxu0 %v396
  %658 = vmatprep.subr.bf16.mxu0 %v413
  %659 = vmatpush1.bf16.msra.mxu0 %v412
  %660 = vmatprep.subr.bf16.mxu0 0
  %661 = vmatpush1.bf16.msra.mxu0 0
  %662 = vmatprep.subr.bf16.mxu0 0
  %663 = vmatpush1.bf16.msra.mxu0 0
  %664 = vmatprep.subr.bf16.mxu0 0
  %665 = vmatpush1.bf16.msra.mxu0 0
  %666 = vmatprep.subr.bf16.mxu0 0
  %667 = vmatpush1.bf16.msra.mxu0 0
  %668 = vmatprep.subr.bf16.mxu0 0
  %669 = vmatpush1.bf16.msra.mxu0 0
  %670 = vmatprep.subr.bf16.mxu0 0
  %671 = vmatpush1.bf16.msra.mxu0 0
  %672 = vmatprep.subr.bf16.mxu0 0
  %673 = vmatpush1.bf16.msra.mxu0 0
  %674 = vmatprep.subr.bf16.mxu0 0
  %675 = vmatpush1.bf16.msra.mxu0 0
  %676 = vmatprep.subr.bf16.mxu0 0
  %677 = vmatpush1.bf16.msra.mxu0 0
  %678 = vmatprep.subr.bf16.mxu0 0
  %679 = vmatpush1.bf16.msra.mxu0 0
  %680 = vmatprep.subr.bf16.mxu0 0
  %681 = vmatpush1.bf16.msra.mxu0 0
  %682 = vmatprep.subr.bf16.mxu0 0
  %683 = vmatpush1.bf16.msra.mxu0 0
  %684 = vmatprep.mubr.bf16.mxu0 0
  %685 = vmatmul.mubr.bf16.gmra.mrb[0].mxu0 %v486
  %v686 = vpop.f32.mrb[0].mxu0
  %v687 = vadd.f32 %v119, %v686
  %v688 = vpop.f32.mrb[0].mxu0
  %v689 = vadd.f32 %v123, %v688
  %v690 = vpop.f32.mrb[0].mxu0
  %v691 = vpop.f32.mrb[0].mxu0
  %692 = vdwg.mxu0
  %693 = vmatprep.subr.bf16.mxu0 %v367
  %694 = vmatpush1.bf16.msra.mxu0 %v366
  %695 = vmatprep.subr.bf16.mxu0 %v383
  %696 = vmatpush1.bf16.msra.mxu0 %v382
  %697 = vmatprep.subr.bf16.mxu0 %v399
  %698 = vmatpush1.bf16.msra.mxu0 %v398
  %699 = vmatprep.subr.bf16.mxu0 %v415
  %700 = vmatpush1.bf16.msra.mxu0 %v414
  %701 = vmatprep.subr.bf16.mxu0 0
  %702 = vmatpush1.bf16.msra.mxu0 0
  %703 = vmatprep.subr.bf16.mxu0 0
  %704 = vmatpush1.bf16.msra.mxu0 0
  %705 = vmatprep.subr.bf16.mxu0 0
  %706 = vmatpush1.bf16.msra.mxu0 0
  %707 = vmatprep.subr.bf16.mxu0 0
  %708 = vmatpush1.bf16.msra.mxu0 0
  %709 = vmatprep.subr.bf16.mxu0 0
  %710 = vmatpush1.bf16.msra.mxu0 0
  %711 = vmatprep.subr.bf16.mxu0 0
  %712 = vmatpush1.bf16.msra.mxu0 0
  %713 = vmatprep.subr.bf16.mxu0 0
  %714 = vmatpush1.bf16.msra.mxu0 0
  %715 = vmatprep.subr.bf16.mxu0 0
  %716 = vmatpush1.bf16.msra.mxu0 0
  %717 = vmatprep.subr.bf16.mxu0 0
  %718 = vmatpush1.bf16.msra.mxu0 0
  %719 = vmatprep.subr.bf16.mxu0 0
  %720 = vmatpush1.bf16.msra.mxu0 0
  %721 = vmatprep.subr.bf16.mxu0 0
  %722 = vmatpush1.bf16.msra.mxu0 0
  %723 = vmatprep.subr.bf16.mxu0 0
  %724 = vmatpush1.bf16.msra.mxu0 0
  %725 = vmatprep.mubr.bf16.mxu0 0
  %726 = vmatmul.mubr.bf16.gmra.mrb[0].mxu0 %v486
  %v727 = vpop.f32.mrb[0].mxu0
  %v728 = vadd.f32 %v127, %v727
  %v729 = vpop.f32.mrb[0].mxu0
  %v730 = vadd.f32 %v131, %v729
  %v731 = vpop.f32.mrb[0].mxu0
  %v732 = vpop.f32.mrb[0].mxu0
  %733 = vdwg.mxu0
  %734 = vmatprep.subr.bf16.mxu0 %v369
  %735 = vmatpush1.bf16.msra.mxu0 %v368
  %736 = vmatprep.subr.bf16.mxu0 %v385
  %737 = vmatpush1.bf16.msra.mxu0 %v384
  %738 = vmatprep.subr.bf16.mxu0 %v401
  %739 = vmatpush1.bf16.msra.mxu0 %v400
  %740 = vmatprep.subr.bf16.mxu0 %v417
  %741 = vmatpush1.bf16.msra.mxu0 %v416
  %742 = vmatprep.subr.bf16.mxu0 0
  %743 = vmatpush1.bf16.msra.mxu0 0
  %744 = vmatprep.subr.bf16.mxu0 0
  %745 = vmatpush1.bf16.msra.mxu0 0
  %746 = vmatprep.subr.bf16.mxu0 0
  %747 = vmatpush1.bf16.msra.mxu0 0
  %748 = vmatprep.subr.bf16.mxu0 0
  %749 = vmatpush1.bf16.msra.mxu0 0
  %750 = vmatprep.subr.bf16.mxu0 0
  %751 = vmatpush1.bf16.msra.mxu0 0
  %752 = vmatprep.subr.bf16.mxu0 0
  %753 = vmatpush1.bf16.msra.mxu0 0
  %754 = vmatprep.subr.bf16.mxu0 0
  %755 = vmatpush1.bf16.msra.mxu0 0
  %756 = vmatprep.subr.bf16.mxu0 0
  %757 = vmatpush1.bf16.msra.mxu0 0
  %758 = vmatprep.subr.bf16.mxu0 0
  %759 = vmatpush1.bf16.msra.mxu0 0
  %760 = vmatprep.subr.bf16.mxu0 0
  %761 = vmatpush1.bf16.msra.mxu0 0
  %762 = vmatprep.subr.bf16.mxu0 0
  %763 = vmatpush1.bf16.msra.mxu0 0
  %764 = vmatprep.subr.bf16.mxu0 0
  %765 = vmatpush1.bf16.msra.mxu0 0
  %766 = vmatprep.mubr.bf16.mxu0 0
  %767 = vmatmul.mubr.bf16.gmra.mrb[0].mxu0 %v486
  %v768 = vpop.f32.mrb[0].mxu0
  %v769 = vadd.f32 %v135, %v768
  %v770 = vpop.f32.mrb[0].mxu0
  %v771 = vadd.f32 %v139, %v770
  %v772 = vpop.f32.mrb[0].mxu0
  %v773 = vpop.f32.mrb[0].mxu0
  %774 = vdwg.mxu0
  %775 = vmatprep.subr.bf16.mxu0 %v371
  %776 = vmatpush1.bf16.msra.mxu0 %v370
  %777 = vmatprep.subr.bf16.mxu0 %v387
  %778 = vmatpush1.bf16.msra.mxu0 %v386
  %779 = vmatprep.subr.bf16.mxu0 %v403
  %780 = vmatpush1.bf16.msra.mxu0 %v402
  %781 = vmatprep.subr.bf16.mxu0 %v419
  %782 = vmatpush1.bf16.msra.mxu0 %v418
  %783 = vmatprep.subr.bf16.mxu0 0
  %784 = vmatpush1.bf16.msra.mxu0 0
  %785 = vmatprep.subr.bf16.mxu0 0
  %786 = vmatpush1.bf16.msra.mxu0 0
  %787 = vmatprep.subr.bf16.mxu0 0
  %788 = vmatpush1.bf16.msra.mxu0 0
  %789 = vmatprep.subr.bf16.mxu0 0
  %790 = vmatpush1.bf16.msra.mxu0 0
  %791 = vmatprep.subr.bf16.mxu0 0
  %792 = vmatpush1.bf16.msra.mxu0 0
  %793 = vmatprep.subr.bf16.mxu0 0
  %794 = vmatpush1.bf16.msra.mxu0 0
  %795 = vmatprep.subr.bf16.mxu0 0
  %796 = vmatpush1.bf16.msra.mxu0 0
  %797 = vmatprep.subr.bf16.mxu0 0
  %798 = vmatpush1.bf16.msra.mxu0 0
  %799 = vmatprep.subr.bf16.mxu0 0
  %800 = vmatpush1.bf16.msra.mxu0 0
  %801 = vmatprep.subr.bf16.mxu0 0
  %802 = vmatpush1.bf16.msra.mxu0 0
  %803 = vmatprep.subr.bf16.mxu0 0
  %804 = vmatpush1.bf16.msra.mxu0 0
  %805 = vmatprep.subr.bf16.mxu0 0
  %806 = vmatpush1.bf16.msra.mxu0 0
  %807 = vmatprep.mubr.bf16.mxu0 0
  %808 = vmatmul.mubr.bf16.gmra.mrb[0].mxu0 %v486
  %v809 = vpop.f32.mrb[0].mxu0
  %v810 = vadd.f32 %v143, %v809
  %v811 = vpop.f32.mrb[0].mxu0
  %v812 = vadd.f32 %v147, %v811
  %v813 = vpop.f32.mrb[0].mxu0
  %v814 = vpop.f32.mrb[0].mxu0
  %815 = vdwg.mxu0
  %v816 = vmax.f32 %v523, 0.0
  %v817 = vmax.f32 %v525, 0.0
  %v818 = vmax.f32 %v564, 0.0
  %v819 = vmax.f32 %v566, 0.0
  %v820 = vmax.f32 %v605, 0.0
  %v821 = vmax.f32 %v607, 0.0
  %v822 = vmax.f32 %v646, 0.0
  %v823 = vmax.f32 %v648, 0.0
  %v824 = vmax.f32 %v687, 0.0
  %v825 = vmax.f32 %v689, 0.0
  %v826 = vmax.f32 %v728, 0.0
  %v827 = vmax.f32 %v730, 0.0
  %v828 = vmax.f32 %v769, 0.0
  %v829 = vmax.f32 %v771, 0.0
  %v830 = vmax.f32 %v810, 0.0
  %v831 = vmax.f32 %v812, 0.0
  %v832 = vpack.c.bf16 %v816, %v816
  %v833 = vpack.c.bf16 %v817, %v817
  %v834 = vpack.c.bf16 %v818, %v818
  %v835 = vpack.c.bf16 %v819, %v819
  %v836 = vpack.c.bf16 %v820, %v820
  %v837 = vpack.c.bf16 %v821, %v821
  %v838 = vpack.c.bf16 %v822, %v822
  %v839 = vpack.c.bf16 %v823, %v823
  %v840 = vpack.c.bf16 %v824, %v824
  %v841 = vpack.c.bf16 %v825, %v825
  %v842 = vpack.c.bf16 %v826, %v826
  %v843 = vpack.c.bf16 %v827, %v827
  %v844 = vpack.c.bf16 %v828, %v828
  %v845 = vpack.c.bf16 %v829, %v829
  %v846 = vpack.c.bf16 %v830, %v830
  %v847 = vpack.c.bf16 %v831, %v831
  %v864 = vcombine.low %v832, %v833
  %v865 = vcombine.low %v834, %v835
  %v866 = vcombine.low %v836, %v837
  %v867 = vcombine.low %v838, %v839
  %v869 = vunpack.c.l.s4 1966171168
  %v870 = vunpack.c.0.s8 %v869
  %v871 = vlaneseq
  %v872 = vshrl.u32 %v871, 7
  %v873 = vsub.s32 %v870, %v872
  %v874 = vrot.slane %v864, %v873
  %v876 = vunpack.c.l.s4 1966171168
  %v877 = vunpack.c.0.s8 %v876
  %v878 = vlaneseq
  %v879 = vshrl.u32 %v878, 7
  %v880 = vsub.s32 %v877, %v879
  %v881 = vrot.slane %v865, %v880
  %v883 = vunpack.c.l.s4 1966171168
  %v884 = vunpack.c.0.s8 %v883
  %v885 = vlaneseq
  %v886 = vshrl.u32 %v885, 7
  %v887 = vsub.s32 %v884, %v886
  %v888 = vrot.slane %v866, %v887
  %v890 = vunpack.c.l.s4 1966171168
  %v891 = vunpack.c.0.s8 %v890
  %v892 = vlaneseq
  %v893 = vshrl.u32 %v892, 7
  %v894 = vsub.s32 %v891, %v893
  %v895 = vrot.slane %v867, %v894
  %v896 = vcombine.low %v874, %v881
  %v897 = vcombine.low %v888, %v895
  %v899 = vunpack.c.l.s4 1966171168
  %v900 = vunpack.c.0.s8 %v899
  %v901 = vlaneseq
  %v902 = vshrl.u32 %v901, 7
  %v903 = vsub.s32 %v900, %v902
  %v904 = vrot.slane %v896, %v903
  %v906 = vunpack.c.l.s4 1966171168
  %v907 = vunpack.c.0.s8 %v906
  %v908 = vlaneseq
  %v909 = vshrl.u32 %v908, 7
  %v910 = vsub.s32 %v907, %v909
  %v911 = vrot.slane %v897, %v910
  %v912 = vcombine.low %v904, %v911
  %v913 = vcombine.low %v840, %v841
  %v914 = vcombine.low %v842, %v843
  %v915 = vcombine.low %v844, %v845
  %v916 = vcombine.low %v846, %v847
  %v918 = vunpack.c.l.s4 1966171168
  %v919 = vunpack.c.0.s8 %v918
  %v920 = vlaneseq
  %v921 = vshrl.u32 %v920, 7
  %v922 = vsub.s32 %v919, %v921
  %v923 = vrot.slane %v913, %v922
  %v925 = vunpack.c.l.s4 1966171168
  %v926 = vunpack.c.0.s8 %v925
  %v927 = vlaneseq
  %v928 = vshrl.u32 %v927, 7
  %v929 = vsub.s32 %v926, %v928
  %v930 = vrot.slane %v914, %v929
  %v932 = vunpack.c.l.s4 1966171168
  %v933 = vunpack.c.0.s8 %v932
  %v934 = vlaneseq
  %v935 = vshrl.u32 %v934, 7
  %v936 = vsub.s32 %v933, %v935
  %v937 = vrot.slane %v915, %v936
  %v939 = vunpack.c.l.s4 1966171168
  %v940 = vunpack.c.0.s8 %v939
  %v941 = vlaneseq
  %v942 = vshrl.u32 %v941, 7
  %v943 = vsub.s32 %v940, %v942
  %v944 = vrot.slane %v916, %v943
  %v945 = vcombine.low %v923, %v930
  %v946 = vcombine.low %v937, %v944
  %v948 = vunpack.c.l.s4 1966171168
  %v949 = vunpack.c.0.s8 %v948
  %v950 = vlaneseq
  %v951 = vshrl.u32 %v950, 7
  %v952 = vsub.s32 %v949, %v951
  %v953 = vrot.slane %v945, %v952
  %v955 = vunpack.c.l.s4 1966171168
  %v956 = vunpack.c.0.s8 %v955
  %v957 = vlaneseq
  %v958 = vshrl.u32 %v957, 7
  %v959 = vsub.s32 %v956, %v958
  %v960 = vrot.slane %v946, %v959
  %v961 = vcombine.low %v953, %v960
  %964 = vst [vmem:[%s3] sm:$0xff] %v912
  %965 = vst [vmem:[%s3 + $0x8] sm:$0xff] %v961
  // Predicated region
  $region14: #{vae_forward.21} parent=0 // pred_check
    _
  $region15: #{vae_forward.21} parent=0 // pred_check_branch
    %967 = sbr.rel (0) target = $region17
  $region16: #{vae_forward.21} parent=0 // pred_region
    _
  $region17: #{vae_forward.21} parent=0 // pred_fallthru
    _
  // Predicated region
  $region18: #{vae_forward.21} parent=0 // pred_check
    _
  $region19: #{vae_forward.21} parent=0 // pred_check_branch
    %969 = sbr.rel (0) target = $region21
  $region20: #{vae_forward.21} parent=0 // pred_region
    _
  $region21: #{vae_forward.21} parent=0 // pred_fallthru
    _

// kernel: vae_forward.20
$region0: #{vae_forward.20}
  #allocation0 [shape = 'u32[]', space=smem, size = 0x4, offset = 0x4, fixed_abs, tag = 'smem constant byte address 0x4 - core index']
  #allocation1 [shape = 'u32[144,128]{1,0:T(1,128)}', space=vmem, size = 0x12000, scoped, tag = 'internal scratch']
  %s0 = inlined_call_operand.vmem [shape: bf16[2,2048], index: 0, kind: input, shape index: {}]
  %s1 = inlined_call_operand.vmem [shape: bf16[2048,128], index: 1, kind: input, shape index: {}]
  %s2 = inlined_call_operand.vmem [shape: f32[1,128], index: 2, kind: input, shape index: {}]
  %s3 = inlined_call_operand.vmem [shape: f32[2,64], index: 3, kind: input, shape index: {}]
  %s4 = inlined_call_operand.vmem [shape: f32[2,128], index: 4, kind: output, shape index: {0}]
  %s5 = inlined_call_operand.vmem [shape: f32[2,64], index: 5, kind: output, shape index: {1}]
  %6 = xla_tuple %s4, %s5
  %s7 = sld [smem:[#allocation0]]
  $region34: #{vae_forward.20} parent=0
    _
  %s9 = ssub.s32 1, %s7
  %s10 = scalar_select 0, %s9, %s7
  // Predicated region
  $region2: #{vae_forward.20} parent=0 // pred_check
    _
  $region3: #{vae_forward.20} parent=0 // pred_check_branch
    %12 = sbr.rel (0) target = $region5
  $region4: #{vae_forward.20} parent=0 // pred_region
    _
  $region5: #{vae_forward.20} parent=0 // pred_fallthru
    _
  // Predicated region
  $region6: #{vae_forward.20} parent=0 // pred_check
    _
  $region7: #{vae_forward.20} parent=0 // pred_check_branch
    %14 = sbr.rel (0) target = $region9
  $region8: #{vae_forward.20} parent=0 // pred_region
    _
  $region9: #{vae_forward.20} parent=0 // pred_fallthru
    _
  // Predicated region
  $region10: #{vae_forward.20} parent=0 // pred_check
    _
  $region11: #{vae_forward.20} parent=0 // pred_check_branch
    %16 = sbr.rel (0) target = $region13
  $region12: #{vae_forward.20} parent=0 // pred_region
    _
  $region13: #{vae_forward.20} parent=0 // pred_fallthru
    _
  // Predicated region
  $region14: #{vae_forward.20} parent=0 // pred_check
    _
  $region15: #{vae_forward.20} parent=0 // pred_check_branch
    %18 = sbr.rel (0) target = $region17
  $region16: #{vae_forward.20} parent=0 // pred_region
    _
  $region17: #{vae_forward.20} parent=0 // pred_fallthru
    _
  %v20 = vld [vmem:[%s0] sm:$0xff]
  %v21 = vld [vmem:[%s0 + $0x8] sm:$0xff]
  %v22 = vld [vmem:[%s1] sm:$0xf]
  %v23 = vld [vmem:[%s1 + $0x4] sm:$0xf]
  %v24 = vld [vmem:[%s1 + $0x8] sm:$0xf]
  %v25 = vld [vmem:[%s1 + $0xc] sm:$0xf]
  %v26 = vld [vmem:[%s1 + $0x10] sm:$0xf]
  %v27 = vld [vmem:[%s1 + $0x14] sm:$0xf]
  %v28 = vld [vmem:[%s1 + $0x18] sm:$0xf]
  %v29 = vld [vmem:[%s1 + $0x1c] sm:$0xf]
  %v30 = vld [vmem:[%s1 + $0x20] sm:$0xf]
  %v31 = vld [vmem:[%s1 + $0x24] sm:$0xf]
  %v32 = vld [vmem:[%s1 + $0x28] sm:$0xf]
  %v33 = vld [vmem:[%s1 + $0x2c] sm:$0xf]
  %v34 = vld [vmem:[%s1 + $0x30] sm:$0xf]
  %v35 = vld [vmem:[%s1 + $0x34] sm:$0xf]
  %v36 = vld [vmem:[%s1 + $0x38] sm:$0xf]
  %v37 = vld [vmem:[%s1 + $0x3c] sm:$0xf]
  %v38 = vld [vmem:[%s1 + $0x40] sm:$0xf]
  %v39 = vld [vmem:[%s1 + $0x44] sm:$0xf]
  %v40 = vld [vmem:[%s1 + $0x48] sm:$0xf]
  %v41 = vld [vmem:[%s1 + $0x4c] sm:$0xf]
  %v42 = vld [vmem:[%s1 + $0x50] sm:$0xf]
  %v43 = vld [vmem:[%s1 + $0x54] sm:$0xf]
  %v44 = vld [vmem:[%s1 + $0x58] sm:$0xf]
  %v45 = vld [vmem:[%s1 + $0x5c] sm:$0xf]
  %v46 = vld [vmem:[%s1 + $0x60] sm:$0xf]
  %v47 = vld [vmem:[%s1 + $0x64] sm:$0xf]
  %v48 = vld [vmem:[%s1 + $0x68] sm:$0xf]
  %v49 = vld [vmem:[%s1 + $0x6c] sm:$0xf]
  %v50 = vld [vmem:[%s1 + $0x70] sm:$0xf]
  %v51 = vld [vmem:[%s1 + $0x74] sm:$0xf]
  %v52 = vld [vmem:[%s1 + $0x78] sm:$0xf]
  %v53 = vld [vmem:[%s1 + $0x7c] sm:$0xf]
  %v54 = vld [vmem:[%s1 + $0x80] sm:$0xf]
  %v55 = vld [vmem:[%s1 + $0x84] sm:$0xf]
  %v56 = vld [vmem:[%s1 + $0x88] sm:$0xf]
  %v57 = vld [vmem:[%s1 + $0x8c] sm:$0xf]
  %v58 = vld [vmem:[%s1 + $0x90] sm:$0xf]
  %v59 = vld [vmem:[%s1 + $0x94] sm:$0xf]
  %v60 = vld [vmem:[%s1 + $0x98] sm:$0xf]
  %v61 = vld [vmem:[%s1 + $0x9c] sm:$0xf]
  %v62 = vld [vmem:[%s1 + $0xa0] sm:$0xf]
  %v63 = vld [vmem:[%s1 + $0xa4] sm:$0xf]
  %v64 = vld [vmem:[%s1 + $0xa8] sm:$0xf]
  %v65 = vld [vmem:[%s1 + $0xac] sm:$0xf]
  %v66 = vld [vmem:[%s1 + $0xb0] sm:$0xf]
  %v67 = vld [vmem:[%s1 + $0xb4] sm:$0xf]
  %v68 = vld [vmem:[%s1 + $0xb8] sm:$0xf]
  %v69 = vld [vmem:[%s1 + $0xbc] sm:$0xf]
  %v70 = vld [vmem:[%s1 + $0xc0] sm:$0xf]
  %v71 = vld [vmem:[%s1 + $0xc4] sm:$0xf]
  %v72 = vld [vmem:[%s1 + $0xc8] sm:$0xf]
  %v73 = vld [vmem:[%s1 + $0xcc] sm:$0xf]
  %v74 = vld [vmem:[%s1 + $0xd0] sm:$0xf]
  %v75 = vld [vmem:[%s1 + $0xd4] sm:$0xf]
  %v76 = vld [vmem:[%s1 + $0xd8] sm:$0xf]
  %v77 = vld [vmem:[%s1 + $0xdc] sm:$0xf]
  %v78 = vld [vmem:[%s1 + $0xe0] sm:$0xf]
  %v79 = vld [vmem:[%s1 + $0xe4] sm:$0xf]
  %v80 = vld [vmem:[%s1 + $0xe8] sm:$0xf]
  %v81 = vld [vmem:[%s1 + $0xec] sm:$0xf]
  %v82 = vld [vmem:[%s1 + $0xf0] sm:$0xf]
  %v83 = vld [vmem:[%s1 + $0xf4] sm:$0xf]
  %v84 = vld [vmem:[%s1 + $0xf8] sm:$0xf]
  %v85 = vld [vmem:[%s1 + $0xfc] sm:$0xf]
  %v86 = vld [vmem:[%s1 + $0x100] sm:$0xf]
  %v87 = vld [vmem:[%s1 + $0x104] sm:$0xf]
  %v88 = vld [vmem:[%s1 + $0x108] sm:$0xf]
  %v89 = vld [vmem:[%s1 + $0x10c] sm:$0xf]
  %v90 = vld [vmem:[%s1 + $0x110] sm:$0xf]
  %v91 = vld [vmem:[%s1 + $0x114] sm:$0xf]
  %v92 = vld [vmem:[%s1 + $0x118] sm:$0xf]
  %v93 = vld [vmem:[%s1 + $0x11c] sm:$0xf]
  %v94 = vld [vmem:[%s1 + $0x120] sm:$0xf]
  %v95 = vld [vmem:[%s1 + $0x124] sm:$0xf]
  %v96 = vld [vmem:[%s1 + $0x128] sm:$0xf]
  %v97 = vld [vmem:[%s1 + $0x12c] sm:$0xf]
  %v98 = vld [vmem:[%s1 + $0x130] sm:$0xf]
  %v99 = vld [vmem:[%s1 + $0x134] sm:$0xf]
  %v100 = vld [vmem:[%s1 + $0x138] sm:$0xf]
  %v101 = vld [vmem:[%s1 + $0x13c] sm:$0xf]
  %v102 = vld [vmem:[%s1 + $0x140] sm:$0xf]
  %v103 = vld [vmem:[%s1 + $0x144] sm:$0xf]
  %v104 = vld [vmem:[%s1 + $0x148] sm:$0xf]
  %v105 = vld [vmem:[%s1 + $0x14c] sm:$0xf]
  %v106 = vld [vmem:[%s1 + $0x150] sm:$0xf]
  %v107 = vld [vmem:[%s1 + $0x154] sm:$0xf]
  %v108 = vld [vmem:[%s1 + $0x158] sm:$0xf]
  %v109 = vld [vmem:[%s1 + $0x15c] sm:$0xf]
  %v110 = vld [vmem:[%s1 + $0x160] sm:$0xf]
  %v111 = vld [vmem:[%s1 + $0x164] sm:$0xf]
  %v112 = vld [vmem:[%s1 + $0x168] sm:$0xf]
  %v113 = vld [vmem:[%s1 + $0x16c] sm:$0xf]
  %v114 = vld [vmem:[%s1 + $0x170] sm:$0xf]
  %v115 = vld [vmem:[%s1 + $0x174] sm:$0xf]
  %v116 = vld [vmem:[%s1 + $0x178] sm:$0xf]
  %v117 = vld [vmem:[%s1 + $0x17c] sm:$0xf]
  %v118 = vld [vmem:[%s1 + $0x180] sm:$0xf]
  %v119 = vld [vmem:[%s1 + $0x184] sm:$0xf]
  %v120 = vld [vmem:[%s1 + $0x188] sm:$0xf]
  %v121 = vld [vmem:[%s1 + $0x18c] sm:$0xf]
  %v122 = vld [vmem:[%s1 + $0x190] sm:$0xf]
  %v123 = vld [vmem:[%s1 + $0x194] sm:$0xf]
  %v124 = vld [vmem:[%s1 + $0x198] sm:$0xf]
  %v125 = vld [vmem:[%s1 + $0x19c] sm:$0xf]
  %v126 = vld [vmem:[%s1 + $0x1a0] sm:$0xf]
  %v127 = vld [vmem:[%s1 + $0x1a4] sm:$0xf]
  %v128 = vld [vmem:[%s1 + $0x1a8] sm:$0xf]
  %v129 = vld [vmem:[%s1 + $0x1ac] sm:$0xf]
  %v130 = vld [vmem:[%s1 + $0x1b0] sm:$0xf]
  %v131 = vld [vmem:[%s1 + $0x1b4] sm:$0xf]
  %v132 = vld [vmem:[%s1 + $0x1b8] sm:$0xf]
  %v133 = vld [vmem:[%s1 + $0x1bc] sm:$0xf]
  %v134 = vld [vmem:[%s1 + $0x1c0] sm:$0xf]
  %v135 = vld [vmem:[%s1 + $0x1c4] sm:$0xf]
  %v136 = vld [vmem:[%s1 + $0x1c8] sm:$0xf]
  %v137 = vld [vmem:[%s1 + $0x1cc] sm:$0xf]
  %v138 = vld [vmem:[%s1 + $0x1d0] sm:$0xf]
  %v139 = vld [vmem:[%s1 + $0x1d4] sm:$0xf]
  %v140 = vld [vmem:[%s1 + $0x1d8] sm:$0xf]
  %v141 = vld [vmem:[%s1 + $0x1dc] sm:$0xf]
  %v142 = vld [vmem:[%s1 + $0x1e0] sm:$0xf]
  %v143 = vld [vmem:[%s1 + $0x1e4] sm:$0xf]
  %v144 = vld [vmem:[%s1 + $0x1e8] sm:$0xf]
  %v145 = vld [vmem:[%s1 + $0x1ec] sm:$0xf]
  %v146 = vld [vmem:[%s1 + $0x1f0] sm:$0xf]
  %v147 = vld [vmem:[%s1 + $0x1f4] sm:$0xf]
  %v148 = vld [vmem:[%s1 + $0x1f8] sm:$0xf]
  %v149 = vld [vmem:[%s1 + $0x1fc] sm:$0xf]
  %v150 = vld [vmem:[%s1 + $0x200] sm:$0xf]
  %v151 = vld [vmem:[%s1 + $0x204] sm:$0xf]
  %v152 = vld [vmem:[%s1 + $0x208] sm:$0xf]
  %v153 = vld [vmem:[%s1 + $0x20c] sm:$0xf]
  %v154 = vld [vmem:[%s1 + $0x210] sm:$0xf]
  %v155 = vld [vmem:[%s1 + $0x214] sm:$0xf]
  %v156 = vld [vmem:[%s1 + $0x218] sm:$0xf]
  %v157 = vld [vmem:[%s1 + $0x21c] sm:$0xf]
  %v158 = vld [vmem:[%s1 + $0x220] sm:$0xf]
  %v159 = vld [vmem:[%s1 + $0x224] sm:$0xf]
  %v160 = vld [vmem:[%s1 + $0x228] sm:$0xf]
  %v161 = vld [vmem:[%s1 + $0x22c] sm:$0xf]
  %v162 = vld [vmem:[%s1 + $0x230] sm:$0xf]
  %v163 = vld [vmem:[%s1 + $0x234] sm:$0xf]
  %v164 = vld [vmem:[%s1 + $0x238] sm:$0xf]
  %v165 = vld [vmem:[%s1 + $0x23c] sm:$0xf]
  %v166 = vld [vmem:[%s1 + $0x240] sm:$0xf]
  %v167 = vld [vmem:[%s1 + $0x244] sm:$0xf]
  %v168 = vld [vmem:[%s1 + $0x248] sm:$0xf]
  %v169 = vld [vmem:[%s1 + $0x24c] sm:$0xf]
  %v170 = vld [vmem:[%s1 + $0x250] sm:$0xf]
  %v171 = vld [vmem:[%s1 + $0x254] sm:$0xf]
  %v172 = vld [vmem:[%s1 + $0x258] sm:$0xf]
  %v173 = vld [vmem:[%s1 + $0x25c] sm:$0xf]
  %v174 = vld [vmem:[%s1 + $0x260] sm:$0xf]
  %v175 = vld [vmem:[%s1 + $0x264] sm:$0xf]
  %v176 = vld [vmem:[%s1 + $0x268] sm:$0xf]
  %v177 = vld [vmem:[%s1 + $0x26c] sm:$0xf]
  %v178 = vld [vmem:[%s1 + $0x270] sm:$0xf]
  %v179 = vld [vmem:[%s1 + $0x274] sm:$0xf]
  %v180 = vld [vmem:[%s1 + $0x278] sm:$0xf]
  %v181 = vld [vmem:[%s1 + $0x27c] sm:$0xf]
  %v182 = vld [vmem:[%s1 + $0x280] sm:$0xf]
  %v183 = vld [vmem:[%s1 + $0x284] sm:$0xf]
  %v184 = vld [vmem:[%s1 + $0x288] sm:$0xf]
  %v185 = vld [vmem:[%s1 + $0x28c] sm:$0xf]
  %v186 = vld [vmem:[%s1 + $0x290] sm:$0xf]
  %v187 = vld [vmem:[%s1 + $0x294] sm:$0xf]
  %v188 = vld [vmem:[%s1 + $0x298] sm:$0xf]
  %v189 = vld [vmem:[%s1 + $0x29c] sm:$0xf]
  %v190 = vld [vmem:[%s1 + $0x2a0] sm:$0xf]
  %v191 = vld [vmem:[%s1 + $0x2a4] sm:$0xf]
  %v192 = vld [vmem:[%s1 + $0x2a8] sm:$0xf]
  %v193 = vld [vmem:[%s1 + $0x2ac] sm:$0xf]
  %v194 = vld [vmem:[%s1 + $0x2b0] sm:$0xf]
  %v195 = vld [vmem:[%s1 + $0x2b4] sm:$0xf]
  %v196 = vld [vmem:[%s1 + $0x2b8] sm:$0xf]
  %v197 = vld [vmem:[%s1 + $0x2bc] sm:$0xf]
  %v198 = vld [vmem:[%s1 + $0x2c0] sm:$0xf]
  %v199 = vld [vmem:[%s1 + $0x2c4] sm:$0xf]
  %v200 = vld [vmem:[%s1 + $0x2c8] sm:$0xf]
  %v201 = vld [vmem:[%s1 + $0x2cc] sm:$0xf]
  %v202 = vld [vmem:[%s1 + $0x2d0] sm:$0xf]
  %v203 = vld [vmem:[%s1 + $0x2d4] sm:$0xf]
  %v204 = vld [vmem:[%s1 + $0x2d8] sm:$0xf]
  %v205 = vld [vmem:[%s1 + $0x2dc] sm:$0xf]
  %v206 = vld [vmem:[%s1 + $0x2e0] sm:$0xf]
  %v207 = vld [vmem:[%s1 + $0x2e4] sm:$0xf]
  %v208 = vld [vmem:[%s1 + $0x2e8] sm:$0xf]
  %v209 = vld [vmem:[%s1 + $0x2ec] sm:$0xf]
  %v210 = vld [vmem:[%s1 + $0x2f0] sm:$0xf]
  %v211 = vld [vmem:[%s1 + $0x2f4] sm:$0xf]
  %v212 = vld [vmem:[%s1 + $0x2f8] sm:$0xf]
  %v213 = vld [vmem:[%s1 + $0x2fc] sm:$0xf]
  %v214 = vld [vmem:[%s1 + $0x300] sm:$0xf]
  %v215 = vld [vmem:[%s1 + $0x304] sm:$0xf]
  %v216 = vld [vmem:[%s1 + $0x308] sm:$0xf]
  %v217 = vld [vmem:[%s1 + $0x30c] sm:$0xf]
  %v218 = vld [vmem:[%s1 + $0x310] sm:$0xf]
  %v219 = vld [vmem:[%s1 + $0x314] sm:$0xf]
  %v220 = vld [vmem:[%s1 + $0x318] sm:$0xf]
  %v221 = vld [vmem:[%s1 + $0x31c] sm:$0xf]
  %v222 = vld [vmem:[%s1 + $0x320] sm:$0xf]
  %v223 = vld [vmem:[%s1 + $0x324] sm:$0xf]
  %v224 = vld [vmem:[%s1 + $0x328] sm:$0xf]
  %v225 = vld [vmem:[%s1 + $0x32c] sm:$0xf]
  %v226 = vld [vmem:[%s1 + $0x330] sm:$0xf]
  %v227 = vld [vmem:[%s1 + $0x334] sm:$0xf]
  %v228 = vld [vmem:[%s1 + $0x338] sm:$0xf]
  %v229 = vld [vmem:[%s1 + $0x33c] sm:$0xf]
  %v230 = vld [vmem:[%s1 + $0x340] sm:$0xf]
  %v231 = vld [vmem:[%s1 + $0x344] sm:$0xf]
  %v232 = vld [vmem:[%s1 + $0x348] sm:$0xf]
  %v233 = vld [vmem:[%s1 + $0x34c] sm:$0xf]
  %v234 = vld [vmem:[%s1 + $0x350] sm:$0xf]
  %v235 = vld [vmem:[%s1 + $0x354] sm:$0xf]
  %v236 = vld [vmem:[%s1 + $0x358] sm:$0xf]
  %v237 = vld [vmem:[%s1 + $0x35c] sm:$0xf]
  %v238 = vld [vmem:[%s1 + $0x360] sm:$0xf]
  %v239 = vld [vmem:[%s1 + $0x364] sm:$0xf]
  %v240 = vld [vmem:[%s1 + $0x368] sm:$0xf]
  %v241 = vld [vmem:[%s1 + $0x36c] sm:$0xf]
  %v242 = vld [vmem:[%s1 + $0x370] sm:$0xf]
  %v243 = vld [vmem:[%s1 + $0x374] sm:$0xf]
  %v244 = vld [vmem:[%s1 + $0x378] sm:$0xf]
  %v245 = vld [vmem:[%s1 + $0x37c] sm:$0xf]
  %v246 = vld [vmem:[%s1 + $0x380] sm:$0xf]
  %v247 = vld [vmem:[%s1 + $0x384] sm:$0xf]
  %v248 = vld [vmem:[%s1 + $0x388] sm:$0xf]
  %v249 = vld [vmem:[%s1 + $0x38c] sm:$0xf]
  %v250 = vld [vmem:[%s1 + $0x390] sm:$0xf]
  %v251 = vld [vmem:[%s1 + $0x394] sm:$0xf]
  %v252 = vld [vmem:[%s1 + $0x398] sm:$0xf]
  %v253 = vld [vmem:[%s1 + $0x39c] sm:$0xf]
  %v254 = vld [vmem:[%s1 + $0x3a0] sm:$0xf]
  %v255 = vld [vmem:[%s1 + $0x3a4] sm:$0xf]
  %v256 = vld [vmem:[%s1 + $0x3a8] sm:$0xf]
  %v257 = vld [vmem:[%s1 + $0x3ac] sm:$0xf]
  %v258 = vld [vmem:[%s1 + $0x3b0] sm:$0xf]
  %v259 = vld [vmem:[%s1 + $0x3b4] sm:$0xf]
  %v260 = vld [vmem:[%s1 + $0x3b8] sm:$0xf]
  %v261 = vld [vmem:[%s1 + $0x3bc] sm:$0xf]
  %v262 = vld [vmem:[%s1 + $0x3c0] sm:$0xf]
  %v263 = vld [vmem:[%s1 + $0x3c4] sm:$0xf]
  %v264 = vld [vmem:[%s1 + $0x3c8] sm:$0xf]
  %v265 = vld [vmem:[%s1 + $0x3cc] sm:$0xf]
  %v266 = vld [vmem:[%s1 + $0x3d0] sm:$0xf]
  %v267 = vld [vmem:[%s1 + $0x3d4] sm:$0xf]
  %v268 = vld [vmem:[%s1 + $0x3d8] sm:$0xf]
  %v269 = vld [vmem:[%s1 + $0x3dc] sm:$0xf]
  %v270 = vld [vmem:[%s1 + $0x3e0] sm:$0xf]
  %v271 = vld [vmem:[%s1 + $0x3e4] sm:$0xf]
  %v272 = vld [vmem:[%s1 + $0x3e8] sm:$0xf]
  %v273 = vld [vmem:[%s1 + $0x3ec] sm:$0xf]
  %v274 = vld [vmem:[%s1 + $0x3f0] sm:$0xf]
  %v275 = vld [vmem:[%s1 + $0x3f4] sm:$0xf]
  %v276 = vld [vmem:[%s1 + $0x3f8] sm:$0xf]
  %v277 = vld [vmem:[%s1 + $0x3fc] sm:$0xf]
  %v278 = vld [vmem:[%s2] sm:$0x1]
  %v280 = vlaneseq
  %v281 = vshrl.u32 %v280, 7
  %v282 = vsub.s32 0, %v281
  %v283 = vrot.slane %v278, %v282
  %v287 = vcombine.high %v20, %v20
  %v289 = vunpack.c.l.s4 1966171168
  %v290 = vunpack.c.0.s8 %v289
  %v291 = vlaneseq
  %v292 = vshrl.u32 %v291, 7
  %v293 = vsub.s32 %v290, %v292
  %v294 = vrot.slane %v20, %v293
  %v296 = vunpack.c.l.s4 1966171168
  %v297 = vunpack.c.0.s8 %v296
  %v298 = vlaneseq
  %v299 = vshrl.u32 %v298, 7
  %v300 = vsub.s32 %v297, %v299
  %v301 = vrot.slane %v287, %v300
  %v302 = vcombine.high %v294, %v294
  %v303 = vcombine.high %v301, %v301
  %v305 = vunpack.c.l.s4 1966171168
  %v306 = vunpack.c.0.s8 %v305
  %v307 = vlaneseq
  %v308 = vshrl.u32 %v307, 7
  %v309 = vsub.s32 %v306, %v308
  %v310 = vrot.slane %v294, %v309
  %v312 = vunpack.c.l.s4 1966171168
  %v313 = vunpack.c.0.s8 %v312
  %v314 = vlaneseq
  %v315 = vshrl.u32 %v314, 7
  %v316 = vsub.s32 %v313, %v315
  %v317 = vrot.slane %v301, %v316
  %v319 = vunpack.c.l.s4 1966171168
  %v320 = vunpack.c.0.s8 %v319
  %v321 = vlaneseq
  %v322 = vshrl.u32 %v321, 7
  %v323 = vsub.s32 %v320, %v322
  %v324 = vrot.slane %v302, %v323
  %v326 = vunpack.c.l.s4 1966171168
  %v327 = vunpack.c.0.s8 %v326
  %v328 = vlaneseq
  %v329 = vshrl.u32 %v328, 7
  %v330 = vsub.s32 %v327, %v329
  %v331 = vrot.slane %v303, %v330
  %v332 = vcombine.high %v310, %v310
  %v333 = vcombine.high %v317, %v317
  %v334 = vcombine.high %v324, %v324
  %v335 = vcombine.high %v331, %v331
  %v336 = vcombine.high %v21, %v21
  %v338 = vunpack.c.l.s4 1966171168
  %v339 = vunpack.c.0.s8 %v338
  %v340 = vlaneseq
  %v341 = vshrl.u32 %v340, 7
  %v342 = vsub.s32 %v339, %v341
  %v343 = vrot.slane %v21, %v342
  %v345 = vunpack.c.l.s4 1966171168
  %v346 = vunpack.c.0.s8 %v345
  %v347 = vlaneseq
  %v348 = vshrl.u32 %v347, 7
  %v349 = vsub.s32 %v346, %v348
  %v350 = vrot.slane %v336, %v349
  %v351 = vcombine.high %v343, %v343
  %v352 = vcombine.high %v350, %v350
  %v354 = vunpack.c.l.s4 1966171168
  %v355 = vunpack.c.0.s8 %v354
  %v356 = vlaneseq
  %v357 = vshrl.u32 %v356, 7
  %v358 = vsub.s32 %v355, %v357
  %v359 = vrot.slane %v343, %v358
  %v361 = vunpack.c.l.s4 1966171168
  %v362 = vunpack.c.0.s8 %v361
  %v363 = vlaneseq
  %v364 = vshrl.u32 %v363, 7
  %v365 = vsub.s32 %v362, %v364
  %v366 = vrot.slane %v350, %v365
  %v368 = vunpack.c.l.s4 1966171168
  %v369 = vunpack.c.0.s8 %v368
  %v370 = vlaneseq
  %v371 = vshrl.u32 %v370, 7
  %v372 = vsub.s32 %v369, %v371
  %v373 = vrot.slane %v351, %v372
  %v375 = vunpack.c.l.s4 1966171168
  %v376 = vunpack.c.0.s8 %v375
  %v377 = vlaneseq
  %v378 = vshrl.u32 %v377, 7
  %v379 = vsub.s32 %v376, %v378
  %v380 = vrot.slane %v352, %v379
  %v381 = vcombine.high %v359, %v359
  %v382 = vcombine.high %v366, %v366
  %v383 = vcombine.high %v373, %v373
  %v384 = vcombine.high %v380, %v380
  %v657 = vunpack.c.l.b16 %v22
  %v658 = vunpack.c.l.b16 %v23
  %v659 = vunpack.c.l.b16 %v24
  %v660 = vunpack.c.l.b16 %v25
  %v661 = vunpack.c.l.b16 %v26
  %v662 = vunpack.c.l.b16 %v27
  %v663 = vunpack.c.l.b16 %v28
  %v664 = vunpack.c.l.b16 %v29
  %v665 = vunpack.c.l.b16 %v30
  %v666 = vunpack.c.l.b16 %v31
  %v667 = vunpack.c.l.b16 %v32
  %v668 = vunpack.c.l.b16 %v33
  %v669 = vunpack.c.l.b16 %v34
  %v670 = vunpack.c.l.b16 %v35
  %v671 = vunpack.c.l.b16 %v36
  %v672 = vunpack.c.l.b16 %v37
  %v673 = vunpack.c.l.b16 %v38
  %v674 = vunpack.c.l.b16 %v39
  %v675 = vunpack.c.l.b16 %v40
  %v676 = vunpack.c.l.b16 %v41
  %v677 = vunpack.c.l.b16 %v42
  %v678 = vunpack.c.l.b16 %v43
  %v679 = vunpack.c.l.b16 %v44
  %v680 = vunpack.c.l.b16 %v45
  %v681 = vunpack.c.l.b16 %v46
  %v682 = vunpack.c.l.b16 %v47
  %v683 = vunpack.c.l.b16 %v48
  %v684 = vunpack.c.l.b16 %v49
  %v685 = vunpack.c.l.b16 %v50
  %v686 = vunpack.c.l.b16 %v51
  %v687 = vunpack.c.l.b16 %v52
  %v688 = vunpack.c.l.b16 %v53
  %v689 = vunpack.c.l.b16 %v54
  %v690 = vunpack.c.l.b16 %v55
  %v691 = vunpack.c.l.b16 %v56
  %v692 = vunpack.c.l.b16 %v57
  %v693 = vunpack.c.l.b16 %v58
  %v694 = vunpack.c.l.b16 %v59
  %v695 = vunpack.c.l.b16 %v60
  %v696 = vunpack.c.l.b16 %v61
  %v697 = vunpack.c.l.b16 %v62
  %v698 = vunpack.c.l.b16 %v63
  %v699 = vunpack.c.l.b16 %v64
  %v700 = vunpack.c.l.b16 %v65
  %v701 = vunpack.c.l.b16 %v66
  %v702 = vunpack.c.l.b16 %v67
  %v703 = vunpack.c.l.b16 %v68
  %v704 = vunpack.c.l.b16 %v69
  %v705 = vunpack.c.l.b16 %v70
  %v706 = vunpack.c.l.b16 %v71
  %v707 = vunpack.c.l.b16 %v72
  %v708 = vunpack.c.l.b16 %v73
  %v709 = vunpack.c.l.b16 %v74
  %v710 = vunpack.c.l.b16 %v75
  %v711 = vunpack.c.l.b16 %v76
  %v712 = vunpack.c.l.b16 %v77
  %v713 = vunpack.c.l.b16 %v78
  %v714 = vunpack.c.l.b16 %v79
  %v715 = vunpack.c.l.b16 %v80
  %v716 = vunpack.c.l.b16 %v81
  %v717 = vunpack.c.l.b16 %v82
  %v718 = vunpack.c.l.b16 %v83
  %v719 = vunpack.c.l.b16 %v84
  %v720 = vunpack.c.l.b16 %v85
  %v721 = vunpack.c.l.b16 %v86
  %v722 = vunpack.c.l.b16 %v87
  %v723 = vunpack.c.l.b16 %v88
  %v724 = vunpack.c.l.b16 %v89
  %v725 = vunpack.c.l.b16 %v90
  %v726 = vunpack.c.l.b16 %v91
  %v727 = vunpack.c.l.b16 %v92
  %v728 = vunpack.c.l.b16 %v93
  %v729 = vunpack.c.l.b16 %v94
  %v730 = vunpack.c.l.b16 %v95
  %v731 = vunpack.c.l.b16 %v96
  %v732 = vunpack.c.l.b16 %v97
  %v733 = vunpack.c.l.b16 %v98
  %v734 = vunpack.c.l.b16 %v99
  %v735 = vunpack.c.l.b16 %v100
  %v736 = vunpack.c.l.b16 %v101
  %v737 = vunpack.c.l.b16 %v102
  %v738 = vunpack.c.l.b16 %v103
  %v739 = vunpack.c.l.b16 %v104
  %v740 = vunpack.c.l.b16 %v105
  %v741 = vunpack.c.l.b16 %v106
  %v742 = vunpack.c.l.b16 %v107
  %v743 = vunpack.c.l.b16 %v108
  %v744 = vunpack.c.l.b16 %v109
  %v745 = vunpack.c.l.b16 %v110
  %v746 = vunpack.c.l.b16 %v111
  %v747 = vunpack.c.l.b16 %v112
  %v748 = vunpack.c.l.b16 %v113
  %v749 = vunpack.c.l.b16 %v114
  %v750 = vunpack.c.l.b16 %v115
  %v751 = vunpack.c.l.b16 %v116
  %v752 = vunpack.c.l.b16 %v117
  %v753 = vunpack.c.l.b16 %v118
  %v754 = vunpack.c.l.b16 %v119
  %v755 = vunpack.c.l.b16 %v120
  %v756 = vunpack.c.l.b16 %v121
  %v757 = vunpack.c.l.b16 %v122
  %v758 = vunpack.c.l.b16 %v123
  %v759 = vunpack.c.l.b16 %v124
  %v760 = vunpack.c.l.b16 %v125
  %v761 = vunpack.c.l.b16 %v126
  %v762 = vunpack.c.l.b16 %v127
  %v763 = vunpack.c.l.b16 %v128
  %v764 = vunpack.c.l.b16 %v129
  %v765 = vunpack.c.l.b16 %v130
  %v766 = vunpack.c.l.b16 %v131
  %v767 = vunpack.c.l.b16 %v132
  %v768 = vunpack.c.l.b16 %v133
  %v769 = vunpack.c.l.b16 %v134
  %v770 = vunpack.c.l.b16 %v135
  %v771 = vunpack.c.l.b16 %v136
  %v772 = vunpack.c.l.b16 %v137
  %v773 = vunpack.c.l.b16 %v138
  %v774 = vunpack.c.l.b16 %v139
  %v775 = vunpack.c.l.b16 %v140
  %v776 = vunpack.c.l.b16 %v141
  %v777 = vunpack.c.l.b16 %v142
  %v778 = vunpack.c.l.b16 %v143
  %v779 = vunpack.c.l.b16 %v144
  %v780 = vunpack.c.l.b16 %v145
  %v781 = vunpack.c.l.b16 %v146
  %v782 = vunpack.c.l.b16 %v147
  %v783 = vunpack.c.l.b16 %v148
  %v784 = vunpack.c.l.b16 %v149
  %v785 = vunpack.c.l.b16 %v150
  %v786 = vunpack.c.l.b16 %v151
  %v787 = vunpack.c.l.b16 %v152
  %v788 = vunpack.c.l.b16 %v153
  %v789 = vunpack.c.l.b16 %v154
  %v790 = vunpack.c.l.b16 %v155
  %v791 = vunpack.c.l.b16 %v156
  %v792 = vunpack.c.l.b16 %v157
  %v793 = vunpack.c.l.b16 %v158
  %v794 = vunpack.c.l.b16 %v159
  %v795 = vunpack.c.l.b16 %v160
  %v796 = vunpack.c.l.b16 %v161
  %v797 = vunpack.c.l.b16 %v162
  %v798 = vunpack.c.l.b16 %v163
  %v799 = vunpack.c.l.b16 %v164
  %v800 = vunpack.c.l.b16 %v165
  %v801 = vunpack.c.l.b16 %v166
  %v802 = vunpack.c.l.b16 %v167
  %v803 = vunpack.c.l.b16 %v168
  %v804 = vunpack.c.l.b16 %v169
  %v805 = vunpack.c.l.b16 %v170
  %v806 = vunpack.c.l.b16 %v171
  %v807 = vunpack.c.l.b16 %v172
  %v808 = vunpack.c.l.b16 %v173
  %v809 = vunpack.c.l.b16 %v174
  %v810 = vunpack.c.l.b16 %v175
  %v811 = vunpack.c.l.b16 %v176
  %v812 = vunpack.c.l.b16 %v177
  %v813 = vunpack.c.l.b16 %v178
  %v814 = vunpack.c.l.b16 %v179
  %v815 = vunpack.c.l.b16 %v180
  %v816 = vunpack.c.l.b16 %v181
  %v817 = vunpack.c.l.b16 %v182
  %v818 = vunpack.c.l.b16 %v183
  %v819 = vunpack.c.l.b16 %v184
  %v820 = vunpack.c.l.b16 %v185
  %v821 = vunpack.c.l.b16 %v186
  %v822 = vunpack.c.l.b16 %v187
  %v823 = vunpack.c.l.b16 %v188
  %v824 = vunpack.c.l.b16 %v189
  %v825 = vunpack.c.l.b16 %v190
  %v826 = vunpack.c.l.b16 %v191
  %v827 = vunpack.c.l.b16 %v192
  %v828 = vunpack.c.l.b16 %v193
  %v829 = vunpack.c.l.b16 %v194
  %v830 = vunpack.c.l.b16 %v195
  %v831 = vunpack.c.l.b16 %v196
  %v832 = vunpack.c.l.b16 %v197
  %v833 = vunpack.c.l.b16 %v198
  %v834 = vunpack.c.l.b16 %v199
  %v835 = vunpack.c.l.b16 %v200
  %v836 = vunpack.c.l.b16 %v201
  %v837 = vunpack.c.l.b16 %v202
  %v838 = vunpack.c.l.b16 %v203
  %v839 = vunpack.c.l.b16 %v204
  %v840 = vunpack.c.l.b16 %v205
  %v841 = vunpack.c.l.b16 %v206
  %v842 = vunpack.c.l.b16 %v207
  %v843 = vunpack.c.l.b16 %v208
  %v844 = vunpack.c.l.b16 %v209
  %v845 = vunpack.c.l.b16 %v210
  %v846 = vunpack.c.l.b16 %v211
  %v847 = vunpack.c.l.b16 %v212
  %v848 = vunpack.c.l.b16 %v213
  %v849 = vunpack.c.l.b16 %v214
  %v850 = vunpack.c.l.b16 %v215
  %v851 = vunpack.c.l.b16 %v216
  %v852 = vunpack.c.l.b16 %v217
  %v853 = vunpack.c.l.b16 %v218
  %v854 = vunpack.c.l.b16 %v219
  %v855 = vunpack.c.l.b16 %v220
  %v856 = vunpack.c.l.b16 %v221
  %v857 = vunpack.c.l.b16 %v222
  %v858 = vunpack.c.l.b16 %v223
  %v859 = vunpack.c.l.b16 %v224
  %v860 = vunpack.c.l.b16 %v225
  %v861 = vunpack.c.l.b16 %v226
  %v862 = vunpack.c.l.b16 %v227
  %v863 = vunpack.c.l.b16 %v228
  %v864 = vunpack.c.l.b16 %v229
  %v865 = vunpack.c.l.b16 %v230
  %v866 = vunpack.c.l.b16 %v231
  %v867 = vunpack.c.l.b16 %v232
  %v868 = vunpack.c.l.b16 %v233
  %v869 = vunpack.c.l.b16 %v234
  %v870 = vunpack.c.l.b16 %v235
  %v871 = vunpack.c.l.b16 %v236
  %v872 = vunpack.c.l.b16 %v237
  %v873 = vunpack.c.l.b16 %v238
  %v874 = vunpack.c.l.b16 %v239
  %v875 = vunpack.c.l.b16 %v240
  %v876 = vunpack.c.l.b16 %v241
  %v877 = vunpack.c.l.b16 %v242
  %v878 = vunpack.c.l.b16 %v243
  %v879 = vunpack.c.l.b16 %v244
  %v880 = vunpack.c.l.b16 %v245
  %v881 = vunpack.c.l.b16 %v246
  %v882 = vunpack.c.l.b16 %v247
  %v883 = vunpack.c.l.b16 %v248
  %v884 = vunpack.c.l.b16 %v249
  %v885 = vunpack.c.l.b16 %v250
  %v886 = vunpack.c.l.b16 %v251
  %v887 = vunpack.c.l.b16 %v252
  %v888 = vunpack.c.l.b16 %v253
  %v889 = vunpack.c.l.b16 %v254
  %v890 = vunpack.c.l.b16 %v255
  %v891 = vunpack.c.l.b16 %v256
  %v892 = vunpack.c.l.b16 %v257
  %v893 = vunpack.c.l.b16 %v258
  %v894 = vunpack.c.l.b16 %v259
  %v895 = vunpack.c.l.b16 %v260
  %v896 = vunpack.c.l.b16 %v261
  %v897 = vunpack.c.l.b16 %v262
  %v898 = vunpack.c.l.b16 %v263
  %v899 = vunpack.c.l.b16 %v264
  %v900 = vunpack.c.l.b16 %v265
  %v901 = vunpack.c.l.b16 %v266
  %v902 = vunpack.c.l.b16 %v267
  %v903 = vunpack.c.l.b16 %v268
  %v904 = vunpack.c.l.b16 %v269
  %v905 = vunpack.c.l.b16 %v270
  %v906 = vunpack.c.l.b16 %v271
  %v907 = vunpack.c.l.b16 %v272
  %v908 = vunpack.c.l.b16 %v273
  %v909 = vunpack.c.l.b16 %v274
  %v910 = vunpack.c.l.b16 %v275
  %v911 = vunpack.c.l.b16 %v276
  %v912 = vunpack.c.l.b16 %v277
  %v913 = vpack.c.b16 %v658, %v657
  %v914 = vpack.c.b16 %v660, %v659
  %v915 = vpack.c.b16 %v662, %v661
  %v916 = vpack.c.b16 %v664, %v663
  %v917 = vpack.c.b16 %v666, %v665
  %v918 = vpack.c.b16 %v668, %v667
  %v919 = vpack.c.b16 %v670, %v669
  %v920 = vpack.c.b16 %v672, %v671
  %v921 = vpack.c.b16 %v674, %v673
  %v922 = vpack.c.b16 %v676, %v675
  %v923 = vpack.c.b16 %v678, %v677
  %v924 = vpack.c.b16 %v680, %v679
  %v925 = vpack.c.b16 %v682, %v681
  %v926 = vpack.c.b16 %v684, %v683
  %v927 = vpack.c.b16 %v686, %v685
  %v928 = vpack.c.b16 %v688, %v687
  %v929 = vpack.c.b16 %v690, %v689
  %v930 = vpack.c.b16 %v692, %v691
  %v931 = vpack.c.b16 %v694, %v693
  %v932 = vpack.c.b16 %v696, %v695
  %v933 = vpack.c.b16 %v698, %v697
  %v934 = vpack.c.b16 %v700, %v699
  %v935 = vpack.c.b16 %v702, %v701
  %v936 = vpack.c.b16 %v704, %v703
  %v937 = vpack.c.b16 %v706, %v705
  %v938 = vpack.c.b16 %v708, %v707
  %v939 = vpack.c.b16 %v710, %v709
  %v940 = vpack.c.b16 %v712, %v711
  %v941 = vpack.c.b16 %v714, %v713
  %v942 = vpack.c.b16 %v716, %v715
  %v943 = vpack.c.b16 %v718, %v717
  %v944 = vpack.c.b16 %v720, %v719
  %v945 = vpack.c.b16 %v722, %v721
  %v946 = vpack.c.b16 %v724, %v723
  %v947 = vpack.c.b16 %v726, %v725
  %v948 = vpack.c.b16 %v728, %v727
  %v949 = vpack.c.b16 %v730, %v729
  %v950 = vpack.c.b16 %v732, %v731
  %v951 = vpack.c.b16 %v734, %v733
  %v952 = vpack.c.b16 %v736, %v735
  %v953 = vpack.c.b16 %v738, %v737
  %v954 = vpack.c.b16 %v740, %v739
  %v955 = vpack.c.b16 %v742, %v741
  %v956 = vpack.c.b16 %v744, %v743
  %v957 = vpack.c.b16 %v746, %v745
  %v958 = vpack.c.b16 %v748, %v747
  %v959 = vpack.c.b16 %v750, %v749
  %v960 = vpack.c.b16 %v752, %v751
  %v961 = vpack.c.b16 %v754, %v753
  %v962 = vpack.c.b16 %v756, %v755
  %v963 = vpack.c.b16 %v758, %v757
  %v964 = vpack.c.b16 %v760, %v759
  %v965 = vpack.c.b16 %v762, %v761
  %v966 = vpack.c.b16 %v764, %v763
  %v967 = vpack.c.b16 %v766, %v765
  %v968 = vpack.c.b16 %v768, %v767
  %v969 = vpack.c.b16 %v770, %v769
  %v970 = vpack.c.b16 %v772, %v771
  %v971 = vpack.c.b16 %v774, %v773
  %v972 = vpack.c.b16 %v776, %v775
  %v973 = vpack.c.b16 %v778, %v777
  %v974 = vpack.c.b16 %v780, %v779
  %v975 = vpack.c.b16 %v782, %v781
  %v976 = vpack.c.b16 %v784, %v783
  %v977 = vpack.c.b16 %v786, %v785
  %v978 = vpack.c.b16 %v788, %v787
  %v979 = vpack.c.b16 %v790, %v789
  %v980 = vpack.c.b16 %v792, %v791
  %v981 = vpack.c.b16 %v794, %v793
  %v982 = vpack.c.b16 %v796, %v795
  %v983 = vpack.c.b16 %v798, %v797
  %v984 = vpack.c.b16 %v800, %v799
  %v985 = vpack.c.b16 %v802, %v801
  %v986 = vpack.c.b16 %v804, %v803
  %v987 = vpack.c.b16 %v806, %v805
  %v988 = vpack.c.b16 %v808, %v807
  %v989 = vpack.c.b16 %v810, %v809
  %v990 = vpack.c.b16 %v812, %v811
  %v991 = vpack.c.b16 %v814, %v813
  %v992 = vpack.c.b16 %v816, %v815
  %v993 = vpack.c.b16 %v818, %v817
  %v994 = vpack.c.b16 %v820, %v819
  %v995 = vpack.c.b16 %v822, %v821
  %v996 = vpack.c.b16 %v824, %v823
  %v997 = vpack.c.b16 %v826, %v825
  %v998 = vpack.c.b16 %v828, %v827
  %v999 = vpack.c.b16 %v830, %v829
  %v1000 = vpack.c.b16 %v832, %v831
  %v1001 = vpack.c.b16 %v834, %v833
  %v1002 = vpack.c.b16 %v836, %v835
  %v1003 = vpack.c.b16 %v838, %v837
  %v1004 = vpack.c.b16 %v840, %v839
  %v1005 = vpack.c.b16 %v842, %v841
  %v1006 = vpack.c.b16 %v844, %v843
  %v1007 = vpack.c.b16 %v846, %v845
  %v1008 = vpack.c.b16 %v848, %v847
  %v1009 = vpack.c.b16 %v850, %v849
  %v1010 = vpack.c.b16 %v852, %v851
  %v1011 = vpack.c.b16 %v854, %v853
  %v1012 = vpack.c.b16 %v856, %v855
  %v1013 = vpack.c.b16 %v858, %v857
  %v1014 = vpack.c.b16 %v860, %v859
  %v1015 = vpack.c.b16 %v862, %v861
  %v1016 = vpack.c.b16 %v864, %v863
  %v1017 = vpack.c.b16 %v866, %v865
  %v1018 = vpack.c.b16 %v868, %v867
  %v1019 = vpack.c.b16 %v870, %v869
  %v1020 = vpack.c.b16 %v872, %v871
  %v1021 = vpack.c.b16 %v874, %v873
  %v1022 = vpack.c.b16 %v876, %v875
  %v1023 = vpack.c.b16 %v878, %v877
  %v1024 = vpack.c.b16 %v880, %v879
  %v1025 = vpack.c.b16 %v882, %v881
  %v1026 = vpack.c.b16 %v884, %v883
  %v1027 = vpack.c.b16 %v886, %v885
  %v1028 = vpack.c.b16 %v888, %v887
  %v1029 = vpack.c.b16 %v890, %v889
  %v1030 = vpack.c.b16 %v892, %v891
  %v1031 = vpack.c.b16 %v894, %v893
  %v1032 = vpack.c.b16 %v896, %v895
  %v1033 = vpack.c.b16 %v898, %v897
  %v1034 = vpack.c.b16 %v900, %v899
  %v1035 = vpack.c.b16 %v902, %v901
  %v1036 = vpack.c.b16 %v904, %v903
  %v1037 = vpack.c.b16 %v906, %v905
  %v1038 = vpack.c.b16 %v908, %v907
  %v1039 = vpack.c.b16 %v910, %v909
  %v1040 = vpack.c.b16 %v912, %v911
  %1169 = vmatprep.subr.bf16.mxu0 0
  %1170 = vmatpush1.bf16.msra.mxu0 %v913
  %1171 = vmatprep.subr.bf16.mxu0 0
  %1172 = vmatpush1.bf16.msra.mxu0 %v914
  %1173 = vmatprep.subr.bf16.mxu0 0
  %1174 = vmatpush1.bf16.msra.mxu0 %v915
  %1175 = vmatprep.subr.bf16.mxu0 0
  %1176 = vmatpush1.bf16.msra.mxu0 %v916
  %1177 = vmatprep.subr.bf16.mxu0 0
  %1178 = vmatpush1.bf16.msra.mxu0 %v917
  %1179 = vmatprep.subr.bf16.mxu0 0
  %1180 = vmatpush1.bf16.msra.mxu0 %v918
  %1181 = vmatprep.subr.bf16.mxu0 0
  %1182 = vmatpush1.bf16.msra.mxu0 %v919
  %1183 = vmatprep.subr.bf16.mxu0 0
  %1184 = vmatpush1.bf16.msra.mxu0 %v920
  %1185 = vmatprep.subr.bf16.mxu0 0
  %1186 = vmatpush1.bf16.msra.mxu0 %v921
  %1187 = vmatprep.subr.bf16.mxu0 0
  %1188 = vmatpush1.bf16.msra.mxu0 %v922
  %1189 = vmatprep.subr.bf16.mxu0 0
  %1190 = vmatpush1.bf16.msra.mxu0 %v923
  %1191 = vmatprep.subr.bf16.mxu0 0
  %1192 = vmatpush1.bf16.msra.mxu0 %v924
  %1193 = vmatprep.subr.bf16.mxu0 0
  %1194 = vmatpush1.bf16.msra.mxu0 %v925
  %1195 = vmatprep.subr.bf16.mxu0 0
  %1196 = vmatpush1.bf16.msra.mxu0 %v926
  %1197 = vmatprep.subr.bf16.mxu0 0
  %1198 = vmatpush1.bf16.msra.mxu0 %v927
  %1199 = vmatprep.subr.bf16.mxu0 0
  %1200 = vmatpush1.bf16.msra.mxu0 %v928
  %1201 = vmatprep.mubr.bf16.mxu0 %v324
  %1202 = vmatmul.mubr.bf16.gmra.mrb[0].mxu0 %v310
  %v1203 = vpop.f32.mrb[0].mxu0
  %v1204 = vadd.f32 %v283, %v1203
  %v1205 = vpop.f32.mrb[0].mxu0
  %v1206 = vpop.f32.mrb[0].mxu0
  %v1207 = vpop.f32.mrb[0].mxu0
  %1208 = vdwg.mxu0
  %1209 = vmatprep.subr.bf16.mxu0 0
  %1210 = vmatpush1.bf16.msra.mxu0 %v929
  %1211 = vmatprep.subr.bf16.mxu0 0
  %1212 = vmatpush1.bf16.msra.mxu0 %v930
  %1213 = vmatprep.subr.bf16.mxu0 0
  %1214 = vmatpush1.bf16.msra.mxu0 %v931
  %1215 = vmatprep.subr.bf16.mxu0 0
  %1216 = vmatpush1.bf16.msra.mxu0 %v932
  %1217 = vmatprep.subr.bf16.mxu0 0
  %1218 = vmatpush1.bf16.msra.mxu0 %v933
  %1219 = vmatprep.subr.bf16.mxu0 0
  %1220 = vmatpush1.bf16.msra.mxu0 %v934
  %1221 = vmatprep.subr.bf16.mxu0 0
  %1222 = vmatpush1.bf16.msra.mxu0 %v935
  %1223 = vmatprep.subr.bf16.mxu0 0
  %1224 = vmatpush1.bf16.msra.mxu0 %v936
  %1225 = vmatprep.subr.bf16.mxu0 0
  %1226 = vmatpush1.bf16.msra.mxu0 %v937
  %1227 = vmatprep.subr.bf16.mxu0 0
  %1228 = vmatpush1.bf16.msra.mxu0 %v938
  %1229 = vmatprep.subr.bf16.mxu0 0
  %1230 = vmatpush1.bf16.msra.mxu0 %v939
  %1231 = vmatprep.subr.bf16.mxu0 0
  %1232 = vmatpush1.bf16.msra.mxu0 %v940
  %1233 = vmatprep.subr.bf16.mxu0 0
  %1234 = vmatpush1.bf16.msra.mxu0 %v941
  %1235 = vmatprep.subr.bf16.mxu0 0
  %1236 = vmatpush1.bf16.msra.mxu0 %v942
  %1237 = vmatprep.subr.bf16.mxu0 0
  %1238 = vmatpush1.bf16.msra.mxu0 %v943
  %1239 = vmatprep.subr.bf16.mxu0 0
  %1240 = vmatpush1.bf16.msra.mxu0 %v944
  %1241 = vmatprep.mubr.bf16.mxu0 %v334
  %1242 = vmatmul.mubr.bf16.gmra.mrb[0].mxu0 %v332
  %v1243 = vpop.f32.mrb[0].mxu0
  %v1244 = vadd.f32 %v1204, %v1243
  %v1245 = vpop.f32.mrb[0].mxu0
  %v1246 = vpop.f32.mrb[0].mxu0
  %v1247 = vpop.f32.mrb[0].mxu0
  %1248 = vdwg.mxu0
  %1249 = vmatprep.subr.bf16.mxu0 0
  %1250 = vmatpush1.bf16.msra.mxu0 %v945
  %1251 = vmatprep.subr.bf16.mxu0 0
  %1252 = vmatpush1.bf16.msra.mxu0 %v946
  %1253 = vmatprep.subr.bf16.mxu0 0
  %1254 = vmatpush1.bf16.msra.mxu0 %v947
  %1255 = vmatprep.subr.bf16.mxu0 0
  %1256 = vmatpush1.bf16.msra.mxu0 %v948
  %1257 = vmatprep.subr.bf16.mxu0 0
  %1258 = vmatpush1.bf16.msra.mxu0 %v949
  %1259 = vmatprep.subr.bf16.mxu0 0
  %1260 = vmatpush1.bf16.msra.mxu0 %v950
  %1261 = vmatprep.subr.bf16.mxu0 0
  %1262 = vmatpush1.bf16.msra.mxu0 %v951
  %1263 = vmatprep.subr.bf16.mxu0 0
  %1264 = vmatpush1.bf16.msra.mxu0 %v952
  %1265 = vmatprep.subr.bf16.mxu0 0
  %1266 = vmatpush1.bf16.msra.mxu0 %v953
  %1267 = vmatprep.subr.bf16.mxu0 0
  %1268 = vmatpush1.bf16.msra.mxu0 %v954
  %1269 = vmatprep.subr.bf16.mxu0 0
  %1270 = vmatpush1.bf16.msra.mxu0 %v955
  %1271 = vmatprep.subr.bf16.mxu0 0
  %1272 = vmatpush1.bf16.msra.mxu0 %v956
  %1273 = vmatprep.subr.bf16.mxu0 0
  %1274 = vmatpush1.bf16.msra.mxu0 %v957
  %1275 = vmatprep.subr.bf16.mxu0 0
  %1276 = vmatpush1.bf16.msra.mxu0 %v958
  %1277 = vmatprep.subr.bf16.mxu0 0
  %1278 = vmatpush1.bf16.msra.mxu0 %v959
  %1279 = vmatprep.subr.bf16.mxu0 0
  %1280 = vmatpush1.bf16.msra.mxu0 %v960
  %1281 = vmatprep.mubr.bf16.mxu0 %v331
  %1282 = vmatmul.mubr.bf16.gmra.mrb[0].mxu0 %v317
  %v1283 = vpop.f32.mrb[0].mxu0
  %v1284 = vadd.f32 %v1244, %v1283
  %v1285 = vpop.f32.mrb[0].mxu0
  %v1286 = vpop.f32.mrb[0].mxu0
  %v1287 = vpop.f32.mrb[0].mxu0
  %1288 = vdwg.mxu0
  %1289 = vmatprep.subr.bf16.mxu0 0
  %1290 = vmatpush1.bf16.msra.mxu0 %v961
  %1291 = vmatprep.subr.bf16.mxu0 0
  %1292 = vmatpush1.bf16.msra.mxu0 %v962
  %1293 = vmatprep.subr.bf16.mxu0 0
  %1294 = vmatpush1.bf16.msra.mxu0 %v963
  %1295 = vmatprep.subr.bf16.mxu0 0
  %1296 = vmatpush1.bf16.msra.mxu0 %v964
  %1297 = vmatprep.subr.bf16.mxu0 0
  %1298 = vmatpush1.bf16.msra.mxu0 %v965
  %1299 = vmatprep.subr.bf16.mxu0 0
  %1300 = vmatpush1.bf16.msra.mxu0 %v966
  %1301 = vmatprep.subr.bf16.mxu0 0
  %1302 = vmatpush1.bf16.msra.mxu0 %v967
  %1303 = vmatprep.subr.bf16.mxu0 0
  %1304 = vmatpush1.bf16.msra.mxu0 %v968
  %1305 = vmatprep.subr.bf16.mxu0 0
  %1306 = vmatpush1.bf16.msra.mxu0 %v969
  %1307 = vmatprep.subr.bf16.mxu0 0
  %1308 = vmatpush1.bf16.msra.mxu0 %v970
  %1309 = vmatprep.subr.bf16.mxu0 0
  %1310 = vmatpush1.bf16.msra.mxu0 %v971
  %1311 = vmatprep.subr.bf16.mxu0 0
  %1312 = vmatpush1.bf16.msra.mxu0 %v972
  %1313 = vmatprep.subr.bf16.mxu0 0
  %1314 = vmatpush1.bf16.msra.mxu0 %v973
  %1315 = vmatprep.subr.bf16.mxu0 0
  %1316 = vmatpush1.bf16.msra.mxu0 %v974
  %1317 = vmatprep.subr.bf16.mxu0 0
  %1318 = vmatpush1.bf16.msra.mxu0 %v975
  %1319 = vmatprep.subr.bf16.mxu0 0
  %1320 = vmatpush1.bf16.msra.mxu0 %v976
  %1321 = vmatprep.mubr.bf16.mxu0 %v335
  %1322 = vmatmul.mubr.bf16.gmra.mrb[0].mxu0 %v333
  %v1323 = vpop.f32.mrb[0].mxu0
  %v1324 = vadd.f32 %v1284, %v1323
  %v1325 = vpop.f32.mrb[0].mxu0
  %v1326 = vpop.f32.mrb[0].mxu0
  %v1327 = vpop.f32.mrb[0].mxu0
  %1328 = vdwg.mxu0
  %1329 = vmatprep.subr.bf16.mxu0 0
  %1330 = vmatpush1.bf16.msra.mxu0 %v977
  %1331 = vmatprep.subr.bf16.mxu0 0
  %1332 = vmatpush1.bf16.msra.mxu0 %v978
  %1333 = vmatprep.subr.bf16.mxu0 0
  %1334 = vmatpush1.bf16.msra.mxu0 %v979
  %1335 = vmatprep.subr.bf16.mxu0 0
  %1336 = vmatpush1.bf16.msra.mxu0 %v980
  %1337 = vmatprep.subr.bf16.mxu0 0
  %1338 = vmatpush1.bf16.msra.mxu0 %v981
  %1339 = vmatprep.subr.bf16.mxu0 0
  %1340 = vmatpush1.bf16.msra.mxu0 %v982
  %1341 = vmatprep.subr.bf16.mxu0 0
  %1342 = vmatpush1.bf16.msra.mxu0 %v983
  %1343 = vmatprep.subr.bf16.mxu0 0
  %1344 = vmatpush1.bf16.msra.mxu0 %v984
  %1345 = vmatprep.subr.bf16.mxu0 0
  %1346 = vmatpush1.bf16.msra.mxu0 %v985
  %1347 = vmatprep.subr.bf16.mxu0 0
  %1348 = vmatpush1.bf16.msra.mxu0 %v986
  %1349 = vmatprep.subr.bf16.mxu0 0
  %1350 = vmatpush1.bf16.msra.mxu0 %v987
  %1351 = vmatprep.subr.bf16.mxu0 0
  %1352 = vmatpush1.bf16.msra.mxu0 %v988
  %1353 = vmatprep.subr.bf16.mxu0 0
  %1354 = vmatpush1.bf16.msra.mxu0 %v989
  %1355 = vmatprep.subr.bf16.mxu0 0
  %1356 = vmatpush1.bf16.msra.mxu0 %v990
  %1357 = vmatprep.subr.bf16.mxu0 0
  %1358 = vmatpush1.bf16.msra.mxu0 %v991
  %1359 = vmatprep.subr.bf16.mxu0 0
  %1360 = vmatpush1.bf16.msra.mxu0 %v992
  %1361 = vmatprep.mubr.bf16.mxu0 %v373
  %1362 = vmatmul.mubr.bf16.gmra.mrb[0].mxu0 %v359
  %v1363 = vpop.f32.mrb[0].mxu0
  %v1364 = vadd.f32 %v1324, %v1363
  %v1365 = vpop.f32.mrb[0].mxu0
  %v1366 = vpop.f32.mrb[0].mxu0
  %v1367 = vpop.f32.mrb[0].mxu0
  %1368 = vdwg.mxu0
  %1369 = vmatprep.subr.bf16.mxu0 0
  %1370 = vmatpush1.bf16.msra.mxu0 %v993
  %1371 = vmatprep.subr.bf16.mxu0 0
  %1372 = vmatpush1.bf16.msra.mxu0 %v994
  %1373 = vmatprep.subr.bf16.mxu0 0
  %1374 = vmatpush1.bf16.msra.mxu0 %v995
  %1375 = vmatprep.subr.bf16.mxu0 0
  %1376 = vmatpush1.bf16.msra.mxu0 %v996
  %1377 = vmatprep.subr.bf16.mxu0 0
  %1378 = vmatpush1.bf16.msra.mxu0 %v997
  %1379 = vmatprep.subr.bf16.mxu0 0
  %1380 = vmatpush1.bf16.msra.mxu0 %v998
  %1381 = vmatprep.subr.bf16.mxu0 0
  %1382 = vmatpush1.bf16.msra.mxu0 %v999
  %1383 = vmatprep.subr.bf16.mxu0 0
  %1384 = vmatpush1.bf16.msra.mxu0 %v1000
  %1385 = vmatprep.subr.bf16.mxu0 0
  %1386 = vmatpush1.bf16.msra.mxu0 %v1001
  %1387 = vmatprep.subr.bf16.mxu0 0
  %1388 = vmatpush1.bf16.msra.mxu0 %v1002
  %1389 = vmatprep.subr.bf16.mxu0 0
  %1390 = vmatpush1.bf16.msra.mxu0 %v1003
  %1391 = vmatprep.subr.bf16.mxu0 0
  %1392 = vmatpush1.bf16.msra.mxu0 %v1004
  %1393 = vmatprep.subr.bf16.mxu0 0
  %1394 = vmatpush1.bf16.msra.mxu0 %v1005
  %1395 = vmatprep.subr.bf16.mxu0 0
  %1396 = vmatpush1.bf16.msra.mxu0 %v1006
  %1397 = vmatprep.subr.bf16.mxu0 0
  %1398 = vmatpush1.bf16.msra.mxu0 %v1007
  %1399 = vmatprep.subr.bf16.mxu0 0
  %1400 = vmatpush1.bf16.msra.mxu0 %v1008
  %1401 = vmatprep.mubr.bf16.mxu0 %v383
  %1402 = vmatmul.mubr.bf16.gmra.mrb[0].mxu0 %v381
  %v1403 = vpop.f32.mrb[0].mxu0
  %v1404 = vadd.f32 %v1364, %v1403
  %v1405 = vpop.f32.mrb[0].mxu0
  %v1406 = vpop.f32.mrb[0].mxu0
  %v1407 = vpop.f32.mrb[0].mxu0
  %1408 = vdwg.mxu0
  %1409 = vmatprep.subr.bf16.mxu0 0
  %1410 = vmatpush1.bf16.msra.mxu0 %v1009
  %1411 = vmatprep.subr.bf16.mxu0 0
  %1412 = vmatpush1.bf16.msra.mxu0 %v1010
  %1413 = vmatprep.subr.bf16.mxu0 0
  %1414 = vmatpush1.bf16.msra.mxu0 %v1011
  %1415 = vmatprep.subr.bf16.mxu0 0
  %1416 = vmatpush1.bf16.msra.mxu0 %v1012
  %1417 = vmatprep.subr.bf16.mxu0 0
  %1418 = vmatpush1.bf16.msra.mxu0 %v1013
  %1419 = vmatprep.subr.bf16.mxu0 0
  %1420 = vmatpush1.bf16.msra.mxu0 %v1014
  %1421 = vmatprep.subr.bf16.mxu0 0
  %1422 = vmatpush1.bf16.msra.mxu0 %v1015
  %1423 = vmatprep.subr.bf16.mxu0 0
  %1424 = vmatpush1.bf16.msra.mxu0 %v1016
  %1425 = vmatprep.subr.bf16.mxu0 0
  %1426 = vmatpush1.bf16.msra.mxu0 %v1017
  %1427 = vmatprep.subr.bf16.mxu0 0
  %1428 = vmatpush1.bf16.msra.mxu0 %v1018
  %1429 = vmatprep.subr.bf16.mxu0 0
  %1430 = vmatpush1.bf16.msra.mxu0 %v1019
  %1431 = vmatprep.subr.bf16.mxu0 0
  %1432 = vmatpush1.bf16.msra.mxu0 %v1020
  %1433 = vmatprep.subr.bf16.mxu0 0
  %1434 = vmatpush1.bf16.msra.mxu0 %v1021
  %1435 = vmatprep.subr.bf16.mxu0 0
  %1436 = vmatpush1.bf16.msra.mxu0 %v1022
  %1437 = vmatprep.subr.bf16.mxu0 0
  %1438 = vmatpush1.bf16.msra.mxu0 %v1023
  %1439 = vmatprep.subr.bf16.mxu0 0
  %1440 = vmatpush1.bf16.msra.mxu0 %v1024
  %1441 = vmatprep.mubr.bf16.mxu0 %v380
  %1442 = vmatmul.mubr.bf16.gmra.mrb[0].mxu0 %v366
  %v1443 = vpop.f32.mrb[0].mxu0
  %v1444 = vadd.f32 %v1404, %v1443
  %v1445 = vpop.f32.mrb[0].mxu0
  %v1446 = vpop.f32.mrb[0].mxu0
  %v1447 = vpop.f32.mrb[0].mxu0
  %1448 = vdwg.mxu0
  %1449 = vmatprep.subr.bf16.mxu0 0
  %1450 = vmatpush1.bf16.msra.mxu0 %v1025
  %1451 = vmatprep.subr.bf16.mxu0 0
  %1452 = vmatpush1.bf16.msra.mxu0 %v1026
  %1453 = vmatprep.subr.bf16.mxu0 0
  %1454 = vmatpush1.bf16.msra.mxu0 %v1027
  %1455 = vmatprep.subr.bf16.mxu0 0
  %1456 = vmatpush1.bf16.msra.mxu0 %v1028
  %1457 = vmatprep.subr.bf16.mxu0 0
  %1458 = vmatpush1.bf16.msra.mxu0 %v1029
  %1459 = vmatprep.subr.bf16.mxu0 0
  %1460 = vmatpush1.bf16.msra.mxu0 %v1030
  %1461 = vmatprep.subr.bf16.mxu0 0
  %1462 = vmatpush1.bf16.msra.mxu0 %v1031
  %1463 = vmatprep.subr.bf16.mxu0 0
  %1464 = vmatpush1.bf16.msra.mxu0 %v1032
  %1465 = vmatprep.subr.bf16.mxu0 0
  %1466 = vmatpush1.bf16.msra.mxu0 %v1033
  %1467 = vmatprep.subr.bf16.mxu0 0
  %1468 = vmatpush1.bf16.msra.mxu0 %v1034
  %1469 = vmatprep.subr.bf16.mxu0 0
  %1470 = vmatpush1.bf16.msra.mxu0 %v1035
  %1471 = vmatprep.subr.bf16.mxu0 0
  %1472 = vmatpush1.bf16.msra.mxu0 %v1036
  %1473 = vmatprep.subr.bf16.mxu0 0
  %1474 = vmatpush1.bf16.msra.mxu0 %v1037
  %1475 = vmatprep.subr.bf16.mxu0 0
  %1476 = vmatpush1.bf16.msra.mxu0 %v1038
  %1477 = vmatprep.subr.bf16.mxu0 0
  %1478 = vmatpush1.bf16.msra.mxu0 %v1039
  %1479 = vmatprep.subr.bf16.mxu0 0
  %1480 = vmatpush1.bf16.msra.mxu0 %v1040
  %1481 = vmatprep.mubr.bf16.mxu0 %v384
  %1482 = vmatmul.mubr.bf16.gmra.mrb[0].mxu0 %v382
  %v1483 = vpop.f32.mrb[0].mxu0
  %v1484 = vadd.f32 %v1444, %v1483
  %v1485 = vpop.f32.mrb[0].mxu0
  %v1486 = vpop.f32.mrb[0].mxu0
  %v1487 = vpop.f32.mrb[0].mxu0
  %1488 = vdwg.mxu0
  %v1489 = vmax.f32 %v1484, -4.0
  %v1490 = vmin.f32 %v1489, 4.0
  %vm1491 = vcmask 517120
  %1492 = vst.msk [vmem:[%s4] sm:$0x3] %vm1491, %v1484
  %vm1493 = vcmask 1041920
  %1494 = vst.msk [vmem:[%s4] sm:$0x3] %vm1493, %v1490
  %v1495 = vld [vmem:[%s3] sm:$0x3]
  %v1496 = vmul.f32 %v1490, 0.5
  %v1497 = vmul.f32 %v1496, 1.442695
  %v1498 = vpow.pop %v1497
  %1500 = vrot.lane.b32.xlu0 %v1498, 64
  %v1501 = vpop.permute.xlu0 %1500
  %v1503 = vmul.f32 %v1495, %v1501
  %v1504 = vadd.f32 %v1484, %v1503
  %1505 = vst.msk [vmem:[%s5] sm:$0x3] %vm1491, %v1504
  // Predicated region
  $region18: #{vae_forward.20} parent=0 // pred_check
    _
  $region19: #{vae_forward.20} parent=0 // pred_check_branch
    %1507 = sbr.rel (0) target = $region21
  $region20: #{vae_forward.20} parent=0 // pred_region
    _
  $region21: #{vae_forward.20} parent=0 // pred_fallthru
    _
  // Predicated region
  $region22: #{vae_forward.20} parent=0 // pred_check
    _
  $region23: #{vae_forward.20} parent=0 // pred_check_branch
    %1509 = sbr.rel (0) target = $region25
  $region24: #{vae_forward.20} parent=0 // pred_region
    _
  $region25: #{vae_forward.20} parent=0 // pred_fallthru
    _
  // Predicated region
  $region26: #{vae_forward.20} parent=0 // pred_check
    _
  $region27: #{vae_forward.20} parent=0 // pred_check_branch
    %1511 = sbr.rel (0) target = $region29
  $region28: #{vae_forward.20} parent=0 // pred_region
    _
  $region29: #{vae_forward.20} parent=0 // pred_fallthru
    _
  // Predicated region
  $region30: #{vae_forward.20} parent=0 // pred_check
    _
  $region31: #{vae_forward.20} parent=0 // pred_check_branch
    %1513 = sbr.rel (0) target = $region33
  $region32: #{vae_forward.20} parent=0 // pred_region
    _
  $region33: #{vae_forward.20} parent=0 // pred_fallthru
    _

// kernel: tile.33
$region0: #{tile.33}
  #allocation0 [shape = 's32[1]{0}', space=sflag, size = 0x4, scoped, tag = 'scoped memory for tile.33']
  %s0 = inlined_call_operand.vmem [shape: f32[64], index: 0, kind: input, shape index: {}]
  %s1 = inlined_call_operand.vmem [shape: f32[4,64], index: 1, kind: output, shape index: {}]
  // Predicated region
  $region2: #{tile.33} parent=0 // pred_check
    _
  $region3: #{tile.33} parent=0 // pred_check_branch
    %3 = sbr.rel (0) target = $region5
  $region4: #{tile.33} parent=0 // pred_region
    _
  $region5: #{tile.33} parent=0 // pred_fallthru
    _
  %v4 = vld [vmem:[%s0] ss:$0 sm:$0xff]
  %5 = vst [vmem:[%s1] sm:$0xf] %v4

// kernel: tile.38
$region0: #{tile.38}
  %s0 = inlined_call_operand.vmem [shape: f32[4,64], index: 0, kind: input, shape index: {}]
  %s1 = inlined_call_operand.vmem [shape: f32[1,256], index: 1, kind: output, shape index: {}]
  $region1: #{tile.38} parent=0
    #allocation0 [shape = 'u8[8192]{0}', space=vmem, size = 0x2000, scoped, tag = 'scoped mem for output reshape']
    #allocation1 [shape = 'u8[4096]{0}', space=vmem, size = 0x1000, scoped, tag = 'scoped mem for input reshape']
    %s3 = sshllo.u32 0, 4
    %v4 = vld [vmem:[%s0] sm:%s3]
    %5 = vst [vmem:[#allocation1] sm:%s3] %v4
    %s6 = smov 3
    %v7 = vld [vmem:[#allocation1] ss:$2 sm:%s6]
    %vm8 = vcmask 523264
    %9 = vst.msk [vmem:[#allocation0] ss:$8 sm:$0x3] %vm8, %v7
    %s10 = scalar_lea.vmem [#allocation1], 1
    %s11 = smov 3
    %v12 = vld [vmem:[%s10] ss:$2 sm:%s11]
    %13 = vrot.lane.b32.xlu0 %v12, 64
    %v14 = vpop.permute.xlu0 %13
    %vm15 = vcmask 1048064
    %16 = vst.msk [vmem:[#allocation0] ss:$8 sm:$0x3] %vm15, %v14
    %s18 = sshllo.u32 0, 1
    %v20 = vld [vmem:[#allocation0] sm:%s18]
    %s21 = sshllo.u32 0, 1
    %22 = vst [vmem:[%s1] sm:%s21] %v20
    %s23 = scalar_lea.vmem [#allocation0], 8
    %v24 = vld [vmem:[%s23] sm:%s18]
    %s25 = sshllo.u32 0, 1
    %s26 = scalar_lea.vmem %s1, 1
    %27 = vst [vmem:[%s26] sm:%s25] %v24

// kernel: vae_forward.23
$region0: #{vae_forward.23}
  #allocation0 [shape = 'u32[]', space=smem, size = 0x4, offset = 0x4, fixed_abs, tag = 'smem constant byte address 0x4 - core index']
  #allocation1 [shape = 'u32[144,128]{1,0:T(1,128)}', space=vmem, size = 0x12000, scoped, tag = 'internal scratch']
  %s0 = inlined_call_operand.vmem [shape: f32[32,256], index: 0, kind: input, shape index: {}]
  %s1 = inlined_call_operand.vmem [shape: f32[1,256], index: 1, kind: input, shape index: {}]
  %s2 = inlined_call_operand.vmem [shape: f32[1,256], index: 2, kind: input, shape index: {}]
  %s3 = inlined_call_operand.vmem [shape: bf16[32,256], index: 3, kind: output, shape index: {}]
  %s4 = sld [smem:[#allocation0]]
  $region22: #{vae_forward.23} parent=0
    _
  %s6 = ssub.s32 1, %s4
  %s7 = scalar_select 0, %s6, %s4
  // Predicated region
  $region2: #{vae_forward.23} parent=0 // pred_check
    _
  $region3: #{vae_forward.23} parent=0 // pred_check_branch
    %9 = sbr.rel (0) target = $region5
  $region4: #{vae_forward.23} parent=0 // pred_region
    _
  $region5: #{vae_forward.23} parent=0 // pred_fallthru
    _
  // Predicated region
  $region6: #{vae_forward.23} parent=0 // pred_check
    _
  $region7: #{vae_forward.23} parent=0 // pred_check_branch
    %11 = sbr.rel (0) target = $region9
  $region8: #{vae_forward.23} parent=0 // pred_region
    _
  $region9: #{vae_forward.23} parent=0 // pred_fallthru
    _
  // Predicated region
  $region10: #{vae_forward.23} parent=0 // pred_check
    _
  $region11: #{vae_forward.23} parent=0 // pred_check_branch
    %13 = sbr.rel (0) target = $region13
  $region12: #{vae_forward.23} parent=0 // pred_region
    _
  $region13: #{vae_forward.23} parent=0 // pred_fallthru
    _
  %v14 = vld [vmem:[%s0] sm:$0xff]
  %v15 = vld [vmem:[%s0 + $0x8] sm:$0xff]
  %v16 = vld [vmem:[%s0 + $0x10] sm:$0xff]
  %v17 = vld [vmem:[%s0 + $0x18] sm:$0xff]
  %v18 = vld [vmem:[%s0 + $0x20] sm:$0xff]
  %v19 = vld [vmem:[%s0 + $0x28] sm:$0xff]
  %v20 = vld [vmem:[%s0 + $0x30] sm:$0xff]
  %v21 = vld [vmem:[%s0 + $0x38] sm:$0xff]
  %v22 = vld [vmem:[%s1] sm:$0x3]
  %v24 = vlaneseq
  %v25 = vshrl.u32 %v24, 7
  %v26 = vsub.s32 0, %v25
  %v27 = vrot.slane %v22, %v26
  %v28 = vlaneseq
  %v29 = vshrl.u32 %v28, 7
  %v30 = vsub.s32 1, %v29
  %v31 = vrot.slane %v22, %v30
  %v34 = vmul.f32 %v14, %v27
  %v35 = vmul.f32 %v15, %v31
  %v36 = vmul.f32 %v16, %v27
  %v37 = vmul.f32 %v17, %v31
  %v38 = vmul.f32 %v18, %v27
  %v39 = vmul.f32 %v19, %v31
  %v40 = vmul.f32 %v20, %v27
  %v41 = vmul.f32 %v21, %v31
  %v42 = vld [vmem:[%s2] sm:$0x3]
  %v44 = vlaneseq
  %v45 = vshrl.u32 %v44, 7
  %v46 = vsub.s32 0, %v45
  %v47 = vrot.slane %v42, %v46
  %v48 = vlaneseq
  %v49 = vshrl.u32 %v48, 7
  %v50 = vsub.s32 1, %v49
  %v51 = vrot.slane %v42, %v50
  %v54 = vadd.f32 %v34, %v47
  %v55 = vadd.f32 %v35, %v51
  %v56 = vadd.f32 %v36, %v47
  %v57 = vadd.f32 %v37, %v51
  %v58 = vadd.f32 %v38, %v47
  %v59 = vadd.f32 %v39, %v51
  %v60 = vadd.f32 %v40, %v47
  %v61 = vadd.f32 %v41, %v51
  %v62 = vmax.f32 %v54, 0.0
  %v63 = vmax.f32 %v55, 0.0
  %v64 = vmax.f32 %v56, 0.0
  %v65 = vmax.f32 %v57, 0.0
  %v66 = vmax.f32 %v58, 0.0
  %v67 = vmax.f32 %v59, 0.0
  %v68 = vmax.f32 %v60, 0.0
  %v69 = vmax.f32 %v61, 0.0
  %v70 = vpack.c.bf16 %v64, %v62
  %v71 = vpack.c.bf16 %v65, %v63
  %v72 = vpack.c.bf16 %v68, %v66
  %v73 = vpack.c.bf16 %v69, %v67
  %v78 = vunpack.c.l.b16 %v70
  %v79 = vunpack.c.l.b16 %v71
  %v80 = vunpack.c.h.b16 %v70
  %v81 = vunpack.c.h.b16 %v71
  %v82 = vunpack.c.l.b16 %v72
  %v83 = vunpack.c.l.b16 %v73
  %v84 = vunpack.c.h.b16 %v72
  %v85 = vunpack.c.h.b16 %v73
  %v86 = vpack.c.b16 %v79, %v78
  %v87 = vpack.c.b16 %v81, %v80
  %v88 = vpack.c.b16 %v83, %v82
  %v89 = vpack.c.b16 %v85, %v84
  %94 = vst [vmem:[%s3] sm:$0xff] %v86
  %95 = vst [vmem:[%s3 + $0x8] sm:$0xff] %v87
  %96 = vst [vmem:[%s3 + $0x10] sm:$0xff] %v88
  %97 = vst [vmem:[%s3 + $0x18] sm:$0xff] %v89
  // Predicated region
  $region14: #{vae_forward.23} parent=0 // pred_check
    _
  $region15: #{vae_forward.23} parent=0 // pred_check_branch
    %99 = sbr.rel (0) target = $region17
  $region16: #{vae_forward.23} parent=0 // pred_region
    _
  $region17: #{vae_forward.23} parent=0 // pred_fallthru
    _
  // Predicated region
  $region18: #{vae_forward.23} parent=0 // pred_check
    _
  $region19: #{vae_forward.23} parent=0 // pred_check_branch
    %101 = sbr.rel (0) target = $region21
  $region20: #{vae_forward.23} parent=0 // pred_region
    _
  $region21: #{vae_forward.23} parent=0 // pred_fallthru
    _

// kernel: vae_forward.22
$region0: #{vae_forward.22}
  #allocation0 [shape = 'u32[]', space=smem, size = 0x4, offset = 0x4, fixed_abs, tag = 'smem constant byte address 0x4 - core index']
  #allocation1 [shape = 'u32[144,128]{1,0:T(1,128)}', space=vmem, size = 0x12000, scoped, tag = 'internal scratch']
  %s0 = inlined_call_operand.vmem [shape: bf16[32,512], index: 0, kind: input, shape index: {}]
  %s1 = inlined_call_operand.vmem [shape: bf16[512,256], index: 1, kind: input, shape index: {}]
  %s2 = inlined_call_operand.vmem [shape: f32[1,256], index: 2, kind: input, shape index: {}]
  %s3 = inlined_call_operand.vmem [shape: f32[32,256], index: 3, kind: output, shape index: {0}]
  %s4 = inlined_call_operand.vmem [shape: f32[2,256], index: 4, kind: output, shape index: {1}]
  %5 = xla_tuple %s3, %s4
  %s6 = sld [smem:[#allocation0]]
  $region34: #{vae_forward.22} parent=0
    _
  %s8 = ssub.s32 1, %s6
  %s9 = scalar_select 0, %s8, %s6
  // Predicated region
  $region2: #{vae_forward.22} parent=0 // pred_check
    _
  $region3: #{vae_forward.22} parent=0 // pred_check_branch
    %11 = sbr.rel (0) target = $region5
  $region4: #{vae_forward.22} parent=0 // pred_region
    _
  $region5: #{vae_forward.22} parent=0 // pred_fallthru
    _
  // Predicated region
  $region6: #{vae_forward.22} parent=0 // pred_check
    _
  $region7: #{vae_forward.22} parent=0 // pred_check_branch
    %13 = sbr.rel (0) target = $region9
  $region8: #{vae_forward.22} parent=0 // pred_region
    _
  $region9: #{vae_forward.22} parent=0 // pred_fallthru
    _
  // Predicated region
  $region10: #{vae_forward.22} parent=0 // pred_check
    _
  $region11: #{vae_forward.22} parent=0 // pred_check_branch
    %15 = sbr.rel (0) target = $region13
  $region12: #{vae_forward.22} parent=0 // pred_region
    _
  $region13: #{vae_forward.22} parent=0 // pred_fallthru
    _
  %v16 = vld [vmem:[%s0] sm:$0xff]
  %v17 = vld [vmem:[%s0 + $0x8] sm:$0xff]
  %v18 = vld [vmem:[%s0 + $0x10] sm:$0xff]
  %v19 = vld [vmem:[%s0 + $0x18] sm:$0xff]
  %v20 = vld [vmem:[%s0 + $0x20] sm:$0xff]
  %v21 = vld [vmem:[%s0 + $0x28] sm:$0xff]
  %v22 = vld [vmem:[%s0 + $0x30] sm:$0xff]
  %v23 = vld [vmem:[%s0 + $0x38] sm:$0xff]
  %v24 = vld [vmem:[%s1] sm:$0xff]
  %v25 = vld [vmem:[%s1 + $0x8] sm:$0xff]
  %v26 = vld [vmem:[%s1 + $0x10] sm:$0xff]
  %v27 = vld [vmem:[%s1 + $0x18] sm:$0xff]
  %v28 = vld [vmem:[%s1 + $0x20] sm:$0xff]
  %v29 = vld [vmem:[%s1 + $0x28] sm:$0xff]
  %v30 = vld [vmem:[%s1 + $0x30] sm:$0xff]
  %v31 = vld [vmem:[%s1 + $0x38] sm:$0xff]
  %v32 = vld [vmem:[%s1 + $0x40] sm:$0xff]
  %v33 = vld [vmem:[%s1 + $0x48] sm:$0xff]
  %v34 = vld [vmem:[%s1 + $0x50] sm:$0xff]
  %v35 = vld [vmem:[%s1 + $0x58] sm:$0xff]
  %v36 = vld [vmem:[%s1 + $0x60] sm:$0xff]
  %v37 = vld [vmem:[%s1 + $0x68] sm:$0xff]
  %v38 = vld [vmem:[%s1 + $0x70] sm:$0xff]
  %v39 = vld [vmem:[%s1 + $0x78] sm:$0xff]
  %v40 = vld [vmem:[%s1 + $0x80] sm:$0xff]
  %v41 = vld [vmem:[%s1 + $0x88] sm:$0xff]
  %v42 = vld [vmem:[%s1 + $0x90] sm:$0xff]
  %v43 = vld [vmem:[%s1 + $0x98] sm:$0xff]
  %v44 = vld [vmem:[%s1 + $0xa0] sm:$0xff]
  %v45 = vld [vmem:[%s1 + $0xa8] sm:$0xff]
  %v46 = vld [vmem:[%s1 + $0xb0] sm:$0xff]
  %v47 = vld [vmem:[%s1 + $0xb8] sm:$0xff]
  %v48 = vld [vmem:[%s1 + $0xc0] sm:$0xff]
  %v49 = vld [vmem:[%s1 + $0xc8] sm:$0xff]
  %v50 = vld [vmem:[%s1 + $0xd0] sm:$0xff]
  %v51 = vld [vmem:[%s1 + $0xd8] sm:$0xff]
  %v52 = vld [vmem:[%s1 + $0xe0] sm:$0xff]
  %v53 = vld [vmem:[%s1 + $0xe8] sm:$0xff]
  %v54 = vld [vmem:[%s1 + $0xf0] sm:$0xff]
  %v55 = vld [vmem:[%s1 + $0xf8] sm:$0xff]
  %v56 = vld [vmem:[%s1 + $0x100] sm:$0xff]
  %v57 = vld [vmem:[%s1 + $0x108] sm:$0xff]
  %v58 = vld [vmem:[%s1 + $0x110] sm:$0xff]
  %v59 = vld [vmem:[%s1 + $0x118] sm:$0xff]
  %v60 = vld [vmem:[%s1 + $0x120] sm:$0xff]
  %v61 = vld [vmem:[%s1 + $0x128] sm:$0xff]
  %v62 = vld [vmem:[%s1 + $0x130] sm:$0xff]
  %v63 = vld [vmem:[%s1 + $0x138] sm:$0xff]
  %v64 = vld [vmem:[%s1 + $0x140] sm:$0xff]
  %v65 = vld [vmem:[%s1 + $0x148] sm:$0xff]
  %v66 = vld [vmem:[%s1 + $0x150] sm:$0xff]
  %v67 = vld [vmem:[%s1 + $0x158] sm:$0xff]
  %v68 = vld [vmem:[%s1 + $0x160] sm:$0xff]
  %v69 = vld [vmem:[%s1 + $0x168] sm:$0xff]
  %v70 = vld [vmem:[%s1 + $0x170] sm:$0xff]
  %v71 = vld [vmem:[%s1 + $0x178] sm:$0xff]
  %v72 = vld [vmem:[%s1 + $0x180] sm:$0xff]
  %v73 = vld [vmem:[%s1 + $0x188] sm:$0xff]
  %v74 = vld [vmem:[%s1 + $0x190] sm:$0xff]
  %v75 = vld [vmem:[%s1 + $0x198] sm:$0xff]
  %v76 = vld [vmem:[%s1 + $0x1a0] sm:$0xff]
  %v77 = vld [vmem:[%s1 + $0x1a8] sm:$0xff]
  %v78 = vld [vmem:[%s1 + $0x1b0] sm:$0xff]
  %v79 = vld [vmem:[%s1 + $0x1b8] sm:$0xff]
  %v80 = vld [vmem:[%s1 + $0x1c0] sm:$0xff]
  %v81 = vld [vmem:[%s1 + $0x1c8] sm:$0xff]
  %v82 = vld [vmem:[%s1 + $0x1d0] sm:$0xff]
  %v83 = vld [vmem:[%s1 + $0x1d8] sm:$0xff]
  %v84 = vld [vmem:[%s1 + $0x1e0] sm:$0xff]
  %v85 = vld [vmem:[%s1 + $0x1e8] sm:$0xff]
  %v86 = vld [vmem:[%s1 + $0x1f0] sm:$0xff]
  %v87 = vld [vmem:[%s1 + $0x1f8] sm:$0xff]
  %v88 = vld [vmem:[%s2] sm:$0x3]
  %v90 = vlaneseq
  %v91 = vshrl.u32 %v90, 7
  %v92 = vsub.s32 0, %v91
  %v93 = vrot.slane %v88, %v92
  %v94 = vlaneseq
  %v95 = vshrl.u32 %v94, 7
  %v96 = vsub.s32 1, %v95
  %v97 = vrot.slane %v88, %v96
  %v108 = vunpack.c.l.b16 %v16
  %v109 = vunpack.c.h.b16 %v16
  %v110 = vunpack.c.l.b16 %v17
  %v111 = vunpack.c.h.b16 %v17
  %v112 = vunpack.c.l.b16 %v18
  %v113 = vunpack.c.h.b16 %v18
  %v114 = vunpack.c.l.b16 %v19
  %v115 = vunpack.c.h.b16 %v19
  %v116 = vunpack.c.l.b16 %v20
  %v117 = vunpack.c.h.b16 %v20
  %v118 = vunpack.c.l.b16 %v21
  %v119 = vunpack.c.h.b16 %v21
  %v120 = vunpack.c.l.b16 %v22
  %v121 = vunpack.c.h.b16 %v22
  %v122 = vunpack.c.l.b16 %v23
  %v123 = vunpack.c.h.b16 %v23
  %v124 = vpack.c.b16 %v112, %v108
  %v125 = vpack.c.b16 %v113, %v109
  %v126 = vpack.c.b16 %v114, %v110
  %v127 = vpack.c.b16 %v115, %v111
  %v128 = vpack.c.b16 %v120, %v116
  %v129 = vpack.c.b16 %v121, %v117
  %v130 = vpack.c.b16 %v122, %v118
  %v131 = vpack.c.b16 %v123, %v119
  %v204 = vunpack.c.l.b16 %v24
  %v205 = vunpack.c.h.b16 %v24
  %v206 = vunpack.c.l.b16 %v25
  %v207 = vunpack.c.h.b16 %v25
  %v208 = vunpack.c.l.b16 %v26
  %v209 = vunpack.c.h.b16 %v26
  %v210 = vunpack.c.l.b16 %v27
  %v211 = vunpack.c.h.b16 %v27
  %v212 = vunpack.c.l.b16 %v28
  %v213 = vunpack.c.h.b16 %v28
  %v214 = vunpack.c.l.b16 %v29
  %v215 = vunpack.c.h.b16 %v29
  %v216 = vunpack.c.l.b16 %v30
  %v217 = vunpack.c.h.b16 %v30
  %v218 = vunpack.c.l.b16 %v31
  %v219 = vunpack.c.h.b16 %v31
  %v220 = vunpack.c.l.b16 %v32
  %v221 = vunpack.c.h.b16 %v32
  %v222 = vunpack.c.l.b16 %v33
  %v223 = vunpack.c.h.b16 %v33
  %v224 = vunpack.c.l.b16 %v34
  %v225 = vunpack.c.h.b16 %v34
  %v226 = vunpack.c.l.b16 %v35
  %v227 = vunpack.c.h.b16 %v35
  %v228 = vunpack.c.l.b16 %v36
  %v229 = vunpack.c.h.b16 %v36
  %v230 = vunpack.c.l.b16 %v37
  %v231 = vunpack.c.h.b16 %v37
  %v232 = vunpack.c.l.b16 %v38
  %v233 = vunpack.c.h.b16 %v38
  %v234 = vunpack.c.l.b16 %v39
  %v235 = vunpack.c.h.b16 %v39
  %v236 = vunpack.c.l.b16 %v40
  %v237 = vunpack.c.h.b16 %v40
  %v238 = vunpack.c.l.b16 %v41
  %v239 = vunpack.c.h.b16 %v41
  %v240 = vunpack.c.l.b16 %v42
  %v241 = vunpack.c.h.b16 %v42
  %v242 = vunpack.c.l.b16 %v43
  %v243 = vunpack.c.h.b16 %v43
  %v244 = vunpack.c.l.b16 %v44
  %v245 = vunpack.c.h.b16 %v44
  %v246 = vunpack.c.l.b16 %v45
  %v247 = vunpack.c.h.b16 %v45
  %v248 = vunpack.c.l.b16 %v46
  %v249 = vunpack.c.h.b16 %v46
  %v250 = vunpack.c.l.b16 %v47
  %v251 = vunpack.c.h.b16 %v47
  %v252 = vunpack.c.l.b16 %v48
  %v253 = vunpack.c.h.b16 %v48
  %v254 = vunpack.c.l.b16 %v49
  %v255 = vunpack.c.h.b16 %v49
  %v256 = vunpack.c.l.b16 %v50
  %v257 = vunpack.c.h.b16 %v50
  %v258 = vunpack.c.l.b16 %v51
  %v259 = vunpack.c.h.b16 %v51
  %v260 = vunpack.c.l.b16 %v52
  %v261 = vunpack.c.h.b16 %v52
  %v262 = vunpack.c.l.b16 %v53
  %v263 = vunpack.c.h.b16 %v53
  %v264 = vunpack.c.l.b16 %v54
  %v265 = vunpack.c.h.b16 %v54
  %v266 = vunpack.c.l.b16 %v55
  %v267 = vunpack.c.h.b16 %v55
  %v268 = vunpack.c.l.b16 %v56
  %v269 = vunpack.c.h.b16 %v56
  %v270 = vunpack.c.l.b16 %v57
  %v271 = vunpack.c.h.b16 %v57
  %v272 = vunpack.c.l.b16 %v58
  %v273 = vunpack.c.h.b16 %v58
  %v274 = vunpack.c.l.b16 %v59
  %v275 = vunpack.c.h.b16 %v59
  %v276 = vunpack.c.l.b16 %v60
  %v277 = vunpack.c.h.b16 %v60
  %v278 = vunpack.c.l.b16 %v61
  %v279 = vunpack.c.h.b16 %v61
  %v280 = vunpack.c.l.b16 %v62
  %v281 = vunpack.c.h.b16 %v62
  %v282 = vunpack.c.l.b16 %v63
  %v283 = vunpack.c.h.b16 %v63
  %v284 = vunpack.c.l.b16 %v64
  %v285 = vunpack.c.h.b16 %v64
  %v286 = vunpack.c.l.b16 %v65
  %v287 = vunpack.c.h.b16 %v65
  %v288 = vunpack.c.l.b16 %v66
  %v289 = vunpack.c.h.b16 %v66
  %v290 = vunpack.c.l.b16 %v67
  %v291 = vunpack.c.h.b16 %v67
  %v292 = vunpack.c.l.b16 %v68
  %v293 = vunpack.c.h.b16 %v68
  %v294 = vunpack.c.l.b16 %v69
  %v295 = vunpack.c.h.b16 %v69
  %v296 = vunpack.c.l.b16 %v70
  %v297 = vunpack.c.h.b16 %v70
  %v298 = vunpack.c.l.b16 %v71
  %v299 = vunpack.c.h.b16 %v71
  %v300 = vunpack.c.l.b16 %v72
  %v301 = vunpack.c.h.b16 %v72
  %v302 = vunpack.c.l.b16 %v73
  %v303 = vunpack.c.h.b16 %v73
  %v304 = vunpack.c.l.b16 %v74
  %v305 = vunpack.c.h.b16 %v74
  %v306 = vunpack.c.l.b16 %v75
  %v307 = vunpack.c.h.b16 %v75
  %v308 = vunpack.c.l.b16 %v76
  %v309 = vunpack.c.h.b16 %v76
  %v310 = vunpack.c.l.b16 %v77
  %v311 = vunpack.c.h.b16 %v77
  %v312 = vunpack.c.l.b16 %v78
  %v313 = vunpack.c.h.b16 %v78
  %v314 = vunpack.c.l.b16 %v79
  %v315 = vunpack.c.h.b16 %v79
  %v316 = vunpack.c.l.b16 %v80
  %v317 = vunpack.c.h.b16 %v80
  %v318 = vunpack.c.l.b16 %v81
  %v319 = vunpack.c.h.b16 %v81
  %v320 = vunpack.c.l.b16 %v82
  %v321 = vunpack.c.h.b16 %v82
  %v322 = vunpack.c.l.b16 %v83
  %v323 = vunpack.c.h.b16 %v83
  %v324 = vunpack.c.l.b16 %v84
  %v325 = vunpack.c.h.b16 %v84
  %v326 = vunpack.c.l.b16 %v85
  %v327 = vunpack.c.h.b16 %v85
  %v328 = vunpack.c.l.b16 %v86
  %v329 = vunpack.c.h.b16 %v86
  %v330 = vunpack.c.l.b16 %v87
  %v331 = vunpack.c.h.b16 %v87
  %v332 = vpack.c.b16 %v206, %v204
  %v333 = vpack.c.b16 %v207, %v205
  %v334 = vpack.c.b16 %v210, %v208
  %v335 = vpack.c.b16 %v211, %v209
  %v336 = vpack.c.b16 %v214, %v212
  %v337 = vpack.c.b16 %v215, %v213
  %v338 = vpack.c.b16 %v218, %v216
  %v339 = vpack.c.b16 %v219, %v217
  %v340 = vpack.c.b16 %v222, %v220
  %v341 = vpack.c.b16 %v223, %v221
  %v342 = vpack.c.b16 %v226, %v224
  %v343 = vpack.c.b16 %v227, %v225
  %v344 = vpack.c.b16 %v230, %v228
  %v345 = vpack.c.b16 %v231, %v229
  %v346 = vpack.c.b16 %v234, %v232
  %v347 = vpack.c.b16 %v235, %v233
  %v348 = vpack.c.b16 %v238, %v236
  %v349 = vpack.c.b16 %v239, %v237
  %v350 = vpack.c.b16 %v242, %v240
  %v351 = vpack.c.b16 %v243, %v241
  %v352 = vpack.c.b16 %v246, %v244
  %v353 = vpack.c.b16 %v247, %v245
  %v354 = vpack.c.b16 %v250, %v248
  %v355 = vpack.c.b16 %v251, %v249
  %v356 = vpack.c.b16 %v254, %v252
  %v357 = vpack.c.b16 %v255, %v253
  %v358 = vpack.c.b16 %v258, %v256
  %v359 = vpack.c.b16 %v259, %v257
  %v360 = vpack.c.b16 %v262, %v260
  %v361 = vpack.c.b16 %v263, %v261
  %v362 = vpack.c.b16 %v266, %v264
  %v363 = vpack.c.b16 %v267, %v265
  %v364 = vpack.c.b16 %v270, %v268
  %v365 = vpack.c.b16 %v271, %v269
  %v366 = vpack.c.b16 %v274, %v272
  %v367 = vpack.c.b16 %v275, %v273
  %v368 = vpack.c.b16 %v278, %v276
  %v369 = vpack.c.b16 %v279, %v277
  %v370 = vpack.c.b16 %v282, %v280
  %v371 = vpack.c.b16 %v283, %v281
  %v372 = vpack.c.b16 %v286, %v284
  %v373 = vpack.c.b16 %v287, %v285
  %v374 = vpack.c.b16 %v290, %v288
  %v375 = vpack.c.b16 %v291, %v289
  %v376 = vpack.c.b16 %v294, %v292
  %v377 = vpack.c.b16 %v295, %v293
  %v378 = vpack.c.b16 %v298, %v296
  %v379 = vpack.c.b16 %v299, %v297
  %v380 = vpack.c.b16 %v302, %v300
  %v381 = vpack.c.b16 %v303, %v301
  %v382 = vpack.c.b16 %v306, %v304
  %v383 = vpack.c.b16 %v307, %v305
  %v384 = vpack.c.b16 %v310, %v308
  %v385 = vpack.c.b16 %v311, %v309
  %v386 = vpack.c.b16 %v314, %v312
  %v387 = vpack.c.b16 %v315, %v313
  %v388 = vpack.c.b16 %v318, %v316
  %v389 = vpack.c.b16 %v319, %v317
  %v390 = vpack.c.b16 %v322, %v320
  %v391 = vpack.c.b16 %v323, %v321
  %v392 = vpack.c.b16 %v326, %v324
  %v393 = vpack.c.b16 %v327, %v325
  %v394 = vpack.c.b16 %v330, %v328
  %v395 = vpack.c.b16 %v331, %v329
  %460 = vmatprep.subr.bf16.mxu0 %v333
  %461 = vmatpush1.bf16.msra.mxu0 %v332
  %462 = vmatprep.subr.bf16.mxu0 %v335
  %463 = vmatpush1.bf16.msra.mxu0 %v334
  %464 = vmatprep.subr.bf16.mxu0 %v337
  %465 = vmatpush1.bf16.msra.mxu0 %v336
  %466 = vmatprep.subr.bf16.mxu0 %v339
  %467 = vmatpush1.bf16.msra.mxu0 %v338
  %468 = vmatprep.subr.bf16.mxu0 %v341
  %469 = vmatpush1.bf16.msra.mxu0 %v340
  %470 = vmatprep.subr.bf16.mxu0 %v343
  %471 = vmatpush1.bf16.msra.mxu0 %v342
  %472 = vmatprep.subr.bf16.mxu0 %v345
  %473 = vmatpush1.bf16.msra.mxu0 %v344
  %474 = vmatprep.subr.bf16.mxu0 %v347
  %475 = vmatpush1.bf16.msra.mxu0 %v346
  %476 = vmatprep.subr.bf16.mxu0 %v349
  %477 = vmatpush1.bf16.msra.mxu0 %v348
  %478 = vmatprep.subr.bf16.mxu0 %v351
  %479 = vmatpush1.bf16.msra.mxu0 %v350
  %480 = vmatprep.subr.bf16.mxu0 %v353
  %481 = vmatpush1.bf16.msra.mxu0 %v352
  %482 = vmatprep.subr.bf16.mxu0 %v355
  %483 = vmatpush1.bf16.msra.mxu0 %v354
  %484 = vmatprep.subr.bf16.mxu0 %v357
  %485 = vmatpush1.bf16.msra.mxu0 %v356
  %486 = vmatprep.subr.bf16.mxu0 %v359
  %487 = vmatpush1.bf16.msra.mxu0 %v358
  %488 = vmatprep.subr.bf16.mxu0 %v361
  %489 = vmatpush1.bf16.msra.mxu0 %v360
  %490 = vmatprep.subr.bf16.mxu0 %v363
  %491 = vmatpush1.bf16.msra.mxu0 %v362
  %492 = vmatprep.mubr.bf16.mxu0 %v125
  %493 = vmatmul.mubr.bf16.gmra.mrb[0].mxu0 %v124
  %v494 = vpop.f32.mrb[0].mxu0
  %v495 = vadd.f32 %v93, %v494
  %v496 = vpop.f32.mrb[0].mxu0
  %v497 = vadd.f32 %v97, %v496
  %v498 = vpop.f32.mrb[0].mxu0
  %v499 = vadd.f32 %v93, %v498
  %v500 = vpop.f32.mrb[0].mxu0
  %v501 = vadd.f32 %v97, %v500
  %502 = vmatprep.mubr.bf16.mxu0 %v129
  %503 = vmatmul.mubr.bf16.gmra.mrb[0].mxu0 %v128
  %v504 = vpop.f32.mrb[0].mxu0
  %v505 = vadd.f32 %v93, %v504
  %v506 = vpop.f32.mrb[0].mxu0
  %v507 = vadd.f32 %v97, %v506
  %v508 = vpop.f32.mrb[0].mxu0
  %v509 = vadd.f32 %v93, %v508
  %v510 = vpop.f32.mrb[0].mxu0
  %v511 = vadd.f32 %v97, %v510
  %512 = vdwg.mxu0
  %513 = vmatprep.subr.bf16.mxu0 %v365
  %514 = vmatpush1.bf16.msra.mxu0 %v364
  %515 = vmatprep.subr.bf16.mxu0 %v367
  %516 = vmatpush1.bf16.msra.mxu0 %v366
  %517 = vmatprep.subr.bf16.mxu0 %v369
  %518 = vmatpush1.bf16.msra.mxu0 %v368
  %519 = vmatprep.subr.bf16.mxu0 %v371
  %520 = vmatpush1.bf16.msra.mxu0 %v370
  %521 = vmatprep.subr.bf16.mxu0 %v373
  %522 = vmatpush1.bf16.msra.mxu0 %v372
  %523 = vmatprep.subr.bf16.mxu0 %v375
  %524 = vmatpush1.bf16.msra.mxu0 %v374
  %525 = vmatprep.subr.bf16.mxu0 %v377
  %526 = vmatpush1.bf16.msra.mxu0 %v376
  %527 = vmatprep.subr.bf16.mxu0 %v379
  %528 = vmatpush1.bf16.msra.mxu0 %v378
  %529 = vmatprep.subr.bf16.mxu0 %v381
  %530 = vmatpush1.bf16.msra.mxu0 %v380
  %531 = vmatprep.subr.bf16.mxu0 %v383
  %532 = vmatpush1.bf16.msra.mxu0 %v382
  %533 = vmatprep.subr.bf16.mxu0 %v385
  %534 = vmatpush1.bf16.msra.mxu0 %v384
  %535 = vmatprep.subr.bf16.mxu0 %v387
  %536 = vmatpush1.bf16.msra.mxu0 %v386
  %537 = vmatprep.subr.bf16.mxu0 %v389
  %538 = vmatpush1.bf16.msra.mxu0 %v388
  %539 = vmatprep.subr.bf16.mxu0 %v391
  %540 = vmatpush1.bf16.msra.mxu0 %v390
  %541 = vmatprep.subr.bf16.mxu0 %v393
  %542 = vmatpush1.bf16.msra.mxu0 %v392
  %543 = vmatprep.subr.bf16.mxu0 %v395
  %544 = vmatpush1.bf16.msra.mxu0 %v394
  %545 = vmatprep.mubr.bf16.mxu0 %v127
  %546 = vmatmul.mubr.bf16.gmra.mrb[0].mxu0 %v126
  %v547 = vpop.f32.mrb[0].mxu0
  %v548 = vadd.f32 %v495, %v547
  %v549 = vpop.f32.mrb[0].mxu0
  %v550 = vadd.f32 %v497, %v549
  %v551 = vpop.f32.mrb[0].mxu0
  %v552 = vadd.f32 %v499, %v551
  %v553 = vpop.f32.mrb[0].mxu0
  %v554 = vadd.f32 %v501, %v553
  %555 = vmatprep.mubr.bf16.mxu0 %v131
  %556 = vmatmul.mubr.bf16.gmra.mrb[0].mxu0 %v130
  %v557 = vpop.f32.mrb[0].mxu0
  %v558 = vadd.f32 %v505, %v557
  %v559 = vpop.f32.mrb[0].mxu0
  %v560 = vadd.f32 %v507, %v559
  %v561 = vpop.f32.mrb[0].mxu0
  %v562 = vadd.f32 %v509, %v561
  %v563 = vpop.f32.mrb[0].mxu0
  %v564 = vadd.f32 %v511, %v563
  %565 = vdwg.mxu0
  %566 = vst [vmem:[%s3] sm:$0xff] %v548
  %567 = vst [vmem:[%s3 + $0x8] sm:$0xff] %v550
  %568 = vst [vmem:[%s3 + $0x10] sm:$0xff] %v552
  %569 = vst [vmem:[%s3 + $0x18] sm:$0xff] %v554
  %570 = vst [vmem:[%s3 + $0x20] sm:$0xff] %v558
  %571 = vst [vmem:[%s3 + $0x28] sm:$0xff] %v560
  %572 = vst [vmem:[%s3 + $0x30] sm:$0xff] %v562
  %573 = vst [vmem:[%s3 + $0x38] sm:$0xff] %v564
  %v574 = vadd.f32 %v548, %v552
  %v575 = vadd.f32 %v574, %v558
  %v576 = vadd.f32 %v575, %v562
  %v577 = vrot.slane %v576, 4
  %v578 = vadd.f32 %v576, %v577
  %v579 = vrot.slane %v578, 2
  %v580 = vadd.f32 %v578, %v579
  %v581 = vrot.slane %v580, 1
  %v582 = vadd.f32 %v580, %v581
  %v583 = vadd.f32 %v550, %v554
  %v584 = vadd.f32 %v583, %v560
  %v585 = vadd.f32 %v584, %v564
  %v586 = vrot.slane %v585, 4
  %v587 = vadd.f32 %v585, %v586
  %v588 = vrot.slane %v587, 2
  %v589 = vadd.f32 %v587, %v588
  %v590 = vrot.slane %v589, 1
  %v591 = vadd.f32 %v589, %v590
  %v592 = vmul.f32 %v548, %v548
  %v593 = vmul.f32 %v550, %v550
  %v594 = vmul.f32 %v552, %v552
  %v595 = vmul.f32 %v554, %v554
  %v596 = vmul.f32 %v558, %v558
  %v597 = vmul.f32 %v560, %v560
  %v598 = vmul.f32 %v562, %v562
  %v599 = vmul.f32 %v564, %v564
  %v600 = vadd.f32 %v592, %v594
  %v601 = vadd.f32 %v600, %v596
  %v602 = vadd.f32 %v601, %v598
  %v603 = vrot.slane %v602, 4
  %v604 = vadd.f32 %v602, %v603
  %v605 = vrot.slane %v604, 2
  %v606 = vadd.f32 %v604, %v605
  %v607 = vrot.slane %v606, 1
  %v608 = vadd.f32 %v606, %v607
  %v609 = vadd.f32 %v593, %v595
  %v610 = vadd.f32 %v609, %v597
  %v611 = vadd.f32 %v610, %v599
  %v612 = vrot.slane %v611, 4
  %v613 = vadd.f32 %v611, %v612
  %v614 = vrot.slane %v613, 2
  %v615 = vadd.f32 %v613, %v614
  %v616 = vrot.slane %v615, 1
  %v617 = vadd.f32 %v615, %v616
  %vm618 = vcmask 1040384
  %v619 = vsel %vm618, %v582, %v608
  %v620 = vsel %vm618, %v591, %v617
  %p621 = scmp.eq.s32.totalorder 0, 0
  // Predicated region
  $region14: #{vae_forward.22} parent=0 // pred_check
    %p622 = pneg %p621
  $region15: #{vae_forward.22} parent=0 // pred_check_branch
    %624 = sbr.rel (%p622) target = $region17
  $region16: #{vae_forward.22} parent=0 // pred_region
    %625 = vst [vmem:[%s4] sm:$0xf] 0.0
  $region17: #{vae_forward.22} parent=0 // pred_fallthru
    _
  %v626 = vld [vmem:[%s4] sm:$0xf]
  %v629 = vcombine.low %v619, %v620
  %v631 = vunpack.c.l.s4 1983009808
  %v632 = vunpack.c.0.s8 %v631
  %v633 = vlaneseq
  %v634 = vshrl.u32 %v633, 7
  %v635 = vsub.s32 %v632, %v634
  %v636 = vrot.slane %v629, %v635
  %v638 = vadd.f32 %v626, %v636
  %639 = vst [vmem:[%s4] sm:$0xf] %v638
  // Predicated region
  $region18: #{vae_forward.22} parent=0 // pred_check
    _
  $region19: #{vae_forward.22} parent=0 // pred_check_branch
    %641 = sbr.rel (0) target = $region21
  $region20: #{vae_forward.22} parent=0 // pred_region
    _
  $region21: #{vae_forward.22} parent=0 // pred_fallthru
    _
  // Predicated region
  $region22: #{vae_forward.22} parent=0 // pred_check
    _
  $region23: #{vae_forward.22} parent=0 // pred_check_branch
    %643 = sbr.rel (0) target = $region25
  $region24: #{vae_forward.22} parent=0 // pred_region
    _
  $region25: #{vae_forward.22} parent=0 // pred_fallthru
    _
  // Predicated region
  $region26: #{vae_forward.22} parent=0 // pred_check
    _
  $region27: #{vae_forward.22} parent=0 // pred_check_branch
    %645 = sbr.rel (0) target = $region29
  $region28: #{vae_forward.22} parent=0 // pred_region
    _
  $region29: #{vae_forward.22} parent=0 // pred_fallthru
    _
  // Predicated region
  $region30: #{vae_forward.22} parent=0 // pred_check
    _
  $region31: #{vae_forward.22} parent=0 // pred_check_branch
    %647 = sbr.rel (0) target = $region33
  $region32: #{vae_forward.22} parent=0 // pred_region
    _
  $region33: #{vae_forward.22} parent=0 // pred_fallthru
    _

// kernel: tile.43
$region0: #{tile.43}
  #allocation0 [shape = 's32[1]{0}', space=sflag, size = 0x4, scoped, tag = 'scoped memory for tile.43']
  %s0 = inlined_call_operand.vmem [shape: f32[32], index: 0, kind: input, shape index: {}]
  %s1 = inlined_call_operand.vmem [shape: f32[4,32], index: 1, kind: output, shape index: {}]
  // Predicated region
  $region2: #{tile.43} parent=0 // pred_check
    _
  $region3: #{tile.43} parent=0 // pred_check_branch
    %3 = sbr.rel (0) target = $region5
  $region4: #{tile.43} parent=0 // pred_region
    _
  $region5: #{tile.43} parent=0 // pred_fallthru
    _
  %v4 = vld [vmem:[%s0] ss:$0 sm:$0xff]
  %5 = vst [vmem:[%s1] sm:$0xf] %v4

// kernel: tile.48
$region0: #{tile.48}
  %s0 = inlined_call_operand.vmem [shape: f32[4,32], index: 0, kind: input, shape index: {}]
  %s1 = inlined_call_operand.vmem [shape: f32[1,128], index: 1, kind: output, shape index: {}]
  $region1: #{tile.48} parent=0
    #allocation0 [shape = 'u8[4096]{0}', space=vmem, size = 0x1000, scoped, tag = 'scoped mem for output reshape']
    #allocation1 [shape = 'u8[4096]{0}', space=vmem, size = 0x1000, scoped, tag = 'scoped mem for input reshape']
    %s3 = sshllo.u32 0, 4
    %v4 = vld [vmem:[%s0] sm:%s3]
    %5 = vst [vmem:[#allocation1] sm:%s3] %v4
    %v6 = vld [vmem:[#allocation1] sm:$0x1]
    %vm7 = vcmask 261120
    %8 = vst.msk [vmem:[#allocation0] sm:$0x1] %vm7, %v6
    %s9 = scalar_lea.vmem [#allocation1], 3
    %v10 = vld [vmem:[%s9] sm:$0x1]
    %11 = vrot.lane.b32.xlu0 %v10, 96
    %v12 = vpop.permute.xlu0 %11
    %vm13 = vcmask 1048320
    %14 = vst.msk [vmem:[#allocation0] sm:$0x1] %vm13, %v12
    %s15 = scalar_lea.vmem [#allocation1], 2
    %v16 = vld [vmem:[%s15] sm:$0x1]
    %17 = vrot.lane.b32.xlu0 %v16, 64
    %v18 = vpop.permute.xlu0 %17
    %vm19 = vcmask 785920
    %20 = vst.msk [vmem:[#allocation0] sm:$0x1] %vm19, %v18
    %s21 = scalar_lea.vmem [#allocation1], 1
    %v22 = vld [vmem:[%s21] sm:$0x1]
    %23 = vrot.lane.b32.xlu0 %v22, 32
    %v24 = vpop.permute.xlu0 %23
    %vm25 = vcmask 523520
    %26 = vst.msk [vmem:[#allocation0] sm:$0x1] %vm25, %v24
    %s28 = sshllo.u32 0, 1
    %v30 = vld [vmem:[#allocation0] sm:%s28]
    %s31 = sshllo.u32 0, 1
    %32 = vst [vmem:[%s1] sm:%s31] %v30

// kernel: vae_forward.24
$region0: #{vae_forward.24}
  #allocation0 [shape = 'u32[]', space=smem, size = 0x4, offset = 0x4, fixed_abs, tag = 'smem constant byte address 0x4 - core index']
  #allocation1 [shape = 'u32[144,128]{1,0:T(1,128)}', space=vmem, size = 0x12000, scoped, tag = 'internal scratch']
  %s0 = inlined_call_operand.vmem [shape: bf16[128,256], index: 0, kind: input, shape index: {}]
  %s1 = inlined_call_operand.vmem [shape: bf16[256,128], index: 1, kind: input, shape index: {}]
  %s2 = inlined_call_operand.vmem [shape: f32[1,128], index: 2, kind: input, shape index: {}]
  %s3 = inlined_call_operand.vmem [shape: f32[128,128], index: 3, kind: output, shape index: {0}]
  %s4 = inlined_call_operand.vmem [shape: f32[2,128], index: 4, kind: output, shape index: {1}]
  %5 = xla_tuple %s3, %s4
  %s6 = sld [smem:[#allocation0]]
  $region34: #{vae_forward.24} parent=0
    _
  %s8 = ssub.s32 1, %s6
  %s9 = scalar_select 0, %s8, %s6
  // Predicated region
  $region2: #{vae_forward.24} parent=0 // pred_check
    _
  $region3: #{vae_forward.24} parent=0 // pred_check_branch
    %11 = sbr.rel (0) target = $region5
  $region4: #{vae_forward.24} parent=0 // pred_region
    _
  $region5: #{vae_forward.24} parent=0 // pred_fallthru
    _
  // Predicated region
  $region6: #{vae_forward.24} parent=0 // pred_check
    _
  $region7: #{vae_forward.24} parent=0 // pred_check_branch
    %13 = sbr.rel (0) target = $region9
  $region8: #{vae_forward.24} parent=0 // pred_region
    _
  $region9: #{vae_forward.24} parent=0 // pred_fallthru
    _
  // Predicated region
  $region10: #{vae_forward.24} parent=0 // pred_check
    _
  $region11: #{vae_forward.24} parent=0 // pred_check_branch
    %15 = sbr.rel (0) target = $region13
  $region12: #{vae_forward.24} parent=0 // pred_region
    _
  $region13: #{vae_forward.24} parent=0 // pred_fallthru
    _
  %v17 = vld [vmem:[%s0] sm:$0xff]
  %v18 = vld [vmem:[%s0 + $0x8] sm:$0xff]
  %v19 = vld [vmem:[%s0 + $0x10] sm:$0xff]
  %v20 = vld [vmem:[%s0 + $0x18] sm:$0xff]
  %v21 = vld [vmem:[%s0 + $0x20] sm:$0xff]
  %v22 = vld [vmem:[%s0 + $0x28] sm:$0xff]
  %v23 = vld [vmem:[%s0 + $0x30] sm:$0xff]
  %v24 = vld [vmem:[%s0 + $0x38] sm:$0xff]
  %v25 = vld [vmem:[%s0 + $0x40] sm:$0xff]
  %v26 = vld [vmem:[%s0 + $0x48] sm:$0xff]
  %v27 = vld [vmem:[%s0 + $0x50] sm:$0xff]
  %v28 = vld [vmem:[%s0 + $0x58] sm:$0xff]
  %v29 = vld [vmem:[%s0 + $0x60] sm:$0xff]
  %v30 = vld [vmem:[%s0 + $0x68] sm:$0xff]
  %v31 = vld [vmem:[%s0 + $0x70] sm:$0xff]
  %v32 = vld [vmem:[%s0 + $0x78] sm:$0xff]
  %v33 = vld [vmem:[%s1] sm:$0xf]
  %v34 = vld [vmem:[%s1 + $0x4] sm:$0xf]
  %v35 = vld [vmem:[%s1 + $0x8] sm:$0xf]
  %v36 = vld [vmem:[%s1 + $0xc] sm:$0xf]
  %v37 = vld [vmem:[%s1 + $0x10] sm:$0xf]
  %v38 = vld [vmem:[%s1 + $0x14] sm:$0xf]
  %v39 = vld [vmem:[%s1 + $0x18] sm:$0xf]
  %v40 = vld [vmem:[%s1 + $0x1c] sm:$0xf]
  %v41 = vld [vmem:[%s1 + $0x20] sm:$0xf]
  %v42 = vld [vmem:[%s1 + $0x24] sm:$0xf]
  %v43 = vld [vmem:[%s1 + $0x28] sm:$0xf]
  %v44 = vld [vmem:[%s1 + $0x2c] sm:$0xf]
  %v45 = vld [vmem:[%s1 + $0x30] sm:$0xf]
  %v46 = vld [vmem:[%s1 + $0x34] sm:$0xf]
  %v47 = vld [vmem:[%s1 + $0x38] sm:$0xf]
  %v48 = vld [vmem:[%s1 + $0x3c] sm:$0xf]
  %v49 = vld [vmem:[%s1 + $0x40] sm:$0xf]
  %v50 = vld [vmem:[%s1 + $0x44] sm:$0xf]
  %v51 = vld [vmem:[%s1 + $0x48] sm:$0xf]
  %v52 = vld [vmem:[%s1 + $0x4c] sm:$0xf]
  %v53 = vld [vmem:[%s1 + $0x50] sm:$0xf]
  %v54 = vld [vmem:[%s1 + $0x54] sm:$0xf]
  %v55 = vld [vmem:[%s1 + $0x58] sm:$0xf]
  %v56 = vld [vmem:[%s1 + $0x5c] sm:$0xf]
  %v57 = vld [vmem:[%s1 + $0x60] sm:$0xf]
  %v58 = vld [vmem:[%s1 + $0x64] sm:$0xf]
  %v59 = vld [vmem:[%s1 + $0x68] sm:$0xf]
  %v60 = vld [vmem:[%s1 + $0x6c] sm:$0xf]
  %v61 = vld [vmem:[%s1 + $0x70] sm:$0xf]
  %v62 = vld [vmem:[%s1 + $0x74] sm:$0xf]
  %v63 = vld [vmem:[%s1 + $0x78] sm:$0xf]
  %v64 = vld [vmem:[%s1 + $0x7c] sm:$0xf]
  %v65 = vld [vmem:[%s2] sm:$0x1]
  %v67 = vlaneseq
  %v68 = vshrl.u32 %v67, 7
  %v69 = vsub.s32 0, %v68
  %v70 = vrot.slane %v65, %v69
  %v88 = vunpack.c.l.b16 %v17
  %v89 = vunpack.c.h.b16 %v17
  %v90 = vunpack.c.l.b16 %v18
  %v91 = vunpack.c.h.b16 %v18
  %v92 = vunpack.c.l.b16 %v19
  %v93 = vunpack.c.h.b16 %v19
  %v94 = vunpack.c.l.b16 %v20
  %v95 = vunpack.c.h.b16 %v20
  %v96 = vunpack.c.l.b16 %v21
  %v97 = vunpack.c.h.b16 %v21
  %v98 = vunpack.c.l.b16 %v22
  %v99 = vunpack.c.h.b16 %v22
  %v100 = vunpack.c.l.b16 %v23
  %v101 = vunpack.c.h.b16 %v23
  %v102 = vunpack.c.l.b16 %v24
  %v103 = vunpack.c.h.b16 %v24
  %v104 = vunpack.c.l.b16 %v25
  %v105 = vunpack.c.h.b16 %v25
  %v106 = vunpack.c.l.b16 %v26
  %v107 = vunpack.c.h.b16 %v26
  %v108 = vunpack.c.l.b16 %v27
  %v109 = vunpack.c.h.b16 %v27
  %v110 = vunpack.c.l.b16 %v28
  %v111 = vunpack.c.h.b16 %v28
  %v112 = vunpack.c.l.b16 %v29
  %v113 = vunpack.c.h.b16 %v29
  %v114 = vunpack.c.l.b16 %v30
  %v115 = vunpack.c.h.b16 %v30
  %v116 = vunpack.c.l.b16 %v31
  %v117 = vunpack.c.h.b16 %v31
  %v118 = vunpack.c.l.b16 %v32
  %v119 = vunpack.c.h.b16 %v32
  %v120 = vpack.c.b16 %v90, %v88
  %v121 = vpack.c.b16 %v91, %v89
  %v122 = vpack.c.b16 %v94, %v92
  %v123 = vpack.c.b16 %v95, %v93
  %v124 = vpack.c.b16 %v98, %v96
  %v125 = vpack.c.b16 %v99, %v97
  %v126 = vpack.c.b16 %v102, %v100
  %v127 = vpack.c.b16 %v103, %v101
  %v128 = vpack.c.b16 %v106, %v104
  %v129 = vpack.c.b16 %v107, %v105
  %v130 = vpack.c.b16 %v110, %v108
  %v131 = vpack.c.b16 %v111, %v109
  %v132 = vpack.c.b16 %v114, %v112
  %v133 = vpack.c.b16 %v115, %v113
  %v134 = vpack.c.b16 %v118, %v116
  %v135 = vpack.c.b16 %v119, %v117
  %v184 = vunpack.c.l.b16 %v33
  %v185 = vunpack.c.l.b16 %v34
  %v186 = vunpack.c.l.b16 %v35
  %v187 = vunpack.c.l.b16 %v36
  %v188 = vunpack.c.l.b16 %v37
  %v189 = vunpack.c.l.b16 %v38
  %v190 = vunpack.c.l.b16 %v39
  %v191 = vunpack.c.l.b16 %v40
  %v192 = vunpack.c.l.b16 %v41
  %v193 = vunpack.c.l.b16 %v42
  %v194 = vunpack.c.l.b16 %v43
  %v195 = vunpack.c.l.b16 %v44
  %v196 = vunpack.c.l.b16 %v45
  %v197 = vunpack.c.l.b16 %v46
  %v198 = vunpack.c.l.b16 %v47
  %v199 = vunpack.c.l.b16 %v48
  %v200 = vunpack.c.l.b16 %v49
  %v201 = vunpack.c.l.b16 %v50
  %v202 = vunpack.c.l.b16 %v51
  %v203 = vunpack.c.l.b16 %v52
  %v204 = vunpack.c.l.b16 %v53
  %v205 = vunpack.c.l.b16 %v54
  %v206 = vunpack.c.l.b16 %v55
  %v207 = vunpack.c.l.b16 %v56
  %v208 = vunpack.c.l.b16 %v57
  %v209 = vunpack.c.l.b16 %v58
  %v210 = vunpack.c.l.b16 %v59
  %v211 = vunpack.c.l.b16 %v60
  %v212 = vunpack.c.l.b16 %v61
  %v213 = vunpack.c.l.b16 %v62
  %v214 = vunpack.c.l.b16 %v63
  %v215 = vunpack.c.l.b16 %v64
  %v216 = vpack.c.b16 %v185, %v184
  %v217 = vpack.c.b16 %v187, %v186
  %v218 = vpack.c.b16 %v189, %v188
  %v219 = vpack.c.b16 %v191, %v190
  %v220 = vpack.c.b16 %v193, %v192
  %v221 = vpack.c.b16 %v195, %v194
  %v222 = vpack.c.b16 %v197, %v196
  %v223 = vpack.c.b16 %v199, %v198
  %v224 = vpack.c.b16 %v201, %v200
  %v225 = vpack.c.b16 %v203, %v202
  %v226 = vpack.c.b16 %v205, %v204
  %v227 = vpack.c.b16 %v207, %v206
  %v228 = vpack.c.b16 %v209, %v208
  %v229 = vpack.c.b16 %v211, %v210
  %v230 = vpack.c.b16 %v213, %v212
  %v231 = vpack.c.b16 %v215, %v214
  %248 = vmatprep.subr.bf16.mxu0 0
  %249 = vmatpush1.bf16.msra.mxu0 %v216
  %250 = vmatprep.subr.bf16.mxu0 0
  %251 = vmatpush1.bf16.msra.mxu0 %v217
  %252 = vmatprep.subr.bf16.mxu0 0
  %253 = vmatpush1.bf16.msra.mxu0 %v218
  %254 = vmatprep.subr.bf16.mxu0 0
  %255 = vmatpush1.bf16.msra.mxu0 %v219
  %256 = vmatprep.subr.bf16.mxu0 0
  %257 = vmatpush1.bf16.msra.mxu0 %v220
  %258 = vmatprep.subr.bf16.mxu0 0
  %259 = vmatpush1.bf16.msra.mxu0 %v221
  %260 = vmatprep.subr.bf16.mxu0 0
  %261 = vmatpush1.bf16.msra.mxu0 %v222
  %262 = vmatprep.subr.bf16.mxu0 0
  %263 = vmatpush1.bf16.msra.mxu0 %v223
  %264 = vmatprep.subr.bf16.mxu0 0
  %265 = vmatpush1.bf16.msra.mxu0 %v224
  %266 = vmatprep.subr.bf16.mxu0 0
  %267 = vmatpush1.bf16.msra.mxu0 %v225
  %268 = vmatprep.subr.bf16.mxu0 0
  %269 = vmatpush1.bf16.msra.mxu0 %v226
  %270 = vmatprep.subr.bf16.mxu0 0
  %271 = vmatpush1.bf16.msra.mxu0 %v227
  %272 = vmatprep.subr.bf16.mxu0 0
  %273 = vmatpush1.bf16.msra.mxu0 %v228
  %274 = vmatprep.subr.bf16.mxu0 0
  %275 = vmatpush1.bf16.msra.mxu0 %v229
  %276 = vmatprep.subr.bf16.mxu0 0
  %277 = vmatpush1.bf16.msra.mxu0 %v230
  %278 = vmatprep.subr.bf16.mxu0 0
  %279 = vmatpush1.bf16.msra.mxu0 %v231
  %280 = vmatprep.mubr.bf16.mxu0 %v121
  %281 = vmatmul.mubr.bf16.gmra.mrb[0].mxu0 %v120
  %v282 = vpop.f32.mrb[0].mxu0
  %v283 = vadd.f32 %v70, %v282
  %v284 = vpop.f32.mrb[0].mxu0
  %v285 = vpop.f32.mrb[0].mxu0
  %v286 = vadd.f32 %v70, %v285
  %v287 = vpop.f32.mrb[0].mxu0
  %288 = vmatprep.mubr.bf16.mxu0 %v123
  %289 = vmatmul.mubr.bf16.gmra.mrb[0].mxu0 %v122
  %v290 = vpop.f32.mrb[0].mxu0
  %v291 = vadd.f32 %v70, %v290
  %v292 = vpop.f32.mrb[0].mxu0
  %v293 = vpop.f32.mrb[0].mxu0
  %v294 = vadd.f32 %v70, %v293
  %v295 = vpop.f32.mrb[0].mxu0
  %296 = vmatprep.mubr.bf16.mxu0 %v125
  %297 = vmatmul.mubr.bf16.gmra.mrb[0].mxu0 %v124
  %v298 = vpop.f32.mrb[0].mxu0
  %v299 = vadd.f32 %v70, %v298
  %v300 = vpop.f32.mrb[0].mxu0
  %v301 = vpop.f32.mrb[0].mxu0
  %v302 = vadd.f32 %v70, %v301
  %v303 = vpop.f32.mrb[0].mxu0
  %304 = vmatprep.mubr.bf16.mxu0 %v127
  %305 = vmatmul.mubr.bf16.gmra.mrb[0].mxu0 %v126
  %v306 = vpop.f32.mrb[0].mxu0
  %v307 = vadd.f32 %v70, %v306
  %v308 = vpop.f32.mrb[0].mxu0
  %v309 = vpop.f32.mrb[0].mxu0
  %v310 = vadd.f32 %v70, %v309
  %v311 = vpop.f32.mrb[0].mxu0
  %312 = vmatprep.mubr.bf16.mxu0 %v129
  %313 = vmatmul.mubr.bf16.gmra.mrb[0].mxu0 %v128
  %v314 = vpop.f32.mrb[0].mxu0
  %v315 = vadd.f32 %v70, %v314
  %v316 = vpop.f32.mrb[0].mxu0
  %v317 = vpop.f32.mrb[0].mxu0
  %v318 = vadd.f32 %v70, %v317
  %v319 = vpop.f32.mrb[0].mxu0
  %320 = vmatprep.mubr.bf16.mxu0 %v131
  %321 = vmatmul.mubr.bf16.gmra.mrb[0].mxu0 %v130
  %v322 = vpop.f32.mrb[0].mxu0
  %v323 = vadd.f32 %v70, %v322
  %v324 = vpop.f32.mrb[0].mxu0
  %v325 = vpop.f32.mrb[0].mxu0
  %v326 = vadd.f32 %v70, %v325
  %v327 = vpop.f32.mrb[0].mxu0
  %328 = vmatprep.mubr.bf16.mxu0 %v133
  %329 = vmatmul.mubr.bf16.gmra.mrb[0].mxu0 %v132
  %v330 = vpop.f32.mrb[0].mxu0
  %v331 = vadd.f32 %v70, %v330
  %v332 = vpop.f32.mrb[0].mxu0
  %v333 = vpop.f32.mrb[0].mxu0
  %v334 = vadd.f32 %v70, %v333
  %v335 = vpop.f32.mrb[0].mxu0
  %336 = vmatprep.mubr.bf16.mxu0 %v135
  %337 = vmatmul.mubr.bf16.gmra.mrb[0].mxu0 %v134
  %v338 = vpop.f32.mrb[0].mxu0
  %v339 = vadd.f32 %v70, %v338
  %v340 = vpop.f32.mrb[0].mxu0
  %v341 = vpop.f32.mrb[0].mxu0
  %v342 = vadd.f32 %v70, %v341
  %v343 = vpop.f32.mrb[0].mxu0
  %344 = vdwg.mxu0
  %345 = vst [vmem:[%s3] sm:$0xff] %v283
  %346 = vst [vmem:[%s3 + $0x8] sm:$0xff] %v286
  %347 = vst [vmem:[%s3 + $0x10] sm:$0xff] %v291
  %348 = vst [vmem:[%s3 + $0x18] sm:$0xff] %v294
  %349 = vst [vmem:[%s3 + $0x20] sm:$0xff] %v299
  %350 = vst [vmem:[%s3 + $0x28] sm:$0xff] %v302
  %351 = vst [vmem:[%s3 + $0x30] sm:$0xff] %v307
  %352 = vst [vmem:[%s3 + $0x38] sm:$0xff] %v310
  %353 = vst [vmem:[%s3 + $0x40] sm:$0xff] %v315
  %354 = vst [vmem:[%s3 + $0x48] sm:$0xff] %v318
  %355 = vst [vmem:[%s3 + $0x50] sm:$0xff] %v323
  %356 = vst [vmem:[%s3 + $0x58] sm:$0xff] %v326
  %357 = vst [vmem:[%s3 + $0x60] sm:$0xff] %v331
  %358 = vst [vmem:[%s3 + $0x68] sm:$0xff] %v334
  %359 = vst [vmem:[%s3 + $0x70] sm:$0xff] %v339
  %360 = vst [vmem:[%s3 + $0x78] sm:$0xff] %v342
  %v361 = vadd.f32 %v283, %v286
  %v362 = vadd.f32 %v361, %v291
  %v363 = vadd.f32 %v362, %v294
  %v364 = vadd.f32 %v363, %v299
  %v365 = vadd.f32 %v364, %v302
  %v366 = vadd.f32 %v365, %v307
  %v367 = vadd.f32 %v366, %v310
  %v368 = vadd.f32 %v367, %v315
  %v369 = vadd.f32 %v368, %v318
  %v370 = vadd.f32 %v369, %v323
  %v371 = vadd.f32 %v370, %v326
  %v372 = vadd.f32 %v371, %v331
  %v373 = vadd.f32 %v372, %v334
  %v374 = vadd.f32 %v373, %v339
  %v375 = vadd.f32 %v374, %v342
  %v376 = vrot.slane %v375, 4
  %v377 = vadd.f32 %v375, %v376
  %v378 = vrot.slane %v377, 2
  %v379 = vadd.f32 %v377, %v378
  %v380 = vrot.slane %v379, 1
  %v381 = vadd.f32 %v379, %v380
  %v382 = vmul.f32 %v283, %v283
  %v383 = vmul.f32 %v286, %v286
  %v384 = vmul.f32 %v291, %v291
  %v385 = vmul.f32 %v294, %v294
  %v386 = vmul.f32 %v299, %v299
  %v387 = vmul.f32 %v302, %v302
  %v388 = vmul.f32 %v307, %v307
  %v389 = vmul.f32 %v310, %v310
  %v390 = vmul.f32 %v315, %v315
  %v391 = vmul.f32 %v318, %v318
  %v392 = vmul.f32 %v323, %v323
  %v393 = vmul.f32 %v326, %v326
  %v394 = vmul.f32 %v331, %v331
  %v395 = vmul.f32 %v334, %v334
  %v396 = vmul.f32 %v339, %v339
  %v397 = vmul.f32 %v342, %v342
  %v398 = vadd.f32 %v382, %v383
  %v399 = vadd.f32 %v398, %v384
  %v400 = vadd.f32 %v399, %v385
  %v401 = vadd.f32 %v400, %v386
  %v402 = vadd.f32 %v401, %v387
  %v403 = vadd.f32 %v402, %v388
  %v404 = vadd.f32 %v403, %v389
  %v405 = vadd.f32 %v404, %v390
  %v406 = vadd.f32 %v405, %v391
  %v407 = vadd.f32 %v406, %v392
  %v408 = vadd.f32 %v407, %v393
  %v409 = vadd.f32 %v408, %v394
  %v410 = vadd.f32 %v409, %v395
  %v411 = vadd.f32 %v410, %v396
  %v412 = vadd.f32 %v411, %v397
  %v413 = vrot.slane %v412, 4
  %v414 = vadd.f32 %v412, %v413
  %v415 = vrot.slane %v414, 2
  %v416 = vadd.f32 %v414, %v415
  %v417 = vrot.slane %v416, 1
  %v418 = vadd.f32 %v416, %v417
  %vm419 = vcmask 1040384
  %v420 = vsel %vm419, %v381, %v418
  %p421 = scmp.eq.s32.totalorder 0, 0
  // Predicated region
  $region14: #{vae_forward.24} parent=0 // pred_check
    %p422 = pneg %p421
  $region15: #{vae_forward.24} parent=0 // pred_check_branch
    %424 = sbr.rel (%p422) target = $region17
  $region16: #{vae_forward.24} parent=0 // pred_region
    %425 = vst [vmem:[%s4] sm:$0x3] 0.0
  $region17: #{vae_forward.24} parent=0 // pred_fallthru
    _
  %v426 = vld [vmem:[%s4] sm:$0x3]
  %v427 = vadd.f32 %v426, %v420
  %428 = vst [vmem:[%s4] sm:$0x3] %v427
  // Predicated region
  $region18: #{vae_forward.24} parent=0 // pred_check
    _
  $region19: #{vae_forward.24} parent=0 // pred_check_branch
    %430 = sbr.rel (0) target = $region21
  $region20: #{vae_forward.24} parent=0 // pred_region
    _
  $region21: #{vae_forward.24} parent=0 // pred_fallthru
    _
  // Predicated region
  $region22: #{vae_forward.24} parent=0 // pred_check
    _
  $region23: #{vae_forward.24} parent=0 // pred_check_branch
    %432 = sbr.rel (0) target = $region25
  $region24: #{vae_forward.24} parent=0 // pred_region
    _
  $region25: #{vae_forward.24} parent=0 // pred_fallthru
    _
  // Predicated region
  $region26: #{vae_forward.24} parent=0 // pred_check
    _
  $region27: #{vae_forward.24} parent=0 // pred_check_branch
    %434 = sbr.rel (0) target = $region29
  $region28: #{vae_forward.24} parent=0 // pred_region
    _
  $region29: #{vae_forward.24} parent=0 // pred_fallthru
    _
  // Predicated region
  $region30: #{vae_forward.24} parent=0 // pred_check
    _
  $region31: #{vae_forward.24} parent=0 // pred_check_branch
    %436 = sbr.rel (0) target = $region33
  $region32: #{vae_forward.24} parent=0 // pred_region
    _
  $region33: #{vae_forward.24} parent=0 // pred_fallthru
    _

// kernel: vae_forward.27
$region0: #{vae_forward.27}
  #allocation0 [shape = 'u32[]', space=smem, size = 0x4, offset = 0x4, fixed_abs, tag = 'smem constant byte address 0x4 - core index']
  #allocation1 [shape = 'u32[144,128]{1,0:T(1,128)}', space=vmem, size = 0x12000, scoped, tag = 'internal scratch']
  %s0 = inlined_call_operand.vmem [shape: f32[512,128], index: 0, kind: input, shape index: {}]
  %s1 = inlined_call_operand.vmem [shape: f32[1,128], index: 1, kind: input, shape index: {}]
  %s2 = inlined_call_operand.vmem [shape: f32[1,128], index: 2, kind: input, shape index: {}]
  %s3 = inlined_call_operand.vmem [shape: f32[512,128], index: 3, kind: output, shape index: {}]
  %s4 = sld [smem:[#allocation0]]
  $region22: #{vae_forward.27} parent=0
    _
  %s6 = ssub.s32 1, %s4
  %s7 = scalar_select 0, %s6, %s4
  // Predicated region
  $region2: #{vae_forward.27} parent=0 // pred_check
    _
  $region3: #{vae_forward.27} parent=0 // pred_check_branch
    %9 = sbr.rel (0) target = $region5
  $region4: #{vae_forward.27} parent=0 // pred_region
    _
  $region5: #{vae_forward.27} parent=0 // pred_fallthru
    _
  // Predicated region
  $region6: #{vae_forward.27} parent=0 // pred_check
    _
  $region7: #{vae_forward.27} parent=0 // pred_check_branch
    %11 = sbr.rel (0) target = $region9
  $region8: #{vae_forward.27} parent=0 // pred_region
    _
  $region9: #{vae_forward.27} parent=0 // pred_fallthru
    _
  // Predicated region
  $region10: #{vae_forward.27} parent=0 // pred_check
    _
  $region11: #{vae_forward.27} parent=0 // pred_check_branch
    %13 = sbr.rel (0) target = $region13
  $region12: #{vae_forward.27} parent=0 // pred_region
    _
  $region13: #{vae_forward.27} parent=0 // pred_fallthru
    _
  %v14 = vld [vmem:[%s0] sm:$0xff]
  %v15 = vld [vmem:[%s0 + $0x8] sm:$0xff]
  %v16 = vld [vmem:[%s0 + $0x10] sm:$0xff]
  %v17 = vld [vmem:[%s0 + $0x18] sm:$0xff]
  %v18 = vld [vmem:[%s0 + $0x20] sm:$0xff]
  %v19 = vld [vmem:[%s0 + $0x28] sm:$0xff]
  %v20 = vld [vmem:[%s0 + $0x30] sm:$0xff]
  %v21 = vld [vmem:[%s0 + $0x38] sm:$0xff]
  %v22 = vld [vmem:[%s0 + $0x40] sm:$0xff]
  %v23 = vld [vmem:[%s0 + $0x48] sm:$0xff]
  %v24 = vld [vmem:[%s0 + $0x50] sm:$0xff]
  %v25 = vld [vmem:[%s0 + $0x58] sm:$0xff]
  %v26 = vld [vmem:[%s0 + $0x60] sm:$0xff]
  %v27 = vld [vmem:[%s0 + $0x68] sm:$0xff]
  %v28 = vld [vmem:[%s0 + $0x70] sm:$0xff]
  %v29 = vld [vmem:[%s0 + $0x78] sm:$0xff]
  %v30 = vld [vmem:[%s0 + $0x80] sm:$0xff]
  %v31 = vld [vmem:[%s0 + $0x88] sm:$0xff]
  %v32 = vld [vmem:[%s0 + $0x90] sm:$0xff]
  %v33 = vld [vmem:[%s0 + $0x98] sm:$0xff]
  %v34 = vld [vmem:[%s0 + $0xa0] sm:$0xff]
  %v35 = vld [vmem:[%s0 + $0xa8] sm:$0xff]
  %v36 = vld [vmem:[%s0 + $0xb0] sm:$0xff]
  %v37 = vld [vmem:[%s0 + $0xb8] sm:$0xff]
  %v38 = vld [vmem:[%s0 + $0xc0] sm:$0xff]
  %v39 = vld [vmem:[%s0 + $0xc8] sm:$0xff]
  %v40 = vld [vmem:[%s0 + $0xd0] sm:$0xff]
  %v41 = vld [vmem:[%s0 + $0xd8] sm:$0xff]
  %v42 = vld [vmem:[%s0 + $0xe0] sm:$0xff]
  %v43 = vld [vmem:[%s0 + $0xe8] sm:$0xff]
  %v44 = vld [vmem:[%s0 + $0xf0] sm:$0xff]
  %v45 = vld [vmem:[%s0 + $0xf8] sm:$0xff]
  %v46 = vld [vmem:[%s0 + $0x100] sm:$0xff]
  %v47 = vld [vmem:[%s0 + $0x108] sm:$0xff]
  %v48 = vld [vmem:[%s0 + $0x110] sm:$0xff]
  %v49 = vld [vmem:[%s0 + $0x118] sm:$0xff]
  %v50 = vld [vmem:[%s0 + $0x120] sm:$0xff]
  %v51 = vld [vmem:[%s0 + $0x128] sm:$0xff]
  %v52 = vld [vmem:[%s0 + $0x130] sm:$0xff]
  %v53 = vld [vmem:[%s0 + $0x138] sm:$0xff]
  %v54 = vld [vmem:[%s0 + $0x140] sm:$0xff]
  %v55 = vld [vmem:[%s0 + $0x148] sm:$0xff]
  %v56 = vld [vmem:[%s0 + $0x150] sm:$0xff]
  %v57 = vld [vmem:[%s0 + $0x158] sm:$0xff]
  %v58 = vld [vmem:[%s0 + $0x160] sm:$0xff]
  %v59 = vld [vmem:[%s0 + $0x168] sm:$0xff]
  %v60 = vld [vmem:[%s0 + $0x170] sm:$0xff]
  %v61 = vld [vmem:[%s0 + $0x178] sm:$0xff]
  %v62 = vld [vmem:[%s0 + $0x180] sm:$0xff]
  %v63 = vld [vmem:[%s0 + $0x188] sm:$0xff]
  %v64 = vld [vmem:[%s0 + $0x190] sm:$0xff]
  %v65 = vld [vmem:[%s0 + $0x198] sm:$0xff]
  %v66 = vld [vmem:[%s0 + $0x1a0] sm:$0xff]
  %v67 = vld [vmem:[%s0 + $0x1a8] sm:$0xff]
  %v68 = vld [vmem:[%s0 + $0x1b0] sm:$0xff]
  %v69 = vld [vmem:[%s0 + $0x1b8] sm:$0xff]
  %v70 = vld [vmem:[%s0 + $0x1c0] sm:$0xff]
  %v71 = vld [vmem:[%s0 + $0x1c8] sm:$0xff]
  %v72 = vld [vmem:[%s0 + $0x1d0] sm:$0xff]
  %v73 = vld [vmem:[%s0 + $0x1d8] sm:$0xff]
  %v74 = vld [vmem:[%s0 + $0x1e0] sm:$0xff]
  %v75 = vld [vmem:[%s0 + $0x1e8] sm:$0xff]
  %v76 = vld [vmem:[%s0 + $0x1f0] sm:$0xff]
  %v77 = vld [vmem:[%s0 + $0x1f8] sm:$0xff]
  %v78 = vld [vmem:[%s1] sm:$0x1]
  %v80 = vlaneseq
  %v81 = vshrl.u32 %v80, 7
  %v82 = vsub.s32 0, %v81
  %v83 = vrot.slane %v78, %v82
  %v85 = vmul.f32 %v14, %v83
  %v86 = vmul.f32 %v15, %v83
  %v87 = vmul.f32 %v16, %v83
  %v88 = vmul.f32 %v17, %v83
  %v89 = vmul.f32 %v18, %v83
  %v90 = vmul.f32 %v19, %v83
  %v91 = vmul.f32 %v20, %v83
  %v92 = vmul.f32 %v21, %v83
  %v93 = vmul.f32 %v22, %v83
  %v94 = vmul.f32 %v23, %v83
  %v95 = vmul.f32 %v24, %v83
  %v96 = vmul.f32 %v25, %v83
  %v97 = vmul.f32 %v26, %v83
  %v98 = vmul.f32 %v27, %v83
  %v99 = vmul.f32 %v28, %v83
  %v100 = vmul.f32 %v29, %v83
  %v101 = vmul.f32 %v30, %v83
  %v102 = vmul.f32 %v31, %v83
  %v103 = vmul.f32 %v32, %v83
  %v104 = vmul.f32 %v33, %v83
  %v105 = vmul.f32 %v34, %v83
  %v106 = vmul.f32 %v35, %v83
  %v107 = vmul.f32 %v36, %v83
  %v108 = vmul.f32 %v37, %v83
  %v109 = vmul.f32 %v38, %v83
  %v110 = vmul.f32 %v39, %v83
  %v111 = vmul.f32 %v40, %v83
  %v112 = vmul.f32 %v41, %v83
  %v113 = vmul.f32 %v42, %v83
  %v114 = vmul.f32 %v43, %v83
  %v115 = vmul.f32 %v44, %v83
  %v116 = vmul.f32 %v45, %v83
  %v117 = vmul.f32 %v46, %v83
  %v118 = vmul.f32 %v47, %v83
  %v119 = vmul.f32 %v48, %v83
  %v120 = vmul.f32 %v49, %v83
  %v121 = vmul.f32 %v50, %v83
  %v122 = vmul.f32 %v51, %v83
  %v123 = vmul.f32 %v52, %v83
  %v124 = vmul.f32 %v53, %v83
  %v125 = vmul.f32 %v54, %v83
  %v126 = vmul.f32 %v55, %v83
  %v127 = vmul.f32 %v56, %v83
  %v128 = vmul.f32 %v57, %v83
  %v129 = vmul.f32 %v58, %v83
  %v130 = vmul.f32 %v59, %v83
  %v131 = vmul.f32 %v60, %v83
  %v132 = vmul.f32 %v61, %v83
  %v133 = vmul.f32 %v62, %v83
  %v134 = vmul.f32 %v63, %v83
  %v135 = vmul.f32 %v64, %v83
  %v136 = vmul.f32 %v65, %v83
  %v137 = vmul.f32 %v66, %v83
  %v138 = vmul.f32 %v67, %v83
  %v139 = vmul.f32 %v68, %v83
  %v140 = vmul.f32 %v69, %v83
  %v141 = vmul.f32 %v70, %v83
  %v142 = vmul.f32 %v71, %v83
  %v143 = vmul.f32 %v72, %v83
  %v144 = vmul.f32 %v73, %v83
  %v145 = vmul.f32 %v74, %v83
  %v146 = vmul.f32 %v75, %v83
  %v147 = vmul.f32 %v76, %v83
  %v148 = vmul.f32 %v77, %v83
  %v149 = vld [vmem:[%s2] sm:$0x1]
  %v151 = vlaneseq
  %v152 = vshrl.u32 %v151, 7
  %v153 = vsub.s32 0, %v152
  %v154 = vrot.slane %v149, %v153
  %v156 = vadd.f32 %v85, %v154
  %v157 = vadd.f32 %v86, %v154
  %v158 = vadd.f32 %v87, %v154
  %v159 = vadd.f32 %v88, %v154
  %v160 = vadd.f32 %v89, %v154
  %v161 = vadd.f32 %v90, %v154
  %v162 = vadd.f32 %v91, %v154
  %v163 = vadd.f32 %v92, %v154
  %v164 = vadd.f32 %v93, %v154
  %v165 = vadd.f32 %v94, %v154
  %v166 = vadd.f32 %v95, %v154
  %v167 = vadd.f32 %v96, %v154
  %v168 = vadd.f32 %v97, %v154
  %v169 = vadd.f32 %v98, %v154
  %v170 = vadd.f32 %v99, %v154
  %v171 = vadd.f32 %v100, %v154
  %v172 = vadd.f32 %v101, %v154
  %v173 = vadd.f32 %v102, %v154
  %v174 = vadd.f32 %v103, %v154
  %v175 = vadd.f32 %v104, %v154
  %v176 = vadd.f32 %v105, %v154
  %v177 = vadd.f32 %v106, %v154
  %v178 = vadd.f32 %v107, %v154
  %v179 = vadd.f32 %v108, %v154
  %v180 = vadd.f32 %v109, %v154
  %v181 = vadd.f32 %v110, %v154
  %v182 = vadd.f32 %v111, %v154
  %v183 = vadd.f32 %v112, %v154
  %v184 = vadd.f32 %v113, %v154
  %v185 = vadd.f32 %v114, %v154
  %v186 = vadd.f32 %v115, %v154
  %v187 = vadd.f32 %v116, %v154
  %v188 = vadd.f32 %v117, %v154
  %v189 = vadd.f32 %v118, %v154
  %v190 = vadd.f32 %v119, %v154
  %v191 = vadd.f32 %v120, %v154
  %v192 = vadd.f32 %v121, %v154
  %v193 = vadd.f32 %v122, %v154
  %v194 = vadd.f32 %v123, %v154
  %v195 = vadd.f32 %v124, %v154
  %v196 = vadd.f32 %v125, %v154
  %v197 = vadd.f32 %v126, %v154
  %v198 = vadd.f32 %v127, %v154
  %v199 = vadd.f32 %v128, %v154
  %v200 = vadd.f32 %v129, %v154
  %v201 = vadd.f32 %v130, %v154
  %v202 = vadd.f32 %v131, %v154
  %v203 = vadd.f32 %v132, %v154
  %v204 = vadd.f32 %v133, %v154
  %v205 = vadd.f32 %v134, %v154
  %v206 = vadd.f32 %v135, %v154
  %v207 = vadd.f32 %v136, %v154
  %v208 = vadd.f32 %v137, %v154
  %v209 = vadd.f32 %v138, %v154
  %v210 = vadd.f32 %v139, %v154
  %v211 = vadd.f32 %v140, %v154
  %v212 = vadd.f32 %v141, %v154
  %v213 = vadd.f32 %v142, %v154
  %v214 = vadd.f32 %v143, %v154
  %v215 = vadd.f32 %v144, %v154
  %v216 = vadd.f32 %v145, %v154
  %v217 = vadd.f32 %v146, %v154
  %v218 = vadd.f32 %v147, %v154
  %v219 = vadd.f32 %v148, %v154
  %v220 = vxor.u32 %v156, 2147483648
  %v221 = vxor.u32 %v157, 2147483648
  %v222 = vxor.u32 %v158, 2147483648
  %v223 = vxor.u32 %v159, 2147483648
  %v224 = vxor.u32 %v160, 2147483648
  %v225 = vxor.u32 %v161, 2147483648
  %v226 = vxor.u32 %v162, 2147483648
  %v227 = vxor.u32 %v163, 2147483648
  %v228 = vxor.u32 %v164, 2147483648
  %v229 = vxor.u32 %v165, 2147483648
  %v230 = vxor.u32 %v166, 2147483648
  %v231 = vxor.u32 %v167, 2147483648
  %v232 = vxor.u32 %v168, 2147483648
  %v233 = vxor.u32 %v169, 2147483648
  %v234 = vxor.u32 %v170, 2147483648
  %v235 = vxor.u32 %v171, 2147483648
  %v236 = vxor.u32 %v172, 2147483648
  %v237 = vxor.u32 %v173, 2147483648
  %v238 = vxor.u32 %v174, 2147483648
  %v239 = vxor.u32 %v175, 2147483648
  %v240 = vxor.u32 %v176, 2147483648
  %v241 = vxor.u32 %v177, 2147483648
  %v242 = vxor.u32 %v178, 2147483648
  %v243 = vxor.u32 %v179, 2147483648
  %v244 = vxor.u32 %v180, 2147483648
  %v245 = vxor.u32 %v181, 2147483648
  %v246 = vxor.u32 %v182, 2147483648
  %v247 = vxor.u32 %v183, 2147483648
  %v248 = vxor.u32 %v184, 2147483648
  %v249 = vxor.u32 %v185, 2147483648
  %v250 = vxor.u32 %v186, 2147483648
  %v251 = vxor.u32 %v187, 2147483648
  %v252 = vxor.u32 %v188, 2147483648
  %v253 = vxor.u32 %v189, 2147483648
  %v254 = vxor.u32 %v190, 2147483648
  %v255 = vxor.u32 %v191, 2147483648
  %v256 = vxor.u32 %v192, 2147483648
  %v257 = vxor.u32 %v193, 2147483648
  %v258 = vxor.u32 %v194, 2147483648
  %v259 = vxor.u32 %v195, 2147483648
  %v260 = vxor.u32 %v196, 2147483648
  %v261 = vxor.u32 %v197, 2147483648
  %v262 = vxor.u32 %v198, 2147483648
  %v263 = vxor.u32 %v199, 2147483648
  %v264 = vxor.u32 %v200, 2147483648
  %v265 = vxor.u32 %v201, 2147483648
  %v266 = vxor.u32 %v202, 2147483648
  %v267 = vxor.u32 %v203, 2147483648
  %v268 = vxor.u32 %v204, 2147483648
  %v269 = vxor.u32 %v205, 2147483648
  %v270 = vxor.u32 %v206, 2147483648
  %v271 = vxor.u32 %v207, 2147483648
  %v272 = vxor.u32 %v208, 2147483648
  %v273 = vxor.u32 %v209, 2147483648
  %v274 = vxor.u32 %v210, 2147483648
  %v275 = vxor.u32 %v211, 2147483648
  %v276 = vxor.u32 %v212, 2147483648
  %v277 = vxor.u32 %v213, 2147483648
  %v278 = vxor.u32 %v214, 2147483648
  %v279 = vxor.u32 %v215, 2147483648
  %v280 = vxor.u32 %v216, 2147483648
  %v281 = vxor.u32 %v217, 2147483648
  %v282 = vxor.u32 %v218, 2147483648
  %v283 = vxor.u32 %v219, 2147483648
  %v284 = vmul.f32 %v220, 1.442695
  %v285 = vpow.pop %v284
  %v286 = vmul.f32 %v221, 1.442695
  %v287 = vpow.pop %v286
  %v288 = vmul.f32 %v222, 1.442695
  %v289 = vpow.pop %v288
  %v290 = vmul.f32 %v223, 1.442695
  %v291 = vpow.pop %v290
  %v292 = vmul.f32 %v224, 1.442695
  %v293 = vpow.pop %v292
  %v294 = vmul.f32 %v225, 1.442695
  %v295 = vpow.pop %v294
  %v296 = vmul.f32 %v226, 1.442695
  %v297 = vpow.pop %v296
  %v298 = vmul.f32 %v227, 1.442695
  %v299 = vpow.pop %v298
  %v300 = vmul.f32 %v228, 1.442695
  %v301 = vpow.pop %v300
  %v302 = vmul.f32 %v229, 1.442695
  %v303 = vpow.pop %v302
  %v304 = vmul.f32 %v230, 1.442695
  %v305 = vpow.pop %v304
  %v306 = vmul.f32 %v231, 1.442695
  %v307 = vpow.pop %v306
  %v308 = vmul.f32 %v232, 1.442695
  %v309 = vpow.pop %v308
  %v310 = vmul.f32 %v233, 1.442695
  %v311 = vpow.pop %v310
  %v312 = vmul.f32 %v234, 1.442695
  %v313 = vpow.pop %v312
  %v314 = vmul.f32 %v235, 1.442695
  %v315 = vpow.pop %v314
  %v316 = vmul.f32 %v236, 1.442695
  %v317 = vpow.pop %v316
  %v318 = vmul.f32 %v237, 1.442695
  %v319 = vpow.pop %v318
  %v320 = vmul.f32 %v238, 1.442695
  %v321 = vpow.pop %v320
  %v322 = vmul.f32 %v239, 1.442695
  %v323 = vpow.pop %v322
  %v324 = vmul.f32 %v240, 1.442695
  %v325 = vpow.pop %v324
  %v326 = vmul.f32 %v241, 1.442695
  %v327 = vpow.pop %v326
  %v328 = vmul.f32 %v242, 1.442695
  %v329 = vpow.pop %v328
  %v330 = vmul.f32 %v243, 1.442695
  %v331 = vpow.pop %v330
  %v332 = vmul.f32 %v244, 1.442695
  %v333 = vpow.pop %v332
  %v334 = vmul.f32 %v245, 1.442695
  %v335 = vpow.pop %v334
  %v336 = vmul.f32 %v246, 1.442695
  %v337 = vpow.pop %v336
  %v338 = vmul.f32 %v247, 1.442695
  %v339 = vpow.pop %v338
  %v340 = vmul.f32 %v248, 1.442695
  %v341 = vpow.pop %v340
  %v342 = vmul.f32 %v249, 1.442695
  %v343 = vpow.pop %v342
  %v344 = vmul.f32 %v250, 1.442695
  %v345 = vpow.pop %v344
  %v346 = vmul.f32 %v251, 1.442695
  %v347 = vpow.pop %v346
  %v348 = vmul.f32 %v252, 1.442695
  %v349 = vpow.pop %v348
  %v350 = vmul.f32 %v253, 1.442695
  %v351 = vpow.pop %v350
  %v352 = vmul.f32 %v254, 1.442695
  %v353 = vpow.pop %v352
  %v354 = vmul.f32 %v255, 1.442695
  %v355 = vpow.pop %v354
  %v356 = vmul.f32 %v256, 1.442695
  %v357 = vpow.pop %v356
  %v358 = vmul.f32 %v257, 1.442695
  %v359 = vpow.pop %v358
  %v360 = vmul.f32 %v258, 1.442695
  %v361 = vpow.pop %v360
  %v362 = vmul.f32 %v259, 1.442695
  %v363 = vpow.pop %v362
  %v364 = vmul.f32 %v260, 1.442695
  %v365 = vpow.pop %v364
  %v366 = vmul.f32 %v261, 1.442695
  %v367 = vpow.pop %v366
  %v368 = vmul.f32 %v262, 1.442695
  %v369 = vpow.pop %v368
  %v370 = vmul.f32 %v263, 1.442695
  %v371 = vpow.pop %v370
  %v372 = vmul.f32 %v264, 1.442695
  %v373 = vpow.pop %v372
  %v374 = vmul.f32 %v265, 1.442695
  %v375 = vpow.pop %v374
  %v376 = vmul.f32 %v266, 1.442695
  %v377 = vpow.pop %v376
  %v378 = vmul.f32 %v267, 1.442695
  %v379 = vpow.pop %v378
  %v380 = vmul.f32 %v268, 1.442695
  %v381 = vpow.pop %v380
  %v382 = vmul.f32 %v269, 1.442695
  %v383 = vpow.pop %v382
  %v384 = vmul.f32 %v270, 1.442695
  %v385 = vpow.pop %v384
  %v386 = vmul.f32 %v271, 1.442695
  %v387 = vpow.pop %v386
  %v388 = vmul.f32 %v272, 1.442695
  %v389 = vpow.pop %v388
  %v390 = vmul.f32 %v273, 1.442695
  %v391 = vpow.pop %v390
  %v392 = vmul.f32 %v274, 1.442695
  %v393 = vpow.pop %v392
  %v394 = vmul.f32 %v275, 1.442695
  %v395 = vpow.pop %v394
  %v396 = vmul.f32 %v276, 1.442695
  %v397 = vpow.pop %v396
  %v398 = vmul.f32 %v277, 1.442695
  %v399 = vpow.pop %v398
  %v400 = vmul.f32 %v278, 1.442695
  %v401 = vpow.pop %v400
  %v402 = vmul.f32 %v279, 1.442695
  %v403 = vpow.pop %v402
  %v404 = vmul.f32 %v280, 1.442695
  %v405 = vpow.pop %v404
  %v406 = vmul.f32 %v281, 1.442695
  %v407 = vpow.pop %v406
  %v408 = vmul.f32 %v282, 1.442695
  %v409 = vpow.pop %v408
  %v410 = vmul.f32 %v283, 1.442695
  %v411 = vpow.pop %v410
  %v412 = vadd.f32 %v285, 1.0
  %v413 = vadd.f32 %v287, 1.0
  %v414 = vadd.f32 %v289, 1.0
  %v415 = vadd.f32 %v291, 1.0
  %v416 = vadd.f32 %v293, 1.0
  %v417 = vadd.f32 %v295, 1.0
  %v418 = vadd.f32 %v297, 1.0
  %v419 = vadd.f32 %v299, 1.0
  %v420 = vadd.f32 %v301, 1.0
  %v421 = vadd.f32 %v303, 1.0
  %v422 = vadd.f32 %v305, 1.0
  %v423 = vadd.f32 %v307, 1.0
  %v424 = vadd.f32 %v309, 1.0
  %v425 = vadd.f32 %v311, 1.0
  %v426 = vadd.f32 %v313, 1.0
  %v427 = vadd.f32 %v315, 1.0
  %v428 = vadd.f32 %v317, 1.0
  %v429 = vadd.f32 %v319, 1.0
  %v430 = vadd.f32 %v321, 1.0
  %v431 = vadd.f32 %v323, 1.0
  %v432 = vadd.f32 %v325, 1.0
  %v433 = vadd.f32 %v327, 1.0
  %v434 = vadd.f32 %v329, 1.0
  %v435 = vadd.f32 %v331, 1.0
  %v436 = vadd.f32 %v333, 1.0
  %v437 = vadd.f32 %v335, 1.0
  %v438 = vadd.f32 %v337, 1.0
  %v439 = vadd.f32 %v339, 1.0
  %v440 = vadd.f32 %v341, 1.0
  %v441 = vadd.f32 %v343, 1.0
  %v442 = vadd.f32 %v345, 1.0
  %v443 = vadd.f32 %v347, 1.0
  %v444 = vadd.f32 %v349, 1.0
  %v445 = vadd.f32 %v351, 1.0
  %v446 = vadd.f32 %v353, 1.0
  %v447 = vadd.f32 %v355, 1.0
  %v448 = vadd.f32 %v357, 1.0
  %v449 = vadd.f32 %v359, 1.0
  %v450 = vadd.f32 %v361, 1.0
  %v451 = vadd.f32 %v363, 1.0
  %v452 = vadd.f32 %v365, 1.0
  %v453 = vadd.f32 %v367, 1.0
  %v454 = vadd.f32 %v369, 1.0
  %v455 = vadd.f32 %v371, 1.0
  %v456 = vadd.f32 %v373, 1.0
  %v457 = vadd.f32 %v375, 1.0
  %v458 = vadd.f32 %v377, 1.0
  %v459 = vadd.f32 %v379, 1.0
  %v460 = vadd.f32 %v381, 1.0
  %v461 = vadd.f32 %v383, 1.0
  %v462 = vadd.f32 %v385, 1.0
  %v463 = vadd.f32 %v387, 1.0
  %v464 = vadd.f32 %v389, 1.0
  %v465 = vadd.f32 %v391, 1.0
  %v466 = vadd.f32 %v393, 1.0
  %v467 = vadd.f32 %v395, 1.0
  %v468 = vadd.f32 %v397, 1.0
  %v469 = vadd.f32 %v399, 1.0
  %v470 = vadd.f32 %v401, 1.0
  %v471 = vadd.f32 %v403, 1.0
  %v472 = vadd.f32 %v405, 1.0
  %v473 = vadd.f32 %v407, 1.0
  %v474 = vadd.f32 %v409, 1.0
  %v475 = vadd.f32 %v411, 1.0
  %v476 = vrcp.pop %v412
  %v477 = vmul.f32 1.0, %v476
  %v478 = vrcp.pop %v413
  %v479 = vmul.f32 1.0, %v478
  %v480 = vrcp.pop %v414
  %v481 = vmul.f32 1.0, %v480
  %v482 = vrcp.pop %v415
  %v483 = vmul.f32 1.0, %v482
  %v484 = vrcp.pop %v416
  %v485 = vmul.f32 1.0, %v484
  %v486 = vrcp.pop %v417
  %v487 = vmul.f32 1.0, %v486
  %v488 = vrcp.pop %v418
  %v489 = vmul.f32 1.0, %v488
  %v490 = vrcp.pop %v419
  %v491 = vmul.f32 1.0, %v490
  %v492 = vrcp.pop %v420
  %v493 = vmul.f32 1.0, %v492
  %v494 = vrcp.pop %v421
  %v495 = vmul.f32 1.0, %v494
  %v496 = vrcp.pop %v422
  %v497 = vmul.f32 1.0, %v496
  %v498 = vrcp.pop %v423
  %v499 = vmul.f32 1.0, %v498
  %v500 = vrcp.pop %v424
  %v501 = vmul.f32 1.0, %v500
  %v502 = vrcp.pop %v425
  %v503 = vmul.f32 1.0, %v502
  %v504 = vrcp.pop %v426
  %v505 = vmul.f32 1.0, %v504
  %v506 = vrcp.pop %v427
  %v507 = vmul.f32 1.0, %v506
  %v508 = vrcp.pop %v428
  %v509 = vmul.f32 1.0, %v508
  %v510 = vrcp.pop %v429
  %v511 = vmul.f32 1.0, %v510
  %v512 = vrcp.pop %v430
  %v513 = vmul.f32 1.0, %v512
  %v514 = vrcp.pop %v431
  %v515 = vmul.f32 1.0, %v514
  %v516 = vrcp.pop %v432
  %v517 = vmul.f32 1.0, %v516
  %v518 = vrcp.pop %v433
  %v519 = vmul.f32 1.0, %v518
  %v520 = vrcp.pop %v434
  %v521 = vmul.f32 1.0, %v520
  %v522 = vrcp.pop %v435
  %v523 = vmul.f32 1.0, %v522
  %v524 = vrcp.pop %v436
  %v525 = vmul.f32 1.0, %v524
  %v526 = vrcp.pop %v437
  %v527 = vmul.f32 1.0, %v526
  %v528 = vrcp.pop %v438
  %v529 = vmul.f32 1.0, %v528
  %v530 = vrcp.pop %v439
  %v531 = vmul.f32 1.0, %v530
  %v532 = vrcp.pop %v440
  %v533 = vmul.f32 1.0, %v532
  %v534 = vrcp.pop %v441
  %v535 = vmul.f32 1.0, %v534
  %v536 = vrcp.pop %v442
  %v537 = vmul.f32 1.0, %v536
  %v538 = vrcp.pop %v443
  %v539 = vmul.f32 1.0, %v538
  %v540 = vrcp.pop %v444
  %v541 = vmul.f32 1.0, %v540
  %v542 = vrcp.pop %v445
  %v543 = vmul.f32 1.0, %v542
  %v544 = vrcp.pop %v446
  %v545 = vmul.f32 1.0, %v544
  %v546 = vrcp.pop %v447
  %v547 = vmul.f32 1.0, %v546
  %v548 = vrcp.pop %v448
  %v549 = vmul.f32 1.0, %v548
  %v550 = vrcp.pop %v449
  %v551 = vmul.f32 1.0, %v550
  %v552 = vrcp.pop %v450
  %v553 = vmul.f32 1.0, %v552
  %v554 = vrcp.pop %v451
  %v555 = vmul.f32 1.0, %v554
  %v556 = vrcp.pop %v452
  %v557 = vmul.f32 1.0, %v556
  %v558 = vrcp.pop %v453
  %v559 = vmul.f32 1.0, %v558
  %v560 = vrcp.pop %v454
  %v561 = vmul.f32 1.0, %v560
  %v562 = vrcp.pop %v455
  %v563 = vmul.f32 1.0, %v562
  %v564 = vrcp.pop %v456
  %v565 = vmul.f32 1.0, %v564
  %v566 = vrcp.pop %v457
  %v567 = vmul.f32 1.0, %v566
  %v568 = vrcp.pop %v458
  %v569 = vmul.f32 1.0, %v568
  %v570 = vrcp.pop %v459
  %v571 = vmul.f32 1.0, %v570
  %v572 = vrcp.pop %v460
  %v573 = vmul.f32 1.0, %v572
  %v574 = vrcp.pop %v461
  %v575 = vmul.f32 1.0, %v574
  %v576 = vrcp.pop %v462
  %v577 = vmul.f32 1.0, %v576
  %v578 = vrcp.pop %v463
  %v579 = vmul.f32 1.0, %v578
  %v580 = vrcp.pop %v464
  %v581 = vmul.f32 1.0, %v580
  %v582 = vrcp.pop %v465
  %v583 = vmul.f32 1.0, %v582
  %v584 = vrcp.pop %v466
  %v585 = vmul.f32 1.0, %v584
  %v586 = vrcp.pop %v467
  %v587 = vmul.f32 1.0, %v586
  %v588 = vrcp.pop %v468
  %v589 = vmul.f32 1.0, %v588
  %v590 = vrcp.pop %v469
  %v591 = vmul.f32 1.0, %v590
  %v592 = vrcp.pop %v470
  %v593 = vmul.f32 1.0, %v592
  %v594 = vrcp.pop %v471
  %v595 = vmul.f32 1.0, %v594
  %v596 = vrcp.pop %v472
  %v597 = vmul.f32 1.0, %v596
  %v598 = vrcp.pop %v473
  %v599 = vmul.f32 1.0, %v598
  %v600 = vrcp.pop %v474
  %v601 = vmul.f32 1.0, %v600
  %v602 = vrcp.pop %v475
  %v603 = vmul.f32 1.0, %v602
  %604 = vst [vmem:[%s3] sm:$0xff] %v477
  %605 = vst [vmem:[%s3 + $0x8] sm:$0xff] %v479
  %606 = vst [vmem:[%s3 + $0x10] sm:$0xff] %v481
  %607 = vst [vmem:[%s3 + $0x18] sm:$0xff] %v483
  %608 = vst [vmem:[%s3 + $0x20] sm:$0xff] %v485
  %609 = vst [vmem:[%s3 + $0x28] sm:$0xff] %v487
  %610 = vst [vmem:[%s3 + $0x30] sm:$0xff] %v489
  %611 = vst [vmem:[%s3 + $0x38] sm:$0xff] %v491
  %612 = vst [vmem:[%s3 + $0x40] sm:$0xff] %v493
  %613 = vst [vmem:[%s3 + $0x48] sm:$0xff] %v495
  %614 = vst [vmem:[%s3 + $0x50] sm:$0xff] %v497
  %615 = vst [vmem:[%s3 + $0x58] sm:$0xff] %v499
  %616 = vst [vmem:[%s3 + $0x60] sm:$0xff] %v501
  %617 = vst [vmem:[%s3 + $0x68] sm:$0xff] %v503
  %618 = vst [vmem:[%s3 + $0x70] sm:$0xff] %v505
  %619 = vst [vmem:[%s3 + $0x78] sm:$0xff] %v507
  %620 = vst [vmem:[%s3 + $0x80] sm:$0xff] %v509
  %621 = vst [vmem:[%s3 + $0x88] sm:$0xff] %v511
  %622 = vst [vmem:[%s3 + $0x90] sm:$0xff] %v513
  %623 = vst [vmem:[%s3 + $0x98] sm:$0xff] %v515
  %624 = vst [vmem:[%s3 + $0xa0] sm:$0xff] %v517
  %625 = vst [vmem:[%s3 + $0xa8] sm:$0xff] %v519
  %626 = vst [vmem:[%s3 + $0xb0] sm:$0xff] %v521
  %627 = vst [vmem:[%s3 + $0xb8] sm:$0xff] %v523
  %628 = vst [vmem:[%s3 + $0xc0] sm:$0xff] %v525
  %629 = vst [vmem:[%s3 + $0xc8] sm:$0xff] %v527
  %630 = vst [vmem:[%s3 + $0xd0] sm:$0xff] %v529
  %631 = vst [vmem:[%s3 + $0xd8] sm:$0xff] %v531
  %632 = vst [vmem:[%s3 + $0xe0] sm:$0xff] %v533
  %633 = vst [vmem:[%s3 + $0xe8] sm:$0xff] %v535
  %634 = vst [vmem:[%s3 + $0xf0] sm:$0xff] %v537
  %635 = vst [vmem:[%s3 + $0xf8] sm:$0xff] %v539
  %636 = vst [vmem:[%s3 + $0x100] sm:$0xff] %v541
  %637 = vst [vmem:[%s3 + $0x108] sm:$0xff] %v543
  %638 = vst [vmem:[%s3 + $0x110] sm:$0xff] %v545
  %639 = vst [vmem:[%s3 + $0x118] sm:$0xff] %v547
  %640 = vst [vmem:[%s3 + $0x120] sm:$0xff] %v549
  %641 = vst [vmem:[%s3 + $0x128] sm:$0xff] %v551
  %642 = vst [vmem:[%s3 + $0x130] sm:$0xff] %v553
  %643 = vst [vmem:[%s3 + $0x138] sm:$0xff] %v555
  %644 = vst [vmem:[%s3 + $0x140] sm:$0xff] %v557
  %645 = vst [vmem:[%s3 + $0x148] sm:$0xff] %v559
  %646 = vst [vmem:[%s3 + $0x150] sm:$0xff] %v561
  %647 = vst [vmem:[%s3 + $0x158] sm:$0xff] %v563
  %648 = vst [vmem:[%s3 + $0x160] sm:$0xff] %v565
  %649 = vst [vmem:[%s3 + $0x168] sm:$0xff] %v567
  %650 = vst [vmem:[%s3 + $0x170] sm:$0xff] %v569
  %651 = vst [vmem:[%s3 + $0x178] sm:$0xff] %v571
  %652 = vst [vmem:[%s3 + $0x180] sm:$0xff] %v573
  %653 = vst [vmem:[%s3 + $0x188] sm:$0xff] %v575
  %654 = vst [vmem:[%s3 + $0x190] sm:$0xff] %v577
  %655 = vst [vmem:[%s3 + $0x198] sm:$0xff] %v579
  %656 = vst [vmem:[%s3 + $0x1a0] sm:$0xff] %v581
  %657 = vst [vmem:[%s3 + $0x1a8] sm:$0xff] %v583
  %658 = vst [vmem:[%s3 + $0x1b0] sm:$0xff] %v585
  %659 = vst [vmem:[%s3 + $0x1b8] sm:$0xff] %v587
  %660 = vst [vmem:[%s3 + $0x1c0] sm:$0xff] %v589
  %661 = vst [vmem:[%s3 + $0x1c8] sm:$0xff] %v591
  %662 = vst [vmem:[%s3 + $0x1d0] sm:$0xff] %v593
  %663 = vst [vmem:[%s3 + $0x1d8] sm:$0xff] %v595
  %664 = vst [vmem:[%s3 + $0x1e0] sm:$0xff] %v597
  %665 = vst [vmem:[%s3 + $0x1e8] sm:$0xff] %v599
  %666 = vst [vmem:[%s3 + $0x1f0] sm:$0xff] %v601
  %667 = vst [vmem:[%s3 + $0x1f8] sm:$0xff] %v603
  // Predicated region
  $region14: #{vae_forward.27} parent=0 // pred_check
    _
  $region15: #{vae_forward.27} parent=0 // pred_check_branch
    %669 = sbr.rel (0) target = $region17
  $region16: #{vae_forward.27} parent=0 // pred_region
    _
  $region17: #{vae_forward.27} parent=0 // pred_fallthru
    _
  // Predicated region
  $region18: #{vae_forward.27} parent=0 // pred_check
    _
  $region19: #{vae_forward.27} parent=0 // pred_check_branch
    %671 = sbr.rel (0) target = $region21
  $region20: #{vae_forward.27} parent=0 // pred_region
    _
  $region21: #{vae_forward.27} parent=0 // pred_fallthru
    _

// kernel: vae_forward.26
$region0: #{vae_forward.26}
  #allocation0 [shape = 'u32[]', space=smem, size = 0x4, offset = 0x4, fixed_abs, tag = 'smem constant byte address 0x4 - core index']
  #allocation1 [shape = 'u32[144,128]{1,0:T(1,128)}', space=vmem, size = 0x12000, scoped, tag = 'internal scratch']
  %s0 = inlined_call_operand.vmem [shape: bf16[512,128], index: 0, kind: input, shape index: {}]
  %s1 = inlined_call_operand.vmem [shape: bf16[128,128], index: 1, kind: input, shape index: {}]
  %s2 = inlined_call_operand.vmem [shape: f32[1,128], index: 2, kind: input, shape index: {}]
  %s3 = inlined_call_operand.vmem [shape: f32[512,128], index: 3, kind: output, shape index: {0}]
  %s4 = inlined_call_operand.vmem [shape: f32[2,128], index: 4, kind: output, shape index: {1}]
  %5 = xla_tuple %s3, %s4
  %s6 = sld [smem:[#allocation0]]
  $region34: #{vae_forward.26} parent=0
    _
  %s8 = ssub.s32 1, %s6
  %s9 = scalar_select 0, %s8, %s6
  // Predicated region
  $region2: #{vae_forward.26} parent=0 // pred_check
    _
  $region3: #{vae_forward.26} parent=0 // pred_check_branch
    %11 = sbr.rel (0) target = $region5
  $region4: #{vae_forward.26} parent=0 // pred_region
    _
  $region5: #{vae_forward.26} parent=0 // pred_fallthru
    _
  // Predicated region
  $region6: #{vae_forward.26} parent=0 // pred_check
    _
  $region7: #{vae_forward.26} parent=0 // pred_check_branch
    %13 = sbr.rel (0) target = $region9
  $region8: #{vae_forward.26} parent=0 // pred_region
    _
  $region9: #{vae_forward.26} parent=0 // pred_fallthru
    _
  // Predicated region
  $region10: #{vae_forward.26} parent=0 // pred_check
    _
  $region11: #{vae_forward.26} parent=0 // pred_check_branch
    %15 = sbr.rel (0) target = $region13
  $region12: #{vae_forward.26} parent=0 // pred_region
    _
  $region13: #{vae_forward.26} parent=0 // pred_fallthru
    _
  %v17 = vld [vmem:[%s0] sm:$0xf]
  %v18 = vld [vmem:[%s0 + $0x4] sm:$0xf]
  %v19 = vld [vmem:[%s0 + $0x8] sm:$0xf]
  %v20 = vld [vmem:[%s0 + $0xc] sm:$0xf]
  %v21 = vld [vmem:[%s0 + $0x10] sm:$0xf]
  %v22 = vld [vmem:[%s0 + $0x14] sm:$0xf]
  %v23 = vld [vmem:[%s0 + $0x18] sm:$0xf]
  %v24 = vld [vmem:[%s0 + $0x1c] sm:$0xf]
  %v25 = vld [vmem:[%s0 + $0x20] sm:$0xf]
  %v26 = vld [vmem:[%s0 + $0x24] sm:$0xf]
  %v27 = vld [vmem:[%s0 + $0x28] sm:$0xf]
  %v28 = vld [vmem:[%s0 + $0x2c] sm:$0xf]
  %v29 = vld [vmem:[%s0 + $0x30] sm:$0xf]
  %v30 = vld [vmem:[%s0 + $0x34] sm:$0xf]
  %v31 = vld [vmem:[%s0 + $0x38] sm:$0xf]
  %v32 = vld [vmem:[%s0 + $0x3c] sm:$0xf]
  %v33 = vld [vmem:[%s0 + $0x40] sm:$0xf]
  %v34 = vld [vmem:[%s0 + $0x44] sm:$0xf]
  %v35 = vld [vmem:[%s0 + $0x48] sm:$0xf]
  %v36 = vld [vmem:[%s0 + $0x4c] sm:$0xf]
  %v37 = vld [vmem:[%s0 + $0x50] sm:$0xf]
  %v38 = vld [vmem:[%s0 + $0x54] sm:$0xf]
  %v39 = vld [vmem:[%s0 + $0x58] sm:$0xf]
  %v40 = vld [vmem:[%s0 + $0x5c] sm:$0xf]
  %v41 = vld [vmem:[%s0 + $0x60] sm:$0xf]
  %v42 = vld [vmem:[%s0 + $0x64] sm:$0xf]
  %v43 = vld [vmem:[%s0 + $0x68] sm:$0xf]
  %v44 = vld [vmem:[%s0 + $0x6c] sm:$0xf]
  %v45 = vld [vmem:[%s0 + $0x70] sm:$0xf]
  %v46 = vld [vmem:[%s0 + $0x74] sm:$0xf]
  %v47 = vld [vmem:[%s0 + $0x78] sm:$0xf]
  %v48 = vld [vmem:[%s0 + $0x7c] sm:$0xf]
  %v49 = vld [vmem:[%s0 + $0x80] sm:$0xf]
  %v50 = vld [vmem:[%s0 + $0x84] sm:$0xf]
  %v51 = vld [vmem:[%s0 + $0x88] sm:$0xf]
  %v52 = vld [vmem:[%s0 + $0x8c] sm:$0xf]
  %v53 = vld [vmem:[%s0 + $0x90] sm:$0xf]
  %v54 = vld [vmem:[%s0 + $0x94] sm:$0xf]
  %v55 = vld [vmem:[%s0 + $0x98] sm:$0xf]
  %v56 = vld [vmem:[%s0 + $0x9c] sm:$0xf]
  %v57 = vld [vmem:[%s0 + $0xa0] sm:$0xf]
  %v58 = vld [vmem:[%s0 + $0xa4] sm:$0xf]
  %v59 = vld [vmem:[%s0 + $0xa8] sm:$0xf]
  %v60 = vld [vmem:[%s0 + $0xac] sm:$0xf]
  %v61 = vld [vmem:[%s0 + $0xb0] sm:$0xf]
  %v62 = vld [vmem:[%s0 + $0xb4] sm:$0xf]
  %v63 = vld [vmem:[%s0 + $0xb8] sm:$0xf]
  %v64 = vld [vmem:[%s0 + $0xbc] sm:$0xf]
  %v65 = vld [vmem:[%s0 + $0xc0] sm:$0xf]
  %v66 = vld [vmem:[%s0 + $0xc4] sm:$0xf]
  %v67 = vld [vmem:[%s0 + $0xc8] sm:$0xf]
  %v68 = vld [vmem:[%s0 + $0xcc] sm:$0xf]
  %v69 = vld [vmem:[%s0 + $0xd0] sm:$0xf]
  %v70 = vld [vmem:[%s0 + $0xd4] sm:$0xf]
  %v71 = vld [vmem:[%s0 + $0xd8] sm:$0xf]
  %v72 = vld [vmem:[%s0 + $0xdc] sm:$0xf]
  %v73 = vld [vmem:[%s0 + $0xe0] sm:$0xf]
  %v74 = vld [vmem:[%s0 + $0xe4] sm:$0xf]
  %v75 = vld [vmem:[%s0 + $0xe8] sm:$0xf]
  %v76 = vld [vmem:[%s0 + $0xec] sm:$0xf]
  %v77 = vld [vmem:[%s0 + $0xf0] sm:$0xf]
  %v78 = vld [vmem:[%s0 + $0xf4] sm:$0xf]
  %v79 = vld [vmem:[%s0 + $0xf8] sm:$0xf]
  %v80 = vld [vmem:[%s0 + $0xfc] sm:$0xf]
  %v81 = vld [vmem:[%s1] sm:$0xf]
  %v82 = vld [vmem:[%s1 + $0x4] sm:$0xf]
  %v83 = vld [vmem:[%s1 + $0x8] sm:$0xf]
  %v84 = vld [vmem:[%s1 + $0xc] sm:$0xf]
  %v85 = vld [vmem:[%s1 + $0x10] sm:$0xf]
  %v86 = vld [vmem:[%s1 + $0x14] sm:$0xf]
  %v87 = vld [vmem:[%s1 + $0x18] sm:$0xf]
  %v88 = vld [vmem:[%s1 + $0x1c] sm:$0xf]
  %v89 = vld [vmem:[%s1 + $0x20] sm:$0xf]
  %v90 = vld [vmem:[%s1 + $0x24] sm:$0xf]
  %v91 = vld [vmem:[%s1 + $0x28] sm:$0xf]
  %v92 = vld [vmem:[%s1 + $0x2c] sm:$0xf]
  %v93 = vld [vmem:[%s1 + $0x30] sm:$0xf]
  %v94 = vld [vmem:[%s1 + $0x34] sm:$0xf]
  %v95 = vld [vmem:[%s1 + $0x38] sm:$0xf]
  %v96 = vld [vmem:[%s1 + $0x3c] sm:$0xf]
  %v97 = vld [vmem:[%s2] sm:$0x1]
  %v99 = vlaneseq
  %v100 = vshrl.u32 %v99, 7
  %v101 = vsub.s32 0, %v100
  %v102 = vrot.slane %v97, %v101
  %v168 = vunpack.c.l.b16 %v17
  %v169 = vunpack.c.l.b16 %v18
  %v170 = vunpack.c.l.b16 %v19
  %v171 = vunpack.c.l.b16 %v20
  %v172 = vunpack.c.l.b16 %v21
  %v173 = vunpack.c.l.b16 %v22
  %v174 = vunpack.c.l.b16 %v23
  %v175 = vunpack.c.l.b16 %v24
  %v176 = vunpack.c.l.b16 %v25
  %v177 = vunpack.c.l.b16 %v26
  %v178 = vunpack.c.l.b16 %v27
  %v179 = vunpack.c.l.b16 %v28
  %v180 = vunpack.c.l.b16 %v29
  %v181 = vunpack.c.l.b16 %v30
  %v182 = vunpack.c.l.b16 %v31
  %v183 = vunpack.c.l.b16 %v32
  %v184 = vunpack.c.l.b16 %v33
  %v185 = vunpack.c.l.b16 %v34
  %v186 = vunpack.c.l.b16 %v35
  %v187 = vunpack.c.l.b16 %v36
  %v188 = vunpack.c.l.b16 %v37
  %v189 = vunpack.c.l.b16 %v38
  %v190 = vunpack.c.l.b16 %v39
  %v191 = vunpack.c.l.b16 %v40
  %v192 = vunpack.c.l.b16 %v41
  %v193 = vunpack.c.l.b16 %v42
  %v194 = vunpack.c.l.b16 %v43
  %v195 = vunpack.c.l.b16 %v44
  %v196 = vunpack.c.l.b16 %v45
  %v197 = vunpack.c.l.b16 %v46
  %v198 = vunpack.c.l.b16 %v47
  %v199 = vunpack.c.l.b16 %v48
  %v200 = vunpack.c.l.b16 %v49
  %v201 = vunpack.c.l.b16 %v50
  %v202 = vunpack.c.l.b16 %v51
  %v203 = vunpack.c.l.b16 %v52
  %v204 = vunpack.c.l.b16 %v53
  %v205 = vunpack.c.l.b16 %v54
  %v206 = vunpack.c.l.b16 %v55
  %v207 = vunpack.c.l.b16 %v56
  %v208 = vunpack.c.l.b16 %v57
  %v209 = vunpack.c.l.b16 %v58
  %v210 = vunpack.c.l.b16 %v59
  %v211 = vunpack.c.l.b16 %v60
  %v212 = vunpack.c.l.b16 %v61
  %v213 = vunpack.c.l.b16 %v62
  %v214 = vunpack.c.l.b16 %v63
  %v215 = vunpack.c.l.b16 %v64
  %v216 = vunpack.c.l.b16 %v65
  %v217 = vunpack.c.l.b16 %v66
  %v218 = vunpack.c.l.b16 %v67
  %v219 = vunpack.c.l.b16 %v68
  %v220 = vunpack.c.l.b16 %v69
  %v221 = vunpack.c.l.b16 %v70
  %v222 = vunpack.c.l.b16 %v71
  %v223 = vunpack.c.l.b16 %v72
  %v224 = vunpack.c.l.b16 %v73
  %v225 = vunpack.c.l.b16 %v74
  %v226 = vunpack.c.l.b16 %v75
  %v227 = vunpack.c.l.b16 %v76
  %v228 = vunpack.c.l.b16 %v77
  %v229 = vunpack.c.l.b16 %v78
  %v230 = vunpack.c.l.b16 %v79
  %v231 = vunpack.c.l.b16 %v80
  %v232 = vpack.c.b16 %v169, %v168
  %v233 = vpack.c.b16 %v171, %v170
  %v234 = vpack.c.b16 %v173, %v172
  %v235 = vpack.c.b16 %v175, %v174
  %v236 = vpack.c.b16 %v177, %v176
  %v237 = vpack.c.b16 %v179, %v178
  %v238 = vpack.c.b16 %v181, %v180
  %v239 = vpack.c.b16 %v183, %v182
  %v240 = vpack.c.b16 %v185, %v184
  %v241 = vpack.c.b16 %v187, %v186
  %v242 = vpack.c.b16 %v189, %v188
  %v243 = vpack.c.b16 %v191, %v190
  %v244 = vpack.c.b16 %v193, %v192
  %v245 = vpack.c.b16 %v195, %v194
  %v246 = vpack.c.b16 %v197, %v196
  %v247 = vpack.c.b16 %v199, %v198
  %v248 = vpack.c.b16 %v201, %v200
  %v249 = vpack.c.b16 %v203, %v202
  %v250 = vpack.c.b16 %v205, %v204
  %v251 = vpack.c.b16 %v207, %v206
  %v252 = vpack.c.b16 %v209, %v208
  %v253 = vpack.c.b16 %v211, %v210
  %v254 = vpack.c.b16 %v213, %v212
  %v255 = vpack.c.b16 %v215, %v214
  %v256 = vpack.c.b16 %v217, %v216
  %v257 = vpack.c.b16 %v219, %v218
  %v258 = vpack.c.b16 %v221, %v220
  %v259 = vpack.c.b16 %v223, %v222
  %v260 = vpack.c.b16 %v225, %v224
  %v261 = vpack.c.b16 %v227, %v226
  %v262 = vpack.c.b16 %v229, %v228
  %v263 = vpack.c.b16 %v231, %v230
  %v312 = vunpack.c.l.b16 %v81
  %v313 = vunpack.c.l.b16 %v82
  %v314 = vunpack.c.l.b16 %v83
  %v315 = vunpack.c.l.b16 %v84
  %v316 = vunpack.c.l.b16 %v85
  %v317 = vunpack.c.l.b16 %v86
  %v318 = vunpack.c.l.b16 %v87
  %v319 = vunpack.c.l.b16 %v88
  %v320 = vunpack.c.l.b16 %v89
  %v321 = vunpack.c.l.b16 %v90
  %v322 = vunpack.c.l.b16 %v91
  %v323 = vunpack.c.l.b16 %v92
  %v324 = vunpack.c.l.b16 %v93
  %v325 = vunpack.c.l.b16 %v94
  %v326 = vunpack.c.l.b16 %v95
  %v327 = vunpack.c.l.b16 %v96
  %v328 = vpack.c.b16 %v313, %v312
  %v329 = vpack.c.b16 %v315, %v314
  %v330 = vpack.c.b16 %v317, %v316
  %v331 = vpack.c.b16 %v319, %v318
  %v332 = vpack.c.b16 %v321, %v320
  %v333 = vpack.c.b16 %v323, %v322
  %v334 = vpack.c.b16 %v325, %v324
  %v335 = vpack.c.b16 %v327, %v326
  %344 = vmatprep.subr.bf16.mxu0 0
  %345 = vmatpush1.bf16.msra.mxu0 %v328
  %346 = vmatprep.subr.bf16.mxu0 0
  %347 = vmatpush1.bf16.msra.mxu0 %v329
  %348 = vmatprep.subr.bf16.mxu0 0
  %349 = vmatpush1.bf16.msra.mxu0 %v330
  %350 = vmatprep.subr.bf16.mxu0 0
  %351 = vmatpush1.bf16.msra.mxu0 %v331
  %352 = vmatprep.subr.bf16.mxu0 0
  %353 = vmatpush1.bf16.msra.mxu0 %v332
  %354 = vmatprep.subr.bf16.mxu0 0
  %355 = vmatpush1.bf16.msra.mxu0 %v333
  %356 = vmatprep.subr.bf16.mxu0 0
  %357 = vmatpush1.bf16.msra.mxu0 %v334
  %358 = vmatprep.subr.bf16.mxu0 0
  %359 = vmatpush1.bf16.msra.mxu0 %v335
  %360 = vmatprep.subr.bf16.mxu0 0
  %361 = vmatpush1.bf16.msra.mxu0 0
  %362 = vmatprep.subr.bf16.mxu0 0
  %363 = vmatpush1.bf16.msra.mxu0 0
  %364 = vmatprep.subr.bf16.mxu0 0
  %365 = vmatpush1.bf16.msra.mxu0 0
  %366 = vmatprep.subr.bf16.mxu0 0
  %367 = vmatpush1.bf16.msra.mxu0 0
  %368 = vmatprep.subr.bf16.mxu0 0
  %369 = vmatpush1.bf16.msra.mxu0 0
  %370 = vmatprep.subr.bf16.mxu0 0
  %371 = vmatpush1.bf16.msra.mxu0 0
  %372 = vmatprep.subr.bf16.mxu0 0
  %373 = vmatpush1.bf16.msra.mxu0 0
  %374 = vmatprep.subr.bf16.mxu0 0
  %375 = vmatpush1.bf16.msra.mxu0 0
  %376 = vmatprep.mubr.bf16.mxu0 0
  %377 = vmatmul.mubr.bf16.gmra.mrb[0].mxu0 %v232
  %v378 = vpop.f32.mrb[0].mxu0
  %v379 = vadd.f32 %v102, %v378
  %v380 = vpop.f32.mrb[0].mxu0
  %v381 = vpop.f32.mrb[0].mxu0
  %v382 = vadd.f32 %v102, %v381
  %v383 = vpop.f32.mrb[0].mxu0
  %384 = vmatprep.mubr.bf16.mxu0 0
  %385 = vmatmul.mubr.bf16.gmra.mrb[0].mxu0 %v233
  %v386 = vpop.f32.mrb[0].mxu0
  %v387 = vadd.f32 %v102, %v386
  %v388 = vpop.f32.mrb[0].mxu0
  %v389 = vpop.f32.mrb[0].mxu0
  %v390 = vadd.f32 %v102, %v389
  %v391 = vpop.f32.mrb[0].mxu0
  %392 = vmatprep.mubr.bf16.mxu0 0
  %393 = vmatmul.mubr.bf16.gmra.mrb[0].mxu0 %v234
  %v394 = vpop.f32.mrb[0].mxu0
  %v395 = vadd.f32 %v102, %v394
  %v396 = vpop.f32.mrb[0].mxu0
  %v397 = vpop.f32.mrb[0].mxu0
  %v398 = vadd.f32 %v102, %v397
  %v399 = vpop.f32.mrb[0].mxu0
  %400 = vmatprep.mubr.bf16.mxu0 0
  %401 = vmatmul.mubr.bf16.gmra.mrb[0].mxu0 %v235
  %v402 = vpop.f32.mrb[0].mxu0
  %v403 = vadd.f32 %v102, %v402
  %v404 = vpop.f32.mrb[0].mxu0
  %v405 = vpop.f32.mrb[0].mxu0
  %v406 = vadd.f32 %v102, %v405
  %v407 = vpop.f32.mrb[0].mxu0
  %408 = vmatprep.mubr.bf16.mxu0 0
  %409 = vmatmul.mubr.bf16.gmra.mrb[0].mxu0 %v236
  %v410 = vpop.f32.mrb[0].mxu0
  %v411 = vadd.f32 %v102, %v410
  %v412 = vpop.f32.mrb[0].mxu0
  %v413 = vpop.f32.mrb[0].mxu0
  %v414 = vadd.f32 %v102, %v413
  %v415 = vpop.f32.mrb[0].mxu0
  %416 = vmatprep.mubr.bf16.mxu0 0
  %417 = vmatmul.mubr.bf16.gmra.mrb[0].mxu0 %v237
  %v418 = vpop.f32.mrb[0].mxu0
  %v419 = vadd.f32 %v102, %v418
  %v420 = vpop.f32.mrb[0].mxu0
  %v421 = vpop.f32.mrb[0].mxu0
  %v422 = vadd.f32 %v102, %v421
  %v423 = vpop.f32.mrb[0].mxu0
  %424 = vmatprep.mubr.bf16.mxu0 0
  %425 = vmatmul.mubr.bf16.gmra.mrb[0].mxu0 %v238
  %v426 = vpop.f32.mrb[0].mxu0
  %v427 = vadd.f32 %v102, %v426
  %v428 = vpop.f32.mrb[0].mxu0
  %v429 = vpop.f32.mrb[0].mxu0
  %v430 = vadd.f32 %v102, %v429
  %v431 = vpop.f32.mrb[0].mxu0
  %432 = vmatprep.mubr.bf16.mxu0 0
  %433 = vmatmul.mubr.bf16.gmra.mrb[0].mxu0 %v239
  %v434 = vpop.f32.mrb[0].mxu0
  %v435 = vadd.f32 %v102, %v434
  %v436 = vpop.f32.mrb[0].mxu0
  %v437 = vpop.f32.mrb[0].mxu0
  %v438 = vadd.f32 %v102, %v437
  %v439 = vpop.f32.mrb[0].mxu0
  %440 = vmatprep.mubr.bf16.mxu0 0
  %441 = vmatmul.mubr.bf16.gmra.mrb[0].mxu0 %v240
  %v442 = vpop.f32.mrb[0].mxu0
  %v443 = vadd.f32 %v102, %v442
  %v444 = vpop.f32.mrb[0].mxu0
  %v445 = vpop.f32.mrb[0].mxu0
  %v446 = vadd.f32 %v102, %v445
  %v447 = vpop.f32.mrb[0].mxu0
  %448 = vmatprep.mubr.bf16.mxu0 0
  %449 = vmatmul.mubr.bf16.gmra.mrb[0].mxu0 %v241
  %v450 = vpop.f32.mrb[0].mxu0
  %v451 = vadd.f32 %v102, %v450
  %v452 = vpop.f32.mrb[0].mxu0
  %v453 = vpop.f32.mrb[0].mxu0
  %v454 = vadd.f32 %v102, %v453
  %v455 = vpop.f32.mrb[0].mxu0
  %456 = vmatprep.mubr.bf16.mxu0 0
  %457 = vmatmul.mubr.bf16.gmra.mrb[0].mxu0 %v242
  %v458 = vpop.f32.mrb[0].mxu0
  %v459 = vadd.f32 %v102, %v458
  %v460 = vpop.f32.mrb[0].mxu0
  %v461 = vpop.f32.mrb[0].mxu0
  %v462 = vadd.f32 %v102, %v461
  %v463 = vpop.f32.mrb[0].mxu0
  %464 = vmatprep.mubr.bf16.mxu0 0
  %465 = vmatmul.mubr.bf16.gmra.mrb[0].mxu0 %v243
  %v466 = vpop.f32.mrb[0].mxu0
  %v467 = vadd.f32 %v102, %v466
  %v468 = vpop.f32.mrb[0].mxu0
  %v469 = vpop.f32.mrb[0].mxu0
  %v470 = vadd.f32 %v102, %v469
  %v471 = vpop.f32.mrb[0].mxu0
  %472 = vmatprep.mubr.bf16.mxu0 0
  %473 = vmatmul.mubr.bf16.gmra.mrb[0].mxu0 %v244
  %v474 = vpop.f32.mrb[0].mxu0
  %v475 = vadd.f32 %v102, %v474
  %v476 = vpop.f32.mrb[0].mxu0
  %v477 = vpop.f32.mrb[0].mxu0
  %v478 = vadd.f32 %v102, %v477
  %v479 = vpop.f32.mrb[0].mxu0
  %480 = vmatprep.mubr.bf16.mxu0 0
  %481 = vmatmul.mubr.bf16.gmra.mrb[0].mxu0 %v245
  %v482 = vpop.f32.mrb[0].mxu0
  %v483 = vadd.f32 %v102, %v482
  %v484 = vpop.f32.mrb[0].mxu0
  %v485 = vpop.f32.mrb[0].mxu0
  %v486 = vadd.f32 %v102, %v485
  %v487 = vpop.f32.mrb[0].mxu0
  %488 = vmatprep.mubr.bf16.mxu0 0
  %489 = vmatmul.mubr.bf16.gmra.mrb[0].mxu0 %v246
  %v490 = vpop.f32.mrb[0].mxu0
  %v491 = vadd.f32 %v102, %v490
  %v492 = vpop.f32.mrb[0].mxu0
  %v493 = vpop.f32.mrb[0].mxu0
  %v494 = vadd.f32 %v102, %v493
  %v495 = vpop.f32.mrb[0].mxu0
  %496 = vmatprep.mubr.bf16.mxu0 0
  %497 = vmatmul.mubr.bf16.gmra.mrb[0].mxu0 %v247
  %v498 = vpop.f32.mrb[0].mxu0
  %v499 = vadd.f32 %v102, %v498
  %v500 = vpop.f32.mrb[0].mxu0
  %v501 = vpop.f32.mrb[0].mxu0
  %v502 = vadd.f32 %v102, %v501
  %v503 = vpop.f32.mrb[0].mxu0
  %504 = vmatprep.mubr.bf16.mxu0 0
  %505 = vmatmul.mubr.bf16.gmra.mrb[0].mxu0 %v248
  %v506 = vpop.f32.mrb[0].mxu0
  %v507 = vadd.f32 %v102, %v506
  %v508 = vpop.f32.mrb[0].mxu0
  %v509 = vpop.f32.mrb[0].mxu0
  %v510 = vadd.f32 %v102, %v509
  %v511 = vpop.f32.mrb[0].mxu0
  %512 = vmatprep.mubr.bf16.mxu0 0
  %513 = vmatmul.mubr.bf16.gmra.mrb[0].mxu0 %v249
  %v514 = vpop.f32.mrb[0].mxu0
  %v515 = vadd.f32 %v102, %v514
  %v516 = vpop.f32.mrb[0].mxu0
  %v517 = vpop.f32.mrb[0].mxu0
  %v518 = vadd.f32 %v102, %v517
  %v519 = vpop.f32.mrb[0].mxu0
  %520 = vmatprep.mubr.bf16.mxu0 0
  %521 = vmatmul.mubr.bf16.gmra.mrb[0].mxu0 %v250
  %v522 = vpop.f32.mrb[0].mxu0
  %v523 = vadd.f32 %v102, %v522
  %v524 = vpop.f32.mrb[0].mxu0
  %v525 = vpop.f32.mrb[0].mxu0
  %v526 = vadd.f32 %v102, %v525
  %v527 = vpop.f32.mrb[0].mxu0
  %528 = vmatprep.mubr.bf16.mxu0 0
  %529 = vmatmul.mubr.bf16.gmra.mrb[0].mxu0 %v251
  %v530 = vpop.f32.mrb[0].mxu0
  %v531 = vadd.f32 %v102, %v530
  %v532 = vpop.f32.mrb[0].mxu0
  %v533 = vpop.f32.mrb[0].mxu0
  %v534 = vadd.f32 %v102, %v533
  %v535 = vpop.f32.mrb[0].mxu0
  %536 = vmatprep.mubr.bf16.mxu0 0
  %537 = vmatmul.mubr.bf16.gmra.mrb[0].mxu0 %v252
  %v538 = vpop.f32.mrb[0].mxu0
  %v539 = vadd.f32 %v102, %v538
  %v540 = vpop.f32.mrb[0].mxu0
  %v541 = vpop.f32.mrb[0].mxu0
  %v542 = vadd.f32 %v102, %v541
  %v543 = vpop.f32.mrb[0].mxu0
  %544 = vmatprep.mubr.bf16.mxu0 0
  %545 = vmatmul.mubr.bf16.gmra.mrb[0].mxu0 %v253
  %v546 = vpop.f32.mrb[0].mxu0
  %v547 = vadd.f32 %v102, %v546
  %v548 = vpop.f32.mrb[0].mxu0
  %v549 = vpop.f32.mrb[0].mxu0
  %v550 = vadd.f32 %v102, %v549
  %v551 = vpop.f32.mrb[0].mxu0
  %552 = vmatprep.mubr.bf16.mxu0 0
  %553 = vmatmul.mubr.bf16.gmra.mrb[0].mxu0 %v254
  %v554 = vpop.f32.mrb[0].mxu0
  %v555 = vadd.f32 %v102, %v554
  %v556 = vpop.f32.mrb[0].mxu0
  %v557 = vpop.f32.mrb[0].mxu0
  %v558 = vadd.f32 %v102, %v557
  %v559 = vpop.f32.mrb[0].mxu0
  %560 = vmatprep.mubr.bf16.mxu0 0
  %561 = vmatmul.mubr.bf16.gmra.mrb[0].mxu0 %v255
  %v562 = vpop.f32.mrb[0].mxu0
  %v563 = vadd.f32 %v102, %v562
  %v564 = vpop.f32.mrb[0].mxu0
  %v565 = vpop.f32.mrb[0].mxu0
  %v566 = vadd.f32 %v102, %v565
  %v567 = vpop.f32.mrb[0].mxu0
  %568 = vmatprep.mubr.bf16.mxu0 0
  %569 = vmatmul.mubr.bf16.gmra.mrb[0].mxu0 %v256
  %v570 = vpop.f32.mrb[0].mxu0
  %v571 = vadd.f32 %v102, %v570
  %v572 = vpop.f32.mrb[0].mxu0
  %v573 = vpop.f32.mrb[0].mxu0
  %v574 = vadd.f32 %v102, %v573
  %v575 = vpop.f32.mrb[0].mxu0
  %576 = vmatprep.mubr.bf16.mxu0 0
  %577 = vmatmul.mubr.bf16.gmra.mrb[0].mxu0 %v257
  %v578 = vpop.f32.mrb[0].mxu0
  %v579 = vadd.f32 %v102, %v578
  %v580 = vpop.f32.mrb[0].mxu0
  %v581 = vpop.f32.mrb[0].mxu0
  %v582 = vadd.f32 %v102, %v581
  %v583 = vpop.f32.mrb[0].mxu0
  %584 = vmatprep.mubr.bf16.mxu0 0
  %585 = vmatmul.mubr.bf16.gmra.mrb[0].mxu0 %v258
  %v586 = vpop.f32.mrb[0].mxu0
  %v587 = vadd.f32 %v102, %v586
  %v588 = vpop.f32.mrb[0].mxu0
  %v589 = vpop.f32.mrb[0].mxu0
  %v590 = vadd.f32 %v102, %v589
  %v591 = vpop.f32.mrb[0].mxu0
  %592 = vmatprep.mubr.bf16.mxu0 0
  %593 = vmatmul.mubr.bf16.gmra.mrb[0].mxu0 %v259
  %v594 = vpop.f32.mrb[0].mxu0
  %v595 = vadd.f32 %v102, %v594
  %v596 = vpop.f32.mrb[0].mxu0
  %v597 = vpop.f32.mrb[0].mxu0
  %v598 = vadd.f32 %v102, %v597
  %v599 = vpop.f32.mrb[0].mxu0
  %600 = vmatprep.mubr.bf16.mxu0 0
  %601 = vmatmul.mubr.bf16.gmra.mrb[0].mxu0 %v260
  %v602 = vpop.f32.mrb[0].mxu0
  %v603 = vadd.f32 %v102, %v602
  %v604 = vpop.f32.mrb[0].mxu0
  %v605 = vpop.f32.mrb[0].mxu0
  %v606 = vadd.f32 %v102, %v605
  %v607 = vpop.f32.mrb[0].mxu0
  %608 = vmatprep.mubr.bf16.mxu0 0
  %609 = vmatmul.mubr.bf16.gmra.mrb[0].mxu0 %v261
  %v610 = vpop.f32.mrb[0].mxu0
  %v611 = vadd.f32 %v102, %v610
  %v612 = vpop.f32.mrb[0].mxu0
  %v613 = vpop.f32.mrb[0].mxu0
  %v614 = vadd.f32 %v102, %v613
  %v615 = vpop.f32.mrb[0].mxu0
  %616 = vmatprep.mubr.bf16.mxu0 0
  %617 = vmatmul.mubr.bf16.gmra.mrb[0].mxu0 %v262
  %v618 = vpop.f32.mrb[0].mxu0
  %v619 = vadd.f32 %v102, %v618
  %v620 = vpop.f32.mrb[0].mxu0
  %v621 = vpop.f32.mrb[0].mxu0
  %v622 = vadd.f32 %v102, %v621
  %v623 = vpop.f32.mrb[0].mxu0
  %624 = vmatprep.mubr.bf16.mxu0 0
  %625 = vmatmul.mubr.bf16.gmra.mrb[0].mxu0 %v263
  %v626 = vpop.f32.mrb[0].mxu0
  %v627 = vadd.f32 %v102, %v626
  %v628 = vpop.f32.mrb[0].mxu0
  %v629 = vpop.f32.mrb[0].mxu0
  %v630 = vadd.f32 %v102, %v629
  %v631 = vpop.f32.mrb[0].mxu0
  %632 = vdwg.mxu0
  %633 = vst [vmem:[%s3] sm:$0xff] %v379
  %634 = vst [vmem:[%s3 + $0x8] sm:$0xff] %v382
  %635 = vst [vmem:[%s3 + $0x10] sm:$0xff] %v387
  %636 = vst [vmem:[%s3 + $0x18] sm:$0xff] %v390
  %637 = vst [vmem:[%s3 + $0x20] sm:$0xff] %v395
  %638 = vst [vmem:[%s3 + $0x28] sm:$0xff] %v398
  %639 = vst [vmem:[%s3 + $0x30] sm:$0xff] %v403
  %640 = vst [vmem:[%s3 + $0x38] sm:$0xff] %v406
  %641 = vst [vmem:[%s3 + $0x40] sm:$0xff] %v411
  %642 = vst [vmem:[%s3 + $0x48] sm:$0xff] %v414
  %643 = vst [vmem:[%s3 + $0x50] sm:$0xff] %v419
  %644 = vst [vmem:[%s3 + $0x58] sm:$0xff] %v422
  %645 = vst [vmem:[%s3 + $0x60] sm:$0xff] %v427
  %646 = vst [vmem:[%s3 + $0x68] sm:$0xff] %v430
  %647 = vst [vmem:[%s3 + $0x70] sm:$0xff] %v435
  %648 = vst [vmem:[%s3 + $0x78] sm:$0xff] %v438
  %649 = vst [vmem:[%s3 + $0x80] sm:$0xff] %v443
  %650 = vst [vmem:[%s3 + $0x88] sm:$0xff] %v446
  %651 = vst [vmem:[%s3 + $0x90] sm:$0xff] %v451
  %652 = vst [vmem:[%s3 + $0x98] sm:$0xff] %v454
  %653 = vst [vmem:[%s3 + $0xa0] sm:$0xff] %v459
  %654 = vst [vmem:[%s3 + $0xa8] sm:$0xff] %v462
  %655 = vst [vmem:[%s3 + $0xb0] sm:$0xff] %v467
  %656 = vst [vmem:[%s3 + $0xb8] sm:$0xff] %v470
  %657 = vst [vmem:[%s3 + $0xc0] sm:$0xff] %v475
  %658 = vst [vmem:[%s3 + $0xc8] sm:$0xff] %v478
  %659 = vst [vmem:[%s3 + $0xd0] sm:$0xff] %v483
  %660 = vst [vmem:[%s3 + $0xd8] sm:$0xff] %v486
  %661 = vst [vmem:[%s3 + $0xe0] sm:$0xff] %v491
  %662 = vst [vmem:[%s3 + $0xe8] sm:$0xff] %v494
  %663 = vst [vmem:[%s3 + $0xf0] sm:$0xff] %v499
  %664 = vst [vmem:[%s3 + $0xf8] sm:$0xff] %v502
  %665 = vst [vmem:[%s3 + $0x100] sm:$0xff] %v507
  %666 = vst [vmem:[%s3 + $0x108] sm:$0xff] %v510
  %667 = vst [vmem:[%s3 + $0x110] sm:$0xff] %v515
  %668 = vst [vmem:[%s3 + $0x118] sm:$0xff] %v518
  %669 = vst [vmem:[%s3 + $0x120] sm:$0xff] %v523
  %670 = vst [vmem:[%s3 + $0x128] sm:$0xff] %v526
  %671 = vst [vmem:[%s3 + $0x130] sm:$0xff] %v531
  %672 = vst [vmem:[%s3 + $0x138] sm:$0xff] %v534
  %673 = vst [vmem:[%s3 + $0x140] sm:$0xff] %v539
  %674 = vst [vmem:[%s3 + $0x148] sm:$0xff] %v542
  %675 = vst [vmem:[%s3 + $0x150] sm:$0xff] %v547
  %676 = vst [vmem:[%s3 + $0x158] sm:$0xff] %v550
  %677 = vst [vmem:[%s3 + $0x160] sm:$0xff] %v555
  %678 = vst [vmem:[%s3 + $0x168] sm:$0xff] %v558
  %679 = vst [vmem:[%s3 + $0x170] sm:$0xff] %v563
  %680 = vst [vmem:[%s3 + $0x178] sm:$0xff] %v566
  %681 = vst [vmem:[%s3 + $0x180] sm:$0xff] %v571
  %682 = vst [vmem:[%s3 + $0x188] sm:$0xff] %v574
  %683 = vst [vmem:[%s3 + $0x190] sm:$0xff] %v579
  %684 = vst [vmem:[%s3 + $0x198] sm:$0xff] %v582
  %685 = vst [vmem:[%s3 + $0x1a0] sm:$0xff] %v587
  %686 = vst [vmem:[%s3 + $0x1a8] sm:$0xff] %v590
  %687 = vst [vmem:[%s3 + $0x1b0] sm:$0xff] %v595
  %688 = vst [vmem:[%s3 + $0x1b8] sm:$0xff] %v598
  %689 = vst [vmem:[%s3 + $0x1c0] sm:$0xff] %v603
  %690 = vst [vmem:[%s3 + $0x1c8] sm:$0xff] %v606
  %691 = vst [vmem:[%s3 + $0x1d0] sm:$0xff] %v611
  %692 = vst [vmem:[%s3 + $0x1d8] sm:$0xff] %v614
  %693 = vst [vmem:[%s3 + $0x1e0] sm:$0xff] %v619
  %694 = vst [vmem:[%s3 + $0x1e8] sm:$0xff] %v622
  %695 = vst [vmem:[%s3 + $0x1f0] sm:$0xff] %v627
  %696 = vst [vmem:[%s3 + $0x1f8] sm:$0xff] %v630
  %v697 = vadd.f32 %v379, %v382
  %v698 = vadd.f32 %v697, %v387
  %v699 = vadd.f32 %v698, %v390
  %v700 = vadd.f32 %v699, %v395
  %v701 = vadd.f32 %v700, %v398
  %v702 = vadd.f32 %v701, %v403
  %v703 = vadd.f32 %v702, %v406
  %v704 = vadd.f32 %v703, %v411
  %v705 = vadd.f32 %v704, %v414
  %v706 = vadd.f32 %v705, %v419
  %v707 = vadd.f32 %v706, %v422
  %v708 = vadd.f32 %v707, %v427
  %v709 = vadd.f32 %v708, %v430
  %v710 = vadd.f32 %v709, %v435
  %v711 = vadd.f32 %v710, %v438
  %v712 = vadd.f32 %v711, %v443
  %v713 = vadd.f32 %v712, %v446
  %v714 = vadd.f32 %v713, %v451
  %v715 = vadd.f32 %v714, %v454
  %v716 = vadd.f32 %v715, %v459
  %v717 = vadd.f32 %v716, %v462
  %v718 = vadd.f32 %v717, %v467
  %v719 = vadd.f32 %v718, %v470
  %v720 = vadd.f32 %v719, %v475
  %v721 = vadd.f32 %v720, %v478
  %v722 = vadd.f32 %v721, %v483
  %v723 = vadd.f32 %v722, %v486
  %v724 = vadd.f32 %v723, %v491
  %v725 = vadd.f32 %v724, %v494
  %v726 = vadd.f32 %v725, %v499
  %v727 = vadd.f32 %v726, %v502
  %v728 = vadd.f32 %v727, %v507
  %v729 = vadd.f32 %v728, %v510
  %v730 = vadd.f32 %v729, %v515
  %v731 = vadd.f32 %v730, %v518
  %v732 = vadd.f32 %v731, %v523
  %v733 = vadd.f32 %v732, %v526
  %v734 = vadd.f32 %v733, %v531
  %v735 = vadd.f32 %v734, %v534
  %v736 = vadd.f32 %v735, %v539
  %v737 = vadd.f32 %v736, %v542
  %v738 = vadd.f32 %v737, %v547
  %v739 = vadd.f32 %v738, %v550
  %v740 = vadd.f32 %v739, %v555
  %v741 = vadd.f32 %v740, %v558
  %v742 = vadd.f32 %v741, %v563
  %v743 = vadd.f32 %v742, %v566
  %v744 = vadd.f32 %v743, %v571
  %v745 = vadd.f32 %v744, %v574
  %v746 = vadd.f32 %v745, %v579
  %v747 = vadd.f32 %v746, %v582
  %v748 = vadd.f32 %v747, %v587
  %v749 = vadd.f32 %v748, %v590
  %v750 = vadd.f32 %v749, %v595
  %v751 = vadd.f32 %v750, %v598
  %v752 = vadd.f32 %v751, %v603
  %v753 = vadd.f32 %v752, %v606
  %v754 = vadd.f32 %v753, %v611
  %v755 = vadd.f32 %v754, %v614
  %v756 = vadd.f32 %v755, %v619
  %v757 = vadd.f32 %v756, %v622
  %v758 = vadd.f32 %v757, %v627
  %v759 = vadd.f32 %v758, %v630
  %v760 = vrot.slane %v759, 4
  %v761 = vadd.f32 %v759, %v760
  %v762 = vrot.slane %v761, 2
  %v763 = vadd.f32 %v761, %v762
  %v764 = vrot.slane %v763, 1
  %v765 = vadd.f32 %v763, %v764
  %v766 = vmul.f32 %v379, %v379
  %v767 = vmul.f32 %v382, %v382
  %v768 = vmul.f32 %v387, %v387
  %v769 = vmul.f32 %v390, %v390
  %v770 = vmul.f32 %v395, %v395
  %v771 = vmul.f32 %v398, %v398
  %v772 = vmul.f32 %v403, %v403
  %v773 = vmul.f32 %v406, %v406
  %v774 = vmul.f32 %v411, %v411
  %v775 = vmul.f32 %v414, %v414
  %v776 = vmul.f32 %v419, %v419
  %v777 = vmul.f32 %v422, %v422
  %v778 = vmul.f32 %v427, %v427
  %v779 = vmul.f32 %v430, %v430
  %v780 = vmul.f32 %v435, %v435
  %v781 = vmul.f32 %v438, %v438
  %v782 = vmul.f32 %v443, %v443
  %v783 = vmul.f32 %v446, %v446
  %v784 = vmul.f32 %v451, %v451
  %v785 = vmul.f32 %v454, %v454
  %v786 = vmul.f32 %v459, %v459
  %v787 = vmul.f32 %v462, %v462
  %v788 = vmul.f32 %v467, %v467
  %v789 = vmul.f32 %v470, %v470
  %v790 = vmul.f32 %v475, %v475
  %v791 = vmul.f32 %v478, %v478
  %v792 = vmul.f32 %v483, %v483
  %v793 = vmul.f32 %v486, %v486
  %v794 = vmul.f32 %v491, %v491
  %v795 = vmul.f32 %v494, %v494
  %v796 = vmul.f32 %v499, %v499
  %v797 = vmul.f32 %v502, %v502
  %v798 = vmul.f32 %v507, %v507
  %v799 = vmul.f32 %v510, %v510
  %v800 = vmul.f32 %v515, %v515
  %v801 = vmul.f32 %v518, %v518
  %v802 = vmul.f32 %v523, %v523
  %v803 = vmul.f32 %v526, %v526
  %v804 = vmul.f32 %v531, %v531
  %v805 = vmul.f32 %v534, %v534
  %v806 = vmul.f32 %v539, %v539
  %v807 = vmul.f32 %v542, %v542
  %v808 = vmul.f32 %v547, %v547
  %v809 = vmul.f32 %v550, %v550
  %v810 = vmul.f32 %v555, %v555
  %v811 = vmul.f32 %v558, %v558
  %v812 = vmul.f32 %v563, %v563
  %v813 = vmul.f32 %v566, %v566
  %v814 = vmul.f32 %v571, %v571
  %v815 = vmul.f32 %v574, %v574
  %v816 = vmul.f32 %v579, %v579
  %v817 = vmul.f32 %v582, %v582
  %v818 = vmul.f32 %v587, %v587
  %v819 = vmul.f32 %v590, %v590
  %v820 = vmul.f32 %v595, %v595
  %v821 = vmul.f32 %v598, %v598
  %v822 = vmul.f32 %v603, %v603
  %v823 = vmul.f32 %v606, %v606
  %v824 = vmul.f32 %v611, %v611
  %v825 = vmul.f32 %v614, %v614
  %v826 = vmul.f32 %v619, %v619
  %v827 = vmul.f32 %v622, %v622
  %v828 = vmul.f32 %v627, %v627
  %v829 = vmul.f32 %v630, %v630
  %v830 = vadd.f32 %v766, %v767
  %v831 = vadd.f32 %v830, %v768
  %v832 = vadd.f32 %v831, %v769
  %v833 = vadd.f32 %v832, %v770
  %v834 = vadd.f32 %v833, %v771
  %v835 = vadd.f32 %v834, %v772
  %v836 = vadd.f32 %v835, %v773
  %v837 = vadd.f32 %v836, %v774
  %v838 = vadd.f32 %v837, %v775
  %v839 = vadd.f32 %v838, %v776
  %v840 = vadd.f32 %v839, %v777
  %v841 = vadd.f32 %v840, %v778
  %v842 = vadd.f32 %v841, %v779
  %v843 = vadd.f32 %v842, %v780
  %v844 = vadd.f32 %v843, %v781
  %v845 = vadd.f32 %v844, %v782
  %v846 = vadd.f32 %v845, %v783
  %v847 = vadd.f32 %v846, %v784
  %v848 = vadd.f32 %v847, %v785
  %v849 = vadd.f32 %v848, %v786
  %v850 = vadd.f32 %v849, %v787
  %v851 = vadd.f32 %v850, %v788
  %v852 = vadd.f32 %v851, %v789
  %v853 = vadd.f32 %v852, %v790
  %v854 = vadd.f32 %v853, %v791
  %v855 = vadd.f32 %v854, %v792
  %v856 = vadd.f32 %v855, %v793
  %v857 = vadd.f32 %v856, %v794
  %v858 = vadd.f32 %v857, %v795
  %v859 = vadd.f32 %v858, %v796
  %v860 = vadd.f32 %v859, %v797
  %v861 = vadd.f32 %v860, %v798
  %v862 = vadd.f32 %v861, %v799
  %v863 = vadd.f32 %v862, %v800
  %v864 = vadd.f32 %v863, %v801
  %v865 = vadd.f32 %v864, %v802
  %v866 = vadd.f32 %v865, %v803
  %v867 = vadd.f32 %v866, %v804
  %v868 = vadd.f32 %v867, %v805
  %v869 = vadd.f32 %v868, %v806
  %v870 = vadd.f32 %v869, %v807
  %v871 = vadd.f32 %v870, %v808
  %v872 = vadd.f32 %v871, %v809
  %v873 = vadd.f32 %v872, %v810
  %v874 = vadd.f32 %v873, %v811
  %v875 = vadd.f32 %v874, %v812
  %v876 = vadd.f32 %v875, %v813
  %v877 = vadd.f32 %v876, %v814
  %v878 = vadd.f32 %v877, %v815
  %v879 = vadd.f32 %v878, %v816
  %v880 = vadd.f32 %v879, %v817
  %v881 = vadd.f32 %v880, %v818
  %v882 = vadd.f32 %v881, %v819
  %v883 = vadd.f32 %v882, %v820
  %v884 = vadd.f32 %v883, %v821
  %v885 = vadd.f32 %v884, %v822
  %v886 = vadd.f32 %v885, %v823
  %v887 = vadd.f32 %v886, %v824
  %v888 = vadd.f32 %v887, %v825
  %v889 = vadd.f32 %v888, %v826
  %v890 = vadd.f32 %v889, %v827
  %v891 = vadd.f32 %v890, %v828
  %v892 = vadd.f32 %v891, %v829
  %v893 = vrot.slane %v892, 4
  %v894 = vadd.f32 %v892, %v893
  %v895 = vrot.slane %v894, 2
  %v896 = vadd.f32 %v894, %v895
  %v897 = vrot.slane %v896, 1
  %v898 = vadd.f32 %v896, %v897
  %vm899 = vcmask 1040384
  %v900 = vsel %vm899, %v765, %v898
  %p901 = scmp.eq.s32.totalorder 0, 0
  // Predicated region
  $region14: #{vae_forward.26} parent=0 // pred_check
    %p902 = pneg %p901
  $region15: #{vae_forward.26} parent=0 // pred_check_branch
    %904 = sbr.rel (%p902) target = $region17
  $region16: #{vae_forward.26} parent=0 // pred_region
    %905 = vst [vmem:[%s4] sm:$0x3] 0.0
  $region17: #{vae_forward.26} parent=0 // pred_fallthru
    _
  %v906 = vld [vmem:[%s4] sm:$0x3]
  %v907 = vadd.f32 %v906, %v900
  %908 = vst [vmem:[%s4] sm:$0x3] %v907
  // Predicated region
  $region18: #{vae_forward.26} parent=0 // pred_check
    _
  $region19: #{vae_forward.26} parent=0 // pred_check_branch
    %910 = sbr.rel (0) target = $region21
  $region20: #{vae_forward.26} parent=0 // pred_region
    _
  $region21: #{vae_forward.26} parent=0 // pred_fallthru
    _
  // Predicated region
  $region22: #{vae_forward.26} parent=0 // pred_check
    _
  $region23: #{vae_forward.26} parent=0 // pred_check_branch
    %912 = sbr.rel (0) target = $region25
  $region24: #{vae_forward.26} parent=0 // pred_region
    _
  $region25: #{vae_forward.26} parent=0 // pred_fallthru
    _
  // Predicated region
  $region26: #{vae_forward.26} parent=0 // pred_check
    _
  $region27: #{vae_forward.26} parent=0 // pred_check_branch
    %914 = sbr.rel (0) target = $region29
  $region28: #{vae_forward.26} parent=0 // pred_region
    _
  $region29: #{vae_forward.26} parent=0 // pred_fallthru
    _
  // Predicated region
  $region30: #{vae_forward.26} parent=0 // pred_check
    _
  $region31: #{vae_forward.26} parent=0 // pred_check_branch
    %916 = sbr.rel (0) target = $region33
  $region32: #{vae_forward.26} parent=0 // pred_region
    _
  $region33: #{vae_forward.26} parent=0 // pred_fallthru
    _

</llo_original>
